<compile_context>
chip_gen: v6e
topology: v6e:2x2x1
jax: 0.10.0
libtpu: 0.0.40
codegen_flags: <defaults>
</compile_context>

<pallas_src>
import functools
import math

import jax
import jax.numpy as jnp
from jax.experimental import pallas as pl
from jax.experimental.pallas import tpu as pltpu


def _layer_norm_f32(z, gamma, beta, eps=1e-5):
    mu = jnp.mean(z, axis=-1, keepdims=True)
    var = jnp.mean(jnp.square(z - mu), axis=-1, keepdims=True)
    return (z - mu) * jax.lax.rsqrt(var + eps) * gamma + beta


def resblock_kernel(*refs, n_head, has_mask):
    if has_mask:
        x_ref, mask_ref = refs[0], refs[1]
        wrefs = refs[2:-1]
    else:
        x_ref = refs[0]
        mask_ref = None
        wrefs = refs[1:-1]
    o_ref = refs[-1]
    (ln1_g, ln1_b, w_qkv, b_qkv, w_out, b_out,
     ln2_g, ln2_b, w_fc, b_fc, w_proj, b_proj) = wrefs

    L, D = x_ref.shape[1], x_ref.shape[2]
    H = n_head
    hd = D // H

    x = x_ref[0].astype(jnp.float32)                                  # (L, D)

    # ---- LayerNorm 1 (f32, matches the torch LayerNorm fp32 subclass) ----
    xn = _layer_norm_f32(x, ln1_g[0], ln1_b[0])

    # ---- Multi-head self attention ----
    # bf16 MXU matmuls, f32 accumulation.  The 1/sqrt(hd) scale is already
    # folded into the Q columns of w_qkv / b_qkv on the host.
    qkv = jnp.dot(xn.astype(w_qkv.dtype), w_qkv[...],
                  preferred_element_type=jnp.float32) + b_qkv[0]      # (L, 3D)

    # Split heads once (single reshape+transpose per tensor, lane-aligned
    # per-head access afterwards), cast to bf16 once per tensor.
    def split_heads(t):                                               # (L, D) -> (H, L, hd)
        return t.astype(jnp.bfloat16).reshape(L, H, hd).transpose(1, 0, 2)

    q = split_heads(qkv[:, :D])
    k = split_heads(qkv[:, D:2 * D])
    v = split_heads(qkv[:, 2 * D:])

    # Batched scores over heads: (H, L, L).
    s = jnp.einsum('hqd,hkd->hqk', q, k, preferred_element_type=jnp.float32)
    if has_mask:
        s = s + mask_ref[...].astype(jnp.float32)[None, :, :]
    s = s - jnp.max(s, axis=-1, keepdims=True)
    p = jnp.exp(s)
    p = p * pl.reciprocal(jnp.sum(p, axis=-1, keepdims=True), approx=True)

    # Batched PV: (H, L, hd), then concat heads back onto lanes -> (L, D).
    pv = jnp.einsum('hqk,hkd->hqd', p.astype(jnp.bfloat16), v,
                    preferred_element_type=jnp.float32)
    attn_cat = pv.transpose(1, 0, 2).reshape(L, D)

    # Single output projection with contraction depth D (fills the MXU).
    attn = jnp.dot(attn_cat.astype(w_out.dtype), w_out[...],
                   preferred_element_type=jnp.float32) + b_out[0]

    x = x + attn                                                      # residual 1

    # ---- LayerNorm 2 + MLP (QuickGELU) ----
    xn2 = _layer_norm_f32(x, ln2_g[0], ln2_b[0])
    hmid = jnp.dot(xn2.astype(w_fc.dtype), w_fc[...],
                   preferred_element_type=jnp.float32) + b_fc[0]      # (L, 4D)
    hmid = hmid * jax.nn.sigmoid(1.702 * hmid)                        # QuickGELU (f32)
    mlp = jnp.dot(hmid.astype(w_proj.dtype), w_proj[...],
                  preferred_element_type=jnp.float32) + b_proj[0]

    o_ref[0] = (x + mlp).astype(o_ref.dtype)                          # residual 2


def _invariant_spec(shape):
    # Whole-array block, independent of the batch grid index.
    zeros = (0,) * len(shape)
    return pl.BlockSpec(shape, lambda b, _z=zeros: _z)


def _vmem_limit_bytes():
    # ~7/8 of physical VMEM, capped at 100 MiB.  Narrow try: only the hardware
    # query is guarded, never the pallas_call build itself.
    try:
        cap = pltpu.get_tpu_info().vmem_capacity_bytes
    except Exception:
        return 48 * 1024 * 1024   # safe on all generations (v7x incl.)
    return min(int(cap * 7 // 8), 100 * 1024 * 1024)


_WEIGHT_ORDER = ("ln1_g", "ln1_b", "w_qkv", "b_qkv", "w_out", "b_out",
                 "ln2_g", "ln2_b", "w_fc", "b_fc", "w_proj", "b_proj")


def resblock_pallas(x_nld, params, n_head, add_mask=None):
    """x_nld: (N, L, D) with L already padded; add_mask: optional (L, L) f32."""
    N, L, D = x_nld.shape
    has_mask = add_mask is not None
    weights = [params[k] for k in _WEIGHT_ORDER]

    kernel = functools.partial(resblock_kernel, n_head=n_head, has_mask=has_mask)

    in_specs = [pl.BlockSpec((1, L, D), lambda b: (b, 0, 0))]          # x
    args = [x_nld]
    if has_mask:
        in_specs.append(_invariant_spec(add_mask.shape))
        args.append(add_mask)
    for w in weights:
        in_specs.append(_invariant_spec(w.shape))
    args.extend(weights)

    return pl.pallas_call(
        kernel,
        out_shape=jax.ShapeDtypeStruct((N, L, D), x_nld.dtype),
        grid_spec=pltpu.PrefetchScalarGridSpec(
            num_scalar_prefetch=0,
            grid=(N,),
            in_specs=in_specs,
            out_specs=pl.BlockSpec((1, L, D), lambda b: (b, 0, 0)),
        ),
        compiler_params=pltpu.CompilerParams(
            dimension_semantics=("parallel",),
            vmem_limit_bytes=_vmem_limit_bytes()),
    )(*args)


def residual_attention_block_forward(x_lnd, params, n_head, attn_mask=None):
    """Mirrors ResidualAttentionBlock.forward.

    x_lnd:     (L, N, D)  -- torch's (seq, batch, width) layout
    attn_mask: optional (L, L) float additive mask (torch MHA 2-D attn_mask
               semantics: added to the attention logits of every batch/head).
    """
    # TODO(synk): torch's 3-D (N*heads, L, L) attn_mask / key_padding_mask /
    # need_weights=True variants of nn.MultiheadAttention are not supported.
    L, N, D = x_lnd.shape
    x = jnp.transpose(x_lnd, (1, 0, 2))                                # (N, L, D)

    # Pad L to a multiple of 128 so score/softmax/store tiles are lane-dense.
    L_pad = ((L + 127) // 128) * 128
    needs_pad = L_pad != L

    add_mask = None
    if attn_mask is not None or needs_pad:
        add_mask = jnp.zeros((L_pad, L_pad), jnp.float32)
        if attn_mask is not None:
            add_mask = add_mask.at[:L, :L].set(attn_mask.astype(jnp.float32))
        # Padded key columns must never receive attention weight.
        add_mask = add_mask.at[:, L:].set(-1e9)

    if needs_pad:
        x = jnp.pad(x, ((0, 0), (0, L_pad - L), (0, 0)))

    y = resblock_pallas(x, params, n_head, add_mask)
    y = y[:, :L, :]                                                    # drop padded queries
    return jnp.transpose(y, (1, 0, 2))                                 # back to (L, N, D)


def resblock_reference(x_nld, params, n_head, attn_mask=None):
    """Pure-JAX f32 reference (same packed params, bf16 weights upcast).
    Used only for a tolerance check in __main__."""
    N, L, D = x_nld.shape
    H = n_head
    hd = D // H
    f = lambda a: jnp.asarray(a, jnp.float32)
    x = f(x_nld)
    xn = _layer_norm_f32(x, f(params["ln1_g"][0]), f(params["ln1_b"][0]))
    qkv = xn @ f(params["w_qkv"]) + f(params["b_qkv"][0])
    split = lambda t: t.reshape(N, L, H, hd).transpose(0, 2, 1, 3)
    q, k, v = (split(qkv[..., :D]), split(qkv[..., D:2 * D]), split(qkv[..., 2 * D:]))
    s = jnp.einsum('nhqd,nhkd->nhqk', q, k)
    if attn_mask is not None:
        s = s + f(attn_mask)[None, None]
    p = jax.nn.softmax(s, axis=-1)
    pv = jnp.einsum('nhqk,nhkd->nhqd', p, v).transpose(0, 2, 1, 3).reshape(N, L, D)
    x = x + pv @ f(params["w_out"]) + f(params["b_out"][0])
    xn2 = _layer_norm_f32(x, f(params["ln2_g"][0]), f(params["ln2_b"][0]))
    h = xn2 @ f(params["w_fc"]) + f(params["b_fc"][0])
    h = h * jax.nn.sigmoid(1.702 * h)
    return x + h @ f(params["w_proj"]) + f(params["b_proj"][0])


def init_layer_params(key, width, n_head):
    """Random params, pre-packed for the kernel: weights transposed to
    (in, out), cast to bf16, 1/sqrt(head_dim) folded into the Q projection."""
    D = width
    hd = D // n_head
    scale = 1.0 / math.sqrt(hd)
    ks = jax.random.split(key, 6)
    s = 0.02

    w_qkv = jax.random.normal(ks[0], (D, 3 * D), jnp.float32) * s
    b_qkv = jax.random.normal(ks[1], (1, 3 * D), jnp.float32) * s
    col_scale = jnp.concatenate([jnp.full((D,), scale, jnp.float32),
                                 jnp.ones((2 * D,), jnp.float32)])
    w_qkv = w_qkv * col_scale[None, :]
    b_qkv = b_qkv * col_scale[None, :]

    return {
        "ln1_g": jnp.ones((1, D), jnp.float32),
        "ln1_b": jnp.zeros((1, D), jnp.float32),
        "w_qkv": w_qkv.astype(jnp.bfloat16),                           # (D, 3D)
        "b_qkv": b_qkv,                                                # f32
        "w_out": (jax.random.normal(ks[2], (D, D), jnp.float32) * s
                  ).astype(jnp.bfloat16),                              # (D, D)
        "b_out": jnp.zeros((1, D), jnp.float32),
        "ln2_g": jnp.ones((1, D), jnp.float32),
        "ln2_b": jnp.zeros((1, D), jnp.float32),
        "w_fc": (jax.random.normal(ks[3], (D, 4 * D), jnp.float32) * s
                 ).astype(jnp.bfloat16),                               # (D, 4D)
        "b_fc": jax.random.normal(ks[4], (1, 4 * D), jnp.float32) * s,
        "w_proj": (jax.random.normal(ks[5], (4 * D, D), jnp.float32) * s
                   ).astype(jnp.bfloat16),                             # (4D, D)
        "b_proj": jnp.zeros((1, D), jnp.float32),
    }


if __name__ == "__main__":
    width, heads, seq, batch = 32, 4, 8, 2

    key = jax.random.PRNGKey(0)
    kx, kp = jax.random.split(key, 2)

    x = jax.random.normal(kx, (seq, batch, width), jnp.float32)        # (L, N, D)
    params = init_layer_params(kp, width, heads)

    # 2-D additive attention mask (torch float attn_mask semantics):
    # block attention to the last two key positions.
    attn_mask = jnp.zeros((seq, seq), jnp.float32).at[:, -2:].set(-10000.0)

    out_masked = jax.block_until_ready(
        residual_attention_block_forward(x, params, heads, attn_mask))
    out_nomask = jax.block_until_ready(
        residual_attention_block_forward(x, params, heads, None))

    assert out_masked.shape == (seq, batch, width), out_masked.shape
    assert out_nomask.shape == (seq, batch, width), out_nomask.shape
    assert jnp.all(jnp.isfinite(out_masked))
    assert jnp.all(jnp.isfinite(out_nomask))

    # Tolerance check vs. pure-JAX f32 reference (bf16 activations + approx
    # reciprocal mean the kernel is not bit-exact by design).
    x_nld = jnp.transpose(x, (1, 0, 2))
    ref_masked = jnp.transpose(resblock_reference(x_nld, params, heads, attn_mask), (1, 0, 2))
    ref_nomask = jnp.transpose(resblock_reference(x_nld, params, heads, None), (1, 0, 2))
    assert float(jnp.max(jnp.abs(out_masked - ref_masked))) < 2e-2
    assert float(jnp.max(jnp.abs(out_nomask - ref_nomask))) < 2e-2

    print("KERNEL_OK")
</pallas_src>

<mosaic_0001>
module attributes {stable_mosaic.version = 11 : i64} {
  func.func @resblock_kernel(%arg0: i32, %arg1: memref<1x128x32xf32, #tpu.memory_space<vmem>>, %arg2: memref<128x128xf32, #tpu.memory_space<vmem>>, %arg3: memref<1x32xf32, #tpu.memory_space<vmem>>, %arg4: memref<1x32xf32, #tpu.memory_space<vmem>>, %arg5: memref<32x96xbf16, #tpu.memory_space<vmem>>, %arg6: memref<1x96xf32, #tpu.memory_space<vmem>>, %arg7: memref<32x32xbf16, #tpu.memory_space<vmem>>, %arg8: memref<1x32xf32, #tpu.memory_space<vmem>>, %arg9: memref<1x32xf32, #tpu.memory_space<vmem>>, %arg10: memref<1x32xf32, #tpu.memory_space<vmem>>, %arg11: memref<32x128xbf16, #tpu.memory_space<vmem>>, %arg12: memref<1x128xf32, #tpu.memory_space<vmem>>, %arg13: memref<128x32xbf16, #tpu.memory_space<vmem>>, %arg14: memref<1x32xf32, #tpu.memory_space<vmem>>, %arg15: memref<1x128x32xf32, #tpu.memory_space<vmem>>) attributes {dimension_semantics = [#tpu.dimension_semantics<parallel>], iteration_bounds = array<i64: 2>, scalar_prefetch = 0 : i64, scratch_operands = 0 : i64, tpu.core_type = #tpu.core_type<tc>, window_params = [{transform_indices = @transform_0, window_bounds = array<i64: 1, 128, 32>}, {pipeline_mode = #tpu.pipeline_mode<synchronous>, transform_indices = @transform_1, window_bounds = array<i64: 128, 128>}, {pipeline_mode = #tpu.pipeline_mode<synchronous>, transform_indices = @transform_2, window_bounds = array<i64: 1, 32>}, {pipeline_mode = #tpu.pipeline_mode<synchronous>, transform_indices = @transform_3, window_bounds = array<i64: 1, 32>}, {pipeline_mode = #tpu.pipeline_mode<synchronous>, transform_indices = @transform_4, window_bounds = array<i64: 32, 96>}, {pipeline_mode = #tpu.pipeline_mode<synchronous>, transform_indices = @transform_5, window_bounds = array<i64: 1, 96>}, {pipeline_mode = #tpu.pipeline_mode<synchronous>, transform_indices = @transform_6, window_bounds = array<i64: 32, 32>}, {pipeline_mode = #tpu.pipeline_mode<synchronous>, transform_indices = @transform_7, window_bounds = array<i64: 1, 32>}, {pipeline_mode = #tpu.pipeline_mode<synchronous>, transform_indices = @transform_8, window_bounds = array<i64: 1, 32>}, {pipeline_mode = #tpu.pipeline_mode<synchronous>, transform_indices = @transform_9, window_bounds = array<i64: 1, 32>}, {pipeline_mode = #tpu.pipeline_mode<synchronous>, transform_indices = @transform_10, window_bounds = array<i64: 32, 128>}, {pipeline_mode = #tpu.pipeline_mode<synchronous>, transform_indices = @transform_11, window_bounds = array<i64: 1, 128>}, {pipeline_mode = #tpu.pipeline_mode<synchronous>, transform_indices = @transform_12, window_bounds = array<i64: 128, 32>}, {pipeline_mode = #tpu.pipeline_mode<synchronous>, transform_indices = @transform_13, window_bounds = array<i64: 1, 32>}, {transform_indices = @transform_14, window_bounds = array<i64: 1, 128, 32>}]} {
    %c0 = arith.constant 0 : index
    %c0_0 = arith.constant 0 : index
    %c0_1 = arith.constant 0 : index
    %0 = vector.load %arg1[%c0, %c0_0, %c0_1] : memref<1x128x32xf32, #tpu.memory_space<vmem>>, vector<1x128x32xf32>
    %1 = vector.shape_cast %0 : vector<1x128x32xf32> to vector<128x32xf32>
    %c0_2 = arith.constant 0 : index
    %c0_3 = arith.constant 0 : index
    %2 = vector.load %arg3[%c0_2, %c0_3] : memref<1x32xf32, #tpu.memory_space<vmem>>, vector<1x32xf32>
    %3 = vector.shape_cast %2 : vector<1x32xf32> to vector<32xf32>
    %c0_4 = arith.constant 0 : index
    %c0_5 = arith.constant 0 : index
    %4 = vector.load %arg4[%c0_4, %c0_5] : memref<1x32xf32, #tpu.memory_space<vmem>>, vector<1x32xf32>
    %5 = vector.shape_cast %4 : vector<1x32xf32> to vector<32xf32>
    %cst = arith.constant dense<0.000000e+00> : vector<128xf32>
    %6 = vector.multi_reduction <add>, %1, %cst [1] : vector<128x32xf32> to vector<128xf32>
    %7 = vector.shape_cast %6 : vector<128xf32> to vector<128x1xf32>
    %cst_6 = arith.constant 3.200000e+01 : f32
    %8 = vector.broadcast %cst_6 : f32 to vector<128x1xf32>
    %9 = arith.divf %7, %8 : vector<128x1xf32>
    %10 = vector.broadcast %9 : vector<128x1xf32> to vector<128x32xf32>
    %11 = arith.subf %1, %10 : vector<128x32xf32>
    %12 = arith.mulf %11, %11 : vector<128x32xf32>
    %cst_7 = arith.constant dense<0.000000e+00> : vector<128xf32>
    %13 = vector.multi_reduction <add>, %12, %cst_7 [1] : vector<128x32xf32> to vector<128xf32>
    %14 = vector.shape_cast %13 : vector<128xf32> to vector<128x1xf32>
    %cst_8 = arith.constant 3.200000e+01 : f32
    %15 = vector.broadcast %cst_8 : f32 to vector<128x1xf32>
    %16 = arith.divf %14, %15 : vector<128x1xf32>
    %17 = vector.broadcast %9 : vector<128x1xf32> to vector<128x32xf32>
    %18 = arith.subf %1, %17 : vector<128x32xf32>
    %cst_9 = arith.constant 9.99999974E-6 : f32
    %19 = vector.broadcast %cst_9 : f32 to vector<128x1xf32>
    %20 = arith.addf %16, %19 : vector<128x1xf32>
    %21 = math.rsqrt %20 : vector<128x1xf32>
    %22 = vector.broadcast %21 : vector<128x1xf32> to vector<128x32xf32>
    %23 = arith.mulf %18, %22 : vector<128x32xf32>
    %24 = vector.shape_cast %3 : vector<32xf32> to vector<1x32xf32>
    %25 = vector.broadcast %24 : vector<1x32xf32> to vector<128x32xf32>
    %26 = arith.mulf %23, %25 : vector<128x32xf32>
    %27 = vector.shape_cast %5 : vector<32xf32> to vector<1x32xf32>
    %28 = vector.broadcast %27 : vector<1x32xf32> to vector<128x32xf32>
    %29 = arith.addf %26, %28 : vector<128x32xf32>
    %30 = arith.truncf %29 : vector<128x32xf32> to vector<128x32xbf16>
    %c0_10 = arith.constant 0 : index
    %c0_11 = arith.constant 0 : index
    %31 = vector.load %arg5[%c0_10, %c0_11] : memref<32x96xbf16, #tpu.memory_space<vmem>>, vector<32x96xbf16>
    %cst_12 = arith.constant dense<0.000000e+00> : vector<128x96xf32>
    %32 = tpu.matmul %30, %31, %cst_12 {dimension_numbers = #tpu.dot_dimension_numbers<[1], [0], [0], [1], [0, 0, 1, 1], [], []>} : vector<128x32xbf16>, vector<32x96xbf16>, vector<128x96xf32> -> vector<128x96xf32>
    %c0_13 = arith.constant 0 : index
    %c0_14 = arith.constant 0 : index
    %33 = vector.load %arg6[%c0_13, %c0_14] : memref<1x96xf32, #tpu.memory_space<vmem>>, vector<1x96xf32>
    %34 = vector.shape_cast %33 : vector<1x96xf32> to vector<96xf32>
    %35 = vector.shape_cast %34 : vector<96xf32> to vector<1x96xf32>
    %36 = vector.broadcast %35 : vector<1x96xf32> to vector<128x96xf32>
    %37 = arith.addf %32, %36 : vector<128x96xf32>
    %38 = vector.extract_strided_slice %37 {offsets = [0, 0], sizes = [128, 32], strides = [1, 1]} : vector<128x96xf32> to vector<128x32xf32>
    %39 = arith.truncf %38 : vector<128x32xf32> to vector<128x32xbf16>
    %40 = vector.shape_cast %39 : vector<128x32xbf16> to vector<128x4x8xbf16>
    %41 = tpu.transpose %40, [1, 0, 2] : vector<128x4x8xbf16> -> vector<4x128x8xbf16>
    %42 = vector.extract_strided_slice %37 {offsets = [0, 32], sizes = [128, 32], strides = [1, 1]} : vector<128x96xf32> to vector<128x32xf32>
    %43 = arith.truncf %42 : vector<128x32xf32> to vector<128x32xbf16>
    %44 = vector.shape_cast %43 : vector<128x32xbf16> to vector<128x4x8xbf16>
    %45 = tpu.transpose %44, [1, 0, 2] : vector<128x4x8xbf16> -> vector<4x128x8xbf16>
    %46 = vector.extract_strided_slice %37 {offsets = [0, 64], sizes = [128, 32], strides = [1, 1]} : vector<128x96xf32> to vector<128x32xf32>
    %47 = arith.truncf %46 : vector<128x32xf32> to vector<128x32xbf16>
    %48 = vector.shape_cast %47 : vector<128x32xbf16> to vector<128x4x8xbf16>
    %49 = tpu.transpose %48, [1, 0, 2] : vector<128x4x8xbf16> -> vector<4x128x8xbf16>
    "tpu.trace_start"() <{level = 10 : i32, message = "hqd,hkd->hqk"}> : () -> ()
    %cst_15 = arith.constant dense<0.000000e+00> : vector<4x128x128xf32>
    %50 = tpu.matmul %41, %45, %cst_15 {dimension_numbers = #tpu.dot_dimension_numbers<[2], [2], [1], [1], [0, 0, 0, 1, 1, 1], [0], [0]>} : vector<4x128x8xbf16>, vector<4x128x8xbf16>, vector<4x128x128xf32> -> vector<4x128x128xf32>
    "tpu.trace_stop"() : () -> ()
    %c0_16 = arith.constant 0 : index
    %c0_17 = arith.constant 0 : index
    %51 = vector.load %arg2[%c0_16, %c0_17] : memref<128x128xf32, #tpu.memory_space<vmem>>, vector<128x128xf32>
    %52 = vector.shape_cast %51 : vector<128x128xf32> to vector<1x128x128xf32>
    %53 = vector.broadcast %52 : vector<1x128x128xf32> to vector<4x128x128xf32>
    %54 = arith.addf %50, %53 : vector<4x128x128xf32>
    %cst_18 = arith.constant dense<0xFF800000> : vector<4x128xf32>
    %55 = vector.multi_reduction <maximumf>, %54, %cst_18 [2] : vector<4x128x128xf32> to vector<4x128xf32>
    %56 = vector.shape_cast %55 : vector<4x128xf32> to vector<4x128x1xf32>
    %57 = vector.broadcast %56 : vector<4x128x1xf32> to vector<4x128x128xf32>
    %58 = arith.subf %54, %57 : vector<4x128x128xf32>
    %59 = math.exp %58 : vector<4x128x128xf32>
    %cst_19 = arith.constant dense<0.000000e+00> : vector<4x128xf32>
    %60 = vector.multi_reduction <add>, %59, %cst_19 [2] : vector<4x128x128xf32> to vector<4x128xf32>
    %61 = vector.shape_cast %60 : vector<4x128xf32> to vector<4x128x1xf32>
    %62 = tpu.reciprocal %61 {approx = true} : vector<4x128x1xf32> -> vector<4x128x1xf32>
    %63 = vector.broadcast %62 : vector<4x128x1xf32> to vector<4x128x128xf32>
    %64 = arith.mulf %59, %63 : vector<4x128x128xf32>
    %65 = arith.truncf %64 : vector<4x128x128xf32> to vector<4x128x128xbf16>
    "tpu.trace_start"() <{level = 10 : i32, message = "hqk,hkd->hqd"}> : () -> ()
    %cst_20 = arith.constant dense<0.000000e+00> : vector<4x128x8xf32>
    %66 = tpu.matmul %65, %49, %cst_20 {dimension_numbers = #tpu.dot_dimension_numbers<[2], [1], [1], [2], [0, 0, 0, 1, 1, 2], [0], [0]>} : vector<4x128x128xbf16>, vector<4x128x8xbf16>, vector<4x128x8xf32> -> vector<4x128x8xf32>
    "tpu.trace_stop"() : () -> ()
    %67 = tpu.transpose %66, [1, 0, 2] : vector<4x128x8xf32> -> vector<128x4x8xf32>
    %68 = vector.shape_cast %67 : vector<128x4x8xf32> to vector<128x32xf32>
    %69 = arith.truncf %68 : vector<128x32xf32> to vector<128x32xbf16>
    %c0_21 = arith.constant 0 : index
    %c0_22 = arith.constant 0 : index
    %70 = vector.load %arg7[%c0_21, %c0_22] : memref<32x32xbf16, #tpu.memory_space<vmem>>, vector<32x32xbf16>
    %cst_23 = arith.constant dense<0.000000e+00> : vector<128x32xf32>
    %71 = tpu.matmul %69, %70, %cst_23 {dimension_numbers = #tpu.dot_dimension_numbers<[1], [0], [0], [1], [0, 0, 1, 1], [], []>} : vector<128x32xbf16>, vector<32x32xbf16>, vector<128x32xf32> -> vector<128x32xf32>
    %c0_24 = arith.constant 0 : index
    %c0_25 = arith.constant 0 : index
    %72 = vector.load %arg8[%c0_24, %c0_25] : memref<1x32xf32, #tpu.memory_space<vmem>>, vector<1x32xf32>
    %73 = vector.shape_cast %72 : vector<1x32xf32> to vector<32xf32>
    %74 = vector.shape_cast %73 : vector<32xf32> to vector<1x32xf32>
    %75 = vector.broadcast %74 : vector<1x32xf32> to vector<128x32xf32>
    %76 = arith.addf %71, %75 : vector<128x32xf32>
    %77 = arith.addf %1, %76 : vector<128x32xf32>
    %c0_26 = arith.constant 0 : index
    %c0_27 = arith.constant 0 : index
    %78 = vector.load %arg9[%c0_26, %c0_27] : memref<1x32xf32, #tpu.memory_space<vmem>>, vector<1x32xf32>
    %79 = vector.shape_cast %78 : vector<1x32xf32> to vector<32xf32>
    %c0_28 = arith.constant 0 : index
    %c0_29 = arith.constant 0 : index
    %80 = vector.load %arg10[%c0_28, %c0_29] : memref<1x32xf32, #tpu.memory_space<vmem>>, vector<1x32xf32>
    %81 = vector.shape_cast %80 : vector<1x32xf32> to vector<32xf32>
    %cst_30 = arith.constant dense<0.000000e+00> : vector<128xf32>
    %82 = vector.multi_reduction <add>, %77, %cst_30 [1] : vector<128x32xf32> to vector<128xf32>
    %83 = vector.shape_cast %82 : vector<128xf32> to vector<128x1xf32>
    %cst_31 = arith.constant 3.200000e+01 : f32
    %84 = vector.broadcast %cst_31 : f32 to vector<128x1xf32>
    %85 = arith.divf %83, %84 : vector<128x1xf32>
    %86 = vector.broadcast %85 : vector<128x1xf32> to vector<128x32xf32>
    %87 = arith.subf %77, %86 : vector<128x32xf32>
    %88 = arith.mulf %87, %87 : vector<128x32xf32>
    %cst_32 = arith.constant dense<0.000000e+00> : vector<128xf32>
    %89 = vector.multi_reduction <add>, %88, %cst_32 [1] : vector<128x32xf32> to vector<128xf32>
    %90 = vector.shape_cast %89 : vector<128xf32> to vector<128x1xf32>
    %cst_33 = arith.constant 3.200000e+01 : f32
    %91 = vector.broadcast %cst_33 : f32 to vector<128x1xf32>
    %92 = arith.divf %90, %91 : vector<128x1xf32>
    %93 = vector.broadcast %85 : vector<128x1xf32> to vector<128x32xf32>
    %94 = arith.subf %77, %93 : vector<128x32xf32>
    %cst_34 = arith.constant 9.99999974E-6 : f32
    %95 = vector.broadcast %cst_34 : f32 to vector<128x1xf32>
    %96 = arith.addf %92, %95 : vector<128x1xf32>
    %97 = math.rsqrt %96 : vector<128x1xf32>
    %98 = vector.broadcast %97 : vector<128x1xf32> to vector<128x32xf32>
    %99 = arith.mulf %94, %98 : vector<128x32xf32>
    %100 = vector.shape_cast %79 : vector<32xf32> to vector<1x32xf32>
    %101 = vector.broadcast %100 : vector<1x32xf32> to vector<128x32xf32>
    %102 = arith.mulf %99, %101 : vector<128x32xf32>
    %103 = vector.shape_cast %81 : vector<32xf32> to vector<1x32xf32>
    %104 = vector.broadcast %103 : vector<1x32xf32> to vector<128x32xf32>
    %105 = arith.addf %102, %104 : vector<128x32xf32>
    %106 = arith.truncf %105 : vector<128x32xf32> to vector<128x32xbf16>
    %c0_35 = arith.constant 0 : index
    %c0_36 = arith.constant 0 : index
    %107 = vector.load %arg11[%c0_35, %c0_36] : memref<32x128xbf16, #tpu.memory_space<vmem>>, vector<32x128xbf16>
    %cst_37 = arith.constant dense<0.000000e+00> : vector<128x128xf32>
    %108 = tpu.matmul %106, %107, %cst_37 {dimension_numbers = #tpu.dot_dimension_numbers<[1], [0], [0], [1], [0, 0, 1, 1], [], []>} : vector<128x32xbf16>, vector<32x128xbf16>, vector<128x128xf32> -> vector<128x128xf32>
    %c0_38 = arith.constant 0 : index
    %c0_39 = arith.constant 0 : index
    %109 = vector.load %arg12[%c0_38, %c0_39] : memref<1x128xf32, #tpu.memory_space<vmem>>, vector<1x128xf32>
    %110 = vector.shape_cast %109 : vector<1x128xf32> to vector<128xf32>
    %111 = vector.shape_cast %110 : vector<128xf32> to vector<1x128xf32>
    %112 = vector.broadcast %111 : vector<1x128xf32> to vector<128x128xf32>
    %113 = arith.addf %108, %112 : vector<128x128xf32>
    %cst_40 = arith.constant 1.702000e+00 : f32
    %114 = vector.broadcast %cst_40 : f32 to vector<128x128xf32>
    %115 = arith.mulf %114, %113 : vector<128x128xf32>
    %116 = arith.negf %115 : vector<128x128xf32>
    %117 = math.exp %116 : vector<128x128xf32>
    %cst_41 = arith.constant 1.000000e+00 : f32
    %118 = vector.broadcast %cst_41 : f32 to vector<128x128xf32>
    %119 = arith.addf %118, %117 : vector<128x128xf32>
    %120 = arith.divf %118, %119 : vector<128x128xf32>
    %121 = arith.mulf %113, %120 : vector<128x128xf32>
    %122 = arith.truncf %121 : vector<128x128xf32> to vector<128x128xbf16>
    %c0_42 = arith.constant 0 : index
    %c0_43 = arith.constant 0 : index
    %123 = vector.load %arg13[%c0_42, %c0_43] : memref<128x32xbf16, #tpu.memory_space<vmem>>, vector<128x32xbf16>
    %cst_44 = arith.constant dense<0.000000e+00> : vector<128x32xf32>
    %124 = tpu.matmul %122, %123, %cst_44 {dimension_numbers = #tpu.dot_dimension_numbers<[1], [0], [0], [1], [0, 0, 1, 1], [], []>} : vector<128x128xbf16>, vector<128x32xbf16>, vector<128x32xf32> -> vector<128x32xf32>
    %c0_45 = arith.constant 0 : index
    %c0_46 = arith.constant 0 : index
    %125 = vector.load %arg14[%c0_45, %c0_46] : memref<1x32xf32, #tpu.memory_space<vmem>>, vector<1x32xf32>
    %126 = vector.shape_cast %125 : vector<1x32xf32> to vector<32xf32>
    %127 = vector.shape_cast %126 : vector<32xf32> to vector<1x32xf32>
    %128 = vector.broadcast %127 : vector<1x32xf32> to vector<128x32xf32>
    %129 = arith.addf %124, %128 : vector<128x32xf32>
    %130 = arith.addf %77, %129 : vector<128x32xf32>
    %c0_47 = arith.constant 0 : index
    %c0_48 = arith.constant 0 : index
    %c0_49 = arith.constant 0 : index
    %131 = vector.load %arg15[%c0_47, %c0_48, %c0_49] : memref<1x128x32xf32, #tpu.memory_space<vmem>>, vector<1x128x32xf32>
    %132 = vector.shape_cast %131 : vector<1x128x32xf32> to vector<128x32xf32>
    %133 = vector.shape_cast %130 : vector<128x32xf32> to vector<1x128x32xf32>
    tpu.vector_store %arg15[%c0_47, %c0_48, %c0_49], %133 {strides = array<i32>} : memref<1x128x32xf32, #tpu.memory_space<vmem>>, vector<1x128x32xf32>,
    return
  }
  func.func @transform_0(%arg0: i32) -> (i32, i32, i32) {
    %c0_i32 = arith.constant 0 : i32
    %c0_i32_0 = arith.constant 0 : i32
    %c0_i32_1 = arith.constant 0 : i32
    return %arg0, %c0_i32, %c0_i32_0 : i32, i32, i32
  }
  func.func @transform_1(%arg0: i32) -> (i32, i32) {
    %c0_i32 = arith.constant 0 : i32
    %c0_i32_0 = arith.constant 0 : i32
    %c0_i32_1 = arith.constant 0 : i32
    return %c0_i32, %c0_i32_0 : i32, i32
  }
  func.func @transform_2(%arg0: i32) -> (i32, i32) {
    %c0_i32 = arith.constant 0 : i32
    %c0_i32_0 = arith.constant 0 : i32
    %c0_i32_1 = arith.constant 0 : i32
    return %c0_i32, %c0_i32_0 : i32, i32
  }
  func.func @transform_3(%arg0: i32) -> (i32, i32) {
    %c0_i32 = arith.constant 0 : i32
    %c0_i32_0 = arith.constant 0 : i32
    %c0_i32_1 = arith.constant 0 : i32
    return %c0_i32, %c0_i32_0 : i32, i32
  }
  func.func @transform_4(%arg0: i32) -> (i32, i32) {
    %c0_i32 = arith.constant 0 : i32
    %c0_i32_0 = arith.constant 0 : i32
    %c0_i32_1 = arith.constant 0 : i32
    return %c0_i32, %c0_i32_0 : i32, i32
  }
  func.func @transform_5(%arg0: i32) -> (i32, i32) {
    %c0_i32 = arith.constant 0 : i32
    %c0_i32_0 = arith.constant 0 : i32
    %c0_i32_1 = arith.constant 0 : i32
    return %c0_i32, %c0_i32_0 : i32, i32
  }
  func.func @transform_6(%arg0: i32) -> (i32, i32) {
    %c0_i32 = arith.constant 0 : i32
    %c0_i32_0 = arith.constant 0 : i32
    %c0_i32_1 = arith.constant 0 : i32
    return %c0_i32, %c0_i32_0 : i32, i32
  }
  func.func @transform_7(%arg0: i32) -> (i32, i32) {
    %c0_i32 = arith.constant 0 : i32
    %c0_i32_0 = arith.constant 0 : i32
    %c0_i32_1 = arith.constant 0 : i32
    return %c0_i32, %c0_i32_0 : i32, i32
  }
  func.func @transform_8(%arg0: i32) -> (i32, i32) {
    %c0_i32 = arith.constant 0 : i32
    %c0_i32_0 = arith.constant 0 : i32
    %c0_i32_1 = arith.constant 0 : i32
    return %c0_i32, %c0_i32_0 : i32, i32
  }
  func.func @transform_9(%arg0: i32) -> (i32, i32) {
    %c0_i32 = arith.constant 0 : i32
    %c0_i32_0 = arith.constant 0 : i32
    %c0_i32_1 = arith.constant 0 : i32
    return %c0_i32, %c0_i32_0 : i32, i32
  }
  func.func @transform_10(%arg0: i32) -> (i32, i32) {
    %c0_i32 = arith.constant 0 : i32
    %c0_i32_0 = arith.constant 0 : i32
    %c0_i32_1 = arith.constant 0 : i32
    return %c0_i32, %c0_i32_0 : i32, i32
  }
  func.func @transform_11(%arg0: i32) -> (i32, i32) {
    %c0_i32 = arith.constant 0 : i32
    %c0_i32_0 = arith.constant 0 : i32
    %c0_i32_1 = arith.constant 0 : i32
    return %c0_i32, %c0_i32_0 : i32, i32
  }
  func.func @transform_12(%arg0: i32) -> (i32, i32) {
    %c0_i32 = arith.constant 0 : i32
    %c0_i32_0 = arith.constant 0 : i32
    %c0_i32_1 = arith.constant 0 : i32
    return %c0_i32, %c0_i32_0 : i32, i32
  }
  func.func @transform_13(%arg0: i32) -> (i32, i32) {
    %c0_i32 = arith.constant 0 : i32
    %c0_i32_0 = arith.constant 0 : i32
    %c0_i32_1 = arith.constant 0 : i32
    return %c0_i32, %c0_i32_0 : i32, i32
  }
  func.func @transform_14(%arg0: i32) -> (i32, i32, i32) {
    %c0_i32 = arith.constant 0 : i32
    %c0_i32_0 = arith.constant 0 : i32
    %c0_i32_1 = arith.constant 0 : i32
    return %arg0, %c0_i32, %c0_i32_0 : i32, i32, i32
  }
}

</mosaic_0001>

<llo_original>
// kernel: tpu_custom_call.1
$region0: #{tpu_custom_call.1}
  #allocation0 [shape = 'u32[]', space=smem, size = 0x4, offset = 0x4, fixed_abs, tag = 'smem constant byte address 0x4 - core index']
  #allocation1 [shape = 'u32[144,128]{1,0:T(1,128)}', space=vmem, size = 0x12000, scoped, tag = 'internal scratch']
  %s0 = inlined_call_operand.vmem [shape: f32[2,128,32], index: 0, kind: input, shape index: {}]
  %s1 = inlined_call_operand.vmem [shape: f32[128,128], index: 1, kind: input, shape index: {}]
  %s2 = inlined_call_operand.vmem [shape: f32[1,32], index: 2, kind: input, shape index: {}]
  %s3 = inlined_call_operand.vmem [shape: f32[1,32], index: 3, kind: input, shape index: {}]
  %s4 = inlined_call_operand.vmem [shape: bf16[32,96], index: 4, kind: input, shape index: {}]
  %s5 = inlined_call_operand.vmem [shape: f32[1,96], index: 5, kind: input, shape index: {}]
  %s6 = inlined_call_operand.vmem [shape: bf16[32,32], index: 6, kind: input, shape index: {}]
  %s7 = inlined_call_operand.vmem [shape: f32[1,32], index: 7, kind: input, shape index: {}]
  %s8 = inlined_call_operand.vmem [shape: f32[1,32], index: 8, kind: input, shape index: {}]
  %s9 = inlined_call_operand.vmem [shape: f32[1,32], index: 9, kind: input, shape index: {}]
  %s10 = inlined_call_operand.vmem [shape: bf16[32,128], index: 10, kind: input, shape index: {}]
  %s11 = inlined_call_operand.vmem [shape: f32[1,128], index: 11, kind: input, shape index: {}]
  %s12 = inlined_call_operand.vmem [shape: bf16[128,32], index: 12, kind: input, shape index: {}]
  %s13 = inlined_call_operand.vmem [shape: f32[1,32], index: 13, kind: input, shape index: {}]
  %s14 = inlined_call_operand.vmem [shape: f32[2,128,32], index: 14, kind: output, shape index: {}]
  %s15 = sld [smem:[#allocation0]]
  $region89: #{tpu_custom_call.1} parent=0
    _
  %s17 = ssub.s32 1, %s15
  %s18 = scalar_select 0, %s17, %s15
  loop: start=0, step=1, limit=4
  $region2: #{tpu_custom_call.1} parent=0 // loop_pre_header
    _
  $region3: #{tpu_custom_call.1} parent=0 // loop_header
    %s20 = sphi 0, %s24
    %p21 = scmp.ge.s32.totalorder %s20, 4
    %s30 = sphi 0, %s32
    %s33 = sphi 0, %s30
    %s34 = sphi 0, %s33
    %s50 = sphi 0, %s34
    %s54 = sphi 0, %s54
    %s56 = sphi 0, %s54
    %s57 = sphi 0, %s56
    %s71 = sphi 0, %s57
    %s75 = sphi 0, %s75
    %s77 = sphi 0, %s75
    %s78 = sphi 0, %s77
    %s92 = sphi 0, %s78
    %s96 = sphi 0, %s96
    %s98 = sphi 0, %s96
    %s99 = sphi 0, %s98
    %s113 = sphi 0, %s99
    %s117 = sphi 0, %s117
    %s119 = sphi 0, %s117
    %s120 = sphi 0, %s119
    %s134 = sphi 0, %s120
    %s138 = sphi 0, %s138
    %s140 = sphi 0, %s138
    %s141 = sphi 0, %s140
    %s155 = sphi 0, %s141
    %s159 = sphi 0, %s159
    %s161 = sphi 0, %s159
    %s162 = sphi 0, %s161
    %s176 = sphi 0, %s162
    %s180 = sphi 0, %s180
    %s182 = sphi 0, %s180
    %s183 = sphi 0, %s182
    %s197 = sphi 0, %s183
    %s201 = sphi 0, %s201
    %s203 = sphi 0, %s201
    %s204 = sphi 0, %s203
    %s218 = sphi 0, %s204
    %s222 = sphi 0, %s222
    %s224 = sphi 0, %s222
    %s225 = sphi 0, %s224
    %s239 = sphi 0, %s225
    %s243 = sphi 0, %s243
    %s245 = sphi 0, %s243
    %s246 = sphi 0, %s245
    %s260 = sphi 0, %s246
    %s264 = sphi 0, %s264
    %s266 = sphi 0, %s264
    %s267 = sphi 0, %s266
    %s281 = sphi 0, %s267
    %s285 = sphi 0, %s285
    %s287 = sphi 0, %s285
    %s288 = sphi 0, %s287
    %s302 = sphi 0, %s288
    %s306 = sphi 0, %s306
    %s308 = sphi 0, %s306
    %s309 = sphi 0, %s308
    %s323 = sphi 0, %s309
    %s329 = sphi 0, %s331
    %s332 = sphi 0, %s329
    %s333 = sphi 0, %s332
    %s349 = sphi 0, %s333
  $region4: #{tpu_custom_call.1} parent=0 // loop_header_branch
    %23 = sbr.rel (%p21) target = $region8
  $region5: #{tpu_custom_call.1} parent=0 // loop_body
    %s25 = ssub.s32 %s20, 1
    %s26 = ssub.s32 %s20, 2
    %s27 = sadd.s32 %s20, 1
    %s28 = ssub.s32 %s20, %s27
    %p29 = scmp.eq.s32.totalorder %s28, 0
    %s31 = sadd.s32 %s30, 1
    %s32 = scalar_select %p29, %s30, %s31
    %p35 = pneg %p29
    %p36 = scmp.eq.s32.totalorder %s20, 1
    %p37 = por %p35, %p36
    %p38 = scmp.ne.s32.totalorder %s30, %s33
    %p39 = scmp.eq.s32.totalorder %s20, 0
    %p40 = por %p38, %p39
    %p41 = scmp.ne.s32.totalorder %s30, %s33
    %p42 = scmp.eq.s32.totalorder %s25, 1
    %p43 = por %p41, %p42
    %p44 = scmp.ne.s32.totalorder %s33, %s34
    %p45 = scmp.eq.s32.totalorder %s25, 0
    %p46 = por %p44, %p45
    %p47 = scmp.ne.s32.totalorder %s33, %s34
    %p48 = scmp.eq.s32.totalorder %s26, 1
    %p49 = por %p47, %p48
    %p51 = scmp.ne.s32.totalorder %s34, %s50
    %p52 = scmp.eq.s32.totalorder %s26, 0
    %p53 = por %p51, %p52
    %s55 = sadd.s32 %s54, 1
    %p58 = scmp.eq.s32.totalorder %s20, 1
    %p59 = scmp.ne.s32.totalorder %s54, %s56
    %p60 = scmp.eq.s32.totalorder %s20, 0
    %p61 = por %p59, %p60
    %p62 = scmp.ne.s32.totalorder %s54, %s56
    %p63 = scmp.eq.s32.totalorder %s25, 1
    %p64 = por %p62, %p63
    %p65 = scmp.ne.s32.totalorder %s56, %s57
    %p66 = scmp.eq.s32.totalorder %s25, 0
    %p67 = por %p65, %p66
    %p68 = scmp.ne.s32.totalorder %s56, %s57
    %p69 = scmp.eq.s32.totalorder %s26, 1
    %p70 = por %p68, %p69
    %p72 = scmp.ne.s32.totalorder %s57, %s71
    %p73 = scmp.eq.s32.totalorder %s26, 0
    %p74 = por %p72, %p73
    %s76 = sadd.s32 %s75, 1
    %p79 = scmp.eq.s32.totalorder %s20, 1
    %p80 = scmp.ne.s32.totalorder %s75, %s77
    %p81 = scmp.eq.s32.totalorder %s20, 0
    %p82 = por %p80, %p81
    %p83 = scmp.ne.s32.totalorder %s75, %s77
    %p84 = scmp.eq.s32.totalorder %s25, 1
    %p85 = por %p83, %p84
    %p86 = scmp.ne.s32.totalorder %s77, %s78
    %p87 = scmp.eq.s32.totalorder %s25, 0
    %p88 = por %p86, %p87
    %p89 = scmp.ne.s32.totalorder %s77, %s78
    %p90 = scmp.eq.s32.totalorder %s26, 1
    %p91 = por %p89, %p90
    %p93 = scmp.ne.s32.totalorder %s78, %s92
    %p94 = scmp.eq.s32.totalorder %s26, 0
    %p95 = por %p93, %p94
    %s97 = sadd.s32 %s96, 1
    %p100 = scmp.eq.s32.totalorder %s20, 1
    %p101 = scmp.ne.s32.totalorder %s96, %s98
    %p102 = scmp.eq.s32.totalorder %s20, 0
    %p103 = por %p101, %p102
    %p104 = scmp.ne.s32.totalorder %s96, %s98
    %p105 = scmp.eq.s32.totalorder %s25, 1
    %p106 = por %p104, %p105
    %p107 = scmp.ne.s32.totalorder %s98, %s99
    %p108 = scmp.eq.s32.totalorder %s25, 0
    %p109 = por %p107, %p108
    %p110 = scmp.ne.s32.totalorder %s98, %s99
    %p111 = scmp.eq.s32.totalorder %s26, 1
    %p112 = por %p110, %p111
    %p114 = scmp.ne.s32.totalorder %s99, %s113
    %p115 = scmp.eq.s32.totalorder %s26, 0
    %p116 = por %p114, %p115
    %s118 = sadd.s32 %s117, 1
    %p121 = scmp.eq.s32.totalorder %s20, 1
    %p122 = scmp.ne.s32.totalorder %s117, %s119
    %p123 = scmp.eq.s32.totalorder %s20, 0
    %p124 = por %p122, %p123
    %p125 = scmp.ne.s32.totalorder %s117, %s119
    %p126 = scmp.eq.s32.totalorder %s25, 1
    %p127 = por %p125, %p126
    %p128 = scmp.ne.s32.totalorder %s119, %s120
    %p129 = scmp.eq.s32.totalorder %s25, 0
    %p130 = por %p128, %p129
    %p131 = scmp.ne.s32.totalorder %s119, %s120
    %p132 = scmp.eq.s32.totalorder %s26, 1
    %p133 = por %p131, %p132
    %p135 = scmp.ne.s32.totalorder %s120, %s134
    %p136 = scmp.eq.s32.totalorder %s26, 0
    %p137 = por %p135, %p136
    %s139 = sadd.s32 %s138, 1
    %p142 = scmp.eq.s32.totalorder %s20, 1
    %p143 = scmp.ne.s32.totalorder %s138, %s140
    %p144 = scmp.eq.s32.totalorder %s20, 0
    %p145 = por %p143, %p144
    %p146 = scmp.ne.s32.totalorder %s138, %s140
    %p147 = scmp.eq.s32.totalorder %s25, 1
    %p148 = por %p146, %p147
    %p149 = scmp.ne.s32.totalorder %s140, %s141
    %p150 = scmp.eq.s32.totalorder %s25, 0
    %p151 = por %p149, %p150
    %p152 = scmp.ne.s32.totalorder %s140, %s141
    %p153 = scmp.eq.s32.totalorder %s26, 1
    %p154 = por %p152, %p153
    %p156 = scmp.ne.s32.totalorder %s141, %s155
    %p157 = scmp.eq.s32.totalorder %s26, 0
    %p158 = por %p156, %p157
    %s160 = sadd.s32 %s159, 1
    %p163 = scmp.eq.s32.totalorder %s20, 1
    %p164 = scmp.ne.s32.totalorder %s159, %s161
    %p165 = scmp.eq.s32.totalorder %s20, 0
    %p166 = por %p164, %p165
    %p167 = scmp.ne.s32.totalorder %s159, %s161
    %p168 = scmp.eq.s32.totalorder %s25, 1
    %p169 = por %p167, %p168
    %p170 = scmp.ne.s32.totalorder %s161, %s162
    %p171 = scmp.eq.s32.totalorder %s25, 0
    %p172 = por %p170, %p171
    %p173 = scmp.ne.s32.totalorder %s161, %s162
    %p174 = scmp.eq.s32.totalorder %s26, 1
    %p175 = por %p173, %p174
    %p177 = scmp.ne.s32.totalorder %s162, %s176
    %p178 = scmp.eq.s32.totalorder %s26, 0
    %p179 = por %p177, %p178
    %s181 = sadd.s32 %s180, 1
    %p184 = scmp.eq.s32.totalorder %s20, 1
    %p185 = scmp.ne.s32.totalorder %s180, %s182
    %p186 = scmp.eq.s32.totalorder %s20, 0
    %p187 = por %p185, %p186
    %p188 = scmp.ne.s32.totalorder %s180, %s182
    %p189 = scmp.eq.s32.totalorder %s25, 1
    %p190 = por %p188, %p189
    %p191 = scmp.ne.s32.totalorder %s182, %s183
    %p192 = scmp.eq.s32.totalorder %s25, 0
    %p193 = por %p191, %p192
    %p194 = scmp.ne.s32.totalorder %s182, %s183
    %p195 = scmp.eq.s32.totalorder %s26, 1
    %p196 = por %p194, %p195
    %p198 = scmp.ne.s32.totalorder %s183, %s197
    %p199 = scmp.eq.s32.totalorder %s26, 0
    %p200 = por %p198, %p199
    %s202 = sadd.s32 %s201, 1
    %p205 = scmp.eq.s32.totalorder %s20, 1
    %p206 = scmp.ne.s32.totalorder %s201, %s203
    %p207 = scmp.eq.s32.totalorder %s20, 0
    %p208 = por %p206, %p207
    %p209 = scmp.ne.s32.totalorder %s201, %s203
    %p210 = scmp.eq.s32.totalorder %s25, 1
    %p211 = por %p209, %p210
    %p212 = scmp.ne.s32.totalorder %s203, %s204
    %p213 = scmp.eq.s32.totalorder %s25, 0
    %p214 = por %p212, %p213
    %p215 = scmp.ne.s32.totalorder %s203, %s204
    %p216 = scmp.eq.s32.totalorder %s26, 1
    %p217 = por %p215, %p216
    %p219 = scmp.ne.s32.totalorder %s204, %s218
    %p220 = scmp.eq.s32.totalorder %s26, 0
    %p221 = por %p219, %p220
    %s223 = sadd.s32 %s222, 1
    %p226 = scmp.eq.s32.totalorder %s20, 1
    %p227 = scmp.ne.s32.totalorder %s222, %s224
    %p228 = scmp.eq.s32.totalorder %s20, 0
    %p229 = por %p227, %p228
    %p230 = scmp.ne.s32.totalorder %s222, %s224
    %p231 = scmp.eq.s32.totalorder %s25, 1
    %p232 = por %p230, %p231
    %p233 = scmp.ne.s32.totalorder %s224, %s225
    %p234 = scmp.eq.s32.totalorder %s25, 0
    %p235 = por %p233, %p234
    %p236 = scmp.ne.s32.totalorder %s224, %s225
    %p237 = scmp.eq.s32.totalorder %s26, 1
    %p238 = por %p236, %p237
    %p240 = scmp.ne.s32.totalorder %s225, %s239
    %p241 = scmp.eq.s32.totalorder %s26, 0
    %p242 = por %p240, %p241
    %s244 = sadd.s32 %s243, 1
    %p247 = scmp.eq.s32.totalorder %s20, 1
    %p248 = scmp.ne.s32.totalorder %s243, %s245
    %p249 = scmp.eq.s32.totalorder %s20, 0
    %p250 = por %p248, %p249
    %p251 = scmp.ne.s32.totalorder %s243, %s245
    %p252 = scmp.eq.s32.totalorder %s25, 1
    %p253 = por %p251, %p252
    %p254 = scmp.ne.s32.totalorder %s245, %s246
    %p255 = scmp.eq.s32.totalorder %s25, 0
    %p256 = por %p254, %p255
    %p257 = scmp.ne.s32.totalorder %s245, %s246
    %p258 = scmp.eq.s32.totalorder %s26, 1
    %p259 = por %p257, %p258
    %p261 = scmp.ne.s32.totalorder %s246, %s260
    %p262 = scmp.eq.s32.totalorder %s26, 0
    %p263 = por %p261, %p262
    %s265 = sadd.s32 %s264, 1
    %p268 = scmp.eq.s32.totalorder %s20, 1
    %p269 = scmp.ne.s32.totalorder %s264, %s266
    %p270 = scmp.eq.s32.totalorder %s20, 0
    %p271 = por %p269, %p270
    %p272 = scmp.ne.s32.totalorder %s264, %s266
    %p273 = scmp.eq.s32.totalorder %s25, 1
    %p274 = por %p272, %p273
    %p275 = scmp.ne.s32.totalorder %s266, %s267
    %p276 = scmp.eq.s32.totalorder %s25, 0
    %p277 = por %p275, %p276
    %p278 = scmp.ne.s32.totalorder %s266, %s267
    %p279 = scmp.eq.s32.totalorder %s26, 1
    %p280 = por %p278, %p279
    %p282 = scmp.ne.s32.totalorder %s267, %s281
    %p283 = scmp.eq.s32.totalorder %s26, 0
    %p284 = por %p282, %p283
    %s286 = sadd.s32 %s285, 1
    %p289 = scmp.eq.s32.totalorder %s20, 1
    %p290 = scmp.ne.s32.totalorder %s285, %s287
    %p291 = scmp.eq.s32.totalorder %s20, 0
    %p292 = por %p290, %p291
    %p293 = scmp.ne.s32.totalorder %s285, %s287
    %p294 = scmp.eq.s32.totalorder %s25, 1
    %p295 = por %p293, %p294
    %p296 = scmp.ne.s32.totalorder %s287, %s288
    %p297 = scmp.eq.s32.totalorder %s25, 0
    %p298 = por %p296, %p297
    %p299 = scmp.ne.s32.totalorder %s287, %s288
    %p300 = scmp.eq.s32.totalorder %s26, 1
    %p301 = por %p299, %p300
    %p303 = scmp.ne.s32.totalorder %s288, %s302
    %p304 = scmp.eq.s32.totalorder %s26, 0
    %p305 = por %p303, %p304
    %s307 = sadd.s32 %s306, 1
    %p310 = scmp.eq.s32.totalorder %s20, 1
    %p311 = scmp.ne.s32.totalorder %s306, %s308
    %p312 = scmp.eq.s32.totalorder %s20, 0
    %p313 = por %p311, %p312
    %p314 = scmp.ne.s32.totalorder %s306, %s308
    %p315 = scmp.eq.s32.totalorder %s25, 1
    %p316 = por %p314, %p315
    %p317 = scmp.ne.s32.totalorder %s308, %s309
    %p318 = scmp.eq.s32.totalorder %s25, 0
    %p319 = por %p317, %p318
    %p320 = scmp.ne.s32.totalorder %s308, %s309
    %p321 = scmp.eq.s32.totalorder %s26, 1
    %p322 = por %p320, %p321
    %p324 = scmp.ne.s32.totalorder %s309, %s323
    %p325 = scmp.eq.s32.totalorder %s26, 0
    %p326 = por %p324, %p325
    %s327 = ssub.s32 %s20, %s27
    %p328 = scmp.eq.s32.totalorder %s327, 0
    %s330 = sadd.s32 %s329, 1
    %s331 = scalar_select %p328, %s329, %s330
    %p334 = pneg %p328
    %p335 = scmp.eq.s32.totalorder %s20, 1
    %p336 = por %p334, %p335
    %p337 = scmp.ne.s32.totalorder %s329, %s332
    %p338 = scmp.eq.s32.totalorder %s20, 0
    %p339 = por %p337, %p338
    %p340 = scmp.ne.s32.totalorder %s329, %s332
    %p341 = scmp.eq.s32.totalorder %s25, 1
    %p342 = por %p340, %p341
    %p343 = scmp.ne.s32.totalorder %s332, %s333
    %p344 = scmp.eq.s32.totalorder %s25, 0
    %p345 = por %p343, %p344
    %p346 = scmp.ne.s32.totalorder %s332, %s333
    %p347 = scmp.eq.s32.totalorder %s26, 1
    %p348 = por %p346, %p347
    %p350 = scmp.ne.s32.totalorder %s333, %s349
    %p351 = scmp.eq.s32.totalorder %s26, 0
    %p352 = por %p350, %p351
    %p353 = scmp.le.s32.totalorder 1, %s20
    %p354 = scmp.lt.s32.totalorder %s20, 3
    %p355 = pnand %p353, %p354
    %p356 = pneg %p355
    // Predicated region
    $region9: #{tpu_custom_call.1} parent=5 // pred_check
      _
    $region10: #{tpu_custom_call.1} parent=5 // pred_check_branch
      %358 = sbr.rel (%p355) target = $region12
    $region11: #{tpu_custom_call.1} parent=5 // pred_region
      %s359 = ssub.s32 %s20, 1
      // Predicated region
      $region13: #{tpu_custom_call.1} parent=11 // pred_check
        %p360 = pneg %p67
      $region14: #{tpu_custom_call.1} parent=11 // pred_check_branch
        %362 = sbr.rel (%p360) target = $region16
      $region15: #{tpu_custom_call.1} parent=11 // pred_region
        _
      $region16: #{tpu_custom_call.1} parent=11 // pred_fallthru
        _
      // Predicated region
      $region17: #{tpu_custom_call.1} parent=11 // pred_check
        %p363 = pneg %p88
      $region18: #{tpu_custom_call.1} parent=11 // pred_check_branch
        %365 = sbr.rel (%p363) target = $region20
      $region19: #{tpu_custom_call.1} parent=11 // pred_region
        _
      $region20: #{tpu_custom_call.1} parent=11 // pred_fallthru
        _
      // Predicated region
      $region21: #{tpu_custom_call.1} parent=11 // pred_check
        %p366 = pneg %p109
      $region22: #{tpu_custom_call.1} parent=11 // pred_check_branch
        %368 = sbr.rel (%p366) target = $region24
      $region23: #{tpu_custom_call.1} parent=11 // pred_region
        _
      $region24: #{tpu_custom_call.1} parent=11 // pred_fallthru
        _
      // Predicated region
      $region25: #{tpu_custom_call.1} parent=11 // pred_check
        %p369 = pneg %p130
      $region26: #{tpu_custom_call.1} parent=11 // pred_check_branch
        %371 = sbr.rel (%p369) target = $region28
      $region27: #{tpu_custom_call.1} parent=11 // pred_region
        _
      $region28: #{tpu_custom_call.1} parent=11 // pred_fallthru
        _
      // Predicated region
      $region29: #{tpu_custom_call.1} parent=11 // pred_check
        %p372 = pneg %p151
      $region30: #{tpu_custom_call.1} parent=11 // pred_check_branch
        %374 = sbr.rel (%p372) target = $region32
      $region31: #{tpu_custom_call.1} parent=11 // pred_region
        _
      $region32: #{tpu_custom_call.1} parent=11 // pred_fallthru
        _
      // Predicated region
      $region33: #{tpu_custom_call.1} parent=11 // pred_check
        %p375 = pneg %p172
      $region34: #{tpu_custom_call.1} parent=11 // pred_check_branch
        %377 = sbr.rel (%p375) target = $region36
      $region35: #{tpu_custom_call.1} parent=11 // pred_region
        _
      $region36: #{tpu_custom_call.1} parent=11 // pred_fallthru
        _
      // Predicated region
      $region37: #{tpu_custom_call.1} parent=11 // pred_check
        %p378 = pneg %p193
      $region38: #{tpu_custom_call.1} parent=11 // pred_check_branch
        %380 = sbr.rel (%p378) target = $region40
      $region39: #{tpu_custom_call.1} parent=11 // pred_region
        _
      $region40: #{tpu_custom_call.1} parent=11 // pred_fallthru
        _
      // Predicated region
      $region41: #{tpu_custom_call.1} parent=11 // pred_check
        %p381 = pneg %p214
      $region42: #{tpu_custom_call.1} parent=11 // pred_check_branch
        %383 = sbr.rel (%p381) target = $region44
      $region43: #{tpu_custom_call.1} parent=11 // pred_region
        _
      $region44: #{tpu_custom_call.1} parent=11 // pred_fallthru
        _
      // Predicated region
      $region45: #{tpu_custom_call.1} parent=11 // pred_check
        %p384 = pneg %p235
      $region46: #{tpu_custom_call.1} parent=11 // pred_check_branch
        %386 = sbr.rel (%p384) target = $region48
      $region47: #{tpu_custom_call.1} parent=11 // pred_region
        _
      $region48: #{tpu_custom_call.1} parent=11 // pred_fallthru
        _
      // Predicated region
      $region49: #{tpu_custom_call.1} parent=11 // pred_check
        %p387 = pneg %p256
      $region50: #{tpu_custom_call.1} parent=11 // pred_check_branch
        %389 = sbr.rel (%p387) target = $region52
      $region51: #{tpu_custom_call.1} parent=11 // pred_region
        _
      $region52: #{tpu_custom_call.1} parent=11 // pred_fallthru
        _
      // Predicated region
      $region53: #{tpu_custom_call.1} parent=11 // pred_check
        %p390 = pneg %p277
      $region54: #{tpu_custom_call.1} parent=11 // pred_check_branch
        %392 = sbr.rel (%p390) target = $region56
      $region55: #{tpu_custom_call.1} parent=11 // pred_region
        _
      $region56: #{tpu_custom_call.1} parent=11 // pred_fallthru
        _
      // Predicated region
      $region57: #{tpu_custom_call.1} parent=11 // pred_check
        %p393 = pneg %p298
      $region58: #{tpu_custom_call.1} parent=11 // pred_check_branch
        %395 = sbr.rel (%p393) target = $region60
      $region59: #{tpu_custom_call.1} parent=11 // pred_region
        _
      $region60: #{tpu_custom_call.1} parent=11 // pred_fallthru
        _
      // Predicated region
      $region61: #{tpu_custom_call.1} parent=11 // pred_check
        %p396 = pneg %p319
      $region62: #{tpu_custom_call.1} parent=11 // pred_check_branch
        %398 = sbr.rel (%p396) target = $region64
      $region63: #{tpu_custom_call.1} parent=11 // pred_region
        _
      $region64: #{tpu_custom_call.1} parent=11 // pred_fallthru
        _
    $region12: #{tpu_custom_call.1} parent=5 // pred_fallthru
      _
    %p399 = scmp.lt.s32.totalorder %s20, 2
    // Predicated region
    $region65: #{tpu_custom_call.1} parent=5 // pred_check
      %p400 = pneg %p399
    $region66: #{tpu_custom_call.1} parent=5 // pred_check_branch
      %402 = sbr.rel (%p400) target = $region68
    $region67: #{tpu_custom_call.1} parent=5 // pred_region
      // Predicated region
      $region69: #{tpu_custom_call.1} parent=67 // pred_check
        %p403 = pneg %p40
      $region70: #{tpu_custom_call.1} parent=67 // pred_check_branch
        %405 = sbr.rel (%p403) target = $region72
      $region71: #{tpu_custom_call.1} parent=67 // pred_region
        %p406 = scmp.lt.s32.totalorder %s20, 1
        %s407 = scalar_select %p406, %s20, 1
        %s408 = smul.addr %s407, 16
        %s409 = smul.addr %s408, 8
        %s410 = scalar_lea.vmem %s0, %s409
      $region72: #{tpu_custom_call.1} parent=67 // pred_fallthru
        _
    $region68: #{tpu_custom_call.1} parent=5 // pred_fallthru
      _
    %p411 = scmp.le.s32.totalorder 1, %s20
    %p412 = scmp.lt.s32.totalorder %s20, 3
    %p413 = pnand %p411, %p412
    %p414 = pneg %p413
    // Predicated region
    $region73: #{tpu_custom_call.1} parent=5 // pred_check
      _
    $region74: #{tpu_custom_call.1} parent=5 // pred_check_branch
      %416 = sbr.rel (%p413) target = $region76
    $region75: #{tpu_custom_call.1} parent=5 // pred_region
      %s417 = ssub.s32 %s20, 1
      %p418 = scmp.lt.s32.totalorder %s25, 1
      %s419 = scalar_select %p418, %s25, 1
      %s420 = smul.addr %s419, 16
      %s421 = smul.addr %s420, 8
      %s422 = scalar_lea.vmem %s0, %s421
      %p423 = pneg %p46
      %p424 = pneg %p43
      %p425 = pneg %p67
      %p426 = pneg %p64
      %p427 = pneg %p88
      %p428 = pneg %p85
      %p429 = pneg %p109
      %p430 = pneg %p106
      %p431 = pneg %p130
      %p432 = pneg %p127
      %p433 = pneg %p151
      %p434 = pneg %p148
      %p435 = pneg %p172
      %p436 = pneg %p169
      %p437 = pneg %p193
      %p438 = pneg %p190
      %p439 = pneg %p214
      %p440 = pneg %p211
      %p441 = pneg %p235
      %p442 = pneg %p232
      %p443 = pneg %p256
      %p444 = pneg %p253
      %p445 = pneg %p277
      %p446 = pneg %p274
      %p447 = pneg %p298
      %p448 = pneg %p295
      %p449 = pneg %p319
      %p450 = pneg %p316
      %p451 = pneg %p345
      %p452 = pneg %p342
      %p453 = scmp.lt.s32.totalorder %s25, 1
      %s454 = scalar_select %p453, %s25, 1
      %s455 = smul.addr %s454, 16
      %s456 = smul.addr %s455, 8
      %s457 = scalar_lea.vmem %s14, %s456
      %p458 = scmp.lt.s32.totalorder %s25, 1
      %s459 = scalar_select %p458, %s25, 1
      %s460 = smul.addr %s459, 16
      %s461 = smul.addr %s460, 8
      %s462 = scalar_lea.vmem %s0, %s461
      %p463 = scmp.lt.s32.totalorder %s25, 1
      %s464 = scalar_select %p463, %s25, 1
      %s465 = smul.addr %s464, 16
      %s466 = smul.addr %s465, 8
      %s467 = scalar_lea.vmem %s14, %s466
      %v469 = vld [vmem:[%s462] sm:$0xff]
      %v470 = vld [vmem:[%s462 + $0x8] sm:$0xff]
      %v471 = vld [vmem:[%s462 + $0x10] sm:$0xff]
      %v472 = vld [vmem:[%s462 + $0x18] sm:$0xff]
      %v473 = vld [vmem:[%s462 + $0x20] sm:$0xff]
      %v474 = vld [vmem:[%s462 + $0x28] sm:$0xff]
      %v475 = vld [vmem:[%s462 + $0x30] sm:$0xff]
      %v476 = vld [vmem:[%s462 + $0x38] sm:$0xff]
      %v477 = vld [vmem:[%s462 + $0x40] sm:$0xff]
      %v478 = vld [vmem:[%s462 + $0x48] sm:$0xff]
      %v479 = vld [vmem:[%s462 + $0x50] sm:$0xff]
      %v480 = vld [vmem:[%s462 + $0x58] sm:$0xff]
      %v481 = vld [vmem:[%s462 + $0x60] sm:$0xff]
      %v482 = vld [vmem:[%s462 + $0x68] sm:$0xff]
      %v483 = vld [vmem:[%s462 + $0x70] sm:$0xff]
      %v484 = vld [vmem:[%s462 + $0x78] sm:$0xff]
      %v485 = vld [vmem:[%s2] sm:$0x1]
      %v486 = vld [vmem:[%s3] sm:$0x1]
      %vm487 = vcmask 261120
      %v488 = vsel %vm487, %v469, 0.0
      %489 = vadd.xlane.f32.xlu0 %v488
      %v490 = vpop.xlane.xlu0 %489
      %v491 = vsel %vm487, %v470, 0.0
      %492 = vadd.xlane.f32.xlu0 %v491
      %v493 = vpop.xlane.xlu0 %492
      %v494 = vsel %vm487, %v471, 0.0
      %495 = vadd.xlane.f32.xlu0 %v494
      %v496 = vpop.xlane.xlu0 %495
      %v497 = vsel %vm487, %v472, 0.0
      %498 = vadd.xlane.f32.xlu0 %v497
      %v499 = vpop.xlane.xlu0 %498
      %v500 = vsel %vm487, %v473, 0.0
      %501 = vadd.xlane.f32.xlu0 %v500
      %v502 = vpop.xlane.xlu0 %501
      %v503 = vsel %vm487, %v474, 0.0
      %504 = vadd.xlane.f32.xlu0 %v503
      %v505 = vpop.xlane.xlu0 %504
      %v506 = vsel %vm487, %v475, 0.0
      %507 = vadd.xlane.f32.xlu0 %v506
      %v508 = vpop.xlane.xlu0 %507
      %v509 = vsel %vm487, %v476, 0.0
      %510 = vadd.xlane.f32.xlu0 %v509
      %v511 = vpop.xlane.xlu0 %510
      %v512 = vsel %vm487, %v477, 0.0
      %513 = vadd.xlane.f32.xlu0 %v512
      %v514 = vpop.xlane.xlu0 %513
      %v515 = vsel %vm487, %v478, 0.0
      %516 = vadd.xlane.f32.xlu0 %v515
      %v517 = vpop.xlane.xlu0 %516
      %v518 = vsel %vm487, %v479, 0.0
      %519 = vadd.xlane.f32.xlu0 %v518
      %v520 = vpop.xlane.xlu0 %519
      %v521 = vsel %vm487, %v480, 0.0
      %522 = vadd.xlane.f32.xlu0 %v521
      %v523 = vpop.xlane.xlu0 %522
      %v524 = vsel %vm487, %v481, 0.0
      %525 = vadd.xlane.f32.xlu0 %v524
      %v526 = vpop.xlane.xlu0 %525
      %v527 = vsel %vm487, %v482, 0.0
      %528 = vadd.xlane.f32.xlu0 %v527
      %v529 = vpop.xlane.xlu0 %528
      %v530 = vsel %vm487, %v483, 0.0
      %531 = vadd.xlane.f32.xlu0 %v530
      %v532 = vpop.xlane.xlu0 %531
      %v533 = vsel %vm487, %v484, 0.0
      %534 = vadd.xlane.f32.xlu0 %v533
      %v535 = vpop.xlane.xlu0 %534
      %v536 = vrcp.pop 32.0
      %v537 = vmul.f32 %v490, %v536
      %v538 = vmul.f32 %v493, %v536
      %v539 = vmul.f32 %v496, %v536
      %v540 = vmul.f32 %v499, %v536
      %v541 = vmul.f32 %v502, %v536
      %v542 = vmul.f32 %v505, %v536
      %v543 = vmul.f32 %v508, %v536
      %v544 = vmul.f32 %v511, %v536
      %v545 = vmul.f32 %v514, %v536
      %v546 = vmul.f32 %v517, %v536
      %v547 = vmul.f32 %v520, %v536
      %v548 = vmul.f32 %v523, %v536
      %v549 = vmul.f32 %v526, %v536
      %v550 = vmul.f32 %v529, %v536
      %v551 = vmul.f32 %v532, %v536
      %v552 = vmul.f32 %v535, %v536
      %v553 = vsub.f32 %v469, %v537
      %v554 = vsub.f32 %v470, %v538
      %v555 = vsub.f32 %v471, %v539
      %v556 = vsub.f32 %v472, %v540
      %v557 = vsub.f32 %v473, %v541
      %v558 = vsub.f32 %v474, %v542
      %v559 = vsub.f32 %v475, %v543
      %v560 = vsub.f32 %v476, %v544
      %v561 = vsub.f32 %v477, %v545
      %v562 = vsub.f32 %v478, %v546
      %v563 = vsub.f32 %v479, %v547
      %v564 = vsub.f32 %v480, %v548
      %v565 = vsub.f32 %v481, %v549
      %v566 = vsub.f32 %v482, %v550
      %v567 = vsub.f32 %v483, %v551
      %v568 = vsub.f32 %v484, %v552
      %v569 = vmul.f32 %v553, %v553
      %v570 = vmul.f32 %v554, %v554
      %v571 = vmul.f32 %v555, %v555
      %v572 = vmul.f32 %v556, %v556
      %v573 = vmul.f32 %v557, %v557
      %v574 = vmul.f32 %v558, %v558
      %v575 = vmul.f32 %v559, %v559
      %v576 = vmul.f32 %v560, %v560
      %v577 = vmul.f32 %v561, %v561
      %v578 = vmul.f32 %v562, %v562
      %v579 = vmul.f32 %v563, %v563
      %v580 = vmul.f32 %v564, %v564
      %v581 = vmul.f32 %v565, %v565
      %v582 = vmul.f32 %v566, %v566
      %v583 = vmul.f32 %v567, %v567
      %v584 = vmul.f32 %v568, %v568
      %v585 = vsel %vm487, %v569, 0.0
      %586 = vadd.xlane.f32.xlu0 %v585
      %v587 = vpop.xlane.xlu0 %586
      %v588 = vsel %vm487, %v570, 0.0
      %589 = vadd.xlane.f32.xlu0 %v588
      %v590 = vpop.xlane.xlu0 %589
      %v591 = vsel %vm487, %v571, 0.0
      %592 = vadd.xlane.f32.xlu0 %v591
      %v593 = vpop.xlane.xlu0 %592
      %v594 = vsel %vm487, %v572, 0.0
      %595 = vadd.xlane.f32.xlu0 %v594
      %v596 = vpop.xlane.xlu0 %595
      %v597 = vsel %vm487, %v573, 0.0
      %598 = vadd.xlane.f32.xlu0 %v597
      %v599 = vpop.xlane.xlu0 %598
      %v600 = vsel %vm487, %v574, 0.0
      %601 = vadd.xlane.f32.xlu0 %v600
      %v602 = vpop.xlane.xlu0 %601
      %v603 = vsel %vm487, %v575, 0.0
      %604 = vadd.xlane.f32.xlu0 %v603
      %v605 = vpop.xlane.xlu0 %604
      %v606 = vsel %vm487, %v576, 0.0
      %607 = vadd.xlane.f32.xlu0 %v606
      %v608 = vpop.xlane.xlu0 %607
      %v609 = vsel %vm487, %v577, 0.0
      %610 = vadd.xlane.f32.xlu0 %v609
      %v611 = vpop.xlane.xlu0 %610
      %v612 = vsel %vm487, %v578, 0.0
      %613 = vadd.xlane.f32.xlu0 %v612
      %v614 = vpop.xlane.xlu0 %613
      %v615 = vsel %vm487, %v579, 0.0
      %616 = vadd.xlane.f32.xlu0 %v615
      %v617 = vpop.xlane.xlu0 %616
      %v618 = vsel %vm487, %v580, 0.0
      %619 = vadd.xlane.f32.xlu0 %v618
      %v620 = vpop.xlane.xlu0 %619
      %v621 = vsel %vm487, %v581, 0.0
      %622 = vadd.xlane.f32.xlu0 %v621
      %v623 = vpop.xlane.xlu0 %622
      %v624 = vsel %vm487, %v582, 0.0
      %625 = vadd.xlane.f32.xlu0 %v624
      %v626 = vpop.xlane.xlu0 %625
      %v627 = vsel %vm487, %v583, 0.0
      %628 = vadd.xlane.f32.xlu0 %v627
      %v629 = vpop.xlane.xlu0 %628
      %v630 = vsel %vm487, %v584, 0.0
      %631 = vadd.xlane.f32.xlu0 %v630
      %v632 = vpop.xlane.xlu0 %631
      %v633 = vmul.f32 %v587, %v536
      %v634 = vmul.f32 %v590, %v536
      %v635 = vmul.f32 %v593, %v536
      %v636 = vmul.f32 %v596, %v536
      %v637 = vmul.f32 %v599, %v536
      %v638 = vmul.f32 %v602, %v536
      %v639 = vmul.f32 %v605, %v536
      %v640 = vmul.f32 %v608, %v536
      %v641 = vmul.f32 %v611, %v536
      %v642 = vmul.f32 %v614, %v536
      %v643 = vmul.f32 %v617, %v536
      %v644 = vmul.f32 %v620, %v536
      %v645 = vmul.f32 %v623, %v536
      %v646 = vmul.f32 %v626, %v536
      %v647 = vmul.f32 %v629, %v536
      %v648 = vmul.f32 %v632, %v536
      %v649 = vadd.f32 %v633, 1e-05
      %v650 = vadd.f32 %v634, 1e-05
      %v651 = vadd.f32 %v635, 1e-05
      %v652 = vadd.f32 %v636, 1e-05
      %v653 = vadd.f32 %v637, 1e-05
      %v654 = vadd.f32 %v638, 1e-05
      %v655 = vadd.f32 %v639, 1e-05
      %v656 = vadd.f32 %v640, 1e-05
      %v657 = vadd.f32 %v641, 1e-05
      %v658 = vadd.f32 %v642, 1e-05
      %v659 = vadd.f32 %v643, 1e-05
      %v660 = vadd.f32 %v644, 1e-05
      %v661 = vadd.f32 %v645, 1e-05
      %v662 = vadd.f32 %v646, 1e-05
      %v663 = vadd.f32 %v647, 1e-05
      %v664 = vadd.f32 %v648, 1e-05
      %v665 = vrsqrt.pop %v649
      %v666 = vrsqrt.pop %v650
      %v667 = vrsqrt.pop %v651
      %v668 = vrsqrt.pop %v652
      %v669 = vrsqrt.pop %v653
      %v670 = vrsqrt.pop %v654
      %v671 = vrsqrt.pop %v655
      %v672 = vrsqrt.pop %v656
      %v673 = vrsqrt.pop %v657
      %v674 = vrsqrt.pop %v658
      %v675 = vrsqrt.pop %v659
      %v676 = vrsqrt.pop %v660
      %v677 = vrsqrt.pop %v661
      %v678 = vrsqrt.pop %v662
      %v679 = vrsqrt.pop %v663
      %v680 = vrsqrt.pop %v664
      %v681 = vmul.f32 %v553, %v665
      %v682 = vmul.f32 %v554, %v666
      %v683 = vmul.f32 %v555, %v667
      %v684 = vmul.f32 %v556, %v668
      %v685 = vmul.f32 %v557, %v669
      %v686 = vmul.f32 %v558, %v670
      %v687 = vmul.f32 %v559, %v671
      %v688 = vmul.f32 %v560, %v672
      %v689 = vmul.f32 %v561, %v673
      %v690 = vmul.f32 %v562, %v674
      %v691 = vmul.f32 %v563, %v675
      %v692 = vmul.f32 %v564, %v676
      %v693 = vmul.f32 %v565, %v677
      %v694 = vmul.f32 %v566, %v678
      %v695 = vmul.f32 %v567, %v679
      %v696 = vmul.f32 %v568, %v680
      %v698 = vlaneseq
      %v699 = vshrl.u32 %v698, 7
      %v700 = vsub.s32 0, %v699
      %v701 = vrot.slane %v485, %v700
      %v703 = vmul.f32 %v681, %v701
      %v704 = vmul.f32 %v682, %v701
      %v705 = vmul.f32 %v683, %v701
      %v706 = vmul.f32 %v684, %v701
      %v707 = vmul.f32 %v685, %v701
      %v708 = vmul.f32 %v686, %v701
      %v709 = vmul.f32 %v687, %v701
      %v710 = vmul.f32 %v688, %v701
      %v711 = vmul.f32 %v689, %v701
      %v712 = vmul.f32 %v690, %v701
      %v713 = vmul.f32 %v691, %v701
      %v714 = vmul.f32 %v692, %v701
      %v715 = vmul.f32 %v693, %v701
      %v716 = vmul.f32 %v694, %v701
      %v717 = vmul.f32 %v695, %v701
      %v718 = vmul.f32 %v696, %v701
      %v720 = vlaneseq
      %v721 = vshrl.u32 %v720, 7
      %v722 = vsub.s32 0, %v721
      %v723 = vrot.slane %v486, %v722
      %v725 = vadd.f32 %v703, %v723
      %v726 = vadd.f32 %v704, %v723
      %v727 = vadd.f32 %v705, %v723
      %v728 = vadd.f32 %v706, %v723
      %v729 = vadd.f32 %v707, %v723
      %v730 = vadd.f32 %v708, %v723
      %v731 = vadd.f32 %v709, %v723
      %v732 = vadd.f32 %v710, %v723
      %v733 = vadd.f32 %v711, %v723
      %v734 = vadd.f32 %v712, %v723
      %v735 = vadd.f32 %v713, %v723
      %v736 = vadd.f32 %v714, %v723
      %v737 = vadd.f32 %v715, %v723
      %v738 = vadd.f32 %v716, %v723
      %v739 = vadd.f32 %v717, %v723
      %v740 = vadd.f32 %v718, %v723
      %v741 = vpack.c.bf16 %v726, %v725
      %v742 = vpack.c.bf16 %v728, %v727
      %v743 = vpack.c.bf16 %v730, %v729
      %v744 = vpack.c.bf16 %v732, %v731
      %v745 = vpack.c.bf16 %v734, %v733
      %v746 = vpack.c.bf16 %v736, %v735
      %v747 = vpack.c.bf16 %v738, %v737
      %v748 = vpack.c.bf16 %v740, %v739
      %v749 = vld [vmem:[%s4] sm:$0xf]
      %v750 = vld [vmem:[%s4 + $0x4] sm:$0xf]
      %v751 = vld [vmem:[%s4 + $0x8] sm:$0xf]
      %v752 = vld [vmem:[%s4 + $0xc] sm:$0xf]
      %v753 = vld [vmem:[%s5] sm:$0x1]
      %v755 = vlaneseq
      %v756 = vshrl.u32 %v755, 7
      %v757 = vsub.s32 0, %v756
      %v758 = vrot.slane %v753, %v757
      %v764 = vunpack.c.l.b16 %v749
      %v765 = vunpack.c.l.b16 %v750
      %v766 = vunpack.c.l.b16 %v751
      %v767 = vunpack.c.l.b16 %v752
      %v768 = vpack.c.b16 %v765, %v764
      %v769 = vpack.c.b16 %v767, %v766
      %v773 = vsel %vm487, %v741, 0
      %v776 = vsel %vm487, %v742, 0
      %v779 = vsel %vm487, %v743, 0
      %v782 = vsel %vm487, %v744, 0
      %v785 = vsel %vm487, %v745, 0
      %v788 = vsel %vm487, %v746, 0
      %v791 = vsel %vm487, %v747, 0
      %v794 = vsel %vm487, %v748, 0
      %796 = vmatprep.subr.bf16.mxu0 0
      %797 = vmatpush1.bf16.msra.mxu0 0
      %798 = vmatprep.subr.bf16.mxu0 0
      %799 = vmatpush1.bf16.msra.mxu0 0
      %800 = vmatprep.subr.bf16.mxu0 0
      %801 = vmatpush1.bf16.msra.mxu0 0
      %802 = vmatprep.subr.bf16.mxu0 0
      %803 = vmatpush1.bf16.msra.mxu0 0
      %804 = vmatprep.subr.bf16.mxu0 0
      %805 = vmatpush1.bf16.msra.mxu0 0
      %806 = vmatprep.subr.bf16.mxu0 0
      %807 = vmatpush1.bf16.msra.mxu0 0
      %808 = vmatprep.subr.bf16.mxu0 0
      %809 = vmatpush1.bf16.msra.mxu0 %v769
      %810 = vmatprep.subr.bf16.mxu0 0
      %811 = vmatpush1.bf16.msra.mxu0 %v768
      %812 = vmatprep.subr.bf16.mxu0 0
      %813 = vmatpush2.bf16.msra.mxu0 0
      %814 = vmatprep.subr.bf16.mxu0 0
      %815 = vmatpush2.bf16.msra.mxu0 0
      %816 = vmatprep.subr.bf16.mxu0 0
      %817 = vmatpush2.bf16.msra.mxu0 0
      %818 = vmatprep.subr.bf16.mxu0 0
      %819 = vmatpush2.bf16.msra.mxu0 0
      %820 = vmatprep.subr.bf16.mxu0 0
      %821 = vmatpush2.bf16.msra.mxu0 0
      %822 = vmatprep.subr.bf16.mxu0 0
      %823 = vmatpush2.bf16.msra.mxu0 0
      %824 = vmatprep.subr.bf16.mxu0 0
      %825 = vmatpush2.bf16.msra.mxu0 0
      %826 = vmatprep.subr.bf16.mxu0 0
      %827 = vmatpush2.bf16.msra.mxu0 0
      %828 = vmatprep.mubr.bf16.mxu0 0
      %829 = vmatmul.mubr.bf16.gmra.mxu0 %v773
      %v830 = vpop.f32.mrf.mxu0
      %v831 = vadd.f32 %v758, %v830
      %v832 = vpop.f32.mrf.mxu0
      %v833 = vpop.f32.mrf.mxu0
      %v834 = vadd.f32 %v758, %v833
      %v835 = vpop.f32.mrf.mxu0
      %836 = vmatprep.mubr.bf16.mxu0 0
      %837 = vmatmul.mubr.bf16.gmra.mxu0 %v776
      %v838 = vpop.f32.mrf.mxu0
      %v839 = vadd.f32 %v758, %v838
      %v840 = vpop.f32.mrf.mxu0
      %v841 = vpop.f32.mrf.mxu0
      %v842 = vadd.f32 %v758, %v841
      %v843 = vpop.f32.mrf.mxu0
      %844 = vmatprep.mubr.bf16.mxu0 0
      %845 = vmatmul.mubr.bf16.gmra.mxu0 %v779
      %v846 = vpop.f32.mrf.mxu0
      %v847 = vadd.f32 %v758, %v846
      %v848 = vpop.f32.mrf.mxu0
      %v849 = vpop.f32.mrf.mxu0
      %v850 = vadd.f32 %v758, %v849
      %v851 = vpop.f32.mrf.mxu0
      %852 = vmatprep.mubr.bf16.mxu0 0
      %853 = vmatmul.mubr.bf16.gmra.mxu0 %v782
      %v854 = vpop.f32.mrf.mxu0
      %v855 = vadd.f32 %v758, %v854
      %v856 = vpop.f32.mrf.mxu0
      %v857 = vpop.f32.mrf.mxu0
      %v858 = vadd.f32 %v758, %v857
      %v859 = vpop.f32.mrf.mxu0
      %860 = vmatprep.mubr.bf16.mxu0 0
      %861 = vmatmul.mubr.bf16.gmra.mxu0 %v785
      %v862 = vpop.f32.mrf.mxu0
      %v863 = vadd.f32 %v758, %v862
      %v864 = vpop.f32.mrf.mxu0
      %v865 = vpop.f32.mrf.mxu0
      %v866 = vadd.f32 %v758, %v865
      %v867 = vpop.f32.mrf.mxu0
      %868 = vmatprep.mubr.bf16.mxu0 0
      %869 = vmatmul.mubr.bf16.gmra.mxu0 %v788
      %v870 = vpop.f32.mrf.mxu0
      %v871 = vadd.f32 %v758, %v870
      %v872 = vpop.f32.mrf.mxu0
      %v873 = vpop.f32.mrf.mxu0
      %v874 = vadd.f32 %v758, %v873
      %v875 = vpop.f32.mrf.mxu0
      %876 = vmatprep.mubr.bf16.mxu0 0
      %877 = vmatmul.mubr.bf16.gmra.mxu0 %v791
      %v878 = vpop.f32.mrf.mxu0
      %v879 = vadd.f32 %v758, %v878
      %v880 = vpop.f32.mrf.mxu0
      %v881 = vpop.f32.mrf.mxu0
      %v882 = vadd.f32 %v758, %v881
      %v883 = vpop.f32.mrf.mxu0
      %884 = vmatprep.mubr.bf16.mxu0 0
      %885 = vmatmul.mubr.bf16.gmra.mxu0 %v794
      %v886 = vpop.f32.mrf.mxu0
      %v887 = vadd.f32 %v758, %v886
      %v888 = vpop.f32.mrf.mxu0
      %v889 = vpop.f32.mrf.mxu0
      %v890 = vadd.f32 %v758, %v889
      %v891 = vpop.f32.mrf.mxu0
      %892 = vdwg.mxu0
      %v893 = vpack.c.bf16 %v834, %v831
      %v894 = vpack.c.bf16 %v842, %v839
      %v895 = vpack.c.bf16 %v850, %v847
      %v896 = vpack.c.bf16 %v858, %v855
      %v897 = vpack.c.bf16 %v866, %v863
      %v898 = vpack.c.bf16 %v874, %v871
      %v899 = vpack.c.bf16 %v882, %v879
      %v900 = vpack.c.bf16 %v890, %v887
      %909 = vrot.lane.b32.xlu0 %v893, 120
      %v910 = vpop.permute.xlu0 %909
      %911 = vrot.lane.b32.xlu0 %v894, 120
      %v912 = vpop.permute.xlu0 %911
      %913 = vrot.lane.b32.xlu0 %v895, 120
      %v914 = vpop.permute.xlu0 %913
      %915 = vrot.lane.b32.xlu0 %v896, 120
      %v916 = vpop.permute.xlu0 %915
      %917 = vrot.lane.b32.xlu0 %v897, 120
      %v918 = vpop.permute.xlu0 %917
      %919 = vrot.lane.b32.xlu0 %v898, 120
      %v920 = vpop.permute.xlu0 %919
      %921 = vrot.lane.b32.xlu0 %v899, 120
      %v922 = vpop.permute.xlu0 %921
      %923 = vrot.lane.b32.xlu0 %v900, 120
      %v924 = vpop.permute.xlu0 %923
      %925 = vrot.lane.b32.xlu0 %v893, 112
      %v926 = vpop.permute.xlu0 %925
      %927 = vrot.lane.b32.xlu0 %v894, 112
      %v928 = vpop.permute.xlu0 %927
      %929 = vrot.lane.b32.xlu0 %v895, 112
      %v930 = vpop.permute.xlu0 %929
      %931 = vrot.lane.b32.xlu0 %v896, 112
      %v932 = vpop.permute.xlu0 %931
      %933 = vrot.lane.b32.xlu0 %v897, 112
      %v934 = vpop.permute.xlu0 %933
      %935 = vrot.lane.b32.xlu0 %v898, 112
      %v936 = vpop.permute.xlu0 %935
      %937 = vrot.lane.b32.xlu0 %v899, 112
      %v938 = vpop.permute.xlu0 %937
      %939 = vrot.lane.b32.xlu0 %v900, 112
      %v940 = vpop.permute.xlu0 %939
      %941 = vrot.lane.b32.xlu0 %v893, 104
      %v942 = vpop.permute.xlu0 %941
      %943 = vrot.lane.b32.xlu0 %v894, 104
      %v944 = vpop.permute.xlu0 %943
      %945 = vrot.lane.b32.xlu0 %v895, 104
      %v946 = vpop.permute.xlu0 %945
      %947 = vrot.lane.b32.xlu0 %v896, 104
      %v948 = vpop.permute.xlu0 %947
      %949 = vrot.lane.b32.xlu0 %v897, 104
      %v950 = vpop.permute.xlu0 %949
      %951 = vrot.lane.b32.xlu0 %v898, 104
      %v952 = vpop.permute.xlu0 %951
      %953 = vrot.lane.b32.xlu0 %v899, 104
      %v954 = vpop.permute.xlu0 %953
      %955 = vrot.lane.b32.xlu0 %v900, 104
      %v956 = vpop.permute.xlu0 %955
      %v959 = vpack.i.b16 %v910, %v893
      %v961 = vshrl.u32 %v893, 16
      %v962 = vshrl.u32 %v910, 16
      %v963 = vpack.i.b16 %v962, %v961
      %v967 = vpack.i.b16 %v942, %v926
      %v969 = vshrl.u32 %v926, 16
      %v970 = vshrl.u32 %v942, 16
      %v971 = vpack.i.b16 %v970, %v969
      %v974 = vpack.i.b16 0, 0
      %v976 = vshrl.u32 0, 16
      %v977 = vpack.i.b16 %v976, %v976
      %v981 = vpack.i.b16 %v912, %v894
      %v983 = vshrl.u32 %v894, 16
      %v984 = vshrl.u32 %v912, 16
      %v985 = vpack.i.b16 %v984, %v983
      %v989 = vpack.i.b16 %v944, %v928
      %v991 = vshrl.u32 %v928, 16
      %v992 = vshrl.u32 %v944, 16
      %v993 = vpack.i.b16 %v992, %v991
      %v997 = vpack.i.b16 %v914, %v895
      %v999 = vshrl.u32 %v895, 16
      %v1000 = vshrl.u32 %v914, 16
      %v1001 = vpack.i.b16 %v1000, %v999
      %v1005 = vpack.i.b16 %v946, %v930
      %v1007 = vshrl.u32 %v930, 16
      %v1008 = vshrl.u32 %v946, 16
      %v1009 = vpack.i.b16 %v1008, %v1007
      %v1013 = vpack.i.b16 %v916, %v896
      %v1015 = vshrl.u32 %v896, 16
      %v1016 = vshrl.u32 %v916, 16
      %v1017 = vpack.i.b16 %v1016, %v1015
      %v1021 = vpack.i.b16 %v948, %v932
      %v1023 = vshrl.u32 %v932, 16
      %v1024 = vshrl.u32 %v948, 16
      %v1025 = vpack.i.b16 %v1024, %v1023
      %v1029 = vpack.i.b16 %v918, %v897
      %v1031 = vshrl.u32 %v897, 16
      %v1032 = vshrl.u32 %v918, 16
      %v1033 = vpack.i.b16 %v1032, %v1031
      %v1037 = vpack.i.b16 %v950, %v934
      %v1039 = vshrl.u32 %v934, 16
      %v1040 = vshrl.u32 %v950, 16
      %v1041 = vpack.i.b16 %v1040, %v1039
      %v1045 = vpack.i.b16 %v920, %v898
      %v1047 = vshrl.u32 %v898, 16
      %v1048 = vshrl.u32 %v920, 16
      %v1049 = vpack.i.b16 %v1048, %v1047
      %v1053 = vpack.i.b16 %v952, %v936
      %v1055 = vshrl.u32 %v936, 16
      %v1056 = vshrl.u32 %v952, 16
      %v1057 = vpack.i.b16 %v1056, %v1055
      %v1061 = vpack.i.b16 %v922, %v899
      %v1063 = vshrl.u32 %v899, 16
      %v1064 = vshrl.u32 %v922, 16
      %v1065 = vpack.i.b16 %v1064, %v1063
      %v1069 = vpack.i.b16 %v954, %v938
      %v1071 = vshrl.u32 %v938, 16
      %v1072 = vshrl.u32 %v954, 16
      %v1073 = vpack.i.b16 %v1072, %v1071
      %v1077 = vpack.i.b16 %v924, %v900
      %v1079 = vshrl.u32 %v900, 16
      %v1080 = vshrl.u32 %v924, 16
      %v1081 = vpack.i.b16 %v1080, %v1079
      %v1085 = vpack.i.b16 %v956, %v940
      %v1087 = vshrl.u32 %v940, 16
      %v1088 = vshrl.u32 %v956, 16
      %v1089 = vpack.i.b16 %v1088, %v1087
      %v1091 = vcombine.high %v959, %v974
      %v1093 = vunpack.c.l.s4 1983009808
      %v1094 = vunpack.c.0.s8 %v1093
      %v1095 = vlaneseq
      %v1096 = vshrl.u32 %v1095, 7
      %v1097 = vsub.s32 %v1094, %v1096
      %v1098 = vrot.slane %v959, %v1097
      %v1100 = vunpack.c.l.s4 1983009808
      %v1101 = vunpack.c.0.s8 %v1100
      %v1102 = vlaneseq
      %v1103 = vshrl.u32 %v1102, 7
      %v1104 = vsub.s32 %v1101, %v1103
      %v1105 = vrot.slane %v1091, %v1104
      %v1106 = vcombine.high %v967, %v974
      %v1108 = vunpack.c.l.s4 1983009808
      %v1109 = vunpack.c.0.s8 %v1108
      %v1110 = vlaneseq
      %v1111 = vshrl.u32 %v1110, 7
      %v1112 = vsub.s32 %v1109, %v1111
      %v1113 = vrot.slane %v967, %v1112
      %v1115 = vunpack.c.l.s4 1983009808
      %v1116 = vunpack.c.0.s8 %v1115
      %v1117 = vlaneseq
      %v1118 = vshrl.u32 %v1117, 7
      %v1119 = vsub.s32 %v1116, %v1118
      %v1120 = vrot.slane %v1106, %v1119
      %v1121 = vcombine.low %v1098, %v1113
      %v1122 = vcombine.high %v1098, %v1113
      %v1124 = vunpack.c.l.s4 1934713408
      %v1125 = vunpack.c.0.s8 %v1124
      %v1126 = vlaneseq
      %v1127 = vshrl.u32 %v1126, 7
      %v1128 = vsub.s32 %v1125, %v1127
      %v1129 = vrot.slane %v1121, %v1128
      %v1131 = vunpack.c.l.s4 1934713408
      %v1132 = vunpack.c.0.s8 %v1131
      %v1133 = vlaneseq
      %v1134 = vshrl.u32 %v1133, 7
      %v1135 = vsub.s32 %v1132, %v1134
      %v1136 = vrot.slane %v1122, %v1135
      %v1137 = vcombine.low %v1105, %v1120
      %v1138 = vcombine.high %v1105, %v1120
      %v1140 = vunpack.c.l.s4 1934713408
      %v1141 = vunpack.c.0.s8 %v1140
      %v1142 = vlaneseq
      %v1143 = vshrl.u32 %v1142, 7
      %v1144 = vsub.s32 %v1141, %v1143
      %v1145 = vrot.slane %v1137, %v1144
      %v1147 = vunpack.c.l.s4 1934713408
      %v1148 = vunpack.c.0.s8 %v1147
      %v1149 = vlaneseq
      %v1150 = vshrl.u32 %v1149, 7
      %v1151 = vsub.s32 %v1148, %v1150
      %v1152 = vrot.slane %v1138, %v1151
      %v1153 = vcombine.high %v1129, 0
      %v1154 = vcombine.high %v1136, 0
      %v1155 = vcombine.high %v1145, 0
      %v1156 = vcombine.high %v1152, 0
      %v1157 = vcombine.high %v963, %v977
      %v1159 = vunpack.c.l.s4 1983009808
      %v1160 = vunpack.c.0.s8 %v1159
      %v1161 = vlaneseq
      %v1162 = vshrl.u32 %v1161, 7
      %v1163 = vsub.s32 %v1160, %v1162
      %v1164 = vrot.slane %v963, %v1163
      %v1166 = vunpack.c.l.s4 1983009808
      %v1167 = vunpack.c.0.s8 %v1166
      %v1168 = vlaneseq
      %v1169 = vshrl.u32 %v1168, 7
      %v1170 = vsub.s32 %v1167, %v1169
      %v1171 = vrot.slane %v1157, %v1170
      %v1172 = vcombine.high %v971, %v977
      %v1174 = vunpack.c.l.s4 1983009808
      %v1175 = vunpack.c.0.s8 %v1174
      %v1176 = vlaneseq
      %v1177 = vshrl.u32 %v1176, 7
      %v1178 = vsub.s32 %v1175, %v1177
      %v1179 = vrot.slane %v971, %v1178
      %v1181 = vunpack.c.l.s4 1983009808
      %v1182 = vunpack.c.0.s8 %v1181
      %v1183 = vlaneseq
      %v1184 = vshrl.u32 %v1183, 7
      %v1185 = vsub.s32 %v1182, %v1184
      %v1186 = vrot.slane %v1172, %v1185
      %v1187 = vcombine.low %v1164, %v1179
      %v1188 = vcombine.high %v1164, %v1179
      %v1190 = vunpack.c.l.s4 1934713408
      %v1191 = vunpack.c.0.s8 %v1190
      %v1192 = vlaneseq
      %v1193 = vshrl.u32 %v1192, 7
      %v1194 = vsub.s32 %v1191, %v1193
      %v1195 = vrot.slane %v1187, %v1194
      %v1197 = vunpack.c.l.s4 1934713408
      %v1198 = vunpack.c.0.s8 %v1197
      %v1199 = vlaneseq
      %v1200 = vshrl.u32 %v1199, 7
      %v1201 = vsub.s32 %v1198, %v1200
      %v1202 = vrot.slane %v1188, %v1201
      %v1203 = vcombine.low %v1171, %v1186
      %v1204 = vcombine.high %v1171, %v1186
      %v1206 = vunpack.c.l.s4 1934713408
      %v1207 = vunpack.c.0.s8 %v1206
      %v1208 = vlaneseq
      %v1209 = vshrl.u32 %v1208, 7
      %v1210 = vsub.s32 %v1207, %v1209
      %v1211 = vrot.slane %v1203, %v1210
      %v1213 = vunpack.c.l.s4 1934713408
      %v1214 = vunpack.c.0.s8 %v1213
      %v1215 = vlaneseq
      %v1216 = vshrl.u32 %v1215, 7
      %v1217 = vsub.s32 %v1214, %v1216
      %v1218 = vrot.slane %v1204, %v1217
      %v1219 = vcombine.high %v1195, 0
      %v1220 = vcombine.high %v1202, 0
      %v1221 = vcombine.high %v1211, 0
      %v1222 = vcombine.high %v1218, 0
      %v1223 = vcombine.high %v981, %v974
      %v1225 = vunpack.c.l.s4 1983009808
      %v1226 = vunpack.c.0.s8 %v1225
      %v1227 = vlaneseq
      %v1228 = vshrl.u32 %v1227, 7
      %v1229 = vsub.s32 %v1226, %v1228
      %v1230 = vrot.slane %v981, %v1229
      %v1232 = vunpack.c.l.s4 1983009808
      %v1233 = vunpack.c.0.s8 %v1232
      %v1234 = vlaneseq
      %v1235 = vshrl.u32 %v1234, 7
      %v1236 = vsub.s32 %v1233, %v1235
      %v1237 = vrot.slane %v1223, %v1236
      %v1238 = vcombine.high %v989, %v974
      %v1240 = vunpack.c.l.s4 1983009808
      %v1241 = vunpack.c.0.s8 %v1240
      %v1242 = vlaneseq
      %v1243 = vshrl.u32 %v1242, 7
      %v1244 = vsub.s32 %v1241, %v1243
      %v1245 = vrot.slane %v989, %v1244
      %v1247 = vunpack.c.l.s4 1983009808
      %v1248 = vunpack.c.0.s8 %v1247
      %v1249 = vlaneseq
      %v1250 = vshrl.u32 %v1249, 7
      %v1251 = vsub.s32 %v1248, %v1250
      %v1252 = vrot.slane %v1238, %v1251
      %v1253 = vcombine.low %v1230, %v1245
      %v1254 = vcombine.high %v1230, %v1245
      %v1256 = vunpack.c.l.s4 1934713408
      %v1257 = vunpack.c.0.s8 %v1256
      %v1258 = vlaneseq
      %v1259 = vshrl.u32 %v1258, 7
      %v1260 = vsub.s32 %v1257, %v1259
      %v1261 = vrot.slane %v1253, %v1260
      %v1263 = vunpack.c.l.s4 1934713408
      %v1264 = vunpack.c.0.s8 %v1263
      %v1265 = vlaneseq
      %v1266 = vshrl.u32 %v1265, 7
      %v1267 = vsub.s32 %v1264, %v1266
      %v1268 = vrot.slane %v1254, %v1267
      %v1269 = vcombine.low %v1237, %v1252
      %v1270 = vcombine.high %v1237, %v1252
      %v1272 = vunpack.c.l.s4 1934713408
      %v1273 = vunpack.c.0.s8 %v1272
      %v1274 = vlaneseq
      %v1275 = vshrl.u32 %v1274, 7
      %v1276 = vsub.s32 %v1273, %v1275
      %v1277 = vrot.slane %v1269, %v1276
      %v1279 = vunpack.c.l.s4 1934713408
      %v1280 = vunpack.c.0.s8 %v1279
      %v1281 = vlaneseq
      %v1282 = vshrl.u32 %v1281, 7
      %v1283 = vsub.s32 %v1280, %v1282
      %v1284 = vrot.slane %v1270, %v1283
      %v1285 = vcombine.high %v1261, 0
      %v1286 = vcombine.high %v1268, 0
      %v1287 = vcombine.high %v1277, 0
      %v1288 = vcombine.high %v1284, 0
      %v1289 = vcombine.high %v985, %v977
      %v1291 = vunpack.c.l.s4 1983009808
      %v1292 = vunpack.c.0.s8 %v1291
      %v1293 = vlaneseq
      %v1294 = vshrl.u32 %v1293, 7
      %v1295 = vsub.s32 %v1292, %v1294
      %v1296 = vrot.slane %v985, %v1295
      %v1298 = vunpack.c.l.s4 1983009808
      %v1299 = vunpack.c.0.s8 %v1298
      %v1300 = vlaneseq
      %v1301 = vshrl.u32 %v1300, 7
      %v1302 = vsub.s32 %v1299, %v1301
      %v1303 = vrot.slane %v1289, %v1302
      %v1304 = vcombine.high %v993, %v977
      %v1306 = vunpack.c.l.s4 1983009808
      %v1307 = vunpack.c.0.s8 %v1306
      %v1308 = vlaneseq
      %v1309 = vshrl.u32 %v1308, 7
      %v1310 = vsub.s32 %v1307, %v1309
      %v1311 = vrot.slane %v993, %v1310
      %v1313 = vunpack.c.l.s4 1983009808
      %v1314 = vunpack.c.0.s8 %v1313
      %v1315 = vlaneseq
      %v1316 = vshrl.u32 %v1315, 7
      %v1317 = vsub.s32 %v1314, %v1316
      %v1318 = vrot.slane %v1304, %v1317
      %v1319 = vcombine.low %v1296, %v1311
      %v1320 = vcombine.high %v1296, %v1311
      %v1322 = vunpack.c.l.s4 1934713408
      %v1323 = vunpack.c.0.s8 %v1322
      %v1324 = vlaneseq
      %v1325 = vshrl.u32 %v1324, 7
      %v1326 = vsub.s32 %v1323, %v1325
      %v1327 = vrot.slane %v1319, %v1326
      %v1329 = vunpack.c.l.s4 1934713408
      %v1330 = vunpack.c.0.s8 %v1329
      %v1331 = vlaneseq
      %v1332 = vshrl.u32 %v1331, 7
      %v1333 = vsub.s32 %v1330, %v1332
      %v1334 = vrot.slane %v1320, %v1333
      %v1335 = vcombine.low %v1303, %v1318
      %v1336 = vcombine.high %v1303, %v1318
      %v1338 = vunpack.c.l.s4 1934713408
      %v1339 = vunpack.c.0.s8 %v1338
      %v1340 = vlaneseq
      %v1341 = vshrl.u32 %v1340, 7
      %v1342 = vsub.s32 %v1339, %v1341
      %v1343 = vrot.slane %v1335, %v1342
      %v1345 = vunpack.c.l.s4 1934713408
      %v1346 = vunpack.c.0.s8 %v1345
      %v1347 = vlaneseq
      %v1348 = vshrl.u32 %v1347, 7
      %v1349 = vsub.s32 %v1346, %v1348
      %v1350 = vrot.slane %v1336, %v1349
      %v1351 = vcombine.high %v1327, 0
      %v1352 = vcombine.high %v1334, 0
      %v1353 = vcombine.high %v1343, 0
      %v1354 = vcombine.high %v1350, 0
      %v1355 = vcombine.high %v997, %v974
      %v1357 = vunpack.c.l.s4 1983009808
      %v1358 = vunpack.c.0.s8 %v1357
      %v1359 = vlaneseq
      %v1360 = vshrl.u32 %v1359, 7
      %v1361 = vsub.s32 %v1358, %v1360
      %v1362 = vrot.slane %v997, %v1361
      %v1364 = vunpack.c.l.s4 1983009808
      %v1365 = vunpack.c.0.s8 %v1364
      %v1366 = vlaneseq
      %v1367 = vshrl.u32 %v1366, 7
      %v1368 = vsub.s32 %v1365, %v1367
      %v1369 = vrot.slane %v1355, %v1368
      %v1370 = vcombine.high %v1005, %v974
      %v1372 = vunpack.c.l.s4 1983009808
      %v1373 = vunpack.c.0.s8 %v1372
      %v1374 = vlaneseq
      %v1375 = vshrl.u32 %v1374, 7
      %v1376 = vsub.s32 %v1373, %v1375
      %v1377 = vrot.slane %v1005, %v1376
      %v1379 = vunpack.c.l.s4 1983009808
      %v1380 = vunpack.c.0.s8 %v1379
      %v1381 = vlaneseq
      %v1382 = vshrl.u32 %v1381, 7
      %v1383 = vsub.s32 %v1380, %v1382
      %v1384 = vrot.slane %v1370, %v1383
      %v1385 = vcombine.low %v1362, %v1377
      %v1386 = vcombine.high %v1362, %v1377
      %v1388 = vunpack.c.l.s4 1934713408
      %v1389 = vunpack.c.0.s8 %v1388
      %v1390 = vlaneseq
      %v1391 = vshrl.u32 %v1390, 7
      %v1392 = vsub.s32 %v1389, %v1391
      %v1393 = vrot.slane %v1385, %v1392
      %v1395 = vunpack.c.l.s4 1934713408
      %v1396 = vunpack.c.0.s8 %v1395
      %v1397 = vlaneseq
      %v1398 = vshrl.u32 %v1397, 7
      %v1399 = vsub.s32 %v1396, %v1398
      %v1400 = vrot.slane %v1386, %v1399
      %v1401 = vcombine.low %v1369, %v1384
      %v1402 = vcombine.high %v1369, %v1384
      %v1404 = vunpack.c.l.s4 1934713408
      %v1405 = vunpack.c.0.s8 %v1404
      %v1406 = vlaneseq
      %v1407 = vshrl.u32 %v1406, 7
      %v1408 = vsub.s32 %v1405, %v1407
      %v1409 = vrot.slane %v1401, %v1408
      %v1411 = vunpack.c.l.s4 1934713408
      %v1412 = vunpack.c.0.s8 %v1411
      %v1413 = vlaneseq
      %v1414 = vshrl.u32 %v1413, 7
      %v1415 = vsub.s32 %v1412, %v1414
      %v1416 = vrot.slane %v1402, %v1415
      %v1417 = vcombine.high %v1393, 0
      %v1418 = vcombine.high %v1400, 0
      %v1419 = vcombine.high %v1409, 0
      %v1420 = vcombine.high %v1416, 0
      %v1421 = vcombine.high %v1001, %v977
      %v1423 = vunpack.c.l.s4 1983009808
      %v1424 = vunpack.c.0.s8 %v1423
      %v1425 = vlaneseq
      %v1426 = vshrl.u32 %v1425, 7
      %v1427 = vsub.s32 %v1424, %v1426
      %v1428 = vrot.slane %v1001, %v1427
      %v1430 = vunpack.c.l.s4 1983009808
      %v1431 = vunpack.c.0.s8 %v1430
      %v1432 = vlaneseq
      %v1433 = vshrl.u32 %v1432, 7
      %v1434 = vsub.s32 %v1431, %v1433
      %v1435 = vrot.slane %v1421, %v1434
      %v1436 = vcombine.high %v1009, %v977
      %v1438 = vunpack.c.l.s4 1983009808
      %v1439 = vunpack.c.0.s8 %v1438
      %v1440 = vlaneseq
      %v1441 = vshrl.u32 %v1440, 7
      %v1442 = vsub.s32 %v1439, %v1441
      %v1443 = vrot.slane %v1009, %v1442
      %v1445 = vunpack.c.l.s4 1983009808
      %v1446 = vunpack.c.0.s8 %v1445
      %v1447 = vlaneseq
      %v1448 = vshrl.u32 %v1447, 7
      %v1449 = vsub.s32 %v1446, %v1448
      %v1450 = vrot.slane %v1436, %v1449
      %v1451 = vcombine.low %v1428, %v1443
      %v1452 = vcombine.high %v1428, %v1443
      %v1454 = vunpack.c.l.s4 1934713408
      %v1455 = vunpack.c.0.s8 %v1454
      %v1456 = vlaneseq
      %v1457 = vshrl.u32 %v1456, 7
      %v1458 = vsub.s32 %v1455, %v1457
      %v1459 = vrot.slane %v1451, %v1458
      %v1461 = vunpack.c.l.s4 1934713408
      %v1462 = vunpack.c.0.s8 %v1461
      %v1463 = vlaneseq
      %v1464 = vshrl.u32 %v1463, 7
      %v1465 = vsub.s32 %v1462, %v1464
      %v1466 = vrot.slane %v1452, %v1465
      %v1467 = vcombine.low %v1435, %v1450
      %v1468 = vcombine.high %v1435, %v1450
      %v1470 = vunpack.c.l.s4 1934713408
      %v1471 = vunpack.c.0.s8 %v1470
      %v1472 = vlaneseq
      %v1473 = vshrl.u32 %v1472, 7
      %v1474 = vsub.s32 %v1471, %v1473
      %v1475 = vrot.slane %v1467, %v1474
      %v1477 = vunpack.c.l.s4 1934713408
      %v1478 = vunpack.c.0.s8 %v1477
      %v1479 = vlaneseq
      %v1480 = vshrl.u32 %v1479, 7
      %v1481 = vsub.s32 %v1478, %v1480
      %v1482 = vrot.slane %v1468, %v1481
      %v1483 = vcombine.high %v1459, 0
      %v1484 = vcombine.high %v1466, 0
      %v1485 = vcombine.high %v1475, 0
      %v1486 = vcombine.high %v1482, 0
      %v1487 = vcombine.high %v1013, %v974
      %v1489 = vunpack.c.l.s4 1983009808
      %v1490 = vunpack.c.0.s8 %v1489
      %v1491 = vlaneseq
      %v1492 = vshrl.u32 %v1491, 7
      %v1493 = vsub.s32 %v1490, %v1492
      %v1494 = vrot.slane %v1013, %v1493
      %v1496 = vunpack.c.l.s4 1983009808
      %v1497 = vunpack.c.0.s8 %v1496
      %v1498 = vlaneseq
      %v1499 = vshrl.u32 %v1498, 7
      %v1500 = vsub.s32 %v1497, %v1499
      %v1501 = vrot.slane %v1487, %v1500
      %v1502 = vcombine.high %v1021, %v974
      %v1504 = vunpack.c.l.s4 1983009808
      %v1505 = vunpack.c.0.s8 %v1504
      %v1506 = vlaneseq
      %v1507 = vshrl.u32 %v1506, 7
      %v1508 = vsub.s32 %v1505, %v1507
      %v1509 = vrot.slane %v1021, %v1508
      %v1511 = vunpack.c.l.s4 1983009808
      %v1512 = vunpack.c.0.s8 %v1511
      %v1513 = vlaneseq
      %v1514 = vshrl.u32 %v1513, 7
      %v1515 = vsub.s32 %v1512, %v1514
      %v1516 = vrot.slane %v1502, %v1515
      %v1517 = vcombine.low %v1494, %v1509
      %v1518 = vcombine.high %v1494, %v1509
      %v1520 = vunpack.c.l.s4 1934713408
      %v1521 = vunpack.c.0.s8 %v1520
      %v1522 = vlaneseq
      %v1523 = vshrl.u32 %v1522, 7
      %v1524 = vsub.s32 %v1521, %v1523
      %v1525 = vrot.slane %v1517, %v1524
      %v1527 = vunpack.c.l.s4 1934713408
      %v1528 = vunpack.c.0.s8 %v1527
      %v1529 = vlaneseq
      %v1530 = vshrl.u32 %v1529, 7
      %v1531 = vsub.s32 %v1528, %v1530
      %v1532 = vrot.slane %v1518, %v1531
      %v1533 = vcombine.low %v1501, %v1516
      %v1534 = vcombine.high %v1501, %v1516
      %v1536 = vunpack.c.l.s4 1934713408
      %v1537 = vunpack.c.0.s8 %v1536
      %v1538 = vlaneseq
      %v1539 = vshrl.u32 %v1538, 7
      %v1540 = vsub.s32 %v1537, %v1539
      %v1541 = vrot.slane %v1533, %v1540
      %v1543 = vunpack.c.l.s4 1934713408
      %v1544 = vunpack.c.0.s8 %v1543
      %v1545 = vlaneseq
      %v1546 = vshrl.u32 %v1545, 7
      %v1547 = vsub.s32 %v1544, %v1546
      %v1548 = vrot.slane %v1534, %v1547
      %v1549 = vcombine.high %v1525, 0
      %v1550 = vcombine.high %v1532, 0
      %v1551 = vcombine.high %v1541, 0
      %v1552 = vcombine.high %v1548, 0
      %v1553 = vcombine.high %v1017, %v977
      %v1555 = vunpack.c.l.s4 1983009808
      %v1556 = vunpack.c.0.s8 %v1555
      %v1557 = vlaneseq
      %v1558 = vshrl.u32 %v1557, 7
      %v1559 = vsub.s32 %v1556, %v1558
      %v1560 = vrot.slane %v1017, %v1559
      %v1562 = vunpack.c.l.s4 1983009808
      %v1563 = vunpack.c.0.s8 %v1562
      %v1564 = vlaneseq
      %v1565 = vshrl.u32 %v1564, 7
      %v1566 = vsub.s32 %v1563, %v1565
      %v1567 = vrot.slane %v1553, %v1566
      %v1568 = vcombine.high %v1025, %v977
      %v1570 = vunpack.c.l.s4 1983009808
      %v1571 = vunpack.c.0.s8 %v1570
      %v1572 = vlaneseq
      %v1573 = vshrl.u32 %v1572, 7
      %v1574 = vsub.s32 %v1571, %v1573
      %v1575 = vrot.slane %v1025, %v1574
      %v1577 = vunpack.c.l.s4 1983009808
      %v1578 = vunpack.c.0.s8 %v1577
      %v1579 = vlaneseq
      %v1580 = vshrl.u32 %v1579, 7
      %v1581 = vsub.s32 %v1578, %v1580
      %v1582 = vrot.slane %v1568, %v1581
      %v1583 = vcombine.low %v1560, %v1575
      %v1584 = vcombine.high %v1560, %v1575
      %v1586 = vunpack.c.l.s4 1934713408
      %v1587 = vunpack.c.0.s8 %v1586
      %v1588 = vlaneseq
      %v1589 = vshrl.u32 %v1588, 7
      %v1590 = vsub.s32 %v1587, %v1589
      %v1591 = vrot.slane %v1583, %v1590
      %v1593 = vunpack.c.l.s4 1934713408
      %v1594 = vunpack.c.0.s8 %v1593
      %v1595 = vlaneseq
      %v1596 = vshrl.u32 %v1595, 7
      %v1597 = vsub.s32 %v1594, %v1596
      %v1598 = vrot.slane %v1584, %v1597
      %v1599 = vcombine.low %v1567, %v1582
      %v1600 = vcombine.high %v1567, %v1582
      %v1602 = vunpack.c.l.s4 1934713408
      %v1603 = vunpack.c.0.s8 %v1602
      %v1604 = vlaneseq
      %v1605 = vshrl.u32 %v1604, 7
      %v1606 = vsub.s32 %v1603, %v1605
      %v1607 = vrot.slane %v1599, %v1606
      %v1609 = vunpack.c.l.s4 1934713408
      %v1610 = vunpack.c.0.s8 %v1609
      %v1611 = vlaneseq
      %v1612 = vshrl.u32 %v1611, 7
      %v1613 = vsub.s32 %v1610, %v1612
      %v1614 = vrot.slane %v1600, %v1613
      %v1615 = vcombine.high %v1591, 0
      %v1616 = vcombine.high %v1598, 0
      %v1617 = vcombine.high %v1607, 0
      %v1618 = vcombine.high %v1614, 0
      %v1619 = vcombine.high %v1029, %v974
      %v1621 = vunpack.c.l.s4 1983009808
      %v1622 = vunpack.c.0.s8 %v1621
      %v1623 = vlaneseq
      %v1624 = vshrl.u32 %v1623, 7
      %v1625 = vsub.s32 %v1622, %v1624
      %v1626 = vrot.slane %v1029, %v1625
      %v1628 = vunpack.c.l.s4 1983009808
      %v1629 = vunpack.c.0.s8 %v1628
      %v1630 = vlaneseq
      %v1631 = vshrl.u32 %v1630, 7
      %v1632 = vsub.s32 %v1629, %v1631
      %v1633 = vrot.slane %v1619, %v1632
      %v1634 = vcombine.high %v1037, %v974
      %v1636 = vunpack.c.l.s4 1983009808
      %v1637 = vunpack.c.0.s8 %v1636
      %v1638 = vlaneseq
      %v1639 = vshrl.u32 %v1638, 7
      %v1640 = vsub.s32 %v1637, %v1639
      %v1641 = vrot.slane %v1037, %v1640
      %v1643 = vunpack.c.l.s4 1983009808
      %v1644 = vunpack.c.0.s8 %v1643
      %v1645 = vlaneseq
      %v1646 = vshrl.u32 %v1645, 7
      %v1647 = vsub.s32 %v1644, %v1646
      %v1648 = vrot.slane %v1634, %v1647
      %v1649 = vcombine.low %v1626, %v1641
      %v1650 = vcombine.high %v1626, %v1641
      %v1652 = vunpack.c.l.s4 1934713408
      %v1653 = vunpack.c.0.s8 %v1652
      %v1654 = vlaneseq
      %v1655 = vshrl.u32 %v1654, 7
      %v1656 = vsub.s32 %v1653, %v1655
      %v1657 = vrot.slane %v1649, %v1656
      %v1659 = vunpack.c.l.s4 1934713408
      %v1660 = vunpack.c.0.s8 %v1659
      %v1661 = vlaneseq
      %v1662 = vshrl.u32 %v1661, 7
      %v1663 = vsub.s32 %v1660, %v1662
      %v1664 = vrot.slane %v1650, %v1663
      %v1665 = vcombine.low %v1633, %v1648
      %v1666 = vcombine.high %v1633, %v1648
      %v1668 = vunpack.c.l.s4 1934713408
      %v1669 = vunpack.c.0.s8 %v1668
      %v1670 = vlaneseq
      %v1671 = vshrl.u32 %v1670, 7
      %v1672 = vsub.s32 %v1669, %v1671
      %v1673 = vrot.slane %v1665, %v1672
      %v1675 = vunpack.c.l.s4 1934713408
      %v1676 = vunpack.c.0.s8 %v1675
      %v1677 = vlaneseq
      %v1678 = vshrl.u32 %v1677, 7
      %v1679 = vsub.s32 %v1676, %v1678
      %v1680 = vrot.slane %v1666, %v1679
      %v1681 = vcombine.high %v1657, 0
      %v1682 = vcombine.high %v1664, 0
      %v1683 = vcombine.high %v1673, 0
      %v1684 = vcombine.high %v1680, 0
      %v1685 = vcombine.high %v1033, %v977
      %v1687 = vunpack.c.l.s4 1983009808
      %v1688 = vunpack.c.0.s8 %v1687
      %v1689 = vlaneseq
      %v1690 = vshrl.u32 %v1689, 7
      %v1691 = vsub.s32 %v1688, %v1690
      %v1692 = vrot.slane %v1033, %v1691
      %v1694 = vunpack.c.l.s4 1983009808
      %v1695 = vunpack.c.0.s8 %v1694
      %v1696 = vlaneseq
      %v1697 = vshrl.u32 %v1696, 7
      %v1698 = vsub.s32 %v1695, %v1697
      %v1699 = vrot.slane %v1685, %v1698
      %v1700 = vcombine.high %v1041, %v977
      %v1702 = vunpack.c.l.s4 1983009808
      %v1703 = vunpack.c.0.s8 %v1702
      %v1704 = vlaneseq
      %v1705 = vshrl.u32 %v1704, 7
      %v1706 = vsub.s32 %v1703, %v1705
      %v1707 = vrot.slane %v1041, %v1706
      %v1709 = vunpack.c.l.s4 1983009808
      %v1710 = vunpack.c.0.s8 %v1709
      %v1711 = vlaneseq
      %v1712 = vshrl.u32 %v1711, 7
      %v1713 = vsub.s32 %v1710, %v1712
      %v1714 = vrot.slane %v1700, %v1713
      %v1715 = vcombine.low %v1692, %v1707
      %v1716 = vcombine.high %v1692, %v1707
      %v1718 = vunpack.c.l.s4 1934713408
      %v1719 = vunpack.c.0.s8 %v1718
      %v1720 = vlaneseq
      %v1721 = vshrl.u32 %v1720, 7
      %v1722 = vsub.s32 %v1719, %v1721
      %v1723 = vrot.slane %v1715, %v1722
      %v1725 = vunpack.c.l.s4 1934713408
      %v1726 = vunpack.c.0.s8 %v1725
      %v1727 = vlaneseq
      %v1728 = vshrl.u32 %v1727, 7
      %v1729 = vsub.s32 %v1726, %v1728
      %v1730 = vrot.slane %v1716, %v1729
      %v1731 = vcombine.low %v1699, %v1714
      %v1732 = vcombine.high %v1699, %v1714
      %v1734 = vunpack.c.l.s4 1934713408
      %v1735 = vunpack.c.0.s8 %v1734
      %v1736 = vlaneseq
      %v1737 = vshrl.u32 %v1736, 7
      %v1738 = vsub.s32 %v1735, %v1737
      %v1739 = vrot.slane %v1731, %v1738
      %v1741 = vunpack.c.l.s4 1934713408
      %v1742 = vunpack.c.0.s8 %v1741
      %v1743 = vlaneseq
      %v1744 = vshrl.u32 %v1743, 7
      %v1745 = vsub.s32 %v1742, %v1744
      %v1746 = vrot.slane %v1732, %v1745
      %v1747 = vcombine.high %v1723, 0
      %v1748 = vcombine.high %v1730, 0
      %v1749 = vcombine.high %v1739, 0
      %v1750 = vcombine.high %v1746, 0
      %v1751 = vcombine.high %v1045, %v974
      %v1753 = vunpack.c.l.s4 1983009808
      %v1754 = vunpack.c.0.s8 %v1753
      %v1755 = vlaneseq
      %v1756 = vshrl.u32 %v1755, 7
      %v1757 = vsub.s32 %v1754, %v1756
      %v1758 = vrot.slane %v1045, %v1757
      %v1760 = vunpack.c.l.s4 1983009808
      %v1761 = vunpack.c.0.s8 %v1760
      %v1762 = vlaneseq
      %v1763 = vshrl.u32 %v1762, 7
      %v1764 = vsub.s32 %v1761, %v1763
      %v1765 = vrot.slane %v1751, %v1764
      %v1766 = vcombine.high %v1053, %v974
      %v1768 = vunpack.c.l.s4 1983009808
      %v1769 = vunpack.c.0.s8 %v1768
      %v1770 = vlaneseq
      %v1771 = vshrl.u32 %v1770, 7
      %v1772 = vsub.s32 %v1769, %v1771
      %v1773 = vrot.slane %v1053, %v1772
      %v1775 = vunpack.c.l.s4 1983009808
      %v1776 = vunpack.c.0.s8 %v1775
      %v1777 = vlaneseq
      %v1778 = vshrl.u32 %v1777, 7
      %v1779 = vsub.s32 %v1776, %v1778
      %v1780 = vrot.slane %v1766, %v1779
      %v1781 = vcombine.low %v1758, %v1773
      %v1782 = vcombine.high %v1758, %v1773
      %v1784 = vunpack.c.l.s4 1934713408
      %v1785 = vunpack.c.0.s8 %v1784
      %v1786 = vlaneseq
      %v1787 = vshrl.u32 %v1786, 7
      %v1788 = vsub.s32 %v1785, %v1787
      %v1789 = vrot.slane %v1781, %v1788
      %v1791 = vunpack.c.l.s4 1934713408
      %v1792 = vunpack.c.0.s8 %v1791
      %v1793 = vlaneseq
      %v1794 = vshrl.u32 %v1793, 7
      %v1795 = vsub.s32 %v1792, %v1794
      %v1796 = vrot.slane %v1782, %v1795
      %v1797 = vcombine.low %v1765, %v1780
      %v1798 = vcombine.high %v1765, %v1780
      %v1800 = vunpack.c.l.s4 1934713408
      %v1801 = vunpack.c.0.s8 %v1800
      %v1802 = vlaneseq
      %v1803 = vshrl.u32 %v1802, 7
      %v1804 = vsub.s32 %v1801, %v1803
      %v1805 = vrot.slane %v1797, %v1804
      %v1807 = vunpack.c.l.s4 1934713408
      %v1808 = vunpack.c.0.s8 %v1807
      %v1809 = vlaneseq
      %v1810 = vshrl.u32 %v1809, 7
      %v1811 = vsub.s32 %v1808, %v1810
      %v1812 = vrot.slane %v1798, %v1811
      %v1813 = vcombine.high %v1789, 0
      %v1814 = vcombine.high %v1796, 0
      %v1815 = vcombine.high %v1805, 0
      %v1816 = vcombine.high %v1812, 0
      %v1817 = vcombine.high %v1049, %v977
      %v1819 = vunpack.c.l.s4 1983009808
      %v1820 = vunpack.c.0.s8 %v1819
      %v1821 = vlaneseq
      %v1822 = vshrl.u32 %v1821, 7
      %v1823 = vsub.s32 %v1820, %v1822
      %v1824 = vrot.slane %v1049, %v1823
      %v1826 = vunpack.c.l.s4 1983009808
      %v1827 = vunpack.c.0.s8 %v1826
      %v1828 = vlaneseq
      %v1829 = vshrl.u32 %v1828, 7
      %v1830 = vsub.s32 %v1827, %v1829
      %v1831 = vrot.slane %v1817, %v1830
      %v1832 = vcombine.high %v1057, %v977
      %v1834 = vunpack.c.l.s4 1983009808
      %v1835 = vunpack.c.0.s8 %v1834
      %v1836 = vlaneseq
      %v1837 = vshrl.u32 %v1836, 7
      %v1838 = vsub.s32 %v1835, %v1837
      %v1839 = vrot.slane %v1057, %v1838
      %v1841 = vunpack.c.l.s4 1983009808
      %v1842 = vunpack.c.0.s8 %v1841
      %v1843 = vlaneseq
      %v1844 = vshrl.u32 %v1843, 7
      %v1845 = vsub.s32 %v1842, %v1844
      %v1846 = vrot.slane %v1832, %v1845
      %v1847 = vcombine.low %v1824, %v1839
      %v1848 = vcombine.high %v1824, %v1839
      %v1850 = vunpack.c.l.s4 1934713408
      %v1851 = vunpack.c.0.s8 %v1850
      %v1852 = vlaneseq
      %v1853 = vshrl.u32 %v1852, 7
      %v1854 = vsub.s32 %v1851, %v1853
      %v1855 = vrot.slane %v1847, %v1854
      %v1857 = vunpack.c.l.s4 1934713408
      %v1858 = vunpack.c.0.s8 %v1857
      %v1859 = vlaneseq
      %v1860 = vshrl.u32 %v1859, 7
      %v1861 = vsub.s32 %v1858, %v1860
      %v1862 = vrot.slane %v1848, %v1861
      %v1863 = vcombine.low %v1831, %v1846
      %v1864 = vcombine.high %v1831, %v1846
      %v1866 = vunpack.c.l.s4 1934713408
      %v1867 = vunpack.c.0.s8 %v1866
      %v1868 = vlaneseq
      %v1869 = vshrl.u32 %v1868, 7
      %v1870 = vsub.s32 %v1867, %v1869
      %v1871 = vrot.slane %v1863, %v1870
      %v1873 = vunpack.c.l.s4 1934713408
      %v1874 = vunpack.c.0.s8 %v1873
      %v1875 = vlaneseq
      %v1876 = vshrl.u32 %v1875, 7
      %v1877 = vsub.s32 %v1874, %v1876
      %v1878 = vrot.slane %v1864, %v1877
      %v1879 = vcombine.high %v1855, 0
      %v1880 = vcombine.high %v1862, 0
      %v1881 = vcombine.high %v1871, 0
      %v1882 = vcombine.high %v1878, 0
      %v1883 = vcombine.high %v1061, %v974
      %v1885 = vunpack.c.l.s4 1983009808
      %v1886 = vunpack.c.0.s8 %v1885
      %v1887 = vlaneseq
      %v1888 = vshrl.u32 %v1887, 7
      %v1889 = vsub.s32 %v1886, %v1888
      %v1890 = vrot.slane %v1061, %v1889
      %v1892 = vunpack.c.l.s4 1983009808
      %v1893 = vunpack.c.0.s8 %v1892
      %v1894 = vlaneseq
      %v1895 = vshrl.u32 %v1894, 7
      %v1896 = vsub.s32 %v1893, %v1895
      %v1897 = vrot.slane %v1883, %v1896
      %v1898 = vcombine.high %v1069, %v974
      %v1900 = vunpack.c.l.s4 1983009808
      %v1901 = vunpack.c.0.s8 %v1900
      %v1902 = vlaneseq
      %v1903 = vshrl.u32 %v1902, 7
      %v1904 = vsub.s32 %v1901, %v1903
      %v1905 = vrot.slane %v1069, %v1904
      %v1907 = vunpack.c.l.s4 1983009808
      %v1908 = vunpack.c.0.s8 %v1907
      %v1909 = vlaneseq
      %v1910 = vshrl.u32 %v1909, 7
      %v1911 = vsub.s32 %v1908, %v1910
      %v1912 = vrot.slane %v1898, %v1911
      %v1913 = vcombine.low %v1890, %v1905
      %v1914 = vcombine.high %v1890, %v1905
      %v1916 = vunpack.c.l.s4 1934713408
      %v1917 = vunpack.c.0.s8 %v1916
      %v1918 = vlaneseq
      %v1919 = vshrl.u32 %v1918, 7
      %v1920 = vsub.s32 %v1917, %v1919
      %v1921 = vrot.slane %v1913, %v1920
      %v1923 = vunpack.c.l.s4 1934713408
      %v1924 = vunpack.c.0.s8 %v1923
      %v1925 = vlaneseq
      %v1926 = vshrl.u32 %v1925, 7
      %v1927 = vsub.s32 %v1924, %v1926
      %v1928 = vrot.slane %v1914, %v1927
      %v1929 = vcombine.low %v1897, %v1912
      %v1930 = vcombine.high %v1897, %v1912
      %v1932 = vunpack.c.l.s4 1934713408
      %v1933 = vunpack.c.0.s8 %v1932
      %v1934 = vlaneseq
      %v1935 = vshrl.u32 %v1934, 7
      %v1936 = vsub.s32 %v1933, %v1935
      %v1937 = vrot.slane %v1929, %v1936
      %v1939 = vunpack.c.l.s4 1934713408
      %v1940 = vunpack.c.0.s8 %v1939
      %v1941 = vlaneseq
      %v1942 = vshrl.u32 %v1941, 7
      %v1943 = vsub.s32 %v1940, %v1942
      %v1944 = vrot.slane %v1930, %v1943
      %v1945 = vcombine.high %v1921, 0
      %v1946 = vcombine.high %v1928, 0
      %v1947 = vcombine.high %v1937, 0
      %v1948 = vcombine.high %v1944, 0
      %v1949 = vcombine.high %v1065, %v977
      %v1951 = vunpack.c.l.s4 1983009808
      %v1952 = vunpack.c.0.s8 %v1951
      %v1953 = vlaneseq
      %v1954 = vshrl.u32 %v1953, 7
      %v1955 = vsub.s32 %v1952, %v1954
      %v1956 = vrot.slane %v1065, %v1955
      %v1958 = vunpack.c.l.s4 1983009808
      %v1959 = vunpack.c.0.s8 %v1958
      %v1960 = vlaneseq
      %v1961 = vshrl.u32 %v1960, 7
      %v1962 = vsub.s32 %v1959, %v1961
      %v1963 = vrot.slane %v1949, %v1962
      %v1964 = vcombine.high %v1073, %v977
      %v1966 = vunpack.c.l.s4 1983009808
      %v1967 = vunpack.c.0.s8 %v1966
      %v1968 = vlaneseq
      %v1969 = vshrl.u32 %v1968, 7
      %v1970 = vsub.s32 %v1967, %v1969
      %v1971 = vrot.slane %v1073, %v1970
      %v1973 = vunpack.c.l.s4 1983009808
      %v1974 = vunpack.c.0.s8 %v1973
      %v1975 = vlaneseq
      %v1976 = vshrl.u32 %v1975, 7
      %v1977 = vsub.s32 %v1974, %v1976
      %v1978 = vrot.slane %v1964, %v1977
      %v1979 = vcombine.low %v1956, %v1971
      %v1980 = vcombine.high %v1956, %v1971
      %v1982 = vunpack.c.l.s4 1934713408
      %v1983 = vunpack.c.0.s8 %v1982
      %v1984 = vlaneseq
      %v1985 = vshrl.u32 %v1984, 7
      %v1986 = vsub.s32 %v1983, %v1985
      %v1987 = vrot.slane %v1979, %v1986
      %v1989 = vunpack.c.l.s4 1934713408
      %v1990 = vunpack.c.0.s8 %v1989
      %v1991 = vlaneseq
      %v1992 = vshrl.u32 %v1991, 7
      %v1993 = vsub.s32 %v1990, %v1992
      %v1994 = vrot.slane %v1980, %v1993
      %v1995 = vcombine.low %v1963, %v1978
      %v1996 = vcombine.high %v1963, %v1978
      %v1998 = vunpack.c.l.s4 1934713408
      %v1999 = vunpack.c.0.s8 %v1998
      %v2000 = vlaneseq
      %v2001 = vshrl.u32 %v2000, 7
      %v2002 = vsub.s32 %v1999, %v2001
      %v2003 = vrot.slane %v1995, %v2002
      %v2005 = vunpack.c.l.s4 1934713408
      %v2006 = vunpack.c.0.s8 %v2005
      %v2007 = vlaneseq
      %v2008 = vshrl.u32 %v2007, 7
      %v2009 = vsub.s32 %v2006, %v2008
      %v2010 = vrot.slane %v1996, %v2009
      %v2011 = vcombine.high %v1987, 0
      %v2012 = vcombine.high %v1994, 0
      %v2013 = vcombine.high %v2003, 0
      %v2014 = vcombine.high %v2010, 0
      %v2015 = vcombine.high %v1077, %v974
      %v2017 = vunpack.c.l.s4 1983009808
      %v2018 = vunpack.c.0.s8 %v2017
      %v2019 = vlaneseq
      %v2020 = vshrl.u32 %v2019, 7
      %v2021 = vsub.s32 %v2018, %v2020
      %v2022 = vrot.slane %v1077, %v2021
      %v2024 = vunpack.c.l.s4 1983009808
      %v2025 = vunpack.c.0.s8 %v2024
      %v2026 = vlaneseq
      %v2027 = vshrl.u32 %v2026, 7
      %v2028 = vsub.s32 %v2025, %v2027
      %v2029 = vrot.slane %v2015, %v2028
      %v2030 = vcombine.high %v1085, %v974
      %v2032 = vunpack.c.l.s4 1983009808
      %v2033 = vunpack.c.0.s8 %v2032
      %v2034 = vlaneseq
      %v2035 = vshrl.u32 %v2034, 7
      %v2036 = vsub.s32 %v2033, %v2035
      %v2037 = vrot.slane %v1085, %v2036
      %v2039 = vunpack.c.l.s4 1983009808
      %v2040 = vunpack.c.0.s8 %v2039
      %v2041 = vlaneseq
      %v2042 = vshrl.u32 %v2041, 7
      %v2043 = vsub.s32 %v2040, %v2042
      %v2044 = vrot.slane %v2030, %v2043
      %v2045 = vcombine.low %v2022, %v2037
      %v2046 = vcombine.high %v2022, %v2037
      %v2048 = vunpack.c.l.s4 1934713408
      %v2049 = vunpack.c.0.s8 %v2048
      %v2050 = vlaneseq
      %v2051 = vshrl.u32 %v2050, 7
      %v2052 = vsub.s32 %v2049, %v2051
      %v2053 = vrot.slane %v2045, %v2052
      %v2055 = vunpack.c.l.s4 1934713408
      %v2056 = vunpack.c.0.s8 %v2055
      %v2057 = vlaneseq
      %v2058 = vshrl.u32 %v2057, 7
      %v2059 = vsub.s32 %v2056, %v2058
      %v2060 = vrot.slane %v2046, %v2059
      %v2061 = vcombine.low %v2029, %v2044
      %v2062 = vcombine.high %v2029, %v2044
      %v2064 = vunpack.c.l.s4 1934713408
      %v2065 = vunpack.c.0.s8 %v2064
      %v2066 = vlaneseq
      %v2067 = vshrl.u32 %v2066, 7
      %v2068 = vsub.s32 %v2065, %v2067
      %v2069 = vrot.slane %v2061, %v2068
      %v2071 = vunpack.c.l.s4 1934713408
      %v2072 = vunpack.c.0.s8 %v2071
      %v2073 = vlaneseq
      %v2074 = vshrl.u32 %v2073, 7
      %v2075 = vsub.s32 %v2072, %v2074
      %v2076 = vrot.slane %v2062, %v2075
      %v2077 = vcombine.high %v2053, 0
      %v2078 = vcombine.high %v2060, 0
      %v2079 = vcombine.high %v2069, 0
      %v2080 = vcombine.high %v2076, 0
      %v2081 = vcombine.high %v1081, %v977
      %v2083 = vunpack.c.l.s4 1983009808
      %v2084 = vunpack.c.0.s8 %v2083
      %v2085 = vlaneseq
      %v2086 = vshrl.u32 %v2085, 7
      %v2087 = vsub.s32 %v2084, %v2086
      %v2088 = vrot.slane %v1081, %v2087
      %v2090 = vunpack.c.l.s4 1983009808
      %v2091 = vunpack.c.0.s8 %v2090
      %v2092 = vlaneseq
      %v2093 = vshrl.u32 %v2092, 7
      %v2094 = vsub.s32 %v2091, %v2093
      %v2095 = vrot.slane %v2081, %v2094
      %v2096 = vcombine.high %v1089, %v977
      %v2098 = vunpack.c.l.s4 1983009808
      %v2099 = vunpack.c.0.s8 %v2098
      %v2100 = vlaneseq
      %v2101 = vshrl.u32 %v2100, 7
      %v2102 = vsub.s32 %v2099, %v2101
      %v2103 = vrot.slane %v1089, %v2102
      %v2105 = vunpack.c.l.s4 1983009808
      %v2106 = vunpack.c.0.s8 %v2105
      %v2107 = vlaneseq
      %v2108 = vshrl.u32 %v2107, 7
      %v2109 = vsub.s32 %v2106, %v2108
      %v2110 = vrot.slane %v2096, %v2109
      %v2111 = vcombine.low %v2088, %v2103
      %v2112 = vcombine.high %v2088, %v2103
      %v2114 = vunpack.c.l.s4 1934713408
      %v2115 = vunpack.c.0.s8 %v2114
      %v2116 = vlaneseq
      %v2117 = vshrl.u32 %v2116, 7
      %v2118 = vsub.s32 %v2115, %v2117
      %v2119 = vrot.slane %v2111, %v2118
      %v2121 = vunpack.c.l.s4 1934713408
      %v2122 = vunpack.c.0.s8 %v2121
      %v2123 = vlaneseq
      %v2124 = vshrl.u32 %v2123, 7
      %v2125 = vsub.s32 %v2122, %v2124
      %v2126 = vrot.slane %v2112, %v2125
      %v2127 = vcombine.low %v2095, %v2110
      %v2128 = vcombine.high %v2095, %v2110
      %v2130 = vunpack.c.l.s4 1934713408
      %v2131 = vunpack.c.0.s8 %v2130
      %v2132 = vlaneseq
      %v2133 = vshrl.u32 %v2132, 7
      %v2134 = vsub.s32 %v2131, %v2133
      %v2135 = vrot.slane %v2127, %v2134
      %v2137 = vunpack.c.l.s4 1934713408
      %v2138 = vunpack.c.0.s8 %v2137
      %v2139 = vlaneseq
      %v2140 = vshrl.u32 %v2139, 7
      %v2141 = vsub.s32 %v2138, %v2140
      %v2142 = vrot.slane %v2128, %v2141
      %v2143 = vcombine.high %v2119, 0
      %v2144 = vcombine.high %v2126, 0
      %v2145 = vcombine.high %v2135, 0
      %v2146 = vcombine.high %v2142, 0
      %v2147 = vcombine.low %v1129, %v1136
      %v2149 = vunpack.c.l.s4 1983009808
      %v2150 = vunpack.c.0.s8 %v2149
      %v2151 = vlaneseq
      %v2152 = vshrl.u32 %v2151, 7
      %v2153 = vsub.s32 %v2150, %v2152
      %v2154 = vrot.slane %v2147, %v2153
      %v2155 = vcombine.low %v1153, %v1154
      %v2157 = vunpack.c.l.s4 1983009808
      %v2158 = vunpack.c.0.s8 %v2157
      %v2159 = vlaneseq
      %v2160 = vshrl.u32 %v2159, 7
      %v2161 = vsub.s32 %v2158, %v2160
      %v2162 = vrot.slane %v2155, %v2161
      %v2163 = vcombine.low %v1145, %v1152
      %v2165 = vunpack.c.l.s4 1983009808
      %v2166 = vunpack.c.0.s8 %v2165
      %v2167 = vlaneseq
      %v2168 = vshrl.u32 %v2167, 7
      %v2169 = vsub.s32 %v2166, %v2168
      %v2170 = vrot.slane %v2163, %v2169
      %v2171 = vcombine.low %v1155, %v1156
      %v2173 = vunpack.c.l.s4 1983009808
      %v2174 = vunpack.c.0.s8 %v2173
      %v2175 = vlaneseq
      %v2176 = vshrl.u32 %v2175, 7
      %v2177 = vsub.s32 %v2174, %v2176
      %v2178 = vrot.slane %v2171, %v2177
      %v2179 = vcombine.low %v2154, %v2162
      %v2181 = vunpack.c.l.s4 1934713408
      %v2182 = vunpack.c.0.s8 %v2181
      %v2183 = vlaneseq
      %v2184 = vshrl.u32 %v2183, 7
      %v2185 = vsub.s32 %v2182, %v2184
      %v2186 = vrot.slane %v2179, %v2185
      %v2187 = vcombine.low %v2170, %v2178
      %v2189 = vunpack.c.l.s4 1934713408
      %v2190 = vunpack.c.0.s8 %v2189
      %v2191 = vlaneseq
      %v2192 = vshrl.u32 %v2191, 7
      %v2193 = vsub.s32 %v2190, %v2192
      %v2194 = vrot.slane %v2187, %v2193
      %v2195 = vcombine.low %v2186, %v2194
      %v2196 = vcombine.high %v2186, %v2194
      %v2197 = vcombine.low %v1195, %v1202
      %v2199 = vunpack.c.l.s4 1983009808
      %v2200 = vunpack.c.0.s8 %v2199
      %v2201 = vlaneseq
      %v2202 = vshrl.u32 %v2201, 7
      %v2203 = vsub.s32 %v2200, %v2202
      %v2204 = vrot.slane %v2197, %v2203
      %v2205 = vcombine.low %v1219, %v1220
      %v2207 = vunpack.c.l.s4 1983009808
      %v2208 = vunpack.c.0.s8 %v2207
      %v2209 = vlaneseq
      %v2210 = vshrl.u32 %v2209, 7
      %v2211 = vsub.s32 %v2208, %v2210
      %v2212 = vrot.slane %v2205, %v2211
      %v2213 = vcombine.low %v1211, %v1218
      %v2215 = vunpack.c.l.s4 1983009808
      %v2216 = vunpack.c.0.s8 %v2215
      %v2217 = vlaneseq
      %v2218 = vshrl.u32 %v2217, 7
      %v2219 = vsub.s32 %v2216, %v2218
      %v2220 = vrot.slane %v2213, %v2219
      %v2221 = vcombine.low %v1221, %v1222
      %v2223 = vunpack.c.l.s4 1983009808
      %v2224 = vunpack.c.0.s8 %v2223
      %v2225 = vlaneseq
      %v2226 = vshrl.u32 %v2225, 7
      %v2227 = vsub.s32 %v2224, %v2226
      %v2228 = vrot.slane %v2221, %v2227
      %v2229 = vcombine.low %v2204, %v2212
      %v2231 = vunpack.c.l.s4 1934713408
      %v2232 = vunpack.c.0.s8 %v2231
      %v2233 = vlaneseq
      %v2234 = vshrl.u32 %v2233, 7
      %v2235 = vsub.s32 %v2232, %v2234
      %v2236 = vrot.slane %v2229, %v2235
      %v2237 = vcombine.low %v2220, %v2228
      %v2239 = vunpack.c.l.s4 1934713408
      %v2240 = vunpack.c.0.s8 %v2239
      %v2241 = vlaneseq
      %v2242 = vshrl.u32 %v2241, 7
      %v2243 = vsub.s32 %v2240, %v2242
      %v2244 = vrot.slane %v2237, %v2243
      %v2245 = vcombine.low %v2236, %v2244
      %v2246 = vcombine.high %v2236, %v2244
      %v2247 = vcombine.low %v1261, %v1268
      %v2249 = vunpack.c.l.s4 1983009808
      %v2250 = vunpack.c.0.s8 %v2249
      %v2251 = vlaneseq
      %v2252 = vshrl.u32 %v2251, 7
      %v2253 = vsub.s32 %v2250, %v2252
      %v2254 = vrot.slane %v2247, %v2253
      %v2255 = vcombine.low %v1285, %v1286
      %v2257 = vunpack.c.l.s4 1983009808
      %v2258 = vunpack.c.0.s8 %v2257
      %v2259 = vlaneseq
      %v2260 = vshrl.u32 %v2259, 7
      %v2261 = vsub.s32 %v2258, %v2260
      %v2262 = vrot.slane %v2255, %v2261
      %v2263 = vcombine.low %v1277, %v1284
      %v2265 = vunpack.c.l.s4 1983009808
      %v2266 = vunpack.c.0.s8 %v2265
      %v2267 = vlaneseq
      %v2268 = vshrl.u32 %v2267, 7
      %v2269 = vsub.s32 %v2266, %v2268
      %v2270 = vrot.slane %v2263, %v2269
      %v2271 = vcombine.low %v1287, %v1288
      %v2273 = vunpack.c.l.s4 1983009808
      %v2274 = vunpack.c.0.s8 %v2273
      %v2275 = vlaneseq
      %v2276 = vshrl.u32 %v2275, 7
      %v2277 = vsub.s32 %v2274, %v2276
      %v2278 = vrot.slane %v2271, %v2277
      %v2279 = vcombine.low %v2254, %v2262
      %v2281 = vunpack.c.l.s4 1934713408
      %v2282 = vunpack.c.0.s8 %v2281
      %v2283 = vlaneseq
      %v2284 = vshrl.u32 %v2283, 7
      %v2285 = vsub.s32 %v2282, %v2284
      %v2286 = vrot.slane %v2279, %v2285
      %v2287 = vcombine.low %v2270, %v2278
      %v2289 = vunpack.c.l.s4 1934713408
      %v2290 = vunpack.c.0.s8 %v2289
      %v2291 = vlaneseq
      %v2292 = vshrl.u32 %v2291, 7
      %v2293 = vsub.s32 %v2290, %v2292
      %v2294 = vrot.slane %v2287, %v2293
      %v2295 = vcombine.low %v2286, %v2294
      %v2296 = vcombine.high %v2286, %v2294
      %v2297 = vcombine.low %v1327, %v1334
      %v2299 = vunpack.c.l.s4 1983009808
      %v2300 = vunpack.c.0.s8 %v2299
      %v2301 = vlaneseq
      %v2302 = vshrl.u32 %v2301, 7
      %v2303 = vsub.s32 %v2300, %v2302
      %v2304 = vrot.slane %v2297, %v2303
      %v2305 = vcombine.low %v1351, %v1352
      %v2307 = vunpack.c.l.s4 1983009808
      %v2308 = vunpack.c.0.s8 %v2307
      %v2309 = vlaneseq
      %v2310 = vshrl.u32 %v2309, 7
      %v2311 = vsub.s32 %v2308, %v2310
      %v2312 = vrot.slane %v2305, %v2311
      %v2313 = vcombine.low %v1343, %v1350
      %v2315 = vunpack.c.l.s4 1983009808
      %v2316 = vunpack.c.0.s8 %v2315
      %v2317 = vlaneseq
      %v2318 = vshrl.u32 %v2317, 7
      %v2319 = vsub.s32 %v2316, %v2318
      %v2320 = vrot.slane %v2313, %v2319
      %v2321 = vcombine.low %v1353, %v1354
      %v2323 = vunpack.c.l.s4 1983009808
      %v2324 = vunpack.c.0.s8 %v2323
      %v2325 = vlaneseq
      %v2326 = vshrl.u32 %v2325, 7
      %v2327 = vsub.s32 %v2324, %v2326
      %v2328 = vrot.slane %v2321, %v2327
      %v2329 = vcombine.low %v2304, %v2312
      %v2331 = vunpack.c.l.s4 1934713408
      %v2332 = vunpack.c.0.s8 %v2331
      %v2333 = vlaneseq
      %v2334 = vshrl.u32 %v2333, 7
      %v2335 = vsub.s32 %v2332, %v2334
      %v2336 = vrot.slane %v2329, %v2335
      %v2337 = vcombine.low %v2320, %v2328
      %v2339 = vunpack.c.l.s4 1934713408
      %v2340 = vunpack.c.0.s8 %v2339
      %v2341 = vlaneseq
      %v2342 = vshrl.u32 %v2341, 7
      %v2343 = vsub.s32 %v2340, %v2342
      %v2344 = vrot.slane %v2337, %v2343
      %v2345 = vcombine.low %v2336, %v2344
      %v2346 = vcombine.high %v2336, %v2344
      %v2347 = vcombine.low %v1393, %v1400
      %v2349 = vunpack.c.l.s4 1983009808
      %v2350 = vunpack.c.0.s8 %v2349
      %v2351 = vlaneseq
      %v2352 = vshrl.u32 %v2351, 7
      %v2353 = vsub.s32 %v2350, %v2352
      %v2354 = vrot.slane %v2347, %v2353
      %v2355 = vcombine.low %v1417, %v1418
      %v2357 = vunpack.c.l.s4 1983009808
      %v2358 = vunpack.c.0.s8 %v2357
      %v2359 = vlaneseq
      %v2360 = vshrl.u32 %v2359, 7
      %v2361 = vsub.s32 %v2358, %v2360
      %v2362 = vrot.slane %v2355, %v2361
      %v2363 = vcombine.low %v1409, %v1416
      %v2365 = vunpack.c.l.s4 1983009808
      %v2366 = vunpack.c.0.s8 %v2365
      %v2367 = vlaneseq
      %v2368 = vshrl.u32 %v2367, 7
      %v2369 = vsub.s32 %v2366, %v2368
      %v2370 = vrot.slane %v2363, %v2369
      %v2371 = vcombine.low %v1419, %v1420
      %v2373 = vunpack.c.l.s4 1983009808
      %v2374 = vunpack.c.0.s8 %v2373
      %v2375 = vlaneseq
      %v2376 = vshrl.u32 %v2375, 7
      %v2377 = vsub.s32 %v2374, %v2376
      %v2378 = vrot.slane %v2371, %v2377
      %v2379 = vcombine.low %v2354, %v2362
      %v2381 = vunpack.c.l.s4 1934713408
      %v2382 = vunpack.c.0.s8 %v2381
      %v2383 = vlaneseq
      %v2384 = vshrl.u32 %v2383, 7
      %v2385 = vsub.s32 %v2382, %v2384
      %v2386 = vrot.slane %v2379, %v2385
      %v2387 = vcombine.low %v2370, %v2378
      %v2389 = vunpack.c.l.s4 1934713408
      %v2390 = vunpack.c.0.s8 %v2389
      %v2391 = vlaneseq
      %v2392 = vshrl.u32 %v2391, 7
      %v2393 = vsub.s32 %v2390, %v2392
      %v2394 = vrot.slane %v2387, %v2393
      %v2395 = vcombine.low %v2386, %v2394
      %v2396 = vcombine.high %v2386, %v2394
      %v2397 = vcombine.low %v1459, %v1466
      %v2399 = vunpack.c.l.s4 1983009808
      %v2400 = vunpack.c.0.s8 %v2399
      %v2401 = vlaneseq
      %v2402 = vshrl.u32 %v2401, 7
      %v2403 = vsub.s32 %v2400, %v2402
      %v2404 = vrot.slane %v2397, %v2403
      %v2405 = vcombine.low %v1483, %v1484
      %v2407 = vunpack.c.l.s4 1983009808
      %v2408 = vunpack.c.0.s8 %v2407
      %v2409 = vlaneseq
      %v2410 = vshrl.u32 %v2409, 7
      %v2411 = vsub.s32 %v2408, %v2410
      %v2412 = vrot.slane %v2405, %v2411
      %v2413 = vcombine.low %v1475, %v1482
      %v2415 = vunpack.c.l.s4 1983009808
      %v2416 = vunpack.c.0.s8 %v2415
      %v2417 = vlaneseq
      %v2418 = vshrl.u32 %v2417, 7
      %v2419 = vsub.s32 %v2416, %v2418
      %v2420 = vrot.slane %v2413, %v2419
      %v2421 = vcombine.low %v1485, %v1486
      %v2423 = vunpack.c.l.s4 1983009808
      %v2424 = vunpack.c.0.s8 %v2423
      %v2425 = vlaneseq
      %v2426 = vshrl.u32 %v2425, 7
      %v2427 = vsub.s32 %v2424, %v2426
      %v2428 = vrot.slane %v2421, %v2427
      %v2429 = vcombine.low %v2404, %v2412
      %v2431 = vunpack.c.l.s4 1934713408
      %v2432 = vunpack.c.0.s8 %v2431
      %v2433 = vlaneseq
      %v2434 = vshrl.u32 %v2433, 7
      %v2435 = vsub.s32 %v2432, %v2434
      %v2436 = vrot.slane %v2429, %v2435
      %v2437 = vcombine.low %v2420, %v2428
      %v2439 = vunpack.c.l.s4 1934713408
      %v2440 = vunpack.c.0.s8 %v2439
      %v2441 = vlaneseq
      %v2442 = vshrl.u32 %v2441, 7
      %v2443 = vsub.s32 %v2440, %v2442
      %v2444 = vrot.slane %v2437, %v2443
      %v2445 = vcombine.low %v2436, %v2444
      %v2446 = vcombine.high %v2436, %v2444
      %v2447 = vcombine.low %v1525, %v1532
      %v2449 = vunpack.c.l.s4 1983009808
      %v2450 = vunpack.c.0.s8 %v2449
      %v2451 = vlaneseq
      %v2452 = vshrl.u32 %v2451, 7
      %v2453 = vsub.s32 %v2450, %v2452
      %v2454 = vrot.slane %v2447, %v2453
      %v2455 = vcombine.low %v1549, %v1550
      %v2457 = vunpack.c.l.s4 1983009808
      %v2458 = vunpack.c.0.s8 %v2457
      %v2459 = vlaneseq
      %v2460 = vshrl.u32 %v2459, 7
      %v2461 = vsub.s32 %v2458, %v2460
      %v2462 = vrot.slane %v2455, %v2461
      %v2463 = vcombine.low %v1541, %v1548
      %v2465 = vunpack.c.l.s4 1983009808
      %v2466 = vunpack.c.0.s8 %v2465
      %v2467 = vlaneseq
      %v2468 = vshrl.u32 %v2467, 7
      %v2469 = vsub.s32 %v2466, %v2468
      %v2470 = vrot.slane %v2463, %v2469
      %v2471 = vcombine.low %v1551, %v1552
      %v2473 = vunpack.c.l.s4 1983009808
      %v2474 = vunpack.c.0.s8 %v2473
      %v2475 = vlaneseq
      %v2476 = vshrl.u32 %v2475, 7
      %v2477 = vsub.s32 %v2474, %v2476
      %v2478 = vrot.slane %v2471, %v2477
      %v2479 = vcombine.low %v2454, %v2462
      %v2481 = vunpack.c.l.s4 1934713408
      %v2482 = vunpack.c.0.s8 %v2481
      %v2483 = vlaneseq
      %v2484 = vshrl.u32 %v2483, 7
      %v2485 = vsub.s32 %v2482, %v2484
      %v2486 = vrot.slane %v2479, %v2485
      %v2487 = vcombine.low %v2470, %v2478
      %v2489 = vunpack.c.l.s4 1934713408
      %v2490 = vunpack.c.0.s8 %v2489
      %v2491 = vlaneseq
      %v2492 = vshrl.u32 %v2491, 7
      %v2493 = vsub.s32 %v2490, %v2492
      %v2494 = vrot.slane %v2487, %v2493
      %v2495 = vcombine.low %v2486, %v2494
      %v2496 = vcombine.high %v2486, %v2494
      %v2497 = vcombine.low %v1591, %v1598
      %v2499 = vunpack.c.l.s4 1983009808
      %v2500 = vunpack.c.0.s8 %v2499
      %v2501 = vlaneseq
      %v2502 = vshrl.u32 %v2501, 7
      %v2503 = vsub.s32 %v2500, %v2502
      %v2504 = vrot.slane %v2497, %v2503
      %v2505 = vcombine.low %v1615, %v1616
      %v2507 = vunpack.c.l.s4 1983009808
      %v2508 = vunpack.c.0.s8 %v2507
      %v2509 = vlaneseq
      %v2510 = vshrl.u32 %v2509, 7
      %v2511 = vsub.s32 %v2508, %v2510
      %v2512 = vrot.slane %v2505, %v2511
      %v2513 = vcombine.low %v1607, %v1614
      %v2515 = vunpack.c.l.s4 1983009808
      %v2516 = vunpack.c.0.s8 %v2515
      %v2517 = vlaneseq
      %v2518 = vshrl.u32 %v2517, 7
      %v2519 = vsub.s32 %v2516, %v2518
      %v2520 = vrot.slane %v2513, %v2519
      %v2521 = vcombine.low %v1617, %v1618
      %v2523 = vunpack.c.l.s4 1983009808
      %v2524 = vunpack.c.0.s8 %v2523
      %v2525 = vlaneseq
      %v2526 = vshrl.u32 %v2525, 7
      %v2527 = vsub.s32 %v2524, %v2526
      %v2528 = vrot.slane %v2521, %v2527
      %v2529 = vcombine.low %v2504, %v2512
      %v2531 = vunpack.c.l.s4 1934713408
      %v2532 = vunpack.c.0.s8 %v2531
      %v2533 = vlaneseq
      %v2534 = vshrl.u32 %v2533, 7
      %v2535 = vsub.s32 %v2532, %v2534
      %v2536 = vrot.slane %v2529, %v2535
      %v2537 = vcombine.low %v2520, %v2528
      %v2539 = vunpack.c.l.s4 1934713408
      %v2540 = vunpack.c.0.s8 %v2539
      %v2541 = vlaneseq
      %v2542 = vshrl.u32 %v2541, 7
      %v2543 = vsub.s32 %v2540, %v2542
      %v2544 = vrot.slane %v2537, %v2543
      %v2545 = vcombine.low %v2536, %v2544
      %v2546 = vcombine.high %v2536, %v2544
      %v2547 = vcombine.low %v1657, %v1664
      %v2549 = vunpack.c.l.s4 1983009808
      %v2550 = vunpack.c.0.s8 %v2549
      %v2551 = vlaneseq
      %v2552 = vshrl.u32 %v2551, 7
      %v2553 = vsub.s32 %v2550, %v2552
      %v2554 = vrot.slane %v2547, %v2553
      %v2555 = vcombine.low %v1681, %v1682
      %v2557 = vunpack.c.l.s4 1983009808
      %v2558 = vunpack.c.0.s8 %v2557
      %v2559 = vlaneseq
      %v2560 = vshrl.u32 %v2559, 7
      %v2561 = vsub.s32 %v2558, %v2560
      %v2562 = vrot.slane %v2555, %v2561
      %v2563 = vcombine.low %v1673, %v1680
      %v2565 = vunpack.c.l.s4 1983009808
      %v2566 = vunpack.c.0.s8 %v2565
      %v2567 = vlaneseq
      %v2568 = vshrl.u32 %v2567, 7
      %v2569 = vsub.s32 %v2566, %v2568
      %v2570 = vrot.slane %v2563, %v2569
      %v2571 = vcombine.low %v1683, %v1684
      %v2573 = vunpack.c.l.s4 1983009808
      %v2574 = vunpack.c.0.s8 %v2573
      %v2575 = vlaneseq
      %v2576 = vshrl.u32 %v2575, 7
      %v2577 = vsub.s32 %v2574, %v2576
      %v2578 = vrot.slane %v2571, %v2577
      %v2579 = vcombine.low %v2554, %v2562
      %v2581 = vunpack.c.l.s4 1934713408
      %v2582 = vunpack.c.0.s8 %v2581
      %v2583 = vlaneseq
      %v2584 = vshrl.u32 %v2583, 7
      %v2585 = vsub.s32 %v2582, %v2584
      %v2586 = vrot.slane %v2579, %v2585
      %v2587 = vcombine.low %v2570, %v2578
      %v2589 = vunpack.c.l.s4 1934713408
      %v2590 = vunpack.c.0.s8 %v2589
      %v2591 = vlaneseq
      %v2592 = vshrl.u32 %v2591, 7
      %v2593 = vsub.s32 %v2590, %v2592
      %v2594 = vrot.slane %v2587, %v2593
      %v2595 = vcombine.low %v2586, %v2594
      %v2596 = vcombine.high %v2586, %v2594
      %v2597 = vcombine.low %v1723, %v1730
      %v2599 = vunpack.c.l.s4 1983009808
      %v2600 = vunpack.c.0.s8 %v2599
      %v2601 = vlaneseq
      %v2602 = vshrl.u32 %v2601, 7
      %v2603 = vsub.s32 %v2600, %v2602
      %v2604 = vrot.slane %v2597, %v2603
      %v2605 = vcombine.low %v1747, %v1748
      %v2607 = vunpack.c.l.s4 1983009808
      %v2608 = vunpack.c.0.s8 %v2607
      %v2609 = vlaneseq
      %v2610 = vshrl.u32 %v2609, 7
      %v2611 = vsub.s32 %v2608, %v2610
      %v2612 = vrot.slane %v2605, %v2611
      %v2613 = vcombine.low %v1739, %v1746
      %v2615 = vunpack.c.l.s4 1983009808
      %v2616 = vunpack.c.0.s8 %v2615
      %v2617 = vlaneseq
      %v2618 = vshrl.u32 %v2617, 7
      %v2619 = vsub.s32 %v2616, %v2618
      %v2620 = vrot.slane %v2613, %v2619
      %v2621 = vcombine.low %v1749, %v1750
      %v2623 = vunpack.c.l.s4 1983009808
      %v2624 = vunpack.c.0.s8 %v2623
      %v2625 = vlaneseq
      %v2626 = vshrl.u32 %v2625, 7
      %v2627 = vsub.s32 %v2624, %v2626
      %v2628 = vrot.slane %v2621, %v2627
      %v2629 = vcombine.low %v2604, %v2612
      %v2631 = vunpack.c.l.s4 1934713408
      %v2632 = vunpack.c.0.s8 %v2631
      %v2633 = vlaneseq
      %v2634 = vshrl.u32 %v2633, 7
      %v2635 = vsub.s32 %v2632, %v2634
      %v2636 = vrot.slane %v2629, %v2635
      %v2637 = vcombine.low %v2620, %v2628
      %v2639 = vunpack.c.l.s4 1934713408
      %v2640 = vunpack.c.0.s8 %v2639
      %v2641 = vlaneseq
      %v2642 = vshrl.u32 %v2641, 7
      %v2643 = vsub.s32 %v2640, %v2642
      %v2644 = vrot.slane %v2637, %v2643
      %v2645 = vcombine.low %v2636, %v2644
      %v2646 = vcombine.high %v2636, %v2644
      %v2647 = vcombine.low %v1789, %v1796
      %v2649 = vunpack.c.l.s4 1983009808
      %v2650 = vunpack.c.0.s8 %v2649
      %v2651 = vlaneseq
      %v2652 = vshrl.u32 %v2651, 7
      %v2653 = vsub.s32 %v2650, %v2652
      %v2654 = vrot.slane %v2647, %v2653
      %v2655 = vcombine.low %v1813, %v1814
      %v2657 = vunpack.c.l.s4 1983009808
      %v2658 = vunpack.c.0.s8 %v2657
      %v2659 = vlaneseq
      %v2660 = vshrl.u32 %v2659, 7
      %v2661 = vsub.s32 %v2658, %v2660
      %v2662 = vrot.slane %v2655, %v2661
      %v2663 = vcombine.low %v1805, %v1812
      %v2665 = vunpack.c.l.s4 1983009808
      %v2666 = vunpack.c.0.s8 %v2665
      %v2667 = vlaneseq
      %v2668 = vshrl.u32 %v2667, 7
      %v2669 = vsub.s32 %v2666, %v2668
      %v2670 = vrot.slane %v2663, %v2669
      %v2671 = vcombine.low %v1815, %v1816
      %v2673 = vunpack.c.l.s4 1983009808
      %v2674 = vunpack.c.0.s8 %v2673
      %v2675 = vlaneseq
      %v2676 = vshrl.u32 %v2675, 7
      %v2677 = vsub.s32 %v2674, %v2676
      %v2678 = vrot.slane %v2671, %v2677
      %v2679 = vcombine.low %v2654, %v2662
      %v2681 = vunpack.c.l.s4 1934713408
      %v2682 = vunpack.c.0.s8 %v2681
      %v2683 = vlaneseq
      %v2684 = vshrl.u32 %v2683, 7
      %v2685 = vsub.s32 %v2682, %v2684
      %v2686 = vrot.slane %v2679, %v2685
      %v2687 = vcombine.low %v2670, %v2678
      %v2689 = vunpack.c.l.s4 1934713408
      %v2690 = vunpack.c.0.s8 %v2689
      %v2691 = vlaneseq
      %v2692 = vshrl.u32 %v2691, 7
      %v2693 = vsub.s32 %v2690, %v2692
      %v2694 = vrot.slane %v2687, %v2693
      %v2695 = vcombine.low %v2686, %v2694
      %v2696 = vcombine.high %v2686, %v2694
      %v2697 = vcombine.low %v1855, %v1862
      %v2699 = vunpack.c.l.s4 1983009808
      %v2700 = vunpack.c.0.s8 %v2699
      %v2701 = vlaneseq
      %v2702 = vshrl.u32 %v2701, 7
      %v2703 = vsub.s32 %v2700, %v2702
      %v2704 = vrot.slane %v2697, %v2703
      %v2705 = vcombine.low %v1879, %v1880
      %v2707 = vunpack.c.l.s4 1983009808
      %v2708 = vunpack.c.0.s8 %v2707
      %v2709 = vlaneseq
      %v2710 = vshrl.u32 %v2709, 7
      %v2711 = vsub.s32 %v2708, %v2710
      %v2712 = vrot.slane %v2705, %v2711
      %v2713 = vcombine.low %v1871, %v1878
      %v2715 = vunpack.c.l.s4 1983009808
      %v2716 = vunpack.c.0.s8 %v2715
      %v2717 = vlaneseq
      %v2718 = vshrl.u32 %v2717, 7
      %v2719 = vsub.s32 %v2716, %v2718
      %v2720 = vrot.slane %v2713, %v2719
      %v2721 = vcombine.low %v1881, %v1882
      %v2723 = vunpack.c.l.s4 1983009808
      %v2724 = vunpack.c.0.s8 %v2723
      %v2725 = vlaneseq
      %v2726 = vshrl.u32 %v2725, 7
      %v2727 = vsub.s32 %v2724, %v2726
      %v2728 = vrot.slane %v2721, %v2727
      %v2729 = vcombine.low %v2704, %v2712
      %v2731 = vunpack.c.l.s4 1934713408
      %v2732 = vunpack.c.0.s8 %v2731
      %v2733 = vlaneseq
      %v2734 = vshrl.u32 %v2733, 7
      %v2735 = vsub.s32 %v2732, %v2734
      %v2736 = vrot.slane %v2729, %v2735
      %v2737 = vcombine.low %v2720, %v2728
      %v2739 = vunpack.c.l.s4 1934713408
      %v2740 = vunpack.c.0.s8 %v2739
      %v2741 = vlaneseq
      %v2742 = vshrl.u32 %v2741, 7
      %v2743 = vsub.s32 %v2740, %v2742
      %v2744 = vrot.slane %v2737, %v2743
      %v2745 = vcombine.low %v2736, %v2744
      %v2746 = vcombine.high %v2736, %v2744
      %v2747 = vcombine.low %v1921, %v1928
      %v2749 = vunpack.c.l.s4 1983009808
      %v2750 = vunpack.c.0.s8 %v2749
      %v2751 = vlaneseq
      %v2752 = vshrl.u32 %v2751, 7
      %v2753 = vsub.s32 %v2750, %v2752
      %v2754 = vrot.slane %v2747, %v2753
      %v2755 = vcombine.low %v1945, %v1946
      %v2757 = vunpack.c.l.s4 1983009808
      %v2758 = vunpack.c.0.s8 %v2757
      %v2759 = vlaneseq
      %v2760 = vshrl.u32 %v2759, 7
      %v2761 = vsub.s32 %v2758, %v2760
      %v2762 = vrot.slane %v2755, %v2761
      %v2763 = vcombine.low %v1937, %v1944
      %v2765 = vunpack.c.l.s4 1983009808
      %v2766 = vunpack.c.0.s8 %v2765
      %v2767 = vlaneseq
      %v2768 = vshrl.u32 %v2767, 7
      %v2769 = vsub.s32 %v2766, %v2768
      %v2770 = vrot.slane %v2763, %v2769
      %v2771 = vcombine.low %v1947, %v1948
      %v2773 = vunpack.c.l.s4 1983009808
      %v2774 = vunpack.c.0.s8 %v2773
      %v2775 = vlaneseq
      %v2776 = vshrl.u32 %v2775, 7
      %v2777 = vsub.s32 %v2774, %v2776
      %v2778 = vrot.slane %v2771, %v2777
      %v2779 = vcombine.low %v2754, %v2762
      %v2781 = vunpack.c.l.s4 1934713408
      %v2782 = vunpack.c.0.s8 %v2781
      %v2783 = vlaneseq
      %v2784 = vshrl.u32 %v2783, 7
      %v2785 = vsub.s32 %v2782, %v2784
      %v2786 = vrot.slane %v2779, %v2785
      %v2787 = vcombine.low %v2770, %v2778
      %v2789 = vunpack.c.l.s4 1934713408
      %v2790 = vunpack.c.0.s8 %v2789
      %v2791 = vlaneseq
      %v2792 = vshrl.u32 %v2791, 7
      %v2793 = vsub.s32 %v2790, %v2792
      %v2794 = vrot.slane %v2787, %v2793
      %v2795 = vcombine.low %v2786, %v2794
      %v2796 = vcombine.high %v2786, %v2794
      %v2797 = vcombine.low %v1987, %v1994
      %v2799 = vunpack.c.l.s4 1983009808
      %v2800 = vunpack.c.0.s8 %v2799
      %v2801 = vlaneseq
      %v2802 = vshrl.u32 %v2801, 7
      %v2803 = vsub.s32 %v2800, %v2802
      %v2804 = vrot.slane %v2797, %v2803
      %v2805 = vcombine.low %v2011, %v2012
      %v2807 = vunpack.c.l.s4 1983009808
      %v2808 = vunpack.c.0.s8 %v2807
      %v2809 = vlaneseq
      %v2810 = vshrl.u32 %v2809, 7
      %v2811 = vsub.s32 %v2808, %v2810
      %v2812 = vrot.slane %v2805, %v2811
      %v2813 = vcombine.low %v2003, %v2010
      %v2815 = vunpack.c.l.s4 1983009808
      %v2816 = vunpack.c.0.s8 %v2815
      %v2817 = vlaneseq
      %v2818 = vshrl.u32 %v2817, 7
      %v2819 = vsub.s32 %v2816, %v2818
      %v2820 = vrot.slane %v2813, %v2819
      %v2821 = vcombine.low %v2013, %v2014
      %v2823 = vunpack.c.l.s4 1983009808
      %v2824 = vunpack.c.0.s8 %v2823
      %v2825 = vlaneseq
      %v2826 = vshrl.u32 %v2825, 7
      %v2827 = vsub.s32 %v2824, %v2826
      %v2828 = vrot.slane %v2821, %v2827
      %v2829 = vcombine.low %v2804, %v2812
      %v2831 = vunpack.c.l.s4 1934713408
      %v2832 = vunpack.c.0.s8 %v2831
      %v2833 = vlaneseq
      %v2834 = vshrl.u32 %v2833, 7
      %v2835 = vsub.s32 %v2832, %v2834
      %v2836 = vrot.slane %v2829, %v2835
      %v2837 = vcombine.low %v2820, %v2828
      %v2839 = vunpack.c.l.s4 1934713408
      %v2840 = vunpack.c.0.s8 %v2839
      %v2841 = vlaneseq
      %v2842 = vshrl.u32 %v2841, 7
      %v2843 = vsub.s32 %v2840, %v2842
      %v2844 = vrot.slane %v2837, %v2843
      %v2845 = vcombine.low %v2836, %v2844
      %v2846 = vcombine.high %v2836, %v2844
      %v2847 = vcombine.low %v2053, %v2060
      %v2849 = vunpack.c.l.s4 1983009808
      %v2850 = vunpack.c.0.s8 %v2849
      %v2851 = vlaneseq
      %v2852 = vshrl.u32 %v2851, 7
      %v2853 = vsub.s32 %v2850, %v2852
      %v2854 = vrot.slane %v2847, %v2853
      %v2855 = vcombine.low %v2077, %v2078
      %v2857 = vunpack.c.l.s4 1983009808
      %v2858 = vunpack.c.0.s8 %v2857
      %v2859 = vlaneseq
      %v2860 = vshrl.u32 %v2859, 7
      %v2861 = vsub.s32 %v2858, %v2860
      %v2862 = vrot.slane %v2855, %v2861
      %v2863 = vcombine.low %v2069, %v2076
      %v2865 = vunpack.c.l.s4 1983009808
      %v2866 = vunpack.c.0.s8 %v2865
      %v2867 = vlaneseq
      %v2868 = vshrl.u32 %v2867, 7
      %v2869 = vsub.s32 %v2866, %v2868
      %v2870 = vrot.slane %v2863, %v2869
      %v2871 = vcombine.low %v2079, %v2080
      %v2873 = vunpack.c.l.s4 1983009808
      %v2874 = vunpack.c.0.s8 %v2873
      %v2875 = vlaneseq
      %v2876 = vshrl.u32 %v2875, 7
      %v2877 = vsub.s32 %v2874, %v2876
      %v2878 = vrot.slane %v2871, %v2877
      %v2879 = vcombine.low %v2854, %v2862
      %v2881 = vunpack.c.l.s4 1934713408
      %v2882 = vunpack.c.0.s8 %v2881
      %v2883 = vlaneseq
      %v2884 = vshrl.u32 %v2883, 7
      %v2885 = vsub.s32 %v2882, %v2884
      %v2886 = vrot.slane %v2879, %v2885
      %v2887 = vcombine.low %v2870, %v2878
      %v2889 = vunpack.c.l.s4 1934713408
      %v2890 = vunpack.c.0.s8 %v2889
      %v2891 = vlaneseq
      %v2892 = vshrl.u32 %v2891, 7
      %v2893 = vsub.s32 %v2890, %v2892
      %v2894 = vrot.slane %v2887, %v2893
      %v2895 = vcombine.low %v2886, %v2894
      %v2896 = vcombine.high %v2886, %v2894
      %v2897 = vcombine.low %v2119, %v2126
      %v2899 = vunpack.c.l.s4 1983009808
      %v2900 = vunpack.c.0.s8 %v2899
      %v2901 = vlaneseq
      %v2902 = vshrl.u32 %v2901, 7
      %v2903 = vsub.s32 %v2900, %v2902
      %v2904 = vrot.slane %v2897, %v2903
      %v2905 = vcombine.low %v2143, %v2144
      %v2907 = vunpack.c.l.s4 1983009808
      %v2908 = vunpack.c.0.s8 %v2907
      %v2909 = vlaneseq
      %v2910 = vshrl.u32 %v2909, 7
      %v2911 = vsub.s32 %v2908, %v2910
      %v2912 = vrot.slane %v2905, %v2911
      %v2913 = vcombine.low %v2135, %v2142
      %v2915 = vunpack.c.l.s4 1983009808
      %v2916 = vunpack.c.0.s8 %v2915
      %v2917 = vlaneseq
      %v2918 = vshrl.u32 %v2917, 7
      %v2919 = vsub.s32 %v2916, %v2918
      %v2920 = vrot.slane %v2913, %v2919
      %v2921 = vcombine.low %v2145, %v2146
      %v2923 = vunpack.c.l.s4 1983009808
      %v2924 = vunpack.c.0.s8 %v2923
      %v2925 = vlaneseq
      %v2926 = vshrl.u32 %v2925, 7
      %v2927 = vsub.s32 %v2924, %v2926
      %v2928 = vrot.slane %v2921, %v2927
      %v2929 = vcombine.low %v2904, %v2912
      %v2931 = vunpack.c.l.s4 1934713408
      %v2932 = vunpack.c.0.s8 %v2931
      %v2933 = vlaneseq
      %v2934 = vshrl.u32 %v2933, 7
      %v2935 = vsub.s32 %v2932, %v2934
      %v2936 = vrot.slane %v2929, %v2935
      %v2937 = vcombine.low %v2920, %v2928
      %v2939 = vunpack.c.l.s4 1934713408
      %v2940 = vunpack.c.0.s8 %v2939
      %v2941 = vlaneseq
      %v2942 = vshrl.u32 %v2941, 7
      %v2943 = vsub.s32 %v2940, %v2942
      %v2944 = vrot.slane %v2937, %v2943
      %v2945 = vcombine.low %v2936, %v2944
      %v2946 = vcombine.high %v2936, %v2944
      %v2949 = vpack.i.b16 %v2245, %v2195
      %v2950 = vshrl.u32 %v2195, 16
      %v2951 = vshrl.u32 %v2245, 16
      %v2952 = vpack.i.b16 %v2951, %v2950
      %v2955 = vpack.i.b16 %v2246, %v2196
      %v2956 = vshrl.u32 %v2196, 16
      %v2957 = vshrl.u32 %v2246, 16
      %v2958 = vpack.i.b16 %v2957, %v2956
      %v2961 = vpack.i.b16 %v2345, %v2295
      %v2962 = vshrl.u32 %v2295, 16
      %v2963 = vshrl.u32 %v2345, 16
      %v2964 = vpack.i.b16 %v2963, %v2962
      %v2967 = vpack.i.b16 %v2346, %v2296
      %v2968 = vshrl.u32 %v2296, 16
      %v2969 = vshrl.u32 %v2346, 16
      %v2970 = vpack.i.b16 %v2969, %v2968
      %v2973 = vpack.i.b16 %v2445, %v2395
      %v2974 = vshrl.u32 %v2395, 16
      %v2975 = vshrl.u32 %v2445, 16
      %v2976 = vpack.i.b16 %v2975, %v2974
      %v2979 = vpack.i.b16 %v2446, %v2396
      %v2980 = vshrl.u32 %v2396, 16
      %v2981 = vshrl.u32 %v2446, 16
      %v2982 = vpack.i.b16 %v2981, %v2980
      %v2985 = vpack.i.b16 %v2545, %v2495
      %v2986 = vshrl.u32 %v2495, 16
      %v2987 = vshrl.u32 %v2545, 16
      %v2988 = vpack.i.b16 %v2987, %v2986
      %v2991 = vpack.i.b16 %v2546, %v2496
      %v2992 = vshrl.u32 %v2496, 16
      %v2993 = vshrl.u32 %v2546, 16
      %v2994 = vpack.i.b16 %v2993, %v2992
      %v2997 = vpack.i.b16 %v2645, %v2595
      %v2998 = vshrl.u32 %v2595, 16
      %v2999 = vshrl.u32 %v2645, 16
      %v3000 = vpack.i.b16 %v2999, %v2998
      %v3003 = vpack.i.b16 %v2646, %v2596
      %v3004 = vshrl.u32 %v2596, 16
      %v3005 = vshrl.u32 %v2646, 16
      %v3006 = vpack.i.b16 %v3005, %v3004
      %v3009 = vpack.i.b16 %v2745, %v2695
      %v3010 = vshrl.u32 %v2695, 16
      %v3011 = vshrl.u32 %v2745, 16
      %v3012 = vpack.i.b16 %v3011, %v3010
      %v3015 = vpack.i.b16 %v2746, %v2696
      %v3016 = vshrl.u32 %v2696, 16
      %v3017 = vshrl.u32 %v2746, 16
      %v3018 = vpack.i.b16 %v3017, %v3016
      %v3021 = vpack.i.b16 %v2845, %v2795
      %v3022 = vshrl.u32 %v2795, 16
      %v3023 = vshrl.u32 %v2845, 16
      %v3024 = vpack.i.b16 %v3023, %v3022
      %v3027 = vpack.i.b16 %v2846, %v2796
      %v3028 = vshrl.u32 %v2796, 16
      %v3029 = vshrl.u32 %v2846, 16
      %v3030 = vpack.i.b16 %v3029, %v3028
      %v3033 = vpack.i.b16 %v2945, %v2895
      %v3034 = vshrl.u32 %v2895, 16
      %v3035 = vshrl.u32 %v2945, 16
      %v3036 = vpack.i.b16 %v3035, %v3034
      %v3039 = vpack.i.b16 %v2946, %v2896
      %v3040 = vshrl.u32 %v2896, 16
      %v3041 = vshrl.u32 %v2946, 16
      %v3042 = vpack.i.b16 %v3041, %v3040
      %3043 = vrot.lane.b32.xlu0 %v893, 96
      %v3044 = vpop.permute.xlu0 %3043
      %3045 = vrot.lane.b32.xlu0 %v894, 96
      %v3046 = vpop.permute.xlu0 %3045
      %3047 = vrot.lane.b32.xlu0 %v895, 96
      %v3048 = vpop.permute.xlu0 %3047
      %3049 = vrot.lane.b32.xlu0 %v896, 96
      %v3050 = vpop.permute.xlu0 %3049
      %3051 = vrot.lane.b32.xlu0 %v897, 96
      %v3052 = vpop.permute.xlu0 %3051
      %3053 = vrot.lane.b32.xlu0 %v898, 96
      %v3054 = vpop.permute.xlu0 %3053
      %3055 = vrot.lane.b32.xlu0 %v899, 96
      %v3056 = vpop.permute.xlu0 %3055
      %3057 = vrot.lane.b32.xlu0 %v900, 96
      %v3058 = vpop.permute.xlu0 %3057
      %3059 = vrot.lane.b32.xlu0 %v910, 96
      %v3060 = vpop.permute.xlu0 %3059
      %3061 = vrot.lane.b32.xlu0 %v912, 96
      %v3062 = vpop.permute.xlu0 %3061
      %3063 = vrot.lane.b32.xlu0 %v914, 96
      %v3064 = vpop.permute.xlu0 %3063
      %3065 = vrot.lane.b32.xlu0 %v916, 96
      %v3066 = vpop.permute.xlu0 %3065
      %3067 = vrot.lane.b32.xlu0 %v918, 96
      %v3068 = vpop.permute.xlu0 %3067
      %3069 = vrot.lane.b32.xlu0 %v920, 96
      %v3070 = vpop.permute.xlu0 %3069
      %3071 = vrot.lane.b32.xlu0 %v922, 96
      %v3072 = vpop.permute.xlu0 %3071
      %3073 = vrot.lane.b32.xlu0 %v924, 96
      %v3074 = vpop.permute.xlu0 %3073
      %3075 = vrot.lane.b32.xlu0 %v926, 96
      %v3076 = vpop.permute.xlu0 %3075
      %3077 = vrot.lane.b32.xlu0 %v928, 96
      %v3078 = vpop.permute.xlu0 %3077
      %3079 = vrot.lane.b32.xlu0 %v930, 96
      %v3080 = vpop.permute.xlu0 %3079
      %3081 = vrot.lane.b32.xlu0 %v932, 96
      %v3082 = vpop.permute.xlu0 %3081
      %3083 = vrot.lane.b32.xlu0 %v934, 96
      %v3084 = vpop.permute.xlu0 %3083
      %3085 = vrot.lane.b32.xlu0 %v936, 96
      %v3086 = vpop.permute.xlu0 %3085
      %3087 = vrot.lane.b32.xlu0 %v938, 96
      %v3088 = vpop.permute.xlu0 %3087
      %3089 = vrot.lane.b32.xlu0 %v940, 96
      %v3090 = vpop.permute.xlu0 %3089
      %3091 = vrot.lane.b32.xlu0 %v942, 96
      %v3092 = vpop.permute.xlu0 %3091
      %3093 = vrot.lane.b32.xlu0 %v944, 96
      %v3094 = vpop.permute.xlu0 %3093
      %3095 = vrot.lane.b32.xlu0 %v946, 96
      %v3096 = vpop.permute.xlu0 %3095
      %3097 = vrot.lane.b32.xlu0 %v948, 96
      %v3098 = vpop.permute.xlu0 %3097
      %3099 = vrot.lane.b32.xlu0 %v950, 96
      %v3100 = vpop.permute.xlu0 %3099
      %3101 = vrot.lane.b32.xlu0 %v952, 96
      %v3102 = vpop.permute.xlu0 %3101
      %3103 = vrot.lane.b32.xlu0 %v954, 96
      %v3104 = vpop.permute.xlu0 %3103
      %3105 = vrot.lane.b32.xlu0 %v956, 96
      %v3106 = vpop.permute.xlu0 %3105
      %v3109 = vpack.i.b16 %v3060, %v3044
      %v3111 = vshrl.u32 %v3044, 16
      %v3112 = vshrl.u32 %v3060, 16
      %v3113 = vpack.i.b16 %v3112, %v3111
      %v3117 = vpack.i.b16 %v3092, %v3076
      %v3119 = vshrl.u32 %v3076, 16
      %v3120 = vshrl.u32 %v3092, 16
      %v3121 = vpack.i.b16 %v3120, %v3119
      %v3125 = vpack.i.b16 %v3062, %v3046
      %v3127 = vshrl.u32 %v3046, 16
      %v3128 = vshrl.u32 %v3062, 16
      %v3129 = vpack.i.b16 %v3128, %v3127
      %v3133 = vpack.i.b16 %v3094, %v3078
      %v3135 = vshrl.u32 %v3078, 16
      %v3136 = vshrl.u32 %v3094, 16
      %v3137 = vpack.i.b16 %v3136, %v3135
      %v3141 = vpack.i.b16 %v3064, %v3048
      %v3143 = vshrl.u32 %v3048, 16
      %v3144 = vshrl.u32 %v3064, 16
      %v3145 = vpack.i.b16 %v3144, %v3143
      %v3149 = vpack.i.b16 %v3096, %v3080
      %v3151 = vshrl.u32 %v3080, 16
      %v3152 = vshrl.u32 %v3096, 16
      %v3153 = vpack.i.b16 %v3152, %v3151
      %v3157 = vpack.i.b16 %v3066, %v3050
      %v3159 = vshrl.u32 %v3050, 16
      %v3160 = vshrl.u32 %v3066, 16
      %v3161 = vpack.i.b16 %v3160, %v3159
      %v3165 = vpack.i.b16 %v3098, %v3082
      %v3167 = vshrl.u32 %v3082, 16
      %v3168 = vshrl.u32 %v3098, 16
      %v3169 = vpack.i.b16 %v3168, %v3167
      %v3173 = vpack.i.b16 %v3068, %v3052
      %v3175 = vshrl.u32 %v3052, 16
      %v3176 = vshrl.u32 %v3068, 16
      %v3177 = vpack.i.b16 %v3176, %v3175
      %v3181 = vpack.i.b16 %v3100, %v3084
      %v3183 = vshrl.u32 %v3084, 16
      %v3184 = vshrl.u32 %v3100, 16
      %v3185 = vpack.i.b16 %v3184, %v3183
      %v3189 = vpack.i.b16 %v3070, %v3054
      %v3191 = vshrl.u32 %v3054, 16
      %v3192 = vshrl.u32 %v3070, 16
      %v3193 = vpack.i.b16 %v3192, %v3191
      %v3197 = vpack.i.b16 %v3102, %v3086
      %v3199 = vshrl.u32 %v3086, 16
      %v3200 = vshrl.u32 %v3102, 16
      %v3201 = vpack.i.b16 %v3200, %v3199
      %v3205 = vpack.i.b16 %v3072, %v3056
      %v3207 = vshrl.u32 %v3056, 16
      %v3208 = vshrl.u32 %v3072, 16
      %v3209 = vpack.i.b16 %v3208, %v3207
      %v3213 = vpack.i.b16 %v3104, %v3088
      %v3215 = vshrl.u32 %v3088, 16
      %v3216 = vshrl.u32 %v3104, 16
      %v3217 = vpack.i.b16 %v3216, %v3215
      %v3221 = vpack.i.b16 %v3074, %v3058
      %v3223 = vshrl.u32 %v3058, 16
      %v3224 = vshrl.u32 %v3074, 16
      %v3225 = vpack.i.b16 %v3224, %v3223
      %v3229 = vpack.i.b16 %v3106, %v3090
      %v3231 = vshrl.u32 %v3090, 16
      %v3232 = vshrl.u32 %v3106, 16
      %v3233 = vpack.i.b16 %v3232, %v3231
      %v3235 = vcombine.high %v3109, %v974
      %v3237 = vunpack.c.l.s4 1983009808
      %v3238 = vunpack.c.0.s8 %v3237
      %v3239 = vlaneseq
      %v3240 = vshrl.u32 %v3239, 7
      %v3241 = vsub.s32 %v3238, %v3240
      %v3242 = vrot.slane %v3109, %v3241
      %v3244 = vunpack.c.l.s4 1983009808
      %v3245 = vunpack.c.0.s8 %v3244
      %v3246 = vlaneseq
      %v3247 = vshrl.u32 %v3246, 7
      %v3248 = vsub.s32 %v3245, %v3247
      %v3249 = vrot.slane %v3235, %v3248
      %v3250 = vcombine.high %v3117, %v974
      %v3252 = vunpack.c.l.s4 1983009808
      %v3253 = vunpack.c.0.s8 %v3252
      %v3254 = vlaneseq
      %v3255 = vshrl.u32 %v3254, 7
      %v3256 = vsub.s32 %v3253, %v3255
      %v3257 = vrot.slane %v3117, %v3256
      %v3259 = vunpack.c.l.s4 1983009808
      %v3260 = vunpack.c.0.s8 %v3259
      %v3261 = vlaneseq
      %v3262 = vshrl.u32 %v3261, 7
      %v3263 = vsub.s32 %v3260, %v3262
      %v3264 = vrot.slane %v3250, %v3263
      %v3265 = vcombine.low %v3242, %v3257
      %v3266 = vcombine.high %v3242, %v3257
      %v3268 = vunpack.c.l.s4 1934713408
      %v3269 = vunpack.c.0.s8 %v3268
      %v3270 = vlaneseq
      %v3271 = vshrl.u32 %v3270, 7
      %v3272 = vsub.s32 %v3269, %v3271
      %v3273 = vrot.slane %v3265, %v3272
      %v3275 = vunpack.c.l.s4 1934713408
      %v3276 = vunpack.c.0.s8 %v3275
      %v3277 = vlaneseq
      %v3278 = vshrl.u32 %v3277, 7
      %v3279 = vsub.s32 %v3276, %v3278
      %v3280 = vrot.slane %v3266, %v3279
      %v3281 = vcombine.low %v3249, %v3264
      %v3282 = vcombine.high %v3249, %v3264
      %v3284 = vunpack.c.l.s4 1934713408
      %v3285 = vunpack.c.0.s8 %v3284
      %v3286 = vlaneseq
      %v3287 = vshrl.u32 %v3286, 7
      %v3288 = vsub.s32 %v3285, %v3287
      %v3289 = vrot.slane %v3281, %v3288
      %v3291 = vunpack.c.l.s4 1934713408
      %v3292 = vunpack.c.0.s8 %v3291
      %v3293 = vlaneseq
      %v3294 = vshrl.u32 %v3293, 7
      %v3295 = vsub.s32 %v3292, %v3294
      %v3296 = vrot.slane %v3282, %v3295
      %v3297 = vcombine.high %v3273, 0
      %v3298 = vcombine.high %v3280, 0
      %v3299 = vcombine.high %v3289, 0
      %v3300 = vcombine.high %v3296, 0
      %v3301 = vcombine.high %v3113, %v977
      %v3303 = vunpack.c.l.s4 1983009808
      %v3304 = vunpack.c.0.s8 %v3303
      %v3305 = vlaneseq
      %v3306 = vshrl.u32 %v3305, 7
      %v3307 = vsub.s32 %v3304, %v3306
      %v3308 = vrot.slane %v3113, %v3307
      %v3310 = vunpack.c.l.s4 1983009808
      %v3311 = vunpack.c.0.s8 %v3310
      %v3312 = vlaneseq
      %v3313 = vshrl.u32 %v3312, 7
      %v3314 = vsub.s32 %v3311, %v3313
      %v3315 = vrot.slane %v3301, %v3314
      %v3316 = vcombine.high %v3121, %v977
      %v3318 = vunpack.c.l.s4 1983009808
      %v3319 = vunpack.c.0.s8 %v3318
      %v3320 = vlaneseq
      %v3321 = vshrl.u32 %v3320, 7
      %v3322 = vsub.s32 %v3319, %v3321
      %v3323 = vrot.slane %v3121, %v3322
      %v3325 = vunpack.c.l.s4 1983009808
      %v3326 = vunpack.c.0.s8 %v3325
      %v3327 = vlaneseq
      %v3328 = vshrl.u32 %v3327, 7
      %v3329 = vsub.s32 %v3326, %v3328
      %v3330 = vrot.slane %v3316, %v3329
      %v3331 = vcombine.low %v3308, %v3323
      %v3332 = vcombine.high %v3308, %v3323
      %v3334 = vunpack.c.l.s4 1934713408
      %v3335 = vunpack.c.0.s8 %v3334
      %v3336 = vlaneseq
      %v3337 = vshrl.u32 %v3336, 7
      %v3338 = vsub.s32 %v3335, %v3337
      %v3339 = vrot.slane %v3331, %v3338
      %v3341 = vunpack.c.l.s4 1934713408
      %v3342 = vunpack.c.0.s8 %v3341
      %v3343 = vlaneseq
      %v3344 = vshrl.u32 %v3343, 7
      %v3345 = vsub.s32 %v3342, %v3344
      %v3346 = vrot.slane %v3332, %v3345
      %v3347 = vcombine.low %v3315, %v3330
      %v3348 = vcombine.high %v3315, %v3330
      %v3350 = vunpack.c.l.s4 1934713408
      %v3351 = vunpack.c.0.s8 %v3350
      %v3352 = vlaneseq
      %v3353 = vshrl.u32 %v3352, 7
      %v3354 = vsub.s32 %v3351, %v3353
      %v3355 = vrot.slane %v3347, %v3354
      %v3357 = vunpack.c.l.s4 1934713408
      %v3358 = vunpack.c.0.s8 %v3357
      %v3359 = vlaneseq
      %v3360 = vshrl.u32 %v3359, 7
      %v3361 = vsub.s32 %v3358, %v3360
      %v3362 = vrot.slane %v3348, %v3361
      %v3363 = vcombine.high %v3339, 0
      %v3364 = vcombine.high %v3346, 0
      %v3365 = vcombine.high %v3355, 0
      %v3366 = vcombine.high %v3362, 0
      %v3367 = vcombine.high %v3125, %v974
      %v3369 = vunpack.c.l.s4 1983009808
      %v3370 = vunpack.c.0.s8 %v3369
      %v3371 = vlaneseq
      %v3372 = vshrl.u32 %v3371, 7
      %v3373 = vsub.s32 %v3370, %v3372
      %v3374 = vrot.slane %v3125, %v3373
      %v3376 = vunpack.c.l.s4 1983009808
      %v3377 = vunpack.c.0.s8 %v3376
      %v3378 = vlaneseq
      %v3379 = vshrl.u32 %v3378, 7
      %v3380 = vsub.s32 %v3377, %v3379
      %v3381 = vrot.slane %v3367, %v3380
      %v3382 = vcombine.high %v3133, %v974
      %v3384 = vunpack.c.l.s4 1983009808
      %v3385 = vunpack.c.0.s8 %v3384
      %v3386 = vlaneseq
      %v3387 = vshrl.u32 %v3386, 7
      %v3388 = vsub.s32 %v3385, %v3387
      %v3389 = vrot.slane %v3133, %v3388
      %v3391 = vunpack.c.l.s4 1983009808
      %v3392 = vunpack.c.0.s8 %v3391
      %v3393 = vlaneseq
      %v3394 = vshrl.u32 %v3393, 7
      %v3395 = vsub.s32 %v3392, %v3394
      %v3396 = vrot.slane %v3382, %v3395
      %v3397 = vcombine.low %v3374, %v3389
      %v3398 = vcombine.high %v3374, %v3389
      %v3400 = vunpack.c.l.s4 1934713408
      %v3401 = vunpack.c.0.s8 %v3400
      %v3402 = vlaneseq
      %v3403 = vshrl.u32 %v3402, 7
      %v3404 = vsub.s32 %v3401, %v3403
      %v3405 = vrot.slane %v3397, %v3404
      %v3407 = vunpack.c.l.s4 1934713408
      %v3408 = vunpack.c.0.s8 %v3407
      %v3409 = vlaneseq
      %v3410 = vshrl.u32 %v3409, 7
      %v3411 = vsub.s32 %v3408, %v3410
      %v3412 = vrot.slane %v3398, %v3411
      %v3413 = vcombine.low %v3381, %v3396
      %v3414 = vcombine.high %v3381, %v3396
      %v3416 = vunpack.c.l.s4 1934713408
      %v3417 = vunpack.c.0.s8 %v3416
      %v3418 = vlaneseq
      %v3419 = vshrl.u32 %v3418, 7
      %v3420 = vsub.s32 %v3417, %v3419
      %v3421 = vrot.slane %v3413, %v3420
      %v3423 = vunpack.c.l.s4 1934713408
      %v3424 = vunpack.c.0.s8 %v3423
      %v3425 = vlaneseq
      %v3426 = vshrl.u32 %v3425, 7
      %v3427 = vsub.s32 %v3424, %v3426
      %v3428 = vrot.slane %v3414, %v3427
      %v3429 = vcombine.high %v3405, 0
      %v3430 = vcombine.high %v3412, 0
      %v3431 = vcombine.high %v3421, 0
      %v3432 = vcombine.high %v3428, 0
      %v3433 = vcombine.high %v3129, %v977
      %v3435 = vunpack.c.l.s4 1983009808
      %v3436 = vunpack.c.0.s8 %v3435
      %v3437 = vlaneseq
      %v3438 = vshrl.u32 %v3437, 7
      %v3439 = vsub.s32 %v3436, %v3438
      %v3440 = vrot.slane %v3129, %v3439
      %v3442 = vunpack.c.l.s4 1983009808
      %v3443 = vunpack.c.0.s8 %v3442
      %v3444 = vlaneseq
      %v3445 = vshrl.u32 %v3444, 7
      %v3446 = vsub.s32 %v3443, %v3445
      %v3447 = vrot.slane %v3433, %v3446
      %v3448 = vcombine.high %v3137, %v977
      %v3450 = vunpack.c.l.s4 1983009808
      %v3451 = vunpack.c.0.s8 %v3450
      %v3452 = vlaneseq
      %v3453 = vshrl.u32 %v3452, 7
      %v3454 = vsub.s32 %v3451, %v3453
      %v3455 = vrot.slane %v3137, %v3454
      %v3457 = vunpack.c.l.s4 1983009808
      %v3458 = vunpack.c.0.s8 %v3457
      %v3459 = vlaneseq
      %v3460 = vshrl.u32 %v3459, 7
      %v3461 = vsub.s32 %v3458, %v3460
      %v3462 = vrot.slane %v3448, %v3461
      %v3463 = vcombine.low %v3440, %v3455
      %v3464 = vcombine.high %v3440, %v3455
      %v3466 = vunpack.c.l.s4 1934713408
      %v3467 = vunpack.c.0.s8 %v3466
      %v3468 = vlaneseq
      %v3469 = vshrl.u32 %v3468, 7
      %v3470 = vsub.s32 %v3467, %v3469
      %v3471 = vrot.slane %v3463, %v3470
      %v3473 = vunpack.c.l.s4 1934713408
      %v3474 = vunpack.c.0.s8 %v3473
      %v3475 = vlaneseq
      %v3476 = vshrl.u32 %v3475, 7
      %v3477 = vsub.s32 %v3474, %v3476
      %v3478 = vrot.slane %v3464, %v3477
      %v3479 = vcombine.low %v3447, %v3462
      %v3480 = vcombine.high %v3447, %v3462
      %v3482 = vunpack.c.l.s4 1934713408
      %v3483 = vunpack.c.0.s8 %v3482
      %v3484 = vlaneseq
      %v3485 = vshrl.u32 %v3484, 7
      %v3486 = vsub.s32 %v3483, %v3485
      %v3487 = vrot.slane %v3479, %v3486
      %v3489 = vunpack.c.l.s4 1934713408
      %v3490 = vunpack.c.0.s8 %v3489
      %v3491 = vlaneseq
      %v3492 = vshrl.u32 %v3491, 7
      %v3493 = vsub.s32 %v3490, %v3492
      %v3494 = vrot.slane %v3480, %v3493
      %v3495 = vcombine.high %v3471, 0
      %v3496 = vcombine.high %v3478, 0
      %v3497 = vcombine.high %v3487, 0
      %v3498 = vcombine.high %v3494, 0
      %v3499 = vcombine.high %v3141, %v974
      %v3501 = vunpack.c.l.s4 1983009808
      %v3502 = vunpack.c.0.s8 %v3501
      %v3503 = vlaneseq
      %v3504 = vshrl.u32 %v3503, 7
      %v3505 = vsub.s32 %v3502, %v3504
      %v3506 = vrot.slane %v3141, %v3505
      %v3508 = vunpack.c.l.s4 1983009808
      %v3509 = vunpack.c.0.s8 %v3508
      %v3510 = vlaneseq
      %v3511 = vshrl.u32 %v3510, 7
      %v3512 = vsub.s32 %v3509, %v3511
      %v3513 = vrot.slane %v3499, %v3512
      %v3514 = vcombine.high %v3149, %v974
      %v3516 = vunpack.c.l.s4 1983009808
      %v3517 = vunpack.c.0.s8 %v3516
      %v3518 = vlaneseq
      %v3519 = vshrl.u32 %v3518, 7
      %v3520 = vsub.s32 %v3517, %v3519
      %v3521 = vrot.slane %v3149, %v3520
      %v3523 = vunpack.c.l.s4 1983009808
      %v3524 = vunpack.c.0.s8 %v3523
      %v3525 = vlaneseq
      %v3526 = vshrl.u32 %v3525, 7
      %v3527 = vsub.s32 %v3524, %v3526
      %v3528 = vrot.slane %v3514, %v3527
      %v3529 = vcombine.low %v3506, %v3521
      %v3530 = vcombine.high %v3506, %v3521
      %v3532 = vunpack.c.l.s4 1934713408
      %v3533 = vunpack.c.0.s8 %v3532
      %v3534 = vlaneseq
      %v3535 = vshrl.u32 %v3534, 7
      %v3536 = vsub.s32 %v3533, %v3535
      %v3537 = vrot.slane %v3529, %v3536
      %v3539 = vunpack.c.l.s4 1934713408
      %v3540 = vunpack.c.0.s8 %v3539
      %v3541 = vlaneseq
      %v3542 = vshrl.u32 %v3541, 7
      %v3543 = vsub.s32 %v3540, %v3542
      %v3544 = vrot.slane %v3530, %v3543
      %v3545 = vcombine.low %v3513, %v3528
      %v3546 = vcombine.high %v3513, %v3528
      %v3548 = vunpack.c.l.s4 1934713408
      %v3549 = vunpack.c.0.s8 %v3548
      %v3550 = vlaneseq
      %v3551 = vshrl.u32 %v3550, 7
      %v3552 = vsub.s32 %v3549, %v3551
      %v3553 = vrot.slane %v3545, %v3552
      %v3555 = vunpack.c.l.s4 1934713408
      %v3556 = vunpack.c.0.s8 %v3555
      %v3557 = vlaneseq
      %v3558 = vshrl.u32 %v3557, 7
      %v3559 = vsub.s32 %v3556, %v3558
      %v3560 = vrot.slane %v3546, %v3559
      %v3561 = vcombine.high %v3537, 0
      %v3562 = vcombine.high %v3544, 0
      %v3563 = vcombine.high %v3553, 0
      %v3564 = vcombine.high %v3560, 0
      %v3565 = vcombine.high %v3145, %v977
      %v3567 = vunpack.c.l.s4 1983009808
      %v3568 = vunpack.c.0.s8 %v3567
      %v3569 = vlaneseq
      %v3570 = vshrl.u32 %v3569, 7
      %v3571 = vsub.s32 %v3568, %v3570
      %v3572 = vrot.slane %v3145, %v3571
      %v3574 = vunpack.c.l.s4 1983009808
      %v3575 = vunpack.c.0.s8 %v3574
      %v3576 = vlaneseq
      %v3577 = vshrl.u32 %v3576, 7
      %v3578 = vsub.s32 %v3575, %v3577
      %v3579 = vrot.slane %v3565, %v3578
      %v3580 = vcombine.high %v3153, %v977
      %v3582 = vunpack.c.l.s4 1983009808
      %v3583 = vunpack.c.0.s8 %v3582
      %v3584 = vlaneseq
      %v3585 = vshrl.u32 %v3584, 7
      %v3586 = vsub.s32 %v3583, %v3585
      %v3587 = vrot.slane %v3153, %v3586
      %v3589 = vunpack.c.l.s4 1983009808
      %v3590 = vunpack.c.0.s8 %v3589
      %v3591 = vlaneseq
      %v3592 = vshrl.u32 %v3591, 7
      %v3593 = vsub.s32 %v3590, %v3592
      %v3594 = vrot.slane %v3580, %v3593
      %v3595 = vcombine.low %v3572, %v3587
      %v3596 = vcombine.high %v3572, %v3587
      %v3598 = vunpack.c.l.s4 1934713408
      %v3599 = vunpack.c.0.s8 %v3598
      %v3600 = vlaneseq
      %v3601 = vshrl.u32 %v3600, 7
      %v3602 = vsub.s32 %v3599, %v3601
      %v3603 = vrot.slane %v3595, %v3602
      %v3605 = vunpack.c.l.s4 1934713408
      %v3606 = vunpack.c.0.s8 %v3605
      %v3607 = vlaneseq
      %v3608 = vshrl.u32 %v3607, 7
      %v3609 = vsub.s32 %v3606, %v3608
      %v3610 = vrot.slane %v3596, %v3609
      %v3611 = vcombine.low %v3579, %v3594
      %v3612 = vcombine.high %v3579, %v3594
      %v3614 = vunpack.c.l.s4 1934713408
      %v3615 = vunpack.c.0.s8 %v3614
      %v3616 = vlaneseq
      %v3617 = vshrl.u32 %v3616, 7
      %v3618 = vsub.s32 %v3615, %v3617
      %v3619 = vrot.slane %v3611, %v3618
      %v3621 = vunpack.c.l.s4 1934713408
      %v3622 = vunpack.c.0.s8 %v3621
      %v3623 = vlaneseq
      %v3624 = vshrl.u32 %v3623, 7
      %v3625 = vsub.s32 %v3622, %v3624
      %v3626 = vrot.slane %v3612, %v3625
      %v3627 = vcombine.high %v3603, 0
      %v3628 = vcombine.high %v3610, 0
      %v3629 = vcombine.high %v3619, 0
      %v3630 = vcombine.high %v3626, 0
      %v3631 = vcombine.high %v3157, %v974
      %v3633 = vunpack.c.l.s4 1983009808
      %v3634 = vunpack.c.0.s8 %v3633
      %v3635 = vlaneseq
      %v3636 = vshrl.u32 %v3635, 7
      %v3637 = vsub.s32 %v3634, %v3636
      %v3638 = vrot.slane %v3157, %v3637
      %v3640 = vunpack.c.l.s4 1983009808
      %v3641 = vunpack.c.0.s8 %v3640
      %v3642 = vlaneseq
      %v3643 = vshrl.u32 %v3642, 7
      %v3644 = vsub.s32 %v3641, %v3643
      %v3645 = vrot.slane %v3631, %v3644
      %v3646 = vcombine.high %v3165, %v974
      %v3648 = vunpack.c.l.s4 1983009808
      %v3649 = vunpack.c.0.s8 %v3648
      %v3650 = vlaneseq
      %v3651 = vshrl.u32 %v3650, 7
      %v3652 = vsub.s32 %v3649, %v3651
      %v3653 = vrot.slane %v3165, %v3652
      %v3655 = vunpack.c.l.s4 1983009808
      %v3656 = vunpack.c.0.s8 %v3655
      %v3657 = vlaneseq
      %v3658 = vshrl.u32 %v3657, 7
      %v3659 = vsub.s32 %v3656, %v3658
      %v3660 = vrot.slane %v3646, %v3659
      %v3661 = vcombine.low %v3638, %v3653
      %v3662 = vcombine.high %v3638, %v3653
      %v3664 = vunpack.c.l.s4 1934713408
      %v3665 = vunpack.c.0.s8 %v3664
      %v3666 = vlaneseq
      %v3667 = vshrl.u32 %v3666, 7
      %v3668 = vsub.s32 %v3665, %v3667
      %v3669 = vrot.slane %v3661, %v3668
      %v3671 = vunpack.c.l.s4 1934713408
      %v3672 = vunpack.c.0.s8 %v3671
      %v3673 = vlaneseq
      %v3674 = vshrl.u32 %v3673, 7
      %v3675 = vsub.s32 %v3672, %v3674
      %v3676 = vrot.slane %v3662, %v3675
      %v3677 = vcombine.low %v3645, %v3660
      %v3678 = vcombine.high %v3645, %v3660
      %v3680 = vunpack.c.l.s4 1934713408
      %v3681 = vunpack.c.0.s8 %v3680
      %v3682 = vlaneseq
      %v3683 = vshrl.u32 %v3682, 7
      %v3684 = vsub.s32 %v3681, %v3683
      %v3685 = vrot.slane %v3677, %v3684
      %v3687 = vunpack.c.l.s4 1934713408
      %v3688 = vunpack.c.0.s8 %v3687
      %v3689 = vlaneseq
      %v3690 = vshrl.u32 %v3689, 7
      %v3691 = vsub.s32 %v3688, %v3690
      %v3692 = vrot.slane %v3678, %v3691
      %v3693 = vcombine.high %v3669, 0
      %v3694 = vcombine.high %v3676, 0
      %v3695 = vcombine.high %v3685, 0
      %v3696 = vcombine.high %v3692, 0
      %v3697 = vcombine.high %v3161, %v977
      %v3699 = vunpack.c.l.s4 1983009808
      %v3700 = vunpack.c.0.s8 %v3699
      %v3701 = vlaneseq
      %v3702 = vshrl.u32 %v3701, 7
      %v3703 = vsub.s32 %v3700, %v3702
      %v3704 = vrot.slane %v3161, %v3703
      %v3706 = vunpack.c.l.s4 1983009808
      %v3707 = vunpack.c.0.s8 %v3706
      %v3708 = vlaneseq
      %v3709 = vshrl.u32 %v3708, 7
      %v3710 = vsub.s32 %v3707, %v3709
      %v3711 = vrot.slane %v3697, %v3710
      %v3712 = vcombine.high %v3169, %v977
      %v3714 = vunpack.c.l.s4 1983009808
      %v3715 = vunpack.c.0.s8 %v3714
      %v3716 = vlaneseq
      %v3717 = vshrl.u32 %v3716, 7
      %v3718 = vsub.s32 %v3715, %v3717
      %v3719 = vrot.slane %v3169, %v3718
      %v3721 = vunpack.c.l.s4 1983009808
      %v3722 = vunpack.c.0.s8 %v3721
      %v3723 = vlaneseq
      %v3724 = vshrl.u32 %v3723, 7
      %v3725 = vsub.s32 %v3722, %v3724
      %v3726 = vrot.slane %v3712, %v3725
      %v3727 = vcombine.low %v3704, %v3719
      %v3728 = vcombine.high %v3704, %v3719
      %v3730 = vunpack.c.l.s4 1934713408
      %v3731 = vunpack.c.0.s8 %v3730
      %v3732 = vlaneseq
      %v3733 = vshrl.u32 %v3732, 7
      %v3734 = vsub.s32 %v3731, %v3733
      %v3735 = vrot.slane %v3727, %v3734
      %v3737 = vunpack.c.l.s4 1934713408
      %v3738 = vunpack.c.0.s8 %v3737
      %v3739 = vlaneseq
      %v3740 = vshrl.u32 %v3739, 7
      %v3741 = vsub.s32 %v3738, %v3740
      %v3742 = vrot.slane %v3728, %v3741
      %v3743 = vcombine.low %v3711, %v3726
      %v3744 = vcombine.high %v3711, %v3726
      %v3746 = vunpack.c.l.s4 1934713408
      %v3747 = vunpack.c.0.s8 %v3746
      %v3748 = vlaneseq
      %v3749 = vshrl.u32 %v3748, 7
      %v3750 = vsub.s32 %v3747, %v3749
      %v3751 = vrot.slane %v3743, %v3750
      %v3753 = vunpack.c.l.s4 1934713408
      %v3754 = vunpack.c.0.s8 %v3753
      %v3755 = vlaneseq
      %v3756 = vshrl.u32 %v3755, 7
      %v3757 = vsub.s32 %v3754, %v3756
      %v3758 = vrot.slane %v3744, %v3757
      %v3759 = vcombine.high %v3735, 0
      %v3760 = vcombine.high %v3742, 0
      %v3761 = vcombine.high %v3751, 0
      %v3762 = vcombine.high %v3758, 0
      %v3763 = vcombine.high %v3173, %v974
      %v3765 = vunpack.c.l.s4 1983009808
      %v3766 = vunpack.c.0.s8 %v3765
      %v3767 = vlaneseq
      %v3768 = vshrl.u32 %v3767, 7
      %v3769 = vsub.s32 %v3766, %v3768
      %v3770 = vrot.slane %v3173, %v3769
      %v3772 = vunpack.c.l.s4 1983009808
      %v3773 = vunpack.c.0.s8 %v3772
      %v3774 = vlaneseq
      %v3775 = vshrl.u32 %v3774, 7
      %v3776 = vsub.s32 %v3773, %v3775
      %v3777 = vrot.slane %v3763, %v3776
      %v3778 = vcombine.high %v3181, %v974
      %v3780 = vunpack.c.l.s4 1983009808
      %v3781 = vunpack.c.0.s8 %v3780
      %v3782 = vlaneseq
      %v3783 = vshrl.u32 %v3782, 7
      %v3784 = vsub.s32 %v3781, %v3783
      %v3785 = vrot.slane %v3181, %v3784
      %v3787 = vunpack.c.l.s4 1983009808
      %v3788 = vunpack.c.0.s8 %v3787
      %v3789 = vlaneseq
      %v3790 = vshrl.u32 %v3789, 7
      %v3791 = vsub.s32 %v3788, %v3790
      %v3792 = vrot.slane %v3778, %v3791
      %v3793 = vcombine.low %v3770, %v3785
      %v3794 = vcombine.high %v3770, %v3785
      %v3796 = vunpack.c.l.s4 1934713408
      %v3797 = vunpack.c.0.s8 %v3796
      %v3798 = vlaneseq
      %v3799 = vshrl.u32 %v3798, 7
      %v3800 = vsub.s32 %v3797, %v3799
      %v3801 = vrot.slane %v3793, %v3800
      %v3803 = vunpack.c.l.s4 1934713408
      %v3804 = vunpack.c.0.s8 %v3803
      %v3805 = vlaneseq
      %v3806 = vshrl.u32 %v3805, 7
      %v3807 = vsub.s32 %v3804, %v3806
      %v3808 = vrot.slane %v3794, %v3807
      %v3809 = vcombine.low %v3777, %v3792
      %v3810 = vcombine.high %v3777, %v3792
      %v3812 = vunpack.c.l.s4 1934713408
      %v3813 = vunpack.c.0.s8 %v3812
      %v3814 = vlaneseq
      %v3815 = vshrl.u32 %v3814, 7
      %v3816 = vsub.s32 %v3813, %v3815
      %v3817 = vrot.slane %v3809, %v3816
      %v3819 = vunpack.c.l.s4 1934713408
      %v3820 = vunpack.c.0.s8 %v3819
      %v3821 = vlaneseq
      %v3822 = vshrl.u32 %v3821, 7
      %v3823 = vsub.s32 %v3820, %v3822
      %v3824 = vrot.slane %v3810, %v3823
      %v3825 = vcombine.high %v3801, 0
      %v3826 = vcombine.high %v3808, 0
      %v3827 = vcombine.high %v3817, 0
      %v3828 = vcombine.high %v3824, 0
      %v3829 = vcombine.high %v3177, %v977
      %v3831 = vunpack.c.l.s4 1983009808
      %v3832 = vunpack.c.0.s8 %v3831
      %v3833 = vlaneseq
      %v3834 = vshrl.u32 %v3833, 7
      %v3835 = vsub.s32 %v3832, %v3834
      %v3836 = vrot.slane %v3177, %v3835
      %v3838 = vunpack.c.l.s4 1983009808
      %v3839 = vunpack.c.0.s8 %v3838
      %v3840 = vlaneseq
      %v3841 = vshrl.u32 %v3840, 7
      %v3842 = vsub.s32 %v3839, %v3841
      %v3843 = vrot.slane %v3829, %v3842
      %v3844 = vcombine.high %v3185, %v977
      %v3846 = vunpack.c.l.s4 1983009808
      %v3847 = vunpack.c.0.s8 %v3846
      %v3848 = vlaneseq
      %v3849 = vshrl.u32 %v3848, 7
      %v3850 = vsub.s32 %v3847, %v3849
      %v3851 = vrot.slane %v3185, %v3850
      %v3853 = vunpack.c.l.s4 1983009808
      %v3854 = vunpack.c.0.s8 %v3853
      %v3855 = vlaneseq
      %v3856 = vshrl.u32 %v3855, 7
      %v3857 = vsub.s32 %v3854, %v3856
      %v3858 = vrot.slane %v3844, %v3857
      %v3859 = vcombine.low %v3836, %v3851
      %v3860 = vcombine.high %v3836, %v3851
      %v3862 = vunpack.c.l.s4 1934713408
      %v3863 = vunpack.c.0.s8 %v3862
      %v3864 = vlaneseq
      %v3865 = vshrl.u32 %v3864, 7
      %v3866 = vsub.s32 %v3863, %v3865
      %v3867 = vrot.slane %v3859, %v3866
      %v3869 = vunpack.c.l.s4 1934713408
      %v3870 = vunpack.c.0.s8 %v3869
      %v3871 = vlaneseq
      %v3872 = vshrl.u32 %v3871, 7
      %v3873 = vsub.s32 %v3870, %v3872
      %v3874 = vrot.slane %v3860, %v3873
      %v3875 = vcombine.low %v3843, %v3858
      %v3876 = vcombine.high %v3843, %v3858
      %v3878 = vunpack.c.l.s4 1934713408
      %v3879 = vunpack.c.0.s8 %v3878
      %v3880 = vlaneseq
      %v3881 = vshrl.u32 %v3880, 7
      %v3882 = vsub.s32 %v3879, %v3881
      %v3883 = vrot.slane %v3875, %v3882
      %v3885 = vunpack.c.l.s4 1934713408
      %v3886 = vunpack.c.0.s8 %v3885
      %v3887 = vlaneseq
      %v3888 = vshrl.u32 %v3887, 7
      %v3889 = vsub.s32 %v3886, %v3888
      %v3890 = vrot.slane %v3876, %v3889
      %v3891 = vcombine.high %v3867, 0
      %v3892 = vcombine.high %v3874, 0
      %v3893 = vcombine.high %v3883, 0
      %v3894 = vcombine.high %v3890, 0
      %v3895 = vcombine.high %v3189, %v974
      %v3897 = vunpack.c.l.s4 1983009808
      %v3898 = vunpack.c.0.s8 %v3897
      %v3899 = vlaneseq
      %v3900 = vshrl.u32 %v3899, 7
      %v3901 = vsub.s32 %v3898, %v3900
      %v3902 = vrot.slane %v3189, %v3901
      %v3904 = vunpack.c.l.s4 1983009808
      %v3905 = vunpack.c.0.s8 %v3904
      %v3906 = vlaneseq
      %v3907 = vshrl.u32 %v3906, 7
      %v3908 = vsub.s32 %v3905, %v3907
      %v3909 = vrot.slane %v3895, %v3908
      %v3910 = vcombine.high %v3197, %v974
      %v3912 = vunpack.c.l.s4 1983009808
      %v3913 = vunpack.c.0.s8 %v3912
      %v3914 = vlaneseq
      %v3915 = vshrl.u32 %v3914, 7
      %v3916 = vsub.s32 %v3913, %v3915
      %v3917 = vrot.slane %v3197, %v3916
      %v3919 = vunpack.c.l.s4 1983009808
      %v3920 = vunpack.c.0.s8 %v3919
      %v3921 = vlaneseq
      %v3922 = vshrl.u32 %v3921, 7
      %v3923 = vsub.s32 %v3920, %v3922
      %v3924 = vrot.slane %v3910, %v3923
      %v3925 = vcombine.low %v3902, %v3917
      %v3926 = vcombine.high %v3902, %v3917
      %v3928 = vunpack.c.l.s4 1934713408
      %v3929 = vunpack.c.0.s8 %v3928
      %v3930 = vlaneseq
      %v3931 = vshrl.u32 %v3930, 7
      %v3932 = vsub.s32 %v3929, %v3931
      %v3933 = vrot.slane %v3925, %v3932
      %v3935 = vunpack.c.l.s4 1934713408
      %v3936 = vunpack.c.0.s8 %v3935
      %v3937 = vlaneseq
      %v3938 = vshrl.u32 %v3937, 7
      %v3939 = vsub.s32 %v3936, %v3938
      %v3940 = vrot.slane %v3926, %v3939
      %v3941 = vcombine.low %v3909, %v3924
      %v3942 = vcombine.high %v3909, %v3924
      %v3944 = vunpack.c.l.s4 1934713408
      %v3945 = vunpack.c.0.s8 %v3944
      %v3946 = vlaneseq
      %v3947 = vshrl.u32 %v3946, 7
      %v3948 = vsub.s32 %v3945, %v3947
      %v3949 = vrot.slane %v3941, %v3948
      %v3951 = vunpack.c.l.s4 1934713408
      %v3952 = vunpack.c.0.s8 %v3951
      %v3953 = vlaneseq
      %v3954 = vshrl.u32 %v3953, 7
      %v3955 = vsub.s32 %v3952, %v3954
      %v3956 = vrot.slane %v3942, %v3955
      %v3957 = vcombine.high %v3933, 0
      %v3958 = vcombine.high %v3940, 0
      %v3959 = vcombine.high %v3949, 0
      %v3960 = vcombine.high %v3956, 0
      %v3961 = vcombine.high %v3193, %v977
      %v3963 = vunpack.c.l.s4 1983009808
      %v3964 = vunpack.c.0.s8 %v3963
      %v3965 = vlaneseq
      %v3966 = vshrl.u32 %v3965, 7
      %v3967 = vsub.s32 %v3964, %v3966
      %v3968 = vrot.slane %v3193, %v3967
      %v3970 = vunpack.c.l.s4 1983009808
      %v3971 = vunpack.c.0.s8 %v3970
      %v3972 = vlaneseq
      %v3973 = vshrl.u32 %v3972, 7
      %v3974 = vsub.s32 %v3971, %v3973
      %v3975 = vrot.slane %v3961, %v3974
      %v3976 = vcombine.high %v3201, %v977
      %v3978 = vunpack.c.l.s4 1983009808
      %v3979 = vunpack.c.0.s8 %v3978
      %v3980 = vlaneseq
      %v3981 = vshrl.u32 %v3980, 7
      %v3982 = vsub.s32 %v3979, %v3981
      %v3983 = vrot.slane %v3201, %v3982
      %v3985 = vunpack.c.l.s4 1983009808
      %v3986 = vunpack.c.0.s8 %v3985
      %v3987 = vlaneseq
      %v3988 = vshrl.u32 %v3987, 7
      %v3989 = vsub.s32 %v3986, %v3988
      %v3990 = vrot.slane %v3976, %v3989
      %v3991 = vcombine.low %v3968, %v3983
      %v3992 = vcombine.high %v3968, %v3983
      %v3994 = vunpack.c.l.s4 1934713408
      %v3995 = vunpack.c.0.s8 %v3994
      %v3996 = vlaneseq
      %v3997 = vshrl.u32 %v3996, 7
      %v3998 = vsub.s32 %v3995, %v3997
      %v3999 = vrot.slane %v3991, %v3998
      %v4001 = vunpack.c.l.s4 1934713408
      %v4002 = vunpack.c.0.s8 %v4001
      %v4003 = vlaneseq
      %v4004 = vshrl.u32 %v4003, 7
      %v4005 = vsub.s32 %v4002, %v4004
      %v4006 = vrot.slane %v3992, %v4005
      %v4007 = vcombine.low %v3975, %v3990
      %v4008 = vcombine.high %v3975, %v3990
      %v4010 = vunpack.c.l.s4 1934713408
      %v4011 = vunpack.c.0.s8 %v4010
      %v4012 = vlaneseq
      %v4013 = vshrl.u32 %v4012, 7
      %v4014 = vsub.s32 %v4011, %v4013
      %v4015 = vrot.slane %v4007, %v4014
      %v4017 = vunpack.c.l.s4 1934713408
      %v4018 = vunpack.c.0.s8 %v4017
      %v4019 = vlaneseq
      %v4020 = vshrl.u32 %v4019, 7
      %v4021 = vsub.s32 %v4018, %v4020
      %v4022 = vrot.slane %v4008, %v4021
      %v4023 = vcombine.high %v3999, 0
      %v4024 = vcombine.high %v4006, 0
      %v4025 = vcombine.high %v4015, 0
      %v4026 = vcombine.high %v4022, 0
      %v4027 = vcombine.high %v3205, %v974
      %v4029 = vunpack.c.l.s4 1983009808
      %v4030 = vunpack.c.0.s8 %v4029
      %v4031 = vlaneseq
      %v4032 = vshrl.u32 %v4031, 7
      %v4033 = vsub.s32 %v4030, %v4032
      %v4034 = vrot.slane %v3205, %v4033
      %v4036 = vunpack.c.l.s4 1983009808
      %v4037 = vunpack.c.0.s8 %v4036
      %v4038 = vlaneseq
      %v4039 = vshrl.u32 %v4038, 7
      %v4040 = vsub.s32 %v4037, %v4039
      %v4041 = vrot.slane %v4027, %v4040
      %v4042 = vcombine.high %v3213, %v974
      %v4044 = vunpack.c.l.s4 1983009808
      %v4045 = vunpack.c.0.s8 %v4044
      %v4046 = vlaneseq
      %v4047 = vshrl.u32 %v4046, 7
      %v4048 = vsub.s32 %v4045, %v4047
      %v4049 = vrot.slane %v3213, %v4048
      %v4051 = vunpack.c.l.s4 1983009808
      %v4052 = vunpack.c.0.s8 %v4051
      %v4053 = vlaneseq
      %v4054 = vshrl.u32 %v4053, 7
      %v4055 = vsub.s32 %v4052, %v4054
      %v4056 = vrot.slane %v4042, %v4055
      %v4057 = vcombine.low %v4034, %v4049
      %v4058 = vcombine.high %v4034, %v4049
      %v4060 = vunpack.c.l.s4 1934713408
      %v4061 = vunpack.c.0.s8 %v4060
      %v4062 = vlaneseq
      %v4063 = vshrl.u32 %v4062, 7
      %v4064 = vsub.s32 %v4061, %v4063
      %v4065 = vrot.slane %v4057, %v4064
      %v4067 = vunpack.c.l.s4 1934713408
      %v4068 = vunpack.c.0.s8 %v4067
      %v4069 = vlaneseq
      %v4070 = vshrl.u32 %v4069, 7
      %v4071 = vsub.s32 %v4068, %v4070
      %v4072 = vrot.slane %v4058, %v4071
      %v4073 = vcombine.low %v4041, %v4056
      %v4074 = vcombine.high %v4041, %v4056
      %v4076 = vunpack.c.l.s4 1934713408
      %v4077 = vunpack.c.0.s8 %v4076
      %v4078 = vlaneseq
      %v4079 = vshrl.u32 %v4078, 7
      %v4080 = vsub.s32 %v4077, %v4079
      %v4081 = vrot.slane %v4073, %v4080
      %v4083 = vunpack.c.l.s4 1934713408
      %v4084 = vunpack.c.0.s8 %v4083
      %v4085 = vlaneseq
      %v4086 = vshrl.u32 %v4085, 7
      %v4087 = vsub.s32 %v4084, %v4086
      %v4088 = vrot.slane %v4074, %v4087
      %v4089 = vcombine.high %v4065, 0
      %v4090 = vcombine.high %v4072, 0
      %v4091 = vcombine.high %v4081, 0
      %v4092 = vcombine.high %v4088, 0
      %v4093 = vcombine.high %v3209, %v977
      %v4095 = vunpack.c.l.s4 1983009808
      %v4096 = vunpack.c.0.s8 %v4095
      %v4097 = vlaneseq
      %v4098 = vshrl.u32 %v4097, 7
      %v4099 = vsub.s32 %v4096, %v4098
      %v4100 = vrot.slane %v3209, %v4099
      %v4102 = vunpack.c.l.s4 1983009808
      %v4103 = vunpack.c.0.s8 %v4102
      %v4104 = vlaneseq
      %v4105 = vshrl.u32 %v4104, 7
      %v4106 = vsub.s32 %v4103, %v4105
      %v4107 = vrot.slane %v4093, %v4106
      %v4108 = vcombine.high %v3217, %v977
      %v4110 = vunpack.c.l.s4 1983009808
      %v4111 = vunpack.c.0.s8 %v4110
      %v4112 = vlaneseq
      %v4113 = vshrl.u32 %v4112, 7
      %v4114 = vsub.s32 %v4111, %v4113
      %v4115 = vrot.slane %v3217, %v4114
      %v4117 = vunpack.c.l.s4 1983009808
      %v4118 = vunpack.c.0.s8 %v4117
      %v4119 = vlaneseq
      %v4120 = vshrl.u32 %v4119, 7
      %v4121 = vsub.s32 %v4118, %v4120
      %v4122 = vrot.slane %v4108, %v4121
      %v4123 = vcombine.low %v4100, %v4115
      %v4124 = vcombine.high %v4100, %v4115
      %v4126 = vunpack.c.l.s4 1934713408
      %v4127 = vunpack.c.0.s8 %v4126
      %v4128 = vlaneseq
      %v4129 = vshrl.u32 %v4128, 7
      %v4130 = vsub.s32 %v4127, %v4129
      %v4131 = vrot.slane %v4123, %v4130
      %v4133 = vunpack.c.l.s4 1934713408
      %v4134 = vunpack.c.0.s8 %v4133
      %v4135 = vlaneseq
      %v4136 = vshrl.u32 %v4135, 7
      %v4137 = vsub.s32 %v4134, %v4136
      %v4138 = vrot.slane %v4124, %v4137
      %v4139 = vcombine.low %v4107, %v4122
      %v4140 = vcombine.high %v4107, %v4122
      %v4142 = vunpack.c.l.s4 1934713408
      %v4143 = vunpack.c.0.s8 %v4142
      %v4144 = vlaneseq
      %v4145 = vshrl.u32 %v4144, 7
      %v4146 = vsub.s32 %v4143, %v4145
      %v4147 = vrot.slane %v4139, %v4146
      %v4149 = vunpack.c.l.s4 1934713408
      %v4150 = vunpack.c.0.s8 %v4149
      %v4151 = vlaneseq
      %v4152 = vshrl.u32 %v4151, 7
      %v4153 = vsub.s32 %v4150, %v4152
      %v4154 = vrot.slane %v4140, %v4153
      %v4155 = vcombine.high %v4131, 0
      %v4156 = vcombine.high %v4138, 0
      %v4157 = vcombine.high %v4147, 0
      %v4158 = vcombine.high %v4154, 0
      %v4159 = vcombine.high %v3221, %v974
      %v4161 = vunpack.c.l.s4 1983009808
      %v4162 = vunpack.c.0.s8 %v4161
      %v4163 = vlaneseq
      %v4164 = vshrl.u32 %v4163, 7
      %v4165 = vsub.s32 %v4162, %v4164
      %v4166 = vrot.slane %v3221, %v4165
      %v4168 = vunpack.c.l.s4 1983009808
      %v4169 = vunpack.c.0.s8 %v4168
      %v4170 = vlaneseq
      %v4171 = vshrl.u32 %v4170, 7
      %v4172 = vsub.s32 %v4169, %v4171
      %v4173 = vrot.slane %v4159, %v4172
      %v4174 = vcombine.high %v3229, %v974
      %v4176 = vunpack.c.l.s4 1983009808
      %v4177 = vunpack.c.0.s8 %v4176
      %v4178 = vlaneseq
      %v4179 = vshrl.u32 %v4178, 7
      %v4180 = vsub.s32 %v4177, %v4179
      %v4181 = vrot.slane %v3229, %v4180
      %v4183 = vunpack.c.l.s4 1983009808
      %v4184 = vunpack.c.0.s8 %v4183
      %v4185 = vlaneseq
      %v4186 = vshrl.u32 %v4185, 7
      %v4187 = vsub.s32 %v4184, %v4186
      %v4188 = vrot.slane %v4174, %v4187
      %v4189 = vcombine.low %v4166, %v4181
      %v4190 = vcombine.high %v4166, %v4181
      %v4192 = vunpack.c.l.s4 1934713408
      %v4193 = vunpack.c.0.s8 %v4192
      %v4194 = vlaneseq
      %v4195 = vshrl.u32 %v4194, 7
      %v4196 = vsub.s32 %v4193, %v4195
      %v4197 = vrot.slane %v4189, %v4196
      %v4199 = vunpack.c.l.s4 1934713408
      %v4200 = vunpack.c.0.s8 %v4199
      %v4201 = vlaneseq
      %v4202 = vshrl.u32 %v4201, 7
      %v4203 = vsub.s32 %v4200, %v4202
      %v4204 = vrot.slane %v4190, %v4203
      %v4205 = vcombine.low %v4173, %v4188
      %v4206 = vcombine.high %v4173, %v4188
      %v4208 = vunpack.c.l.s4 1934713408
      %v4209 = vunpack.c.0.s8 %v4208
      %v4210 = vlaneseq
      %v4211 = vshrl.u32 %v4210, 7
      %v4212 = vsub.s32 %v4209, %v4211
      %v4213 = vrot.slane %v4205, %v4212
      %v4215 = vunpack.c.l.s4 1934713408
      %v4216 = vunpack.c.0.s8 %v4215
      %v4217 = vlaneseq
      %v4218 = vshrl.u32 %v4217, 7
      %v4219 = vsub.s32 %v4216, %v4218
      %v4220 = vrot.slane %v4206, %v4219
      %v4221 = vcombine.high %v4197, 0
      %v4222 = vcombine.high %v4204, 0
      %v4223 = vcombine.high %v4213, 0
      %v4224 = vcombine.high %v4220, 0
      %v4225 = vcombine.high %v3225, %v977
      %v4227 = vunpack.c.l.s4 1983009808
      %v4228 = vunpack.c.0.s8 %v4227
      %v4229 = vlaneseq
      %v4230 = vshrl.u32 %v4229, 7
      %v4231 = vsub.s32 %v4228, %v4230
      %v4232 = vrot.slane %v3225, %v4231
      %v4234 = vunpack.c.l.s4 1983009808
      %v4235 = vunpack.c.0.s8 %v4234
      %v4236 = vlaneseq
      %v4237 = vshrl.u32 %v4236, 7
      %v4238 = vsub.s32 %v4235, %v4237
      %v4239 = vrot.slane %v4225, %v4238
      %v4240 = vcombine.high %v3233, %v977
      %v4242 = vunpack.c.l.s4 1983009808
      %v4243 = vunpack.c.0.s8 %v4242
      %v4244 = vlaneseq
      %v4245 = vshrl.u32 %v4244, 7
      %v4246 = vsub.s32 %v4243, %v4245
      %v4247 = vrot.slane %v3233, %v4246
      %v4249 = vunpack.c.l.s4 1983009808
      %v4250 = vunpack.c.0.s8 %v4249
      %v4251 = vlaneseq
      %v4252 = vshrl.u32 %v4251, 7
      %v4253 = vsub.s32 %v4250, %v4252
      %v4254 = vrot.slane %v4240, %v4253
      %v4255 = vcombine.low %v4232, %v4247
      %v4256 = vcombine.high %v4232, %v4247
      %v4258 = vunpack.c.l.s4 1934713408
      %v4259 = vunpack.c.0.s8 %v4258
      %v4260 = vlaneseq
      %v4261 = vshrl.u32 %v4260, 7
      %v4262 = vsub.s32 %v4259, %v4261
      %v4263 = vrot.slane %v4255, %v4262
      %v4265 = vunpack.c.l.s4 1934713408
      %v4266 = vunpack.c.0.s8 %v4265
      %v4267 = vlaneseq
      %v4268 = vshrl.u32 %v4267, 7
      %v4269 = vsub.s32 %v4266, %v4268
      %v4270 = vrot.slane %v4256, %v4269
      %v4271 = vcombine.low %v4239, %v4254
      %v4272 = vcombine.high %v4239, %v4254
      %v4274 = vunpack.c.l.s4 1934713408
      %v4275 = vunpack.c.0.s8 %v4274
      %v4276 = vlaneseq
      %v4277 = vshrl.u32 %v4276, 7
      %v4278 = vsub.s32 %v4275, %v4277
      %v4279 = vrot.slane %v4271, %v4278
      %v4281 = vunpack.c.l.s4 1934713408
      %v4282 = vunpack.c.0.s8 %v4281
      %v4283 = vlaneseq
      %v4284 = vshrl.u32 %v4283, 7
      %v4285 = vsub.s32 %v4282, %v4284
      %v4286 = vrot.slane %v4272, %v4285
      %v4287 = vcombine.high %v4263, 0
      %v4288 = vcombine.high %v4270, 0
      %v4289 = vcombine.high %v4279, 0
      %v4290 = vcombine.high %v4286, 0
      %v4291 = vcombine.low %v3273, %v3280
      %v4293 = vunpack.c.l.s4 1983009808
      %v4294 = vunpack.c.0.s8 %v4293
      %v4295 = vlaneseq
      %v4296 = vshrl.u32 %v4295, 7
      %v4297 = vsub.s32 %v4294, %v4296
      %v4298 = vrot.slane %v4291, %v4297
      %v4299 = vcombine.low %v3297, %v3298
      %v4301 = vunpack.c.l.s4 1983009808
      %v4302 = vunpack.c.0.s8 %v4301
      %v4303 = vlaneseq
      %v4304 = vshrl.u32 %v4303, 7
      %v4305 = vsub.s32 %v4302, %v4304
      %v4306 = vrot.slane %v4299, %v4305
      %v4307 = vcombine.low %v3289, %v3296
      %v4309 = vunpack.c.l.s4 1983009808
      %v4310 = vunpack.c.0.s8 %v4309
      %v4311 = vlaneseq
      %v4312 = vshrl.u32 %v4311, 7
      %v4313 = vsub.s32 %v4310, %v4312
      %v4314 = vrot.slane %v4307, %v4313
      %v4315 = vcombine.low %v3299, %v3300
      %v4317 = vunpack.c.l.s4 1983009808
      %v4318 = vunpack.c.0.s8 %v4317
      %v4319 = vlaneseq
      %v4320 = vshrl.u32 %v4319, 7
      %v4321 = vsub.s32 %v4318, %v4320
      %v4322 = vrot.slane %v4315, %v4321
      %v4323 = vcombine.low %v4298, %v4306
      %v4325 = vunpack.c.l.s4 1934713408
      %v4326 = vunpack.c.0.s8 %v4325
      %v4327 = vlaneseq
      %v4328 = vshrl.u32 %v4327, 7
      %v4329 = vsub.s32 %v4326, %v4328
      %v4330 = vrot.slane %v4323, %v4329
      %v4331 = vcombine.low %v4314, %v4322
      %v4333 = vunpack.c.l.s4 1934713408
      %v4334 = vunpack.c.0.s8 %v4333
      %v4335 = vlaneseq
      %v4336 = vshrl.u32 %v4335, 7
      %v4337 = vsub.s32 %v4334, %v4336
      %v4338 = vrot.slane %v4331, %v4337
      %v4339 = vcombine.low %v4330, %v4338
      %v4340 = vcombine.high %v4330, %v4338
      %v4341 = vcombine.low %v3339, %v3346
      %v4343 = vunpack.c.l.s4 1983009808
      %v4344 = vunpack.c.0.s8 %v4343
      %v4345 = vlaneseq
      %v4346 = vshrl.u32 %v4345, 7
      %v4347 = vsub.s32 %v4344, %v4346
      %v4348 = vrot.slane %v4341, %v4347
      %v4349 = vcombine.low %v3363, %v3364
      %v4351 = vunpack.c.l.s4 1983009808
      %v4352 = vunpack.c.0.s8 %v4351
      %v4353 = vlaneseq
      %v4354 = vshrl.u32 %v4353, 7
      %v4355 = vsub.s32 %v4352, %v4354
      %v4356 = vrot.slane %v4349, %v4355
      %v4357 = vcombine.low %v3355, %v3362
      %v4359 = vunpack.c.l.s4 1983009808
      %v4360 = vunpack.c.0.s8 %v4359
      %v4361 = vlaneseq
      %v4362 = vshrl.u32 %v4361, 7
      %v4363 = vsub.s32 %v4360, %v4362
      %v4364 = vrot.slane %v4357, %v4363
      %v4365 = vcombine.low %v3365, %v3366
      %v4367 = vunpack.c.l.s4 1983009808
      %v4368 = vunpack.c.0.s8 %v4367
      %v4369 = vlaneseq
      %v4370 = vshrl.u32 %v4369, 7
      %v4371 = vsub.s32 %v4368, %v4370
      %v4372 = vrot.slane %v4365, %v4371
      %v4373 = vcombine.low %v4348, %v4356
      %v4375 = vunpack.c.l.s4 1934713408
      %v4376 = vunpack.c.0.s8 %v4375
      %v4377 = vlaneseq
      %v4378 = vshrl.u32 %v4377, 7
      %v4379 = vsub.s32 %v4376, %v4378
      %v4380 = vrot.slane %v4373, %v4379
      %v4381 = vcombine.low %v4364, %v4372
      %v4383 = vunpack.c.l.s4 1934713408
      %v4384 = vunpack.c.0.s8 %v4383
      %v4385 = vlaneseq
      %v4386 = vshrl.u32 %v4385, 7
      %v4387 = vsub.s32 %v4384, %v4386
      %v4388 = vrot.slane %v4381, %v4387
      %v4389 = vcombine.low %v4380, %v4388
      %v4390 = vcombine.high %v4380, %v4388
      %v4391 = vcombine.low %v3405, %v3412
      %v4393 = vunpack.c.l.s4 1983009808
      %v4394 = vunpack.c.0.s8 %v4393
      %v4395 = vlaneseq
      %v4396 = vshrl.u32 %v4395, 7
      %v4397 = vsub.s32 %v4394, %v4396
      %v4398 = vrot.slane %v4391, %v4397
      %v4399 = vcombine.low %v3429, %v3430
      %v4401 = vunpack.c.l.s4 1983009808
      %v4402 = vunpack.c.0.s8 %v4401
      %v4403 = vlaneseq
      %v4404 = vshrl.u32 %v4403, 7
      %v4405 = vsub.s32 %v4402, %v4404
      %v4406 = vrot.slane %v4399, %v4405
      %v4407 = vcombine.low %v3421, %v3428
      %v4409 = vunpack.c.l.s4 1983009808
      %v4410 = vunpack.c.0.s8 %v4409
      %v4411 = vlaneseq
      %v4412 = vshrl.u32 %v4411, 7
      %v4413 = vsub.s32 %v4410, %v4412
      %v4414 = vrot.slane %v4407, %v4413
      %v4415 = vcombine.low %v3431, %v3432
      %v4417 = vunpack.c.l.s4 1983009808
      %v4418 = vunpack.c.0.s8 %v4417
      %v4419 = vlaneseq
      %v4420 = vshrl.u32 %v4419, 7
      %v4421 = vsub.s32 %v4418, %v4420
      %v4422 = vrot.slane %v4415, %v4421
      %v4423 = vcombine.low %v4398, %v4406
      %v4425 = vunpack.c.l.s4 1934713408
      %v4426 = vunpack.c.0.s8 %v4425
      %v4427 = vlaneseq
      %v4428 = vshrl.u32 %v4427, 7
      %v4429 = vsub.s32 %v4426, %v4428
      %v4430 = vrot.slane %v4423, %v4429
      %v4431 = vcombine.low %v4414, %v4422
      %v4433 = vunpack.c.l.s4 1934713408
      %v4434 = vunpack.c.0.s8 %v4433
      %v4435 = vlaneseq
      %v4436 = vshrl.u32 %v4435, 7
      %v4437 = vsub.s32 %v4434, %v4436
      %v4438 = vrot.slane %v4431, %v4437
      %v4439 = vcombine.low %v4430, %v4438
      %v4440 = vcombine.high %v4430, %v4438
      %v4441 = vcombine.low %v3471, %v3478
      %v4443 = vunpack.c.l.s4 1983009808
      %v4444 = vunpack.c.0.s8 %v4443
      %v4445 = vlaneseq
      %v4446 = vshrl.u32 %v4445, 7
      %v4447 = vsub.s32 %v4444, %v4446
      %v4448 = vrot.slane %v4441, %v4447
      %v4449 = vcombine.low %v3495, %v3496
      %v4451 = vunpack.c.l.s4 1983009808
      %v4452 = vunpack.c.0.s8 %v4451
      %v4453 = vlaneseq
      %v4454 = vshrl.u32 %v4453, 7
      %v4455 = vsub.s32 %v4452, %v4454
      %v4456 = vrot.slane %v4449, %v4455
      %v4457 = vcombine.low %v3487, %v3494
      %v4459 = vunpack.c.l.s4 1983009808
      %v4460 = vunpack.c.0.s8 %v4459
      %v4461 = vlaneseq
      %v4462 = vshrl.u32 %v4461, 7
      %v4463 = vsub.s32 %v4460, %v4462
      %v4464 = vrot.slane %v4457, %v4463
      %v4465 = vcombine.low %v3497, %v3498
      %v4467 = vunpack.c.l.s4 1983009808
      %v4468 = vunpack.c.0.s8 %v4467
      %v4469 = vlaneseq
      %v4470 = vshrl.u32 %v4469, 7
      %v4471 = vsub.s32 %v4468, %v4470
      %v4472 = vrot.slane %v4465, %v4471
      %v4473 = vcombine.low %v4448, %v4456
      %v4475 = vunpack.c.l.s4 1934713408
      %v4476 = vunpack.c.0.s8 %v4475
      %v4477 = vlaneseq
      %v4478 = vshrl.u32 %v4477, 7
      %v4479 = vsub.s32 %v4476, %v4478
      %v4480 = vrot.slane %v4473, %v4479
      %v4481 = vcombine.low %v4464, %v4472
      %v4483 = vunpack.c.l.s4 1934713408
      %v4484 = vunpack.c.0.s8 %v4483
      %v4485 = vlaneseq
      %v4486 = vshrl.u32 %v4485, 7
      %v4487 = vsub.s32 %v4484, %v4486
      %v4488 = vrot.slane %v4481, %v4487
      %v4489 = vcombine.low %v4480, %v4488
      %v4490 = vcombine.high %v4480, %v4488
      %v4491 = vcombine.low %v3537, %v3544
      %v4493 = vunpack.c.l.s4 1983009808
      %v4494 = vunpack.c.0.s8 %v4493
      %v4495 = vlaneseq
      %v4496 = vshrl.u32 %v4495, 7
      %v4497 = vsub.s32 %v4494, %v4496
      %v4498 = vrot.slane %v4491, %v4497
      %v4499 = vcombine.low %v3561, %v3562
      %v4501 = vunpack.c.l.s4 1983009808
      %v4502 = vunpack.c.0.s8 %v4501
      %v4503 = vlaneseq
      %v4504 = vshrl.u32 %v4503, 7
      %v4505 = vsub.s32 %v4502, %v4504
      %v4506 = vrot.slane %v4499, %v4505
      %v4507 = vcombine.low %v3553, %v3560
      %v4509 = vunpack.c.l.s4 1983009808
      %v4510 = vunpack.c.0.s8 %v4509
      %v4511 = vlaneseq
      %v4512 = vshrl.u32 %v4511, 7
      %v4513 = vsub.s32 %v4510, %v4512
      %v4514 = vrot.slane %v4507, %v4513
      %v4515 = vcombine.low %v3563, %v3564
      %v4517 = vunpack.c.l.s4 1983009808
      %v4518 = vunpack.c.0.s8 %v4517
      %v4519 = vlaneseq
      %v4520 = vshrl.u32 %v4519, 7
      %v4521 = vsub.s32 %v4518, %v4520
      %v4522 = vrot.slane %v4515, %v4521
      %v4523 = vcombine.low %v4498, %v4506
      %v4525 = vunpack.c.l.s4 1934713408
      %v4526 = vunpack.c.0.s8 %v4525
      %v4527 = vlaneseq
      %v4528 = vshrl.u32 %v4527, 7
      %v4529 = vsub.s32 %v4526, %v4528
      %v4530 = vrot.slane %v4523, %v4529
      %v4531 = vcombine.low %v4514, %v4522
      %v4533 = vunpack.c.l.s4 1934713408
      %v4534 = vunpack.c.0.s8 %v4533
      %v4535 = vlaneseq
      %v4536 = vshrl.u32 %v4535, 7
      %v4537 = vsub.s32 %v4534, %v4536
      %v4538 = vrot.slane %v4531, %v4537
      %v4539 = vcombine.low %v4530, %v4538
      %v4540 = vcombine.high %v4530, %v4538
      %v4541 = vcombine.low %v3603, %v3610
      %v4543 = vunpack.c.l.s4 1983009808
      %v4544 = vunpack.c.0.s8 %v4543
      %v4545 = vlaneseq
      %v4546 = vshrl.u32 %v4545, 7
      %v4547 = vsub.s32 %v4544, %v4546
      %v4548 = vrot.slane %v4541, %v4547
      %v4549 = vcombine.low %v3627, %v3628
      %v4551 = vunpack.c.l.s4 1983009808
      %v4552 = vunpack.c.0.s8 %v4551
      %v4553 = vlaneseq
      %v4554 = vshrl.u32 %v4553, 7
      %v4555 = vsub.s32 %v4552, %v4554
      %v4556 = vrot.slane %v4549, %v4555
      %v4557 = vcombine.low %v3619, %v3626
      %v4559 = vunpack.c.l.s4 1983009808
      %v4560 = vunpack.c.0.s8 %v4559
      %v4561 = vlaneseq
      %v4562 = vshrl.u32 %v4561, 7
      %v4563 = vsub.s32 %v4560, %v4562
      %v4564 = vrot.slane %v4557, %v4563
      %v4565 = vcombine.low %v3629, %v3630
      %v4567 = vunpack.c.l.s4 1983009808
      %v4568 = vunpack.c.0.s8 %v4567
      %v4569 = vlaneseq
      %v4570 = vshrl.u32 %v4569, 7
      %v4571 = vsub.s32 %v4568, %v4570
      %v4572 = vrot.slane %v4565, %v4571
      %v4573 = vcombine.low %v4548, %v4556
      %v4575 = vunpack.c.l.s4 1934713408
      %v4576 = vunpack.c.0.s8 %v4575
      %v4577 = vlaneseq
      %v4578 = vshrl.u32 %v4577, 7
      %v4579 = vsub.s32 %v4576, %v4578
      %v4580 = vrot.slane %v4573, %v4579
      %v4581 = vcombine.low %v4564, %v4572
      %v4583 = vunpack.c.l.s4 1934713408
      %v4584 = vunpack.c.0.s8 %v4583
      %v4585 = vlaneseq
      %v4586 = vshrl.u32 %v4585, 7
      %v4587 = vsub.s32 %v4584, %v4586
      %v4588 = vrot.slane %v4581, %v4587
      %v4589 = vcombine.low %v4580, %v4588
      %v4590 = vcombine.high %v4580, %v4588
      %v4591 = vcombine.low %v3669, %v3676
      %v4593 = vunpack.c.l.s4 1983009808
      %v4594 = vunpack.c.0.s8 %v4593
      %v4595 = vlaneseq
      %v4596 = vshrl.u32 %v4595, 7
      %v4597 = vsub.s32 %v4594, %v4596
      %v4598 = vrot.slane %v4591, %v4597
      %v4599 = vcombine.low %v3693, %v3694
      %v4601 = vunpack.c.l.s4 1983009808
      %v4602 = vunpack.c.0.s8 %v4601
      %v4603 = vlaneseq
      %v4604 = vshrl.u32 %v4603, 7
      %v4605 = vsub.s32 %v4602, %v4604
      %v4606 = vrot.slane %v4599, %v4605
      %v4607 = vcombine.low %v3685, %v3692
      %v4609 = vunpack.c.l.s4 1983009808
      %v4610 = vunpack.c.0.s8 %v4609
      %v4611 = vlaneseq
      %v4612 = vshrl.u32 %v4611, 7
      %v4613 = vsub.s32 %v4610, %v4612
      %v4614 = vrot.slane %v4607, %v4613
      %v4615 = vcombine.low %v3695, %v3696
      %v4617 = vunpack.c.l.s4 1983009808
      %v4618 = vunpack.c.0.s8 %v4617
      %v4619 = vlaneseq
      %v4620 = vshrl.u32 %v4619, 7
      %v4621 = vsub.s32 %v4618, %v4620
      %v4622 = vrot.slane %v4615, %v4621
      %v4623 = vcombine.low %v4598, %v4606
      %v4625 = vunpack.c.l.s4 1934713408
      %v4626 = vunpack.c.0.s8 %v4625
      %v4627 = vlaneseq
      %v4628 = vshrl.u32 %v4627, 7
      %v4629 = vsub.s32 %v4626, %v4628
      %v4630 = vrot.slane %v4623, %v4629
      %v4631 = vcombine.low %v4614, %v4622
      %v4633 = vunpack.c.l.s4 1934713408
      %v4634 = vunpack.c.0.s8 %v4633
      %v4635 = vlaneseq
      %v4636 = vshrl.u32 %v4635, 7
      %v4637 = vsub.s32 %v4634, %v4636
      %v4638 = vrot.slane %v4631, %v4637
      %v4639 = vcombine.low %v4630, %v4638
      %v4640 = vcombine.high %v4630, %v4638
      %v4641 = vcombine.low %v3735, %v3742
      %v4643 = vunpack.c.l.s4 1983009808
      %v4644 = vunpack.c.0.s8 %v4643
      %v4645 = vlaneseq
      %v4646 = vshrl.u32 %v4645, 7
      %v4647 = vsub.s32 %v4644, %v4646
      %v4648 = vrot.slane %v4641, %v4647
      %v4649 = vcombine.low %v3759, %v3760
      %v4651 = vunpack.c.l.s4 1983009808
      %v4652 = vunpack.c.0.s8 %v4651
      %v4653 = vlaneseq
      %v4654 = vshrl.u32 %v4653, 7
      %v4655 = vsub.s32 %v4652, %v4654
      %v4656 = vrot.slane %v4649, %v4655
      %v4657 = vcombine.low %v3751, %v3758
      %v4659 = vunpack.c.l.s4 1983009808
      %v4660 = vunpack.c.0.s8 %v4659
      %v4661 = vlaneseq
      %v4662 = vshrl.u32 %v4661, 7
      %v4663 = vsub.s32 %v4660, %v4662
      %v4664 = vrot.slane %v4657, %v4663
      %v4665 = vcombine.low %v3761, %v3762
      %v4667 = vunpack.c.l.s4 1983009808
      %v4668 = vunpack.c.0.s8 %v4667
      %v4669 = vlaneseq
      %v4670 = vshrl.u32 %v4669, 7
      %v4671 = vsub.s32 %v4668, %v4670
      %v4672 = vrot.slane %v4665, %v4671
      %v4673 = vcombine.low %v4648, %v4656
      %v4675 = vunpack.c.l.s4 1934713408
      %v4676 = vunpack.c.0.s8 %v4675
      %v4677 = vlaneseq
      %v4678 = vshrl.u32 %v4677, 7
      %v4679 = vsub.s32 %v4676, %v4678
      %v4680 = vrot.slane %v4673, %v4679
      %v4681 = vcombine.low %v4664, %v4672
      %v4683 = vunpack.c.l.s4 1934713408
      %v4684 = vunpack.c.0.s8 %v4683
      %v4685 = vlaneseq
      %v4686 = vshrl.u32 %v4685, 7
      %v4687 = vsub.s32 %v4684, %v4686
      %v4688 = vrot.slane %v4681, %v4687
      %v4689 = vcombine.low %v4680, %v4688
      %v4690 = vcombine.high %v4680, %v4688
      %v4691 = vcombine.low %v3801, %v3808
      %v4693 = vunpack.c.l.s4 1983009808
      %v4694 = vunpack.c.0.s8 %v4693
      %v4695 = vlaneseq
      %v4696 = vshrl.u32 %v4695, 7
      %v4697 = vsub.s32 %v4694, %v4696
      %v4698 = vrot.slane %v4691, %v4697
      %v4699 = vcombine.low %v3825, %v3826
      %v4701 = vunpack.c.l.s4 1983009808
      %v4702 = vunpack.c.0.s8 %v4701
      %v4703 = vlaneseq
      %v4704 = vshrl.u32 %v4703, 7
      %v4705 = vsub.s32 %v4702, %v4704
      %v4706 = vrot.slane %v4699, %v4705
      %v4707 = vcombine.low %v3817, %v3824
      %v4709 = vunpack.c.l.s4 1983009808
      %v4710 = vunpack.c.0.s8 %v4709
      %v4711 = vlaneseq
      %v4712 = vshrl.u32 %v4711, 7
      %v4713 = vsub.s32 %v4710, %v4712
      %v4714 = vrot.slane %v4707, %v4713
      %v4715 = vcombine.low %v3827, %v3828
      %v4717 = vunpack.c.l.s4 1983009808
      %v4718 = vunpack.c.0.s8 %v4717
      %v4719 = vlaneseq
      %v4720 = vshrl.u32 %v4719, 7
      %v4721 = vsub.s32 %v4718, %v4720
      %v4722 = vrot.slane %v4715, %v4721
      %v4723 = vcombine.low %v4698, %v4706
      %v4725 = vunpack.c.l.s4 1934713408
      %v4726 = vunpack.c.0.s8 %v4725
      %v4727 = vlaneseq
      %v4728 = vshrl.u32 %v4727, 7
      %v4729 = vsub.s32 %v4726, %v4728
      %v4730 = vrot.slane %v4723, %v4729
      %v4731 = vcombine.low %v4714, %v4722
      %v4733 = vunpack.c.l.s4 1934713408
      %v4734 = vunpack.c.0.s8 %v4733
      %v4735 = vlaneseq
      %v4736 = vshrl.u32 %v4735, 7
      %v4737 = vsub.s32 %v4734, %v4736
      %v4738 = vrot.slane %v4731, %v4737
      %v4739 = vcombine.low %v4730, %v4738
      %v4740 = vcombine.high %v4730, %v4738
      %v4741 = vcombine.low %v3867, %v3874
      %v4743 = vunpack.c.l.s4 1983009808
      %v4744 = vunpack.c.0.s8 %v4743
      %v4745 = vlaneseq
      %v4746 = vshrl.u32 %v4745, 7
      %v4747 = vsub.s32 %v4744, %v4746
      %v4748 = vrot.slane %v4741, %v4747
      %v4749 = vcombine.low %v3891, %v3892
      %v4751 = vunpack.c.l.s4 1983009808
      %v4752 = vunpack.c.0.s8 %v4751
      %v4753 = vlaneseq
      %v4754 = vshrl.u32 %v4753, 7
      %v4755 = vsub.s32 %v4752, %v4754
      %v4756 = vrot.slane %v4749, %v4755
      %v4757 = vcombine.low %v3883, %v3890
      %v4759 = vunpack.c.l.s4 1983009808
      %v4760 = vunpack.c.0.s8 %v4759
      %v4761 = vlaneseq
      %v4762 = vshrl.u32 %v4761, 7
      %v4763 = vsub.s32 %v4760, %v4762
      %v4764 = vrot.slane %v4757, %v4763
      %v4765 = vcombine.low %v3893, %v3894
      %v4767 = vunpack.c.l.s4 1983009808
      %v4768 = vunpack.c.0.s8 %v4767
      %v4769 = vlaneseq
      %v4770 = vshrl.u32 %v4769, 7
      %v4771 = vsub.s32 %v4768, %v4770
      %v4772 = vrot.slane %v4765, %v4771
      %v4773 = vcombine.low %v4748, %v4756
      %v4775 = vunpack.c.l.s4 1934713408
      %v4776 = vunpack.c.0.s8 %v4775
      %v4777 = vlaneseq
      %v4778 = vshrl.u32 %v4777, 7
      %v4779 = vsub.s32 %v4776, %v4778
      %v4780 = vrot.slane %v4773, %v4779
      %v4781 = vcombine.low %v4764, %v4772
      %v4783 = vunpack.c.l.s4 1934713408
      %v4784 = vunpack.c.0.s8 %v4783
      %v4785 = vlaneseq
      %v4786 = vshrl.u32 %v4785, 7
      %v4787 = vsub.s32 %v4784, %v4786
      %v4788 = vrot.slane %v4781, %v4787
      %v4789 = vcombine.low %v4780, %v4788
      %v4790 = vcombine.high %v4780, %v4788
      %v4791 = vcombine.low %v3933, %v3940
      %v4793 = vunpack.c.l.s4 1983009808
      %v4794 = vunpack.c.0.s8 %v4793
      %v4795 = vlaneseq
      %v4796 = vshrl.u32 %v4795, 7
      %v4797 = vsub.s32 %v4794, %v4796
      %v4798 = vrot.slane %v4791, %v4797
      %v4799 = vcombine.low %v3957, %v3958
      %v4801 = vunpack.c.l.s4 1983009808
      %v4802 = vunpack.c.0.s8 %v4801
      %v4803 = vlaneseq
      %v4804 = vshrl.u32 %v4803, 7
      %v4805 = vsub.s32 %v4802, %v4804
      %v4806 = vrot.slane %v4799, %v4805
      %v4807 = vcombine.low %v3949, %v3956
      %v4809 = vunpack.c.l.s4 1983009808
      %v4810 = vunpack.c.0.s8 %v4809
      %v4811 = vlaneseq
      %v4812 = vshrl.u32 %v4811, 7
      %v4813 = vsub.s32 %v4810, %v4812
      %v4814 = vrot.slane %v4807, %v4813
      %v4815 = vcombine.low %v3959, %v3960
      %v4817 = vunpack.c.l.s4 1983009808
      %v4818 = vunpack.c.0.s8 %v4817
      %v4819 = vlaneseq
      %v4820 = vshrl.u32 %v4819, 7
      %v4821 = vsub.s32 %v4818, %v4820
      %v4822 = vrot.slane %v4815, %v4821
      %v4823 = vcombine.low %v4798, %v4806
      %v4825 = vunpack.c.l.s4 1934713408
      %v4826 = vunpack.c.0.s8 %v4825
      %v4827 = vlaneseq
      %v4828 = vshrl.u32 %v4827, 7
      %v4829 = vsub.s32 %v4826, %v4828
      %v4830 = vrot.slane %v4823, %v4829
      %v4831 = vcombine.low %v4814, %v4822
      %v4833 = vunpack.c.l.s4 1934713408
      %v4834 = vunpack.c.0.s8 %v4833
      %v4835 = vlaneseq
      %v4836 = vshrl.u32 %v4835, 7
      %v4837 = vsub.s32 %v4834, %v4836
      %v4838 = vrot.slane %v4831, %v4837
      %v4839 = vcombine.low %v4830, %v4838
      %v4840 = vcombine.high %v4830, %v4838
      %v4841 = vcombine.low %v3999, %v4006
      %v4843 = vunpack.c.l.s4 1983009808
      %v4844 = vunpack.c.0.s8 %v4843
      %v4845 = vlaneseq
      %v4846 = vshrl.u32 %v4845, 7
      %v4847 = vsub.s32 %v4844, %v4846
      %v4848 = vrot.slane %v4841, %v4847
      %v4849 = vcombine.low %v4023, %v4024
      %v4851 = vunpack.c.l.s4 1983009808
      %v4852 = vunpack.c.0.s8 %v4851
      %v4853 = vlaneseq
      %v4854 = vshrl.u32 %v4853, 7
      %v4855 = vsub.s32 %v4852, %v4854
      %v4856 = vrot.slane %v4849, %v4855
      %v4857 = vcombine.low %v4015, %v4022
      %v4859 = vunpack.c.l.s4 1983009808
      %v4860 = vunpack.c.0.s8 %v4859
      %v4861 = vlaneseq
      %v4862 = vshrl.u32 %v4861, 7
      %v4863 = vsub.s32 %v4860, %v4862
      %v4864 = vrot.slane %v4857, %v4863
      %v4865 = vcombine.low %v4025, %v4026
      %v4867 = vunpack.c.l.s4 1983009808
      %v4868 = vunpack.c.0.s8 %v4867
      %v4869 = vlaneseq
      %v4870 = vshrl.u32 %v4869, 7
      %v4871 = vsub.s32 %v4868, %v4870
      %v4872 = vrot.slane %v4865, %v4871
      %v4873 = vcombine.low %v4848, %v4856
      %v4875 = vunpack.c.l.s4 1934713408
      %v4876 = vunpack.c.0.s8 %v4875
      %v4877 = vlaneseq
      %v4878 = vshrl.u32 %v4877, 7
      %v4879 = vsub.s32 %v4876, %v4878
      %v4880 = vrot.slane %v4873, %v4879
      %v4881 = vcombine.low %v4864, %v4872
      %v4883 = vunpack.c.l.s4 1934713408
      %v4884 = vunpack.c.0.s8 %v4883
      %v4885 = vlaneseq
      %v4886 = vshrl.u32 %v4885, 7
      %v4887 = vsub.s32 %v4884, %v4886
      %v4888 = vrot.slane %v4881, %v4887
      %v4889 = vcombine.low %v4880, %v4888
      %v4890 = vcombine.high %v4880, %v4888
      %v4891 = vcombine.low %v4065, %v4072
      %v4893 = vunpack.c.l.s4 1983009808
      %v4894 = vunpack.c.0.s8 %v4893
      %v4895 = vlaneseq
      %v4896 = vshrl.u32 %v4895, 7
      %v4897 = vsub.s32 %v4894, %v4896
      %v4898 = vrot.slane %v4891, %v4897
      %v4899 = vcombine.low %v4089, %v4090
      %v4901 = vunpack.c.l.s4 1983009808
      %v4902 = vunpack.c.0.s8 %v4901
      %v4903 = vlaneseq
      %v4904 = vshrl.u32 %v4903, 7
      %v4905 = vsub.s32 %v4902, %v4904
      %v4906 = vrot.slane %v4899, %v4905
      %v4907 = vcombine.low %v4081, %v4088
      %v4909 = vunpack.c.l.s4 1983009808
      %v4910 = vunpack.c.0.s8 %v4909
      %v4911 = vlaneseq
      %v4912 = vshrl.u32 %v4911, 7
      %v4913 = vsub.s32 %v4910, %v4912
      %v4914 = vrot.slane %v4907, %v4913
      %v4915 = vcombine.low %v4091, %v4092
      %v4917 = vunpack.c.l.s4 1983009808
      %v4918 = vunpack.c.0.s8 %v4917
      %v4919 = vlaneseq
      %v4920 = vshrl.u32 %v4919, 7
      %v4921 = vsub.s32 %v4918, %v4920
      %v4922 = vrot.slane %v4915, %v4921
      %v4923 = vcombine.low %v4898, %v4906
      %v4925 = vunpack.c.l.s4 1934713408
      %v4926 = vunpack.c.0.s8 %v4925
      %v4927 = vlaneseq
      %v4928 = vshrl.u32 %v4927, 7
      %v4929 = vsub.s32 %v4926, %v4928
      %v4930 = vrot.slane %v4923, %v4929
      %v4931 = vcombine.low %v4914, %v4922
      %v4933 = vunpack.c.l.s4 1934713408
      %v4934 = vunpack.c.0.s8 %v4933
      %v4935 = vlaneseq
      %v4936 = vshrl.u32 %v4935, 7
      %v4937 = vsub.s32 %v4934, %v4936
      %v4938 = vrot.slane %v4931, %v4937
      %v4939 = vcombine.low %v4930, %v4938
      %v4940 = vcombine.high %v4930, %v4938
      %v4941 = vcombine.low %v4131, %v4138
      %v4943 = vunpack.c.l.s4 1983009808
      %v4944 = vunpack.c.0.s8 %v4943
      %v4945 = vlaneseq
      %v4946 = vshrl.u32 %v4945, 7
      %v4947 = vsub.s32 %v4944, %v4946
      %v4948 = vrot.slane %v4941, %v4947
      %v4949 = vcombine.low %v4155, %v4156
      %v4951 = vunpack.c.l.s4 1983009808
      %v4952 = vunpack.c.0.s8 %v4951
      %v4953 = vlaneseq
      %v4954 = vshrl.u32 %v4953, 7
      %v4955 = vsub.s32 %v4952, %v4954
      %v4956 = vrot.slane %v4949, %v4955
      %v4957 = vcombine.low %v4147, %v4154
      %v4959 = vunpack.c.l.s4 1983009808
      %v4960 = vunpack.c.0.s8 %v4959
      %v4961 = vlaneseq
      %v4962 = vshrl.u32 %v4961, 7
      %v4963 = vsub.s32 %v4960, %v4962
      %v4964 = vrot.slane %v4957, %v4963
      %v4965 = vcombine.low %v4157, %v4158
      %v4967 = vunpack.c.l.s4 1983009808
      %v4968 = vunpack.c.0.s8 %v4967
      %v4969 = vlaneseq
      %v4970 = vshrl.u32 %v4969, 7
      %v4971 = vsub.s32 %v4968, %v4970
      %v4972 = vrot.slane %v4965, %v4971
      %v4973 = vcombine.low %v4948, %v4956
      %v4975 = vunpack.c.l.s4 1934713408
      %v4976 = vunpack.c.0.s8 %v4975
      %v4977 = vlaneseq
      %v4978 = vshrl.u32 %v4977, 7
      %v4979 = vsub.s32 %v4976, %v4978
      %v4980 = vrot.slane %v4973, %v4979
      %v4981 = vcombine.low %v4964, %v4972
      %v4983 = vunpack.c.l.s4 1934713408
      %v4984 = vunpack.c.0.s8 %v4983
      %v4985 = vlaneseq
      %v4986 = vshrl.u32 %v4985, 7
      %v4987 = vsub.s32 %v4984, %v4986
      %v4988 = vrot.slane %v4981, %v4987
      %v4989 = vcombine.low %v4980, %v4988
      %v4990 = vcombine.high %v4980, %v4988
      %v4991 = vcombine.low %v4197, %v4204
      %v4993 = vunpack.c.l.s4 1983009808
      %v4994 = vunpack.c.0.s8 %v4993
      %v4995 = vlaneseq
      %v4996 = vshrl.u32 %v4995, 7
      %v4997 = vsub.s32 %v4994, %v4996
      %v4998 = vrot.slane %v4991, %v4997
      %v4999 = vcombine.low %v4221, %v4222
      %v5001 = vunpack.c.l.s4 1983009808
      %v5002 = vunpack.c.0.s8 %v5001
      %v5003 = vlaneseq
      %v5004 = vshrl.u32 %v5003, 7
      %v5005 = vsub.s32 %v5002, %v5004
      %v5006 = vrot.slane %v4999, %v5005
      %v5007 = vcombine.low %v4213, %v4220
      %v5009 = vunpack.c.l.s4 1983009808
      %v5010 = vunpack.c.0.s8 %v5009
      %v5011 = vlaneseq
      %v5012 = vshrl.u32 %v5011, 7
      %v5013 = vsub.s32 %v5010, %v5012
      %v5014 = vrot.slane %v5007, %v5013
      %v5015 = vcombine.low %v4223, %v4224
      %v5017 = vunpack.c.l.s4 1983009808
      %v5018 = vunpack.c.0.s8 %v5017
      %v5019 = vlaneseq
      %v5020 = vshrl.u32 %v5019, 7
      %v5021 = vsub.s32 %v5018, %v5020
      %v5022 = vrot.slane %v5015, %v5021
      %v5023 = vcombine.low %v4998, %v5006
      %v5025 = vunpack.c.l.s4 1934713408
      %v5026 = vunpack.c.0.s8 %v5025
      %v5027 = vlaneseq
      %v5028 = vshrl.u32 %v5027, 7
      %v5029 = vsub.s32 %v5026, %v5028
      %v5030 = vrot.slane %v5023, %v5029
      %v5031 = vcombine.low %v5014, %v5022
      %v5033 = vunpack.c.l.s4 1934713408
      %v5034 = vunpack.c.0.s8 %v5033
      %v5035 = vlaneseq
      %v5036 = vshrl.u32 %v5035, 7
      %v5037 = vsub.s32 %v5034, %v5036
      %v5038 = vrot.slane %v5031, %v5037
      %v5039 = vcombine.low %v5030, %v5038
      %v5040 = vcombine.high %v5030, %v5038
      %v5041 = vcombine.low %v4263, %v4270
      %v5043 = vunpack.c.l.s4 1983009808
      %v5044 = vunpack.c.0.s8 %v5043
      %v5045 = vlaneseq
      %v5046 = vshrl.u32 %v5045, 7
      %v5047 = vsub.s32 %v5044, %v5046
      %v5048 = vrot.slane %v5041, %v5047
      %v5049 = vcombine.low %v4287, %v4288
      %v5051 = vunpack.c.l.s4 1983009808
      %v5052 = vunpack.c.0.s8 %v5051
      %v5053 = vlaneseq
      %v5054 = vshrl.u32 %v5053, 7
      %v5055 = vsub.s32 %v5052, %v5054
      %v5056 = vrot.slane %v5049, %v5055
      %v5057 = vcombine.low %v4279, %v4286
      %v5059 = vunpack.c.l.s4 1983009808
      %v5060 = vunpack.c.0.s8 %v5059
      %v5061 = vlaneseq
      %v5062 = vshrl.u32 %v5061, 7
      %v5063 = vsub.s32 %v5060, %v5062
      %v5064 = vrot.slane %v5057, %v5063
      %v5065 = vcombine.low %v4289, %v4290
      %v5067 = vunpack.c.l.s4 1983009808
      %v5068 = vunpack.c.0.s8 %v5067
      %v5069 = vlaneseq
      %v5070 = vshrl.u32 %v5069, 7
      %v5071 = vsub.s32 %v5068, %v5070
      %v5072 = vrot.slane %v5065, %v5071
      %v5073 = vcombine.low %v5048, %v5056
      %v5075 = vunpack.c.l.s4 1934713408
      %v5076 = vunpack.c.0.s8 %v5075
      %v5077 = vlaneseq
      %v5078 = vshrl.u32 %v5077, 7
      %v5079 = vsub.s32 %v5076, %v5078
      %v5080 = vrot.slane %v5073, %v5079
      %v5081 = vcombine.low %v5064, %v5072
      %v5083 = vunpack.c.l.s4 1934713408
      %v5084 = vunpack.c.0.s8 %v5083
      %v5085 = vlaneseq
      %v5086 = vshrl.u32 %v5085, 7
      %v5087 = vsub.s32 %v5084, %v5086
      %v5088 = vrot.slane %v5081, %v5087
      %v5089 = vcombine.low %v5080, %v5088
      %v5090 = vcombine.high %v5080, %v5088
      %v5093 = vpack.i.b16 %v4389, %v4339
      %v5094 = vshrl.u32 %v4339, 16
      %v5095 = vshrl.u32 %v4389, 16
      %v5096 = vpack.i.b16 %v5095, %v5094
      %v5099 = vpack.i.b16 %v4390, %v4340
      %v5100 = vshrl.u32 %v4340, 16
      %v5101 = vshrl.u32 %v4390, 16
      %v5102 = vpack.i.b16 %v5101, %v5100
      %v5105 = vpack.i.b16 %v4489, %v4439
      %v5106 = vshrl.u32 %v4439, 16
      %v5107 = vshrl.u32 %v4489, 16
      %v5108 = vpack.i.b16 %v5107, %v5106
      %v5111 = vpack.i.b16 %v4490, %v4440
      %v5112 = vshrl.u32 %v4440, 16
      %v5113 = vshrl.u32 %v4490, 16
      %v5114 = vpack.i.b16 %v5113, %v5112
      %v5117 = vpack.i.b16 %v4589, %v4539
      %v5118 = vshrl.u32 %v4539, 16
      %v5119 = vshrl.u32 %v4589, 16
      %v5120 = vpack.i.b16 %v5119, %v5118
      %v5123 = vpack.i.b16 %v4590, %v4540
      %v5124 = vshrl.u32 %v4540, 16
      %v5125 = vshrl.u32 %v4590, 16
      %v5126 = vpack.i.b16 %v5125, %v5124
      %v5129 = vpack.i.b16 %v4689, %v4639
      %v5130 = vshrl.u32 %v4639, 16
      %v5131 = vshrl.u32 %v4689, 16
      %v5132 = vpack.i.b16 %v5131, %v5130
      %v5135 = vpack.i.b16 %v4690, %v4640
      %v5136 = vshrl.u32 %v4640, 16
      %v5137 = vshrl.u32 %v4690, 16
      %v5138 = vpack.i.b16 %v5137, %v5136
      %v5141 = vpack.i.b16 %v4789, %v4739
      %v5142 = vshrl.u32 %v4739, 16
      %v5143 = vshrl.u32 %v4789, 16
      %v5144 = vpack.i.b16 %v5143, %v5142
      %v5147 = vpack.i.b16 %v4790, %v4740
      %v5148 = vshrl.u32 %v4740, 16
      %v5149 = vshrl.u32 %v4790, 16
      %v5150 = vpack.i.b16 %v5149, %v5148
      %v5153 = vpack.i.b16 %v4889, %v4839
      %v5154 = vshrl.u32 %v4839, 16
      %v5155 = vshrl.u32 %v4889, 16
      %v5156 = vpack.i.b16 %v5155, %v5154
      %v5159 = vpack.i.b16 %v4890, %v4840
      %v5160 = vshrl.u32 %v4840, 16
      %v5161 = vshrl.u32 %v4890, 16
      %v5162 = vpack.i.b16 %v5161, %v5160
      %v5165 = vpack.i.b16 %v4989, %v4939
      %v5166 = vshrl.u32 %v4939, 16
      %v5167 = vshrl.u32 %v4989, 16
      %v5168 = vpack.i.b16 %v5167, %v5166
      %v5171 = vpack.i.b16 %v4990, %v4940
      %v5172 = vshrl.u32 %v4940, 16
      %v5173 = vshrl.u32 %v4990, 16
      %v5174 = vpack.i.b16 %v5173, %v5172
      %v5177 = vpack.i.b16 %v5089, %v5039
      %v5178 = vshrl.u32 %v5039, 16
      %v5179 = vshrl.u32 %v5089, 16
      %v5180 = vpack.i.b16 %v5179, %v5178
      %v5183 = vpack.i.b16 %v5090, %v5040
      %v5184 = vshrl.u32 %v5040, 16
      %v5185 = vshrl.u32 %v5090, 16
      %v5186 = vpack.i.b16 %v5185, %v5184
      %5187 = vrot.lane.b32.xlu0 %v893, 64
      %v5188 = vpop.permute.xlu0 %5187
      %5189 = vrot.lane.b32.xlu0 %v894, 64
      %v5190 = vpop.permute.xlu0 %5189
      %5191 = vrot.lane.b32.xlu0 %v895, 64
      %v5192 = vpop.permute.xlu0 %5191
      %5193 = vrot.lane.b32.xlu0 %v896, 64
      %v5194 = vpop.permute.xlu0 %5193
      %5195 = vrot.lane.b32.xlu0 %v897, 64
      %v5196 = vpop.permute.xlu0 %5195
      %5197 = vrot.lane.b32.xlu0 %v898, 64
      %v5198 = vpop.permute.xlu0 %5197
      %5199 = vrot.lane.b32.xlu0 %v899, 64
      %v5200 = vpop.permute.xlu0 %5199
      %5201 = vrot.lane.b32.xlu0 %v900, 64
      %v5202 = vpop.permute.xlu0 %5201
      %5203 = vrot.lane.b32.xlu0 %v910, 64
      %v5204 = vpop.permute.xlu0 %5203
      %5205 = vrot.lane.b32.xlu0 %v912, 64
      %v5206 = vpop.permute.xlu0 %5205
      %5207 = vrot.lane.b32.xlu0 %v914, 64
      %v5208 = vpop.permute.xlu0 %5207
      %5209 = vrot.lane.b32.xlu0 %v916, 64
      %v5210 = vpop.permute.xlu0 %5209
      %5211 = vrot.lane.b32.xlu0 %v918, 64
      %v5212 = vpop.permute.xlu0 %5211
      %5213 = vrot.lane.b32.xlu0 %v920, 64
      %v5214 = vpop.permute.xlu0 %5213
      %5215 = vrot.lane.b32.xlu0 %v922, 64
      %v5216 = vpop.permute.xlu0 %5215
      %5217 = vrot.lane.b32.xlu0 %v924, 64
      %v5218 = vpop.permute.xlu0 %5217
      %5219 = vrot.lane.b32.xlu0 %v926, 64
      %v5220 = vpop.permute.xlu0 %5219
      %5221 = vrot.lane.b32.xlu0 %v928, 64
      %v5222 = vpop.permute.xlu0 %5221
      %5223 = vrot.lane.b32.xlu0 %v930, 64
      %v5224 = vpop.permute.xlu0 %5223
      %5225 = vrot.lane.b32.xlu0 %v932, 64
      %v5226 = vpop.permute.xlu0 %5225
      %5227 = vrot.lane.b32.xlu0 %v934, 64
      %v5228 = vpop.permute.xlu0 %5227
      %5229 = vrot.lane.b32.xlu0 %v936, 64
      %v5230 = vpop.permute.xlu0 %5229
      %5231 = vrot.lane.b32.xlu0 %v938, 64
      %v5232 = vpop.permute.xlu0 %5231
      %5233 = vrot.lane.b32.xlu0 %v940, 64
      %v5234 = vpop.permute.xlu0 %5233
      %5235 = vrot.lane.b32.xlu0 %v942, 64
      %v5236 = vpop.permute.xlu0 %5235
      %5237 = vrot.lane.b32.xlu0 %v944, 64
      %v5238 = vpop.permute.xlu0 %5237
      %5239 = vrot.lane.b32.xlu0 %v946, 64
      %v5240 = vpop.permute.xlu0 %5239
      %5241 = vrot.lane.b32.xlu0 %v948, 64
      %v5242 = vpop.permute.xlu0 %5241
      %5243 = vrot.lane.b32.xlu0 %v950, 64
      %v5244 = vpop.permute.xlu0 %5243
      %5245 = vrot.lane.b32.xlu0 %v952, 64
      %v5246 = vpop.permute.xlu0 %5245
      %5247 = vrot.lane.b32.xlu0 %v954, 64
      %v5248 = vpop.permute.xlu0 %5247
      %5249 = vrot.lane.b32.xlu0 %v956, 64
      %v5250 = vpop.permute.xlu0 %5249
      %v5253 = vpack.i.b16 %v5204, %v5188
      %v5255 = vshrl.u32 %v5188, 16
      %v5256 = vshrl.u32 %v5204, 16
      %v5257 = vpack.i.b16 %v5256, %v5255
      %v5261 = vpack.i.b16 %v5236, %v5220
      %v5263 = vshrl.u32 %v5220, 16
      %v5264 = vshrl.u32 %v5236, 16
      %v5265 = vpack.i.b16 %v5264, %v5263
      %v5269 = vpack.i.b16 %v5206, %v5190
      %v5271 = vshrl.u32 %v5190, 16
      %v5272 = vshrl.u32 %v5206, 16
      %v5273 = vpack.i.b16 %v5272, %v5271
      %v5277 = vpack.i.b16 %v5238, %v5222
      %v5279 = vshrl.u32 %v5222, 16
      %v5280 = vshrl.u32 %v5238, 16
      %v5281 = vpack.i.b16 %v5280, %v5279
      %v5285 = vpack.i.b16 %v5208, %v5192
      %v5287 = vshrl.u32 %v5192, 16
      %v5288 = vshrl.u32 %v5208, 16
      %v5289 = vpack.i.b16 %v5288, %v5287
      %v5293 = vpack.i.b16 %v5240, %v5224
      %v5295 = vshrl.u32 %v5224, 16
      %v5296 = vshrl.u32 %v5240, 16
      %v5297 = vpack.i.b16 %v5296, %v5295
      %v5301 = vpack.i.b16 %v5210, %v5194
      %v5303 = vshrl.u32 %v5194, 16
      %v5304 = vshrl.u32 %v5210, 16
      %v5305 = vpack.i.b16 %v5304, %v5303
      %v5309 = vpack.i.b16 %v5242, %v5226
      %v5311 = vshrl.u32 %v5226, 16
      %v5312 = vshrl.u32 %v5242, 16
      %v5313 = vpack.i.b16 %v5312, %v5311
      %v5317 = vpack.i.b16 %v5212, %v5196
      %v5319 = vshrl.u32 %v5196, 16
      %v5320 = vshrl.u32 %v5212, 16
      %v5321 = vpack.i.b16 %v5320, %v5319
      %v5325 = vpack.i.b16 %v5244, %v5228
      %v5327 = vshrl.u32 %v5228, 16
      %v5328 = vshrl.u32 %v5244, 16
      %v5329 = vpack.i.b16 %v5328, %v5327
      %v5333 = vpack.i.b16 %v5214, %v5198
      %v5335 = vshrl.u32 %v5198, 16
      %v5336 = vshrl.u32 %v5214, 16
      %v5337 = vpack.i.b16 %v5336, %v5335
      %v5341 = vpack.i.b16 %v5246, %v5230
      %v5343 = vshrl.u32 %v5230, 16
      %v5344 = vshrl.u32 %v5246, 16
      %v5345 = vpack.i.b16 %v5344, %v5343
      %v5349 = vpack.i.b16 %v5216, %v5200
      %v5351 = vshrl.u32 %v5200, 16
      %v5352 = vshrl.u32 %v5216, 16
      %v5353 = vpack.i.b16 %v5352, %v5351
      %v5357 = vpack.i.b16 %v5248, %v5232
      %v5359 = vshrl.u32 %v5232, 16
      %v5360 = vshrl.u32 %v5248, 16
      %v5361 = vpack.i.b16 %v5360, %v5359
      %v5365 = vpack.i.b16 %v5218, %v5202
      %v5367 = vshrl.u32 %v5202, 16
      %v5368 = vshrl.u32 %v5218, 16
      %v5369 = vpack.i.b16 %v5368, %v5367
      %v5373 = vpack.i.b16 %v5250, %v5234
      %v5375 = vshrl.u32 %v5234, 16
      %v5376 = vshrl.u32 %v5250, 16
      %v5377 = vpack.i.b16 %v5376, %v5375
      %v5379 = vcombine.high %v5253, %v974
      %v5381 = vunpack.c.l.s4 1983009808
      %v5382 = vunpack.c.0.s8 %v5381
      %v5383 = vlaneseq
      %v5384 = vshrl.u32 %v5383, 7
      %v5385 = vsub.s32 %v5382, %v5384
      %v5386 = vrot.slane %v5253, %v5385
      %v5388 = vunpack.c.l.s4 1983009808
      %v5389 = vunpack.c.0.s8 %v5388
      %v5390 = vlaneseq
      %v5391 = vshrl.u32 %v5390, 7
      %v5392 = vsub.s32 %v5389, %v5391
      %v5393 = vrot.slane %v5379, %v5392
      %v5394 = vcombine.high %v5261, %v974
      %v5396 = vunpack.c.l.s4 1983009808
      %v5397 = vunpack.c.0.s8 %v5396
      %v5398 = vlaneseq
      %v5399 = vshrl.u32 %v5398, 7
      %v5400 = vsub.s32 %v5397, %v5399
      %v5401 = vrot.slane %v5261, %v5400
      %v5403 = vunpack.c.l.s4 1983009808
      %v5404 = vunpack.c.0.s8 %v5403
      %v5405 = vlaneseq
      %v5406 = vshrl.u32 %v5405, 7
      %v5407 = vsub.s32 %v5404, %v5406
      %v5408 = vrot.slane %v5394, %v5407
      %v5409 = vcombine.low %v5386, %v5401
      %v5410 = vcombine.high %v5386, %v5401
      %v5412 = vunpack.c.l.s4 1934713408
      %v5413 = vunpack.c.0.s8 %v5412
      %v5414 = vlaneseq
      %v5415 = vshrl.u32 %v5414, 7
      %v5416 = vsub.s32 %v5413, %v5415
      %v5417 = vrot.slane %v5409, %v5416
      %v5419 = vunpack.c.l.s4 1934713408
      %v5420 = vunpack.c.0.s8 %v5419
      %v5421 = vlaneseq
      %v5422 = vshrl.u32 %v5421, 7
      %v5423 = vsub.s32 %v5420, %v5422
      %v5424 = vrot.slane %v5410, %v5423
      %v5425 = vcombine.low %v5393, %v5408
      %v5426 = vcombine.high %v5393, %v5408
      %v5428 = vunpack.c.l.s4 1934713408
      %v5429 = vunpack.c.0.s8 %v5428
      %v5430 = vlaneseq
      %v5431 = vshrl.u32 %v5430, 7
      %v5432 = vsub.s32 %v5429, %v5431
      %v5433 = vrot.slane %v5425, %v5432
      %v5435 = vunpack.c.l.s4 1934713408
      %v5436 = vunpack.c.0.s8 %v5435
      %v5437 = vlaneseq
      %v5438 = vshrl.u32 %v5437, 7
      %v5439 = vsub.s32 %v5436, %v5438
      %v5440 = vrot.slane %v5426, %v5439
      %v5441 = vcombine.high %v5417, 0
      %v5442 = vcombine.high %v5424, 0
      %v5443 = vcombine.high %v5433, 0
      %v5444 = vcombine.high %v5440, 0
      %v5445 = vcombine.high %v5257, %v977
      %v5447 = vunpack.c.l.s4 1983009808
      %v5448 = vunpack.c.0.s8 %v5447
      %v5449 = vlaneseq
      %v5450 = vshrl.u32 %v5449, 7
      %v5451 = vsub.s32 %v5448, %v5450
      %v5452 = vrot.slane %v5257, %v5451
      %v5454 = vunpack.c.l.s4 1983009808
      %v5455 = vunpack.c.0.s8 %v5454
      %v5456 = vlaneseq
      %v5457 = vshrl.u32 %v5456, 7
      %v5458 = vsub.s32 %v5455, %v5457
      %v5459 = vrot.slane %v5445, %v5458
      %v5460 = vcombine.high %v5265, %v977
      %v5462 = vunpack.c.l.s4 1983009808
      %v5463 = vunpack.c.0.s8 %v5462
      %v5464 = vlaneseq
      %v5465 = vshrl.u32 %v5464, 7
      %v5466 = vsub.s32 %v5463, %v5465
      %v5467 = vrot.slane %v5265, %v5466
      %v5469 = vunpack.c.l.s4 1983009808
      %v5470 = vunpack.c.0.s8 %v5469
      %v5471 = vlaneseq
      %v5472 = vshrl.u32 %v5471, 7
      %v5473 = vsub.s32 %v5470, %v5472
      %v5474 = vrot.slane %v5460, %v5473
      %v5475 = vcombine.low %v5452, %v5467
      %v5476 = vcombine.high %v5452, %v5467
      %v5478 = vunpack.c.l.s4 1934713408
      %v5479 = vunpack.c.0.s8 %v5478
      %v5480 = vlaneseq
      %v5481 = vshrl.u32 %v5480, 7
      %v5482 = vsub.s32 %v5479, %v5481
      %v5483 = vrot.slane %v5475, %v5482
      %v5485 = vunpack.c.l.s4 1934713408
      %v5486 = vunpack.c.0.s8 %v5485
      %v5487 = vlaneseq
      %v5488 = vshrl.u32 %v5487, 7
      %v5489 = vsub.s32 %v5486, %v5488
      %v5490 = vrot.slane %v5476, %v5489
      %v5491 = vcombine.low %v5459, %v5474
      %v5492 = vcombine.high %v5459, %v5474
      %v5494 = vunpack.c.l.s4 1934713408
      %v5495 = vunpack.c.0.s8 %v5494
      %v5496 = vlaneseq
      %v5497 = vshrl.u32 %v5496, 7
      %v5498 = vsub.s32 %v5495, %v5497
      %v5499 = vrot.slane %v5491, %v5498
      %v5501 = vunpack.c.l.s4 1934713408
      %v5502 = vunpack.c.0.s8 %v5501
      %v5503 = vlaneseq
      %v5504 = vshrl.u32 %v5503, 7
      %v5505 = vsub.s32 %v5502, %v5504
      %v5506 = vrot.slane %v5492, %v5505
      %v5507 = vcombine.high %v5483, 0
      %v5508 = vcombine.high %v5490, 0
      %v5509 = vcombine.high %v5499, 0
      %v5510 = vcombine.high %v5506, 0
      %v5511 = vcombine.high %v5269, %v974
      %v5513 = vunpack.c.l.s4 1983009808
      %v5514 = vunpack.c.0.s8 %v5513
      %v5515 = vlaneseq
      %v5516 = vshrl.u32 %v5515, 7
      %v5517 = vsub.s32 %v5514, %v5516
      %v5518 = vrot.slane %v5269, %v5517
      %v5520 = vunpack.c.l.s4 1983009808
      %v5521 = vunpack.c.0.s8 %v5520
      %v5522 = vlaneseq
      %v5523 = vshrl.u32 %v5522, 7
      %v5524 = vsub.s32 %v5521, %v5523
      %v5525 = vrot.slane %v5511, %v5524
      %v5526 = vcombine.high %v5277, %v974
      %v5528 = vunpack.c.l.s4 1983009808
      %v5529 = vunpack.c.0.s8 %v5528
      %v5530 = vlaneseq
      %v5531 = vshrl.u32 %v5530, 7
      %v5532 = vsub.s32 %v5529, %v5531
      %v5533 = vrot.slane %v5277, %v5532
      %v5535 = vunpack.c.l.s4 1983009808
      %v5536 = vunpack.c.0.s8 %v5535
      %v5537 = vlaneseq
      %v5538 = vshrl.u32 %v5537, 7
      %v5539 = vsub.s32 %v5536, %v5538
      %v5540 = vrot.slane %v5526, %v5539
      %v5541 = vcombine.low %v5518, %v5533
      %v5542 = vcombine.high %v5518, %v5533
      %v5544 = vunpack.c.l.s4 1934713408
      %v5545 = vunpack.c.0.s8 %v5544
      %v5546 = vlaneseq
      %v5547 = vshrl.u32 %v5546, 7
      %v5548 = vsub.s32 %v5545, %v5547
      %v5549 = vrot.slane %v5541, %v5548
      %v5551 = vunpack.c.l.s4 1934713408
      %v5552 = vunpack.c.0.s8 %v5551
      %v5553 = vlaneseq
      %v5554 = vshrl.u32 %v5553, 7
      %v5555 = vsub.s32 %v5552, %v5554
      %v5556 = vrot.slane %v5542, %v5555
      %v5557 = vcombine.low %v5525, %v5540
      %v5558 = vcombine.high %v5525, %v5540
      %v5560 = vunpack.c.l.s4 1934713408
      %v5561 = vunpack.c.0.s8 %v5560
      %v5562 = vlaneseq
      %v5563 = vshrl.u32 %v5562, 7
      %v5564 = vsub.s32 %v5561, %v5563
      %v5565 = vrot.slane %v5557, %v5564
      %v5567 = vunpack.c.l.s4 1934713408
      %v5568 = vunpack.c.0.s8 %v5567
      %v5569 = vlaneseq
      %v5570 = vshrl.u32 %v5569, 7
      %v5571 = vsub.s32 %v5568, %v5570
      %v5572 = vrot.slane %v5558, %v5571
      %v5573 = vcombine.high %v5549, 0
      %v5574 = vcombine.high %v5556, 0
      %v5575 = vcombine.high %v5565, 0
      %v5576 = vcombine.high %v5572, 0
      %v5577 = vcombine.high %v5273, %v977
      %v5579 = vunpack.c.l.s4 1983009808
      %v5580 = vunpack.c.0.s8 %v5579
      %v5581 = vlaneseq
      %v5582 = vshrl.u32 %v5581, 7
      %v5583 = vsub.s32 %v5580, %v5582
      %v5584 = vrot.slane %v5273, %v5583
      %v5586 = vunpack.c.l.s4 1983009808
      %v5587 = vunpack.c.0.s8 %v5586
      %v5588 = vlaneseq
      %v5589 = vshrl.u32 %v5588, 7
      %v5590 = vsub.s32 %v5587, %v5589
      %v5591 = vrot.slane %v5577, %v5590
      %v5592 = vcombine.high %v5281, %v977
      %v5594 = vunpack.c.l.s4 1983009808
      %v5595 = vunpack.c.0.s8 %v5594
      %v5596 = vlaneseq
      %v5597 = vshrl.u32 %v5596, 7
      %v5598 = vsub.s32 %v5595, %v5597
      %v5599 = vrot.slane %v5281, %v5598
      %v5601 = vunpack.c.l.s4 1983009808
      %v5602 = vunpack.c.0.s8 %v5601
      %v5603 = vlaneseq
      %v5604 = vshrl.u32 %v5603, 7
      %v5605 = vsub.s32 %v5602, %v5604
      %v5606 = vrot.slane %v5592, %v5605
      %v5607 = vcombine.low %v5584, %v5599
      %v5608 = vcombine.high %v5584, %v5599
      %v5610 = vunpack.c.l.s4 1934713408
      %v5611 = vunpack.c.0.s8 %v5610
      %v5612 = vlaneseq
      %v5613 = vshrl.u32 %v5612, 7
      %v5614 = vsub.s32 %v5611, %v5613
      %v5615 = vrot.slane %v5607, %v5614
      %v5617 = vunpack.c.l.s4 1934713408
      %v5618 = vunpack.c.0.s8 %v5617
      %v5619 = vlaneseq
      %v5620 = vshrl.u32 %v5619, 7
      %v5621 = vsub.s32 %v5618, %v5620
      %v5622 = vrot.slane %v5608, %v5621
      %v5623 = vcombine.low %v5591, %v5606
      %v5624 = vcombine.high %v5591, %v5606
      %v5626 = vunpack.c.l.s4 1934713408
      %v5627 = vunpack.c.0.s8 %v5626
      %v5628 = vlaneseq
      %v5629 = vshrl.u32 %v5628, 7
      %v5630 = vsub.s32 %v5627, %v5629
      %v5631 = vrot.slane %v5623, %v5630
      %v5633 = vunpack.c.l.s4 1934713408
      %v5634 = vunpack.c.0.s8 %v5633
      %v5635 = vlaneseq
      %v5636 = vshrl.u32 %v5635, 7
      %v5637 = vsub.s32 %v5634, %v5636
      %v5638 = vrot.slane %v5624, %v5637
      %v5639 = vcombine.high %v5615, 0
      %v5640 = vcombine.high %v5622, 0
      %v5641 = vcombine.high %v5631, 0
      %v5642 = vcombine.high %v5638, 0
      %v5643 = vcombine.high %v5285, %v974
      %v5645 = vunpack.c.l.s4 1983009808
      %v5646 = vunpack.c.0.s8 %v5645
      %v5647 = vlaneseq
      %v5648 = vshrl.u32 %v5647, 7
      %v5649 = vsub.s32 %v5646, %v5648
      %v5650 = vrot.slane %v5285, %v5649
      %v5652 = vunpack.c.l.s4 1983009808
      %v5653 = vunpack.c.0.s8 %v5652
      %v5654 = vlaneseq
      %v5655 = vshrl.u32 %v5654, 7
      %v5656 = vsub.s32 %v5653, %v5655
      %v5657 = vrot.slane %v5643, %v5656
      %v5658 = vcombine.high %v5293, %v974
      %v5660 = vunpack.c.l.s4 1983009808
      %v5661 = vunpack.c.0.s8 %v5660
      %v5662 = vlaneseq
      %v5663 = vshrl.u32 %v5662, 7
      %v5664 = vsub.s32 %v5661, %v5663
      %v5665 = vrot.slane %v5293, %v5664
      %v5667 = vunpack.c.l.s4 1983009808
      %v5668 = vunpack.c.0.s8 %v5667
      %v5669 = vlaneseq
      %v5670 = vshrl.u32 %v5669, 7
      %v5671 = vsub.s32 %v5668, %v5670
      %v5672 = vrot.slane %v5658, %v5671
      %v5673 = vcombine.low %v5650, %v5665
      %v5674 = vcombine.high %v5650, %v5665
      %v5676 = vunpack.c.l.s4 1934713408
      %v5677 = vunpack.c.0.s8 %v5676
      %v5678 = vlaneseq
      %v5679 = vshrl.u32 %v5678, 7
      %v5680 = vsub.s32 %v5677, %v5679
      %v5681 = vrot.slane %v5673, %v5680
      %v5683 = vunpack.c.l.s4 1934713408
      %v5684 = vunpack.c.0.s8 %v5683
      %v5685 = vlaneseq
      %v5686 = vshrl.u32 %v5685, 7
      %v5687 = vsub.s32 %v5684, %v5686
      %v5688 = vrot.slane %v5674, %v5687
      %v5689 = vcombine.low %v5657, %v5672
      %v5690 = vcombine.high %v5657, %v5672
      %v5692 = vunpack.c.l.s4 1934713408
      %v5693 = vunpack.c.0.s8 %v5692
      %v5694 = vlaneseq
      %v5695 = vshrl.u32 %v5694, 7
      %v5696 = vsub.s32 %v5693, %v5695
      %v5697 = vrot.slane %v5689, %v5696
      %v5699 = vunpack.c.l.s4 1934713408
      %v5700 = vunpack.c.0.s8 %v5699
      %v5701 = vlaneseq
      %v5702 = vshrl.u32 %v5701, 7
      %v5703 = vsub.s32 %v5700, %v5702
      %v5704 = vrot.slane %v5690, %v5703
      %v5705 = vcombine.high %v5681, 0
      %v5706 = vcombine.high %v5688, 0
      %v5707 = vcombine.high %v5697, 0
      %v5708 = vcombine.high %v5704, 0
      %v5709 = vcombine.high %v5289, %v977
      %v5711 = vunpack.c.l.s4 1983009808
      %v5712 = vunpack.c.0.s8 %v5711
      %v5713 = vlaneseq
      %v5714 = vshrl.u32 %v5713, 7
      %v5715 = vsub.s32 %v5712, %v5714
      %v5716 = vrot.slane %v5289, %v5715
      %v5718 = vunpack.c.l.s4 1983009808
      %v5719 = vunpack.c.0.s8 %v5718
      %v5720 = vlaneseq
      %v5721 = vshrl.u32 %v5720, 7
      %v5722 = vsub.s32 %v5719, %v5721
      %v5723 = vrot.slane %v5709, %v5722
      %v5724 = vcombine.high %v5297, %v977
      %v5726 = vunpack.c.l.s4 1983009808
      %v5727 = vunpack.c.0.s8 %v5726
      %v5728 = vlaneseq
      %v5729 = vshrl.u32 %v5728, 7
      %v5730 = vsub.s32 %v5727, %v5729
      %v5731 = vrot.slane %v5297, %v5730
      %v5733 = vunpack.c.l.s4 1983009808
      %v5734 = vunpack.c.0.s8 %v5733
      %v5735 = vlaneseq
      %v5736 = vshrl.u32 %v5735, 7
      %v5737 = vsub.s32 %v5734, %v5736
      %v5738 = vrot.slane %v5724, %v5737
      %v5739 = vcombine.low %v5716, %v5731
      %v5740 = vcombine.high %v5716, %v5731
      %v5742 = vunpack.c.l.s4 1934713408
      %v5743 = vunpack.c.0.s8 %v5742
      %v5744 = vlaneseq
      %v5745 = vshrl.u32 %v5744, 7
      %v5746 = vsub.s32 %v5743, %v5745
      %v5747 = vrot.slane %v5739, %v5746
      %v5749 = vunpack.c.l.s4 1934713408
      %v5750 = vunpack.c.0.s8 %v5749
      %v5751 = vlaneseq
      %v5752 = vshrl.u32 %v5751, 7
      %v5753 = vsub.s32 %v5750, %v5752
      %v5754 = vrot.slane %v5740, %v5753
      %v5755 = vcombine.low %v5723, %v5738
      %v5756 = vcombine.high %v5723, %v5738
      %v5758 = vunpack.c.l.s4 1934713408
      %v5759 = vunpack.c.0.s8 %v5758
      %v5760 = vlaneseq
      %v5761 = vshrl.u32 %v5760, 7
      %v5762 = vsub.s32 %v5759, %v5761
      %v5763 = vrot.slane %v5755, %v5762
      %v5765 = vunpack.c.l.s4 1934713408
      %v5766 = vunpack.c.0.s8 %v5765
      %v5767 = vlaneseq
      %v5768 = vshrl.u32 %v5767, 7
      %v5769 = vsub.s32 %v5766, %v5768
      %v5770 = vrot.slane %v5756, %v5769
      %v5771 = vcombine.high %v5747, 0
      %v5772 = vcombine.high %v5754, 0
      %v5773 = vcombine.high %v5763, 0
      %v5774 = vcombine.high %v5770, 0
      %v5775 = vcombine.high %v5301, %v974
      %v5777 = vunpack.c.l.s4 1983009808
      %v5778 = vunpack.c.0.s8 %v5777
      %v5779 = vlaneseq
      %v5780 = vshrl.u32 %v5779, 7
      %v5781 = vsub.s32 %v5778, %v5780
      %v5782 = vrot.slane %v5301, %v5781
      %v5784 = vunpack.c.l.s4 1983009808
      %v5785 = vunpack.c.0.s8 %v5784
      %v5786 = vlaneseq
      %v5787 = vshrl.u32 %v5786, 7
      %v5788 = vsub.s32 %v5785, %v5787
      %v5789 = vrot.slane %v5775, %v5788
      %v5790 = vcombine.high %v5309, %v974
      %v5792 = vunpack.c.l.s4 1983009808
      %v5793 = vunpack.c.0.s8 %v5792
      %v5794 = vlaneseq
      %v5795 = vshrl.u32 %v5794, 7
      %v5796 = vsub.s32 %v5793, %v5795
      %v5797 = vrot.slane %v5309, %v5796
      %v5799 = vunpack.c.l.s4 1983009808
      %v5800 = vunpack.c.0.s8 %v5799
      %v5801 = vlaneseq
      %v5802 = vshrl.u32 %v5801, 7
      %v5803 = vsub.s32 %v5800, %v5802
      %v5804 = vrot.slane %v5790, %v5803
      %v5805 = vcombine.low %v5782, %v5797
      %v5806 = vcombine.high %v5782, %v5797
      %v5808 = vunpack.c.l.s4 1934713408
      %v5809 = vunpack.c.0.s8 %v5808
      %v5810 = vlaneseq
      %v5811 = vshrl.u32 %v5810, 7
      %v5812 = vsub.s32 %v5809, %v5811
      %v5813 = vrot.slane %v5805, %v5812
      %v5815 = vunpack.c.l.s4 1934713408
      %v5816 = vunpack.c.0.s8 %v5815
      %v5817 = vlaneseq
      %v5818 = vshrl.u32 %v5817, 7
      %v5819 = vsub.s32 %v5816, %v5818
      %v5820 = vrot.slane %v5806, %v5819
      %v5821 = vcombine.low %v5789, %v5804
      %v5822 = vcombine.high %v5789, %v5804
      %v5824 = vunpack.c.l.s4 1934713408
      %v5825 = vunpack.c.0.s8 %v5824
      %v5826 = vlaneseq
      %v5827 = vshrl.u32 %v5826, 7
      %v5828 = vsub.s32 %v5825, %v5827
      %v5829 = vrot.slane %v5821, %v5828
      %v5831 = vunpack.c.l.s4 1934713408
      %v5832 = vunpack.c.0.s8 %v5831
      %v5833 = vlaneseq
      %v5834 = vshrl.u32 %v5833, 7
      %v5835 = vsub.s32 %v5832, %v5834
      %v5836 = vrot.slane %v5822, %v5835
      %v5837 = vcombine.high %v5813, 0
      %v5838 = vcombine.high %v5820, 0
      %v5839 = vcombine.high %v5829, 0
      %v5840 = vcombine.high %v5836, 0
      %v5841 = vcombine.high %v5305, %v977
      %v5843 = vunpack.c.l.s4 1983009808
      %v5844 = vunpack.c.0.s8 %v5843
      %v5845 = vlaneseq
      %v5846 = vshrl.u32 %v5845, 7
      %v5847 = vsub.s32 %v5844, %v5846
      %v5848 = vrot.slane %v5305, %v5847
      %v5850 = vunpack.c.l.s4 1983009808
      %v5851 = vunpack.c.0.s8 %v5850
      %v5852 = vlaneseq
      %v5853 = vshrl.u32 %v5852, 7
      %v5854 = vsub.s32 %v5851, %v5853
      %v5855 = vrot.slane %v5841, %v5854
      %v5856 = vcombine.high %v5313, %v977
      %v5858 = vunpack.c.l.s4 1983009808
      %v5859 = vunpack.c.0.s8 %v5858
      %v5860 = vlaneseq
      %v5861 = vshrl.u32 %v5860, 7
      %v5862 = vsub.s32 %v5859, %v5861
      %v5863 = vrot.slane %v5313, %v5862
      %v5865 = vunpack.c.l.s4 1983009808
      %v5866 = vunpack.c.0.s8 %v5865
      %v5867 = vlaneseq
      %v5868 = vshrl.u32 %v5867, 7
      %v5869 = vsub.s32 %v5866, %v5868
      %v5870 = vrot.slane %v5856, %v5869
      %v5871 = vcombine.low %v5848, %v5863
      %v5872 = vcombine.high %v5848, %v5863
      %v5874 = vunpack.c.l.s4 1934713408
      %v5875 = vunpack.c.0.s8 %v5874
      %v5876 = vlaneseq
      %v5877 = vshrl.u32 %v5876, 7
      %v5878 = vsub.s32 %v5875, %v5877
      %v5879 = vrot.slane %v5871, %v5878
      %v5881 = vunpack.c.l.s4 1934713408
      %v5882 = vunpack.c.0.s8 %v5881
      %v5883 = vlaneseq
      %v5884 = vshrl.u32 %v5883, 7
      %v5885 = vsub.s32 %v5882, %v5884
      %v5886 = vrot.slane %v5872, %v5885
      %v5887 = vcombine.low %v5855, %v5870
      %v5888 = vcombine.high %v5855, %v5870
      %v5890 = vunpack.c.l.s4 1934713408
      %v5891 = vunpack.c.0.s8 %v5890
      %v5892 = vlaneseq
      %v5893 = vshrl.u32 %v5892, 7
      %v5894 = vsub.s32 %v5891, %v5893
      %v5895 = vrot.slane %v5887, %v5894
      %v5897 = vunpack.c.l.s4 1934713408
      %v5898 = vunpack.c.0.s8 %v5897
      %v5899 = vlaneseq
      %v5900 = vshrl.u32 %v5899, 7
      %v5901 = vsub.s32 %v5898, %v5900
      %v5902 = vrot.slane %v5888, %v5901
      %v5903 = vcombine.high %v5879, 0
      %v5904 = vcombine.high %v5886, 0
      %v5905 = vcombine.high %v5895, 0
      %v5906 = vcombine.high %v5902, 0
      %v5907 = vcombine.high %v5317, %v974
      %v5909 = vunpack.c.l.s4 1983009808
      %v5910 = vunpack.c.0.s8 %v5909
      %v5911 = vlaneseq
      %v5912 = vshrl.u32 %v5911, 7
      %v5913 = vsub.s32 %v5910, %v5912
      %v5914 = vrot.slane %v5317, %v5913
      %v5916 = vunpack.c.l.s4 1983009808
      %v5917 = vunpack.c.0.s8 %v5916
      %v5918 = vlaneseq
      %v5919 = vshrl.u32 %v5918, 7
      %v5920 = vsub.s32 %v5917, %v5919
      %v5921 = vrot.slane %v5907, %v5920
      %v5922 = vcombine.high %v5325, %v974
      %v5924 = vunpack.c.l.s4 1983009808
      %v5925 = vunpack.c.0.s8 %v5924
      %v5926 = vlaneseq
      %v5927 = vshrl.u32 %v5926, 7
      %v5928 = vsub.s32 %v5925, %v5927
      %v5929 = vrot.slane %v5325, %v5928
      %v5931 = vunpack.c.l.s4 1983009808
      %v5932 = vunpack.c.0.s8 %v5931
      %v5933 = vlaneseq
      %v5934 = vshrl.u32 %v5933, 7
      %v5935 = vsub.s32 %v5932, %v5934
      %v5936 = vrot.slane %v5922, %v5935
      %v5937 = vcombine.low %v5914, %v5929
      %v5938 = vcombine.high %v5914, %v5929
      %v5940 = vunpack.c.l.s4 1934713408
      %v5941 = vunpack.c.0.s8 %v5940
      %v5942 = vlaneseq
      %v5943 = vshrl.u32 %v5942, 7
      %v5944 = vsub.s32 %v5941, %v5943
      %v5945 = vrot.slane %v5937, %v5944
      %v5947 = vunpack.c.l.s4 1934713408
      %v5948 = vunpack.c.0.s8 %v5947
      %v5949 = vlaneseq
      %v5950 = vshrl.u32 %v5949, 7
      %v5951 = vsub.s32 %v5948, %v5950
      %v5952 = vrot.slane %v5938, %v5951
      %v5953 = vcombine.low %v5921, %v5936
      %v5954 = vcombine.high %v5921, %v5936
      %v5956 = vunpack.c.l.s4 1934713408
      %v5957 = vunpack.c.0.s8 %v5956
      %v5958 = vlaneseq
      %v5959 = vshrl.u32 %v5958, 7
      %v5960 = vsub.s32 %v5957, %v5959
      %v5961 = vrot.slane %v5953, %v5960
      %v5963 = vunpack.c.l.s4 1934713408
      %v5964 = vunpack.c.0.s8 %v5963
      %v5965 = vlaneseq
      %v5966 = vshrl.u32 %v5965, 7
      %v5967 = vsub.s32 %v5964, %v5966
      %v5968 = vrot.slane %v5954, %v5967
      %v5969 = vcombine.high %v5945, 0
      %v5970 = vcombine.high %v5952, 0
      %v5971 = vcombine.high %v5961, 0
      %v5972 = vcombine.high %v5968, 0
      %v5973 = vcombine.high %v5321, %v977
      %v5975 = vunpack.c.l.s4 1983009808
      %v5976 = vunpack.c.0.s8 %v5975
      %v5977 = vlaneseq
      %v5978 = vshrl.u32 %v5977, 7
      %v5979 = vsub.s32 %v5976, %v5978
      %v5980 = vrot.slane %v5321, %v5979
      %v5982 = vunpack.c.l.s4 1983009808
      %v5983 = vunpack.c.0.s8 %v5982
      %v5984 = vlaneseq
      %v5985 = vshrl.u32 %v5984, 7
      %v5986 = vsub.s32 %v5983, %v5985
      %v5987 = vrot.slane %v5973, %v5986
      %v5988 = vcombine.high %v5329, %v977
      %v5990 = vunpack.c.l.s4 1983009808
      %v5991 = vunpack.c.0.s8 %v5990
      %v5992 = vlaneseq
      %v5993 = vshrl.u32 %v5992, 7
      %v5994 = vsub.s32 %v5991, %v5993
      %v5995 = vrot.slane %v5329, %v5994
      %v5997 = vunpack.c.l.s4 1983009808
      %v5998 = vunpack.c.0.s8 %v5997
      %v5999 = vlaneseq
      %v6000 = vshrl.u32 %v5999, 7
      %v6001 = vsub.s32 %v5998, %v6000
      %v6002 = vrot.slane %v5988, %v6001
      %v6003 = vcombine.low %v5980, %v5995
      %v6004 = vcombine.high %v5980, %v5995
      %v6006 = vunpack.c.l.s4 1934713408
      %v6007 = vunpack.c.0.s8 %v6006
      %v6008 = vlaneseq
      %v6009 = vshrl.u32 %v6008, 7
      %v6010 = vsub.s32 %v6007, %v6009
      %v6011 = vrot.slane %v6003, %v6010
      %v6013 = vunpack.c.l.s4 1934713408
      %v6014 = vunpack.c.0.s8 %v6013
      %v6015 = vlaneseq
      %v6016 = vshrl.u32 %v6015, 7
      %v6017 = vsub.s32 %v6014, %v6016
      %v6018 = vrot.slane %v6004, %v6017
      %v6019 = vcombine.low %v5987, %v6002
      %v6020 = vcombine.high %v5987, %v6002
      %v6022 = vunpack.c.l.s4 1934713408
      %v6023 = vunpack.c.0.s8 %v6022
      %v6024 = vlaneseq
      %v6025 = vshrl.u32 %v6024, 7
      %v6026 = vsub.s32 %v6023, %v6025
      %v6027 = vrot.slane %v6019, %v6026
      %v6029 = vunpack.c.l.s4 1934713408
      %v6030 = vunpack.c.0.s8 %v6029
      %v6031 = vlaneseq
      %v6032 = vshrl.u32 %v6031, 7
      %v6033 = vsub.s32 %v6030, %v6032
      %v6034 = vrot.slane %v6020, %v6033
      %v6035 = vcombine.high %v6011, 0
      %v6036 = vcombine.high %v6018, 0
      %v6037 = vcombine.high %v6027, 0
      %v6038 = vcombine.high %v6034, 0
      %v6039 = vcombine.high %v5333, %v974
      %v6041 = vunpack.c.l.s4 1983009808
      %v6042 = vunpack.c.0.s8 %v6041
      %v6043 = vlaneseq
      %v6044 = vshrl.u32 %v6043, 7
      %v6045 = vsub.s32 %v6042, %v6044
      %v6046 = vrot.slane %v5333, %v6045
      %v6048 = vunpack.c.l.s4 1983009808
      %v6049 = vunpack.c.0.s8 %v6048
      %v6050 = vlaneseq
      %v6051 = vshrl.u32 %v6050, 7
      %v6052 = vsub.s32 %v6049, %v6051
      %v6053 = vrot.slane %v6039, %v6052
      %v6054 = vcombine.high %v5341, %v974
      %v6056 = vunpack.c.l.s4 1983009808
      %v6057 = vunpack.c.0.s8 %v6056
      %v6058 = vlaneseq
      %v6059 = vshrl.u32 %v6058, 7
      %v6060 = vsub.s32 %v6057, %v6059
      %v6061 = vrot.slane %v5341, %v6060
      %v6063 = vunpack.c.l.s4 1983009808
      %v6064 = vunpack.c.0.s8 %v6063
      %v6065 = vlaneseq
      %v6066 = vshrl.u32 %v6065, 7
      %v6067 = vsub.s32 %v6064, %v6066
      %v6068 = vrot.slane %v6054, %v6067
      %v6069 = vcombine.low %v6046, %v6061
      %v6070 = vcombine.high %v6046, %v6061
      %v6072 = vunpack.c.l.s4 1934713408
      %v6073 = vunpack.c.0.s8 %v6072
      %v6074 = vlaneseq
      %v6075 = vshrl.u32 %v6074, 7
      %v6076 = vsub.s32 %v6073, %v6075
      %v6077 = vrot.slane %v6069, %v6076
      %v6079 = vunpack.c.l.s4 1934713408
      %v6080 = vunpack.c.0.s8 %v6079
      %v6081 = vlaneseq
      %v6082 = vshrl.u32 %v6081, 7
      %v6083 = vsub.s32 %v6080, %v6082
      %v6084 = vrot.slane %v6070, %v6083
      %v6085 = vcombine.low %v6053, %v6068
      %v6086 = vcombine.high %v6053, %v6068
      %v6088 = vunpack.c.l.s4 1934713408
      %v6089 = vunpack.c.0.s8 %v6088
      %v6090 = vlaneseq
      %v6091 = vshrl.u32 %v6090, 7
      %v6092 = vsub.s32 %v6089, %v6091
      %v6093 = vrot.slane %v6085, %v6092
      %v6095 = vunpack.c.l.s4 1934713408
      %v6096 = vunpack.c.0.s8 %v6095
      %v6097 = vlaneseq
      %v6098 = vshrl.u32 %v6097, 7
      %v6099 = vsub.s32 %v6096, %v6098
      %v6100 = vrot.slane %v6086, %v6099
      %v6101 = vcombine.high %v6077, 0
      %v6102 = vcombine.high %v6084, 0
      %v6103 = vcombine.high %v6093, 0
      %v6104 = vcombine.high %v6100, 0
      %v6105 = vcombine.high %v5337, %v977
      %v6107 = vunpack.c.l.s4 1983009808
      %v6108 = vunpack.c.0.s8 %v6107
      %v6109 = vlaneseq
      %v6110 = vshrl.u32 %v6109, 7
      %v6111 = vsub.s32 %v6108, %v6110
      %v6112 = vrot.slane %v5337, %v6111
      %v6114 = vunpack.c.l.s4 1983009808
      %v6115 = vunpack.c.0.s8 %v6114
      %v6116 = vlaneseq
      %v6117 = vshrl.u32 %v6116, 7
      %v6118 = vsub.s32 %v6115, %v6117
      %v6119 = vrot.slane %v6105, %v6118
      %v6120 = vcombine.high %v5345, %v977
      %v6122 = vunpack.c.l.s4 1983009808
      %v6123 = vunpack.c.0.s8 %v6122
      %v6124 = vlaneseq
      %v6125 = vshrl.u32 %v6124, 7
      %v6126 = vsub.s32 %v6123, %v6125
      %v6127 = vrot.slane %v5345, %v6126
      %v6129 = vunpack.c.l.s4 1983009808
      %v6130 = vunpack.c.0.s8 %v6129
      %v6131 = vlaneseq
      %v6132 = vshrl.u32 %v6131, 7
      %v6133 = vsub.s32 %v6130, %v6132
      %v6134 = vrot.slane %v6120, %v6133
      %v6135 = vcombine.low %v6112, %v6127
      %v6136 = vcombine.high %v6112, %v6127
      %v6138 = vunpack.c.l.s4 1934713408
      %v6139 = vunpack.c.0.s8 %v6138
      %v6140 = vlaneseq
      %v6141 = vshrl.u32 %v6140, 7
      %v6142 = vsub.s32 %v6139, %v6141
      %v6143 = vrot.slane %v6135, %v6142
      %v6145 = vunpack.c.l.s4 1934713408
      %v6146 = vunpack.c.0.s8 %v6145
      %v6147 = vlaneseq
      %v6148 = vshrl.u32 %v6147, 7
      %v6149 = vsub.s32 %v6146, %v6148
      %v6150 = vrot.slane %v6136, %v6149
      %v6151 = vcombine.low %v6119, %v6134
      %v6152 = vcombine.high %v6119, %v6134
      %v6154 = vunpack.c.l.s4 1934713408
      %v6155 = vunpack.c.0.s8 %v6154
      %v6156 = vlaneseq
      %v6157 = vshrl.u32 %v6156, 7
      %v6158 = vsub.s32 %v6155, %v6157
      %v6159 = vrot.slane %v6151, %v6158
      %v6161 = vunpack.c.l.s4 1934713408
      %v6162 = vunpack.c.0.s8 %v6161
      %v6163 = vlaneseq
      %v6164 = vshrl.u32 %v6163, 7
      %v6165 = vsub.s32 %v6162, %v6164
      %v6166 = vrot.slane %v6152, %v6165
      %v6167 = vcombine.high %v6143, 0
      %v6168 = vcombine.high %v6150, 0
      %v6169 = vcombine.high %v6159, 0
      %v6170 = vcombine.high %v6166, 0
      %v6171 = vcombine.high %v5349, %v974
      %v6173 = vunpack.c.l.s4 1983009808
      %v6174 = vunpack.c.0.s8 %v6173
      %v6175 = vlaneseq
      %v6176 = vshrl.u32 %v6175, 7
      %v6177 = vsub.s32 %v6174, %v6176
      %v6178 = vrot.slane %v5349, %v6177
      %v6180 = vunpack.c.l.s4 1983009808
      %v6181 = vunpack.c.0.s8 %v6180
      %v6182 = vlaneseq
      %v6183 = vshrl.u32 %v6182, 7
      %v6184 = vsub.s32 %v6181, %v6183
      %v6185 = vrot.slane %v6171, %v6184
      %v6186 = vcombine.high %v5357, %v974
      %v6188 = vunpack.c.l.s4 1983009808
      %v6189 = vunpack.c.0.s8 %v6188
      %v6190 = vlaneseq
      %v6191 = vshrl.u32 %v6190, 7
      %v6192 = vsub.s32 %v6189, %v6191
      %v6193 = vrot.slane %v5357, %v6192
      %v6195 = vunpack.c.l.s4 1983009808
      %v6196 = vunpack.c.0.s8 %v6195
      %v6197 = vlaneseq
      %v6198 = vshrl.u32 %v6197, 7
      %v6199 = vsub.s32 %v6196, %v6198
      %v6200 = vrot.slane %v6186, %v6199
      %v6201 = vcombine.low %v6178, %v6193
      %v6202 = vcombine.high %v6178, %v6193
      %v6204 = vunpack.c.l.s4 1934713408
      %v6205 = vunpack.c.0.s8 %v6204
      %v6206 = vlaneseq
      %v6207 = vshrl.u32 %v6206, 7
      %v6208 = vsub.s32 %v6205, %v6207
      %v6209 = vrot.slane %v6201, %v6208
      %v6211 = vunpack.c.l.s4 1934713408
      %v6212 = vunpack.c.0.s8 %v6211
      %v6213 = vlaneseq
      %v6214 = vshrl.u32 %v6213, 7
      %v6215 = vsub.s32 %v6212, %v6214
      %v6216 = vrot.slane %v6202, %v6215
      %v6217 = vcombine.low %v6185, %v6200
      %v6218 = vcombine.high %v6185, %v6200
      %v6220 = vunpack.c.l.s4 1934713408
      %v6221 = vunpack.c.0.s8 %v6220
      %v6222 = vlaneseq
      %v6223 = vshrl.u32 %v6222, 7
      %v6224 = vsub.s32 %v6221, %v6223
      %v6225 = vrot.slane %v6217, %v6224
      %v6227 = vunpack.c.l.s4 1934713408
      %v6228 = vunpack.c.0.s8 %v6227
      %v6229 = vlaneseq
      %v6230 = vshrl.u32 %v6229, 7
      %v6231 = vsub.s32 %v6228, %v6230
      %v6232 = vrot.slane %v6218, %v6231
      %v6233 = vcombine.high %v6209, 0
      %v6234 = vcombine.high %v6216, 0
      %v6235 = vcombine.high %v6225, 0
      %v6236 = vcombine.high %v6232, 0
      %v6237 = vcombine.high %v5353, %v977
      %v6239 = vunpack.c.l.s4 1983009808
      %v6240 = vunpack.c.0.s8 %v6239
      %v6241 = vlaneseq
      %v6242 = vshrl.u32 %v6241, 7
      %v6243 = vsub.s32 %v6240, %v6242
      %v6244 = vrot.slane %v5353, %v6243
      %v6246 = vunpack.c.l.s4 1983009808
      %v6247 = vunpack.c.0.s8 %v6246
      %v6248 = vlaneseq
      %v6249 = vshrl.u32 %v6248, 7
      %v6250 = vsub.s32 %v6247, %v6249
      %v6251 = vrot.slane %v6237, %v6250
      %v6252 = vcombine.high %v5361, %v977
      %v6254 = vunpack.c.l.s4 1983009808
      %v6255 = vunpack.c.0.s8 %v6254
      %v6256 = vlaneseq
      %v6257 = vshrl.u32 %v6256, 7
      %v6258 = vsub.s32 %v6255, %v6257
      %v6259 = vrot.slane %v5361, %v6258
      %v6261 = vunpack.c.l.s4 1983009808
      %v6262 = vunpack.c.0.s8 %v6261
      %v6263 = vlaneseq
      %v6264 = vshrl.u32 %v6263, 7
      %v6265 = vsub.s32 %v6262, %v6264
      %v6266 = vrot.slane %v6252, %v6265
      %v6267 = vcombine.low %v6244, %v6259
      %v6268 = vcombine.high %v6244, %v6259
      %v6270 = vunpack.c.l.s4 1934713408
      %v6271 = vunpack.c.0.s8 %v6270
      %v6272 = vlaneseq
      %v6273 = vshrl.u32 %v6272, 7
      %v6274 = vsub.s32 %v6271, %v6273
      %v6275 = vrot.slane %v6267, %v6274
      %v6277 = vunpack.c.l.s4 1934713408
      %v6278 = vunpack.c.0.s8 %v6277
      %v6279 = vlaneseq
      %v6280 = vshrl.u32 %v6279, 7
      %v6281 = vsub.s32 %v6278, %v6280
      %v6282 = vrot.slane %v6268, %v6281
      %v6283 = vcombine.low %v6251, %v6266
      %v6284 = vcombine.high %v6251, %v6266
      %v6286 = vunpack.c.l.s4 1934713408
      %v6287 = vunpack.c.0.s8 %v6286
      %v6288 = vlaneseq
      %v6289 = vshrl.u32 %v6288, 7
      %v6290 = vsub.s32 %v6287, %v6289
      %v6291 = vrot.slane %v6283, %v6290
      %v6293 = vunpack.c.l.s4 1934713408
      %v6294 = vunpack.c.0.s8 %v6293
      %v6295 = vlaneseq
      %v6296 = vshrl.u32 %v6295, 7
      %v6297 = vsub.s32 %v6294, %v6296
      %v6298 = vrot.slane %v6284, %v6297
      %v6299 = vcombine.high %v6275, 0
      %v6300 = vcombine.high %v6282, 0
      %v6301 = vcombine.high %v6291, 0
      %v6302 = vcombine.high %v6298, 0
      %v6303 = vcombine.high %v5365, %v974
      %v6305 = vunpack.c.l.s4 1983009808
      %v6306 = vunpack.c.0.s8 %v6305
      %v6307 = vlaneseq
      %v6308 = vshrl.u32 %v6307, 7
      %v6309 = vsub.s32 %v6306, %v6308
      %v6310 = vrot.slane %v5365, %v6309
      %v6312 = vunpack.c.l.s4 1983009808
      %v6313 = vunpack.c.0.s8 %v6312
      %v6314 = vlaneseq
      %v6315 = vshrl.u32 %v6314, 7
      %v6316 = vsub.s32 %v6313, %v6315
      %v6317 = vrot.slane %v6303, %v6316
      %v6318 = vcombine.high %v5373, %v974
      %v6320 = vunpack.c.l.s4 1983009808
      %v6321 = vunpack.c.0.s8 %v6320
      %v6322 = vlaneseq
      %v6323 = vshrl.u32 %v6322, 7
      %v6324 = vsub.s32 %v6321, %v6323
      %v6325 = vrot.slane %v5373, %v6324
      %v6327 = vunpack.c.l.s4 1983009808
      %v6328 = vunpack.c.0.s8 %v6327
      %v6329 = vlaneseq
      %v6330 = vshrl.u32 %v6329, 7
      %v6331 = vsub.s32 %v6328, %v6330
      %v6332 = vrot.slane %v6318, %v6331
      %v6333 = vcombine.low %v6310, %v6325
      %v6334 = vcombine.high %v6310, %v6325
      %v6336 = vunpack.c.l.s4 1934713408
      %v6337 = vunpack.c.0.s8 %v6336
      %v6338 = vlaneseq
      %v6339 = vshrl.u32 %v6338, 7
      %v6340 = vsub.s32 %v6337, %v6339
      %v6341 = vrot.slane %v6333, %v6340
      %v6343 = vunpack.c.l.s4 1934713408
      %v6344 = vunpack.c.0.s8 %v6343
      %v6345 = vlaneseq
      %v6346 = vshrl.u32 %v6345, 7
      %v6347 = vsub.s32 %v6344, %v6346
      %v6348 = vrot.slane %v6334, %v6347
      %v6349 = vcombine.low %v6317, %v6332
      %v6350 = vcombine.high %v6317, %v6332
      %v6352 = vunpack.c.l.s4 1934713408
      %v6353 = vunpack.c.0.s8 %v6352
      %v6354 = vlaneseq
      %v6355 = vshrl.u32 %v6354, 7
      %v6356 = vsub.s32 %v6353, %v6355
      %v6357 = vrot.slane %v6349, %v6356
      %v6359 = vunpack.c.l.s4 1934713408
      %v6360 = vunpack.c.0.s8 %v6359
      %v6361 = vlaneseq
      %v6362 = vshrl.u32 %v6361, 7
      %v6363 = vsub.s32 %v6360, %v6362
      %v6364 = vrot.slane %v6350, %v6363
      %v6365 = vcombine.high %v6341, 0
      %v6366 = vcombine.high %v6348, 0
      %v6367 = vcombine.high %v6357, 0
      %v6368 = vcombine.high %v6364, 0
      %v6369 = vcombine.high %v5369, %v977
      %v6371 = vunpack.c.l.s4 1983009808
      %v6372 = vunpack.c.0.s8 %v6371
      %v6373 = vlaneseq
      %v6374 = vshrl.u32 %v6373, 7
      %v6375 = vsub.s32 %v6372, %v6374
      %v6376 = vrot.slane %v5369, %v6375
      %v6378 = vunpack.c.l.s4 1983009808
      %v6379 = vunpack.c.0.s8 %v6378
      %v6380 = vlaneseq
      %v6381 = vshrl.u32 %v6380, 7
      %v6382 = vsub.s32 %v6379, %v6381
      %v6383 = vrot.slane %v6369, %v6382
      %v6384 = vcombine.high %v5377, %v977
      %v6386 = vunpack.c.l.s4 1983009808
      %v6387 = vunpack.c.0.s8 %v6386
      %v6388 = vlaneseq
      %v6389 = vshrl.u32 %v6388, 7
      %v6390 = vsub.s32 %v6387, %v6389
      %v6391 = vrot.slane %v5377, %v6390
      %v6393 = vunpack.c.l.s4 1983009808
      %v6394 = vunpack.c.0.s8 %v6393
      %v6395 = vlaneseq
      %v6396 = vshrl.u32 %v6395, 7
      %v6397 = vsub.s32 %v6394, %v6396
      %v6398 = vrot.slane %v6384, %v6397
      %v6399 = vcombine.low %v6376, %v6391
      %v6400 = vcombine.high %v6376, %v6391
      %v6402 = vunpack.c.l.s4 1934713408
      %v6403 = vunpack.c.0.s8 %v6402
      %v6404 = vlaneseq
      %v6405 = vshrl.u32 %v6404, 7
      %v6406 = vsub.s32 %v6403, %v6405
      %v6407 = vrot.slane %v6399, %v6406
      %v6409 = vunpack.c.l.s4 1934713408
      %v6410 = vunpack.c.0.s8 %v6409
      %v6411 = vlaneseq
      %v6412 = vshrl.u32 %v6411, 7
      %v6413 = vsub.s32 %v6410, %v6412
      %v6414 = vrot.slane %v6400, %v6413
      %v6415 = vcombine.low %v6383, %v6398
      %v6416 = vcombine.high %v6383, %v6398
      %v6418 = vunpack.c.l.s4 1934713408
      %v6419 = vunpack.c.0.s8 %v6418
      %v6420 = vlaneseq
      %v6421 = vshrl.u32 %v6420, 7
      %v6422 = vsub.s32 %v6419, %v6421
      %v6423 = vrot.slane %v6415, %v6422
      %v6425 = vunpack.c.l.s4 1934713408
      %v6426 = vunpack.c.0.s8 %v6425
      %v6427 = vlaneseq
      %v6428 = vshrl.u32 %v6427, 7
      %v6429 = vsub.s32 %v6426, %v6428
      %v6430 = vrot.slane %v6416, %v6429
      %v6431 = vcombine.high %v6407, 0
      %v6432 = vcombine.high %v6414, 0
      %v6433 = vcombine.high %v6423, 0
      %v6434 = vcombine.high %v6430, 0
      %v6435 = vcombine.low %v5417, %v5424
      %v6437 = vunpack.c.l.s4 1983009808
      %v6438 = vunpack.c.0.s8 %v6437
      %v6439 = vlaneseq
      %v6440 = vshrl.u32 %v6439, 7
      %v6441 = vsub.s32 %v6438, %v6440
      %v6442 = vrot.slane %v6435, %v6441
      %v6443 = vcombine.low %v5441, %v5442
      %v6445 = vunpack.c.l.s4 1983009808
      %v6446 = vunpack.c.0.s8 %v6445
      %v6447 = vlaneseq
      %v6448 = vshrl.u32 %v6447, 7
      %v6449 = vsub.s32 %v6446, %v6448
      %v6450 = vrot.slane %v6443, %v6449
      %v6451 = vcombine.low %v5433, %v5440
      %v6453 = vunpack.c.l.s4 1983009808
      %v6454 = vunpack.c.0.s8 %v6453
      %v6455 = vlaneseq
      %v6456 = vshrl.u32 %v6455, 7
      %v6457 = vsub.s32 %v6454, %v6456
      %v6458 = vrot.slane %v6451, %v6457
      %v6459 = vcombine.low %v5443, %v5444
      %v6461 = vunpack.c.l.s4 1983009808
      %v6462 = vunpack.c.0.s8 %v6461
      %v6463 = vlaneseq
      %v6464 = vshrl.u32 %v6463, 7
      %v6465 = vsub.s32 %v6462, %v6464
      %v6466 = vrot.slane %v6459, %v6465
      %v6467 = vcombine.low %v6442, %v6450
      %v6469 = vunpack.c.l.s4 1934713408
      %v6470 = vunpack.c.0.s8 %v6469
      %v6471 = vlaneseq
      %v6472 = vshrl.u32 %v6471, 7
      %v6473 = vsub.s32 %v6470, %v6472
      %v6474 = vrot.slane %v6467, %v6473
      %v6475 = vcombine.low %v6458, %v6466
      %v6477 = vunpack.c.l.s4 1934713408
      %v6478 = vunpack.c.0.s8 %v6477
      %v6479 = vlaneseq
      %v6480 = vshrl.u32 %v6479, 7
      %v6481 = vsub.s32 %v6478, %v6480
      %v6482 = vrot.slane %v6475, %v6481
      %v6483 = vcombine.low %v6474, %v6482
      %v6484 = vcombine.high %v6474, %v6482
      %v6485 = vcombine.low %v5483, %v5490
      %v6487 = vunpack.c.l.s4 1983009808
      %v6488 = vunpack.c.0.s8 %v6487
      %v6489 = vlaneseq
      %v6490 = vshrl.u32 %v6489, 7
      %v6491 = vsub.s32 %v6488, %v6490
      %v6492 = vrot.slane %v6485, %v6491
      %v6493 = vcombine.low %v5507, %v5508
      %v6495 = vunpack.c.l.s4 1983009808
      %v6496 = vunpack.c.0.s8 %v6495
      %v6497 = vlaneseq
      %v6498 = vshrl.u32 %v6497, 7
      %v6499 = vsub.s32 %v6496, %v6498
      %v6500 = vrot.slane %v6493, %v6499
      %v6501 = vcombine.low %v5499, %v5506
      %v6503 = vunpack.c.l.s4 1983009808
      %v6504 = vunpack.c.0.s8 %v6503
      %v6505 = vlaneseq
      %v6506 = vshrl.u32 %v6505, 7
      %v6507 = vsub.s32 %v6504, %v6506
      %v6508 = vrot.slane %v6501, %v6507
      %v6509 = vcombine.low %v5509, %v5510
      %v6511 = vunpack.c.l.s4 1983009808
      %v6512 = vunpack.c.0.s8 %v6511
      %v6513 = vlaneseq
      %v6514 = vshrl.u32 %v6513, 7
      %v6515 = vsub.s32 %v6512, %v6514
      %v6516 = vrot.slane %v6509, %v6515
      %v6517 = vcombine.low %v6492, %v6500
      %v6519 = vunpack.c.l.s4 1934713408
      %v6520 = vunpack.c.0.s8 %v6519
      %v6521 = vlaneseq
      %v6522 = vshrl.u32 %v6521, 7
      %v6523 = vsub.s32 %v6520, %v6522
      %v6524 = vrot.slane %v6517, %v6523
      %v6525 = vcombine.low %v6508, %v6516
      %v6527 = vunpack.c.l.s4 1934713408
      %v6528 = vunpack.c.0.s8 %v6527
      %v6529 = vlaneseq
      %v6530 = vshrl.u32 %v6529, 7
      %v6531 = vsub.s32 %v6528, %v6530
      %v6532 = vrot.slane %v6525, %v6531
      %v6533 = vcombine.low %v6524, %v6532
      %v6534 = vcombine.high %v6524, %v6532
      %v6535 = vcombine.low %v5549, %v5556
      %v6537 = vunpack.c.l.s4 1983009808
      %v6538 = vunpack.c.0.s8 %v6537
      %v6539 = vlaneseq
      %v6540 = vshrl.u32 %v6539, 7
      %v6541 = vsub.s32 %v6538, %v6540
      %v6542 = vrot.slane %v6535, %v6541
      %v6543 = vcombine.low %v5573, %v5574
      %v6545 = vunpack.c.l.s4 1983009808
      %v6546 = vunpack.c.0.s8 %v6545
      %v6547 = vlaneseq
      %v6548 = vshrl.u32 %v6547, 7
      %v6549 = vsub.s32 %v6546, %v6548
      %v6550 = vrot.slane %v6543, %v6549
      %v6551 = vcombine.low %v5565, %v5572
      %v6553 = vunpack.c.l.s4 1983009808
      %v6554 = vunpack.c.0.s8 %v6553
      %v6555 = vlaneseq
      %v6556 = vshrl.u32 %v6555, 7
      %v6557 = vsub.s32 %v6554, %v6556
      %v6558 = vrot.slane %v6551, %v6557
      %v6559 = vcombine.low %v5575, %v5576
      %v6561 = vunpack.c.l.s4 1983009808
      %v6562 = vunpack.c.0.s8 %v6561
      %v6563 = vlaneseq
      %v6564 = vshrl.u32 %v6563, 7
      %v6565 = vsub.s32 %v6562, %v6564
      %v6566 = vrot.slane %v6559, %v6565
      %v6567 = vcombine.low %v6542, %v6550
      %v6569 = vunpack.c.l.s4 1934713408
      %v6570 = vunpack.c.0.s8 %v6569
      %v6571 = vlaneseq
      %v6572 = vshrl.u32 %v6571, 7
      %v6573 = vsub.s32 %v6570, %v6572
      %v6574 = vrot.slane %v6567, %v6573
      %v6575 = vcombine.low %v6558, %v6566
      %v6577 = vunpack.c.l.s4 1934713408
      %v6578 = vunpack.c.0.s8 %v6577
      %v6579 = vlaneseq
      %v6580 = vshrl.u32 %v6579, 7
      %v6581 = vsub.s32 %v6578, %v6580
      %v6582 = vrot.slane %v6575, %v6581
      %v6583 = vcombine.low %v6574, %v6582
      %v6584 = vcombine.high %v6574, %v6582
      %v6585 = vcombine.low %v5615, %v5622
      %v6587 = vunpack.c.l.s4 1983009808
      %v6588 = vunpack.c.0.s8 %v6587
      %v6589 = vlaneseq
      %v6590 = vshrl.u32 %v6589, 7
      %v6591 = vsub.s32 %v6588, %v6590
      %v6592 = vrot.slane %v6585, %v6591
      %v6593 = vcombine.low %v5639, %v5640
      %v6595 = vunpack.c.l.s4 1983009808
      %v6596 = vunpack.c.0.s8 %v6595
      %v6597 = vlaneseq
      %v6598 = vshrl.u32 %v6597, 7
      %v6599 = vsub.s32 %v6596, %v6598
      %v6600 = vrot.slane %v6593, %v6599
      %v6601 = vcombine.low %v5631, %v5638
      %v6603 = vunpack.c.l.s4 1983009808
      %v6604 = vunpack.c.0.s8 %v6603
      %v6605 = vlaneseq
      %v6606 = vshrl.u32 %v6605, 7
      %v6607 = vsub.s32 %v6604, %v6606
      %v6608 = vrot.slane %v6601, %v6607
      %v6609 = vcombine.low %v5641, %v5642
      %v6611 = vunpack.c.l.s4 1983009808
      %v6612 = vunpack.c.0.s8 %v6611
      %v6613 = vlaneseq
      %v6614 = vshrl.u32 %v6613, 7
      %v6615 = vsub.s32 %v6612, %v6614
      %v6616 = vrot.slane %v6609, %v6615
      %v6617 = vcombine.low %v6592, %v6600
      %v6619 = vunpack.c.l.s4 1934713408
      %v6620 = vunpack.c.0.s8 %v6619
      %v6621 = vlaneseq
      %v6622 = vshrl.u32 %v6621, 7
      %v6623 = vsub.s32 %v6620, %v6622
      %v6624 = vrot.slane %v6617, %v6623
      %v6625 = vcombine.low %v6608, %v6616
      %v6627 = vunpack.c.l.s4 1934713408
      %v6628 = vunpack.c.0.s8 %v6627
      %v6629 = vlaneseq
      %v6630 = vshrl.u32 %v6629, 7
      %v6631 = vsub.s32 %v6628, %v6630
      %v6632 = vrot.slane %v6625, %v6631
      %v6633 = vcombine.low %v6624, %v6632
      %v6634 = vcombine.high %v6624, %v6632
      %v6635 = vcombine.low %v5681, %v5688
      %v6637 = vunpack.c.l.s4 1983009808
      %v6638 = vunpack.c.0.s8 %v6637
      %v6639 = vlaneseq
      %v6640 = vshrl.u32 %v6639, 7
      %v6641 = vsub.s32 %v6638, %v6640
      %v6642 = vrot.slane %v6635, %v6641
      %v6643 = vcombine.low %v5705, %v5706
      %v6645 = vunpack.c.l.s4 1983009808
      %v6646 = vunpack.c.0.s8 %v6645
      %v6647 = vlaneseq
      %v6648 = vshrl.u32 %v6647, 7
      %v6649 = vsub.s32 %v6646, %v6648
      %v6650 = vrot.slane %v6643, %v6649
      %v6651 = vcombine.low %v5697, %v5704
      %v6653 = vunpack.c.l.s4 1983009808
      %v6654 = vunpack.c.0.s8 %v6653
      %v6655 = vlaneseq
      %v6656 = vshrl.u32 %v6655, 7
      %v6657 = vsub.s32 %v6654, %v6656
      %v6658 = vrot.slane %v6651, %v6657
      %v6659 = vcombine.low %v5707, %v5708
      %v6661 = vunpack.c.l.s4 1983009808
      %v6662 = vunpack.c.0.s8 %v6661
      %v6663 = vlaneseq
      %v6664 = vshrl.u32 %v6663, 7
      %v6665 = vsub.s32 %v6662, %v6664
      %v6666 = vrot.slane %v6659, %v6665
      %v6667 = vcombine.low %v6642, %v6650
      %v6669 = vunpack.c.l.s4 1934713408
      %v6670 = vunpack.c.0.s8 %v6669
      %v6671 = vlaneseq
      %v6672 = vshrl.u32 %v6671, 7
      %v6673 = vsub.s32 %v6670, %v6672
      %v6674 = vrot.slane %v6667, %v6673
      %v6675 = vcombine.low %v6658, %v6666
      %v6677 = vunpack.c.l.s4 1934713408
      %v6678 = vunpack.c.0.s8 %v6677
      %v6679 = vlaneseq
      %v6680 = vshrl.u32 %v6679, 7
      %v6681 = vsub.s32 %v6678, %v6680
      %v6682 = vrot.slane %v6675, %v6681
      %v6683 = vcombine.low %v6674, %v6682
      %v6684 = vcombine.high %v6674, %v6682
      %v6685 = vcombine.low %v5747, %v5754
      %v6687 = vunpack.c.l.s4 1983009808
      %v6688 = vunpack.c.0.s8 %v6687
      %v6689 = vlaneseq
      %v6690 = vshrl.u32 %v6689, 7
      %v6691 = vsub.s32 %v6688, %v6690
      %v6692 = vrot.slane %v6685, %v6691
      %v6693 = vcombine.low %v5771, %v5772
      %v6695 = vunpack.c.l.s4 1983009808
      %v6696 = vunpack.c.0.s8 %v6695
      %v6697 = vlaneseq
      %v6698 = vshrl.u32 %v6697, 7
      %v6699 = vsub.s32 %v6696, %v6698
      %v6700 = vrot.slane %v6693, %v6699
      %v6701 = vcombine.low %v5763, %v5770
      %v6703 = vunpack.c.l.s4 1983009808
      %v6704 = vunpack.c.0.s8 %v6703
      %v6705 = vlaneseq
      %v6706 = vshrl.u32 %v6705, 7
      %v6707 = vsub.s32 %v6704, %v6706
      %v6708 = vrot.slane %v6701, %v6707
      %v6709 = vcombine.low %v5773, %v5774
      %v6711 = vunpack.c.l.s4 1983009808
      %v6712 = vunpack.c.0.s8 %v6711
      %v6713 = vlaneseq
      %v6714 = vshrl.u32 %v6713, 7
      %v6715 = vsub.s32 %v6712, %v6714
      %v6716 = vrot.slane %v6709, %v6715
      %v6717 = vcombine.low %v6692, %v6700
      %v6719 = vunpack.c.l.s4 1934713408
      %v6720 = vunpack.c.0.s8 %v6719
      %v6721 = vlaneseq
      %v6722 = vshrl.u32 %v6721, 7
      %v6723 = vsub.s32 %v6720, %v6722
      %v6724 = vrot.slane %v6717, %v6723
      %v6725 = vcombine.low %v6708, %v6716
      %v6727 = vunpack.c.l.s4 1934713408
      %v6728 = vunpack.c.0.s8 %v6727
      %v6729 = vlaneseq
      %v6730 = vshrl.u32 %v6729, 7
      %v6731 = vsub.s32 %v6728, %v6730
      %v6732 = vrot.slane %v6725, %v6731
      %v6733 = vcombine.low %v6724, %v6732
      %v6734 = vcombine.high %v6724, %v6732
      %v6735 = vcombine.low %v5813, %v5820
      %v6737 = vunpack.c.l.s4 1983009808
      %v6738 = vunpack.c.0.s8 %v6737
      %v6739 = vlaneseq
      %v6740 = vshrl.u32 %v6739, 7
      %v6741 = vsub.s32 %v6738, %v6740
      %v6742 = vrot.slane %v6735, %v6741
      %v6743 = vcombine.low %v5837, %v5838
      %v6745 = vunpack.c.l.s4 1983009808
      %v6746 = vunpack.c.0.s8 %v6745
      %v6747 = vlaneseq
      %v6748 = vshrl.u32 %v6747, 7
      %v6749 = vsub.s32 %v6746, %v6748
      %v6750 = vrot.slane %v6743, %v6749
      %v6751 = vcombine.low %v5829, %v5836
      %v6753 = vunpack.c.l.s4 1983009808
      %v6754 = vunpack.c.0.s8 %v6753
      %v6755 = vlaneseq
      %v6756 = vshrl.u32 %v6755, 7
      %v6757 = vsub.s32 %v6754, %v6756
      %v6758 = vrot.slane %v6751, %v6757
      %v6759 = vcombine.low %v5839, %v5840
      %v6761 = vunpack.c.l.s4 1983009808
      %v6762 = vunpack.c.0.s8 %v6761
      %v6763 = vlaneseq
      %v6764 = vshrl.u32 %v6763, 7
      %v6765 = vsub.s32 %v6762, %v6764
      %v6766 = vrot.slane %v6759, %v6765
      %v6767 = vcombine.low %v6742, %v6750
      %v6769 = vunpack.c.l.s4 1934713408
      %v6770 = vunpack.c.0.s8 %v6769
      %v6771 = vlaneseq
      %v6772 = vshrl.u32 %v6771, 7
      %v6773 = vsub.s32 %v6770, %v6772
      %v6774 = vrot.slane %v6767, %v6773
      %v6775 = vcombine.low %v6758, %v6766
      %v6777 = vunpack.c.l.s4 1934713408
      %v6778 = vunpack.c.0.s8 %v6777
      %v6779 = vlaneseq
      %v6780 = vshrl.u32 %v6779, 7
      %v6781 = vsub.s32 %v6778, %v6780
      %v6782 = vrot.slane %v6775, %v6781
      %v6783 = vcombine.low %v6774, %v6782
      %v6784 = vcombine.high %v6774, %v6782
      %v6785 = vcombine.low %v5879, %v5886
      %v6787 = vunpack.c.l.s4 1983009808
      %v6788 = vunpack.c.0.s8 %v6787
      %v6789 = vlaneseq
      %v6790 = vshrl.u32 %v6789, 7
      %v6791 = vsub.s32 %v6788, %v6790
      %v6792 = vrot.slane %v6785, %v6791
      %v6793 = vcombine.low %v5903, %v5904
      %v6795 = vunpack.c.l.s4 1983009808
      %v6796 = vunpack.c.0.s8 %v6795
      %v6797 = vlaneseq
      %v6798 = vshrl.u32 %v6797, 7
      %v6799 = vsub.s32 %v6796, %v6798
      %v6800 = vrot.slane %v6793, %v6799
      %v6801 = vcombine.low %v5895, %v5902
      %v6803 = vunpack.c.l.s4 1983009808
      %v6804 = vunpack.c.0.s8 %v6803
      %v6805 = vlaneseq
      %v6806 = vshrl.u32 %v6805, 7
      %v6807 = vsub.s32 %v6804, %v6806
      %v6808 = vrot.slane %v6801, %v6807
      %v6809 = vcombine.low %v5905, %v5906
      %v6811 = vunpack.c.l.s4 1983009808
      %v6812 = vunpack.c.0.s8 %v6811
      %v6813 = vlaneseq
      %v6814 = vshrl.u32 %v6813, 7
      %v6815 = vsub.s32 %v6812, %v6814
      %v6816 = vrot.slane %v6809, %v6815
      %v6817 = vcombine.low %v6792, %v6800
      %v6819 = vunpack.c.l.s4 1934713408
      %v6820 = vunpack.c.0.s8 %v6819
      %v6821 = vlaneseq
      %v6822 = vshrl.u32 %v6821, 7
      %v6823 = vsub.s32 %v6820, %v6822
      %v6824 = vrot.slane %v6817, %v6823
      %v6825 = vcombine.low %v6808, %v6816
      %v6827 = vunpack.c.l.s4 1934713408
      %v6828 = vunpack.c.0.s8 %v6827
      %v6829 = vlaneseq
      %v6830 = vshrl.u32 %v6829, 7
      %v6831 = vsub.s32 %v6828, %v6830
      %v6832 = vrot.slane %v6825, %v6831
      %v6833 = vcombine.low %v6824, %v6832
      %v6834 = vcombine.high %v6824, %v6832
      %v6835 = vcombine.low %v5945, %v5952
      %v6837 = vunpack.c.l.s4 1983009808
      %v6838 = vunpack.c.0.s8 %v6837
      %v6839 = vlaneseq
      %v6840 = vshrl.u32 %v6839, 7
      %v6841 = vsub.s32 %v6838, %v6840
      %v6842 = vrot.slane %v6835, %v6841
      %v6843 = vcombine.low %v5969, %v5970
      %v6845 = vunpack.c.l.s4 1983009808
      %v6846 = vunpack.c.0.s8 %v6845
      %v6847 = vlaneseq
      %v6848 = vshrl.u32 %v6847, 7
      %v6849 = vsub.s32 %v6846, %v6848
      %v6850 = vrot.slane %v6843, %v6849
      %v6851 = vcombine.low %v5961, %v5968
      %v6853 = vunpack.c.l.s4 1983009808
      %v6854 = vunpack.c.0.s8 %v6853
      %v6855 = vlaneseq
      %v6856 = vshrl.u32 %v6855, 7
      %v6857 = vsub.s32 %v6854, %v6856
      %v6858 = vrot.slane %v6851, %v6857
      %v6859 = vcombine.low %v5971, %v5972
      %v6861 = vunpack.c.l.s4 1983009808
      %v6862 = vunpack.c.0.s8 %v6861
      %v6863 = vlaneseq
      %v6864 = vshrl.u32 %v6863, 7
      %v6865 = vsub.s32 %v6862, %v6864
      %v6866 = vrot.slane %v6859, %v6865
      %v6867 = vcombine.low %v6842, %v6850
      %v6869 = vunpack.c.l.s4 1934713408
      %v6870 = vunpack.c.0.s8 %v6869
      %v6871 = vlaneseq
      %v6872 = vshrl.u32 %v6871, 7
      %v6873 = vsub.s32 %v6870, %v6872
      %v6874 = vrot.slane %v6867, %v6873
      %v6875 = vcombine.low %v6858, %v6866
      %v6877 = vunpack.c.l.s4 1934713408
      %v6878 = vunpack.c.0.s8 %v6877
      %v6879 = vlaneseq
      %v6880 = vshrl.u32 %v6879, 7
      %v6881 = vsub.s32 %v6878, %v6880
      %v6882 = vrot.slane %v6875, %v6881
      %v6883 = vcombine.low %v6874, %v6882
      %v6884 = vcombine.high %v6874, %v6882
      %v6885 = vcombine.low %v6011, %v6018
      %v6887 = vunpack.c.l.s4 1983009808
      %v6888 = vunpack.c.0.s8 %v6887
      %v6889 = vlaneseq
      %v6890 = vshrl.u32 %v6889, 7
      %v6891 = vsub.s32 %v6888, %v6890
      %v6892 = vrot.slane %v6885, %v6891
      %v6893 = vcombine.low %v6035, %v6036
      %v6895 = vunpack.c.l.s4 1983009808
      %v6896 = vunpack.c.0.s8 %v6895
      %v6897 = vlaneseq
      %v6898 = vshrl.u32 %v6897, 7
      %v6899 = vsub.s32 %v6896, %v6898
      %v6900 = vrot.slane %v6893, %v6899
      %v6901 = vcombine.low %v6027, %v6034
      %v6903 = vunpack.c.l.s4 1983009808
      %v6904 = vunpack.c.0.s8 %v6903
      %v6905 = vlaneseq
      %v6906 = vshrl.u32 %v6905, 7
      %v6907 = vsub.s32 %v6904, %v6906
      %v6908 = vrot.slane %v6901, %v6907
      %v6909 = vcombine.low %v6037, %v6038
      %v6911 = vunpack.c.l.s4 1983009808
      %v6912 = vunpack.c.0.s8 %v6911
      %v6913 = vlaneseq
      %v6914 = vshrl.u32 %v6913, 7
      %v6915 = vsub.s32 %v6912, %v6914
      %v6916 = vrot.slane %v6909, %v6915
      %v6917 = vcombine.low %v6892, %v6900
      %v6919 = vunpack.c.l.s4 1934713408
      %v6920 = vunpack.c.0.s8 %v6919
      %v6921 = vlaneseq
      %v6922 = vshrl.u32 %v6921, 7
      %v6923 = vsub.s32 %v6920, %v6922
      %v6924 = vrot.slane %v6917, %v6923
      %v6925 = vcombine.low %v6908, %v6916
      %v6927 = vunpack.c.l.s4 1934713408
      %v6928 = vunpack.c.0.s8 %v6927
      %v6929 = vlaneseq
      %v6930 = vshrl.u32 %v6929, 7
      %v6931 = vsub.s32 %v6928, %v6930
      %v6932 = vrot.slane %v6925, %v6931
      %v6933 = vcombine.low %v6924, %v6932
      %v6934 = vcombine.high %v6924, %v6932
      %v6935 = vcombine.low %v6077, %v6084
      %v6937 = vunpack.c.l.s4 1983009808
      %v6938 = vunpack.c.0.s8 %v6937
      %v6939 = vlaneseq
      %v6940 = vshrl.u32 %v6939, 7
      %v6941 = vsub.s32 %v6938, %v6940
      %v6942 = vrot.slane %v6935, %v6941
      %v6943 = vcombine.low %v6101, %v6102
      %v6945 = vunpack.c.l.s4 1983009808
      %v6946 = vunpack.c.0.s8 %v6945
      %v6947 = vlaneseq
      %v6948 = vshrl.u32 %v6947, 7
      %v6949 = vsub.s32 %v6946, %v6948
      %v6950 = vrot.slane %v6943, %v6949
      %v6951 = vcombine.low %v6093, %v6100
      %v6953 = vunpack.c.l.s4 1983009808
      %v6954 = vunpack.c.0.s8 %v6953
      %v6955 = vlaneseq
      %v6956 = vshrl.u32 %v6955, 7
      %v6957 = vsub.s32 %v6954, %v6956
      %v6958 = vrot.slane %v6951, %v6957
      %v6959 = vcombine.low %v6103, %v6104
      %v6961 = vunpack.c.l.s4 1983009808
      %v6962 = vunpack.c.0.s8 %v6961
      %v6963 = vlaneseq
      %v6964 = vshrl.u32 %v6963, 7
      %v6965 = vsub.s32 %v6962, %v6964
      %v6966 = vrot.slane %v6959, %v6965
      %v6967 = vcombine.low %v6942, %v6950
      %v6969 = vunpack.c.l.s4 1934713408
      %v6970 = vunpack.c.0.s8 %v6969
      %v6971 = vlaneseq
      %v6972 = vshrl.u32 %v6971, 7
      %v6973 = vsub.s32 %v6970, %v6972
      %v6974 = vrot.slane %v6967, %v6973
      %v6975 = vcombine.low %v6958, %v6966
      %v6977 = vunpack.c.l.s4 1934713408
      %v6978 = vunpack.c.0.s8 %v6977
      %v6979 = vlaneseq
      %v6980 = vshrl.u32 %v6979, 7
      %v6981 = vsub.s32 %v6978, %v6980
      %v6982 = vrot.slane %v6975, %v6981
      %v6983 = vcombine.low %v6974, %v6982
      %v6984 = vcombine.high %v6974, %v6982
      %v6985 = vcombine.low %v6143, %v6150
      %v6987 = vunpack.c.l.s4 1983009808
      %v6988 = vunpack.c.0.s8 %v6987
      %v6989 = vlaneseq
      %v6990 = vshrl.u32 %v6989, 7
      %v6991 = vsub.s32 %v6988, %v6990
      %v6992 = vrot.slane %v6985, %v6991
      %v6993 = vcombine.low %v6167, %v6168
      %v6995 = vunpack.c.l.s4 1983009808
      %v6996 = vunpack.c.0.s8 %v6995
      %v6997 = vlaneseq
      %v6998 = vshrl.u32 %v6997, 7
      %v6999 = vsub.s32 %v6996, %v6998
      %v7000 = vrot.slane %v6993, %v6999
      %v7001 = vcombine.low %v6159, %v6166
      %v7003 = vunpack.c.l.s4 1983009808
      %v7004 = vunpack.c.0.s8 %v7003
      %v7005 = vlaneseq
      %v7006 = vshrl.u32 %v7005, 7
      %v7007 = vsub.s32 %v7004, %v7006
      %v7008 = vrot.slane %v7001, %v7007
      %v7009 = vcombine.low %v6169, %v6170
      %v7011 = vunpack.c.l.s4 1983009808
      %v7012 = vunpack.c.0.s8 %v7011
      %v7013 = vlaneseq
      %v7014 = vshrl.u32 %v7013, 7
      %v7015 = vsub.s32 %v7012, %v7014
      %v7016 = vrot.slane %v7009, %v7015
      %v7017 = vcombine.low %v6992, %v7000
      %v7019 = vunpack.c.l.s4 1934713408
      %v7020 = vunpack.c.0.s8 %v7019
      %v7021 = vlaneseq
      %v7022 = vshrl.u32 %v7021, 7
      %v7023 = vsub.s32 %v7020, %v7022
      %v7024 = vrot.slane %v7017, %v7023
      %v7025 = vcombine.low %v7008, %v7016
      %v7027 = vunpack.c.l.s4 1934713408
      %v7028 = vunpack.c.0.s8 %v7027
      %v7029 = vlaneseq
      %v7030 = vshrl.u32 %v7029, 7
      %v7031 = vsub.s32 %v7028, %v7030
      %v7032 = vrot.slane %v7025, %v7031
      %v7033 = vcombine.low %v7024, %v7032
      %v7034 = vcombine.high %v7024, %v7032
      %v7035 = vcombine.low %v6209, %v6216
      %v7037 = vunpack.c.l.s4 1983009808
      %v7038 = vunpack.c.0.s8 %v7037
      %v7039 = vlaneseq
      %v7040 = vshrl.u32 %v7039, 7
      %v7041 = vsub.s32 %v7038, %v7040
      %v7042 = vrot.slane %v7035, %v7041
      %v7043 = vcombine.low %v6233, %v6234
      %v7045 = vunpack.c.l.s4 1983009808
      %v7046 = vunpack.c.0.s8 %v7045
      %v7047 = vlaneseq
      %v7048 = vshrl.u32 %v7047, 7
      %v7049 = vsub.s32 %v7046, %v7048
      %v7050 = vrot.slane %v7043, %v7049
      %v7051 = vcombine.low %v6225, %v6232
      %v7053 = vunpack.c.l.s4 1983009808
      %v7054 = vunpack.c.0.s8 %v7053
      %v7055 = vlaneseq
      %v7056 = vshrl.u32 %v7055, 7
      %v7057 = vsub.s32 %v7054, %v7056
      %v7058 = vrot.slane %v7051, %v7057
      %v7059 = vcombine.low %v6235, %v6236
      %v7061 = vunpack.c.l.s4 1983009808
      %v7062 = vunpack.c.0.s8 %v7061
      %v7063 = vlaneseq
      %v7064 = vshrl.u32 %v7063, 7
      %v7065 = vsub.s32 %v7062, %v7064
      %v7066 = vrot.slane %v7059, %v7065
      %v7067 = vcombine.low %v7042, %v7050
      %v7069 = vunpack.c.l.s4 1934713408
      %v7070 = vunpack.c.0.s8 %v7069
      %v7071 = vlaneseq
      %v7072 = vshrl.u32 %v7071, 7
      %v7073 = vsub.s32 %v7070, %v7072
      %v7074 = vrot.slane %v7067, %v7073
      %v7075 = vcombine.low %v7058, %v7066
      %v7077 = vunpack.c.l.s4 1934713408
      %v7078 = vunpack.c.0.s8 %v7077
      %v7079 = vlaneseq
      %v7080 = vshrl.u32 %v7079, 7
      %v7081 = vsub.s32 %v7078, %v7080
      %v7082 = vrot.slane %v7075, %v7081
      %v7083 = vcombine.low %v7074, %v7082
      %v7084 = vcombine.high %v7074, %v7082
      %v7085 = vcombine.low %v6275, %v6282
      %v7087 = vunpack.c.l.s4 1983009808
      %v7088 = vunpack.c.0.s8 %v7087
      %v7089 = vlaneseq
      %v7090 = vshrl.u32 %v7089, 7
      %v7091 = vsub.s32 %v7088, %v7090
      %v7092 = vrot.slane %v7085, %v7091
      %v7093 = vcombine.low %v6299, %v6300
      %v7095 = vunpack.c.l.s4 1983009808
      %v7096 = vunpack.c.0.s8 %v7095
      %v7097 = vlaneseq
      %v7098 = vshrl.u32 %v7097, 7
      %v7099 = vsub.s32 %v7096, %v7098
      %v7100 = vrot.slane %v7093, %v7099
      %v7101 = vcombine.low %v6291, %v6298
      %v7103 = vunpack.c.l.s4 1983009808
      %v7104 = vunpack.c.0.s8 %v7103
      %v7105 = vlaneseq
      %v7106 = vshrl.u32 %v7105, 7
      %v7107 = vsub.s32 %v7104, %v7106
      %v7108 = vrot.slane %v7101, %v7107
      %v7109 = vcombine.low %v6301, %v6302
      %v7111 = vunpack.c.l.s4 1983009808
      %v7112 = vunpack.c.0.s8 %v7111
      %v7113 = vlaneseq
      %v7114 = vshrl.u32 %v7113, 7
      %v7115 = vsub.s32 %v7112, %v7114
      %v7116 = vrot.slane %v7109, %v7115
      %v7117 = vcombine.low %v7092, %v7100
      %v7119 = vunpack.c.l.s4 1934713408
      %v7120 = vunpack.c.0.s8 %v7119
      %v7121 = vlaneseq
      %v7122 = vshrl.u32 %v7121, 7
      %v7123 = vsub.s32 %v7120, %v7122
      %v7124 = vrot.slane %v7117, %v7123
      %v7125 = vcombine.low %v7108, %v7116
      %v7127 = vunpack.c.l.s4 1934713408
      %v7128 = vunpack.c.0.s8 %v7127
      %v7129 = vlaneseq
      %v7130 = vshrl.u32 %v7129, 7
      %v7131 = vsub.s32 %v7128, %v7130
      %v7132 = vrot.slane %v7125, %v7131
      %v7133 = vcombine.low %v7124, %v7132
      %v7134 = vcombine.high %v7124, %v7132
      %v7135 = vcombine.low %v6341, %v6348
      %v7137 = vunpack.c.l.s4 1983009808
      %v7138 = vunpack.c.0.s8 %v7137
      %v7139 = vlaneseq
      %v7140 = vshrl.u32 %v7139, 7
      %v7141 = vsub.s32 %v7138, %v7140
      %v7142 = vrot.slane %v7135, %v7141
      %v7143 = vcombine.low %v6365, %v6366
      %v7145 = vunpack.c.l.s4 1983009808
      %v7146 = vunpack.c.0.s8 %v7145
      %v7147 = vlaneseq
      %v7148 = vshrl.u32 %v7147, 7
      %v7149 = vsub.s32 %v7146, %v7148
      %v7150 = vrot.slane %v7143, %v7149
      %v7151 = vcombine.low %v6357, %v6364
      %v7153 = vunpack.c.l.s4 1983009808
      %v7154 = vunpack.c.0.s8 %v7153
      %v7155 = vlaneseq
      %v7156 = vshrl.u32 %v7155, 7
      %v7157 = vsub.s32 %v7154, %v7156
      %v7158 = vrot.slane %v7151, %v7157
      %v7159 = vcombine.low %v6367, %v6368
      %v7161 = vunpack.c.l.s4 1983009808
      %v7162 = vunpack.c.0.s8 %v7161
      %v7163 = vlaneseq
      %v7164 = vshrl.u32 %v7163, 7
      %v7165 = vsub.s32 %v7162, %v7164
      %v7166 = vrot.slane %v7159, %v7165
      %v7167 = vcombine.low %v7142, %v7150
      %v7169 = vunpack.c.l.s4 1934713408
      %v7170 = vunpack.c.0.s8 %v7169
      %v7171 = vlaneseq
      %v7172 = vshrl.u32 %v7171, 7
      %v7173 = vsub.s32 %v7170, %v7172
      %v7174 = vrot.slane %v7167, %v7173
      %v7175 = vcombine.low %v7158, %v7166
      %v7177 = vunpack.c.l.s4 1934713408
      %v7178 = vunpack.c.0.s8 %v7177
      %v7179 = vlaneseq
      %v7180 = vshrl.u32 %v7179, 7
      %v7181 = vsub.s32 %v7178, %v7180
      %v7182 = vrot.slane %v7175, %v7181
      %v7183 = vcombine.low %v7174, %v7182
      %v7184 = vcombine.high %v7174, %v7182
      %v7185 = vcombine.low %v6407, %v6414
      %v7187 = vunpack.c.l.s4 1983009808
      %v7188 = vunpack.c.0.s8 %v7187
      %v7189 = vlaneseq
      %v7190 = vshrl.u32 %v7189, 7
      %v7191 = vsub.s32 %v7188, %v7190
      %v7192 = vrot.slane %v7185, %v7191
      %v7193 = vcombine.low %v6431, %v6432
      %v7195 = vunpack.c.l.s4 1983009808
      %v7196 = vunpack.c.0.s8 %v7195
      %v7197 = vlaneseq
      %v7198 = vshrl.u32 %v7197, 7
      %v7199 = vsub.s32 %v7196, %v7198
      %v7200 = vrot.slane %v7193, %v7199
      %v7201 = vcombine.low %v6423, %v6430
      %v7203 = vunpack.c.l.s4 1983009808
      %v7204 = vunpack.c.0.s8 %v7203
      %v7205 = vlaneseq
      %v7206 = vshrl.u32 %v7205, 7
      %v7207 = vsub.s32 %v7204, %v7206
      %v7208 = vrot.slane %v7201, %v7207
      %v7209 = vcombine.low %v6433, %v6434
      %v7211 = vunpack.c.l.s4 1983009808
      %v7212 = vunpack.c.0.s8 %v7211
      %v7213 = vlaneseq
      %v7214 = vshrl.u32 %v7213, 7
      %v7215 = vsub.s32 %v7212, %v7214
      %v7216 = vrot.slane %v7209, %v7215
      %v7217 = vcombine.low %v7192, %v7200
      %v7219 = vunpack.c.l.s4 1934713408
      %v7220 = vunpack.c.0.s8 %v7219
      %v7221 = vlaneseq
      %v7222 = vshrl.u32 %v7221, 7
      %v7223 = vsub.s32 %v7220, %v7222
      %v7224 = vrot.slane %v7217, %v7223
      %v7225 = vcombine.low %v7208, %v7216
      %v7227 = vunpack.c.l.s4 1934713408
      %v7228 = vunpack.c.0.s8 %v7227
      %v7229 = vlaneseq
      %v7230 = vshrl.u32 %v7229, 7
      %v7231 = vsub.s32 %v7228, %v7230
      %v7232 = vrot.slane %v7225, %v7231
      %v7233 = vcombine.low %v7224, %v7232
      %v7234 = vcombine.high %v7224, %v7232
      %v7237 = vpack.i.b16 %v6533, %v6483
      %v7239 = vshrl.u32 %v6483, 16
      %v7240 = vshrl.u32 %v6533, 16
      %v7241 = vpack.i.b16 %v7240, %v7239
      %v7245 = vpack.i.b16 %v6534, %v6484
      %v7247 = vshrl.u32 %v6484, 16
      %v7248 = vshrl.u32 %v6534, 16
      %v7249 = vpack.i.b16 %v7248, %v7247
      %v7253 = vpack.i.b16 %v6633, %v6583
      %v7255 = vshrl.u32 %v6583, 16
      %v7256 = vshrl.u32 %v6633, 16
      %v7257 = vpack.i.b16 %v7256, %v7255
      %v7261 = vpack.i.b16 %v6634, %v6584
      %v7263 = vshrl.u32 %v6584, 16
      %v7264 = vshrl.u32 %v6634, 16
      %v7265 = vpack.i.b16 %v7264, %v7263
      %v7269 = vpack.i.b16 %v6733, %v6683
      %v7271 = vshrl.u32 %v6683, 16
      %v7272 = vshrl.u32 %v6733, 16
      %v7273 = vpack.i.b16 %v7272, %v7271
      %v7277 = vpack.i.b16 %v6734, %v6684
      %v7279 = vshrl.u32 %v6684, 16
      %v7280 = vshrl.u32 %v6734, 16
      %v7281 = vpack.i.b16 %v7280, %v7279
      %v7285 = vpack.i.b16 %v6833, %v6783
      %v7287 = vshrl.u32 %v6783, 16
      %v7288 = vshrl.u32 %v6833, 16
      %v7289 = vpack.i.b16 %v7288, %v7287
      %v7293 = vpack.i.b16 %v6834, %v6784
      %v7295 = vshrl.u32 %v6784, 16
      %v7296 = vshrl.u32 %v6834, 16
      %v7297 = vpack.i.b16 %v7296, %v7295
      %v7301 = vpack.i.b16 %v6933, %v6883
      %v7303 = vshrl.u32 %v6883, 16
      %v7304 = vshrl.u32 %v6933, 16
      %v7305 = vpack.i.b16 %v7304, %v7303
      %v7309 = vpack.i.b16 %v6934, %v6884
      %v7311 = vshrl.u32 %v6884, 16
      %v7312 = vshrl.u32 %v6934, 16
      %v7313 = vpack.i.b16 %v7312, %v7311
      %v7317 = vpack.i.b16 %v7033, %v6983
      %v7319 = vshrl.u32 %v6983, 16
      %v7320 = vshrl.u32 %v7033, 16
      %v7321 = vpack.i.b16 %v7320, %v7319
      %v7325 = vpack.i.b16 %v7034, %v6984
      %v7327 = vshrl.u32 %v6984, 16
      %v7328 = vshrl.u32 %v7034, 16
      %v7329 = vpack.i.b16 %v7328, %v7327
      %v7333 = vpack.i.b16 %v7133, %v7083
      %v7335 = vshrl.u32 %v7083, 16
      %v7336 = vshrl.u32 %v7133, 16
      %v7337 = vpack.i.b16 %v7336, %v7335
      %v7341 = vpack.i.b16 %v7134, %v7084
      %v7343 = vshrl.u32 %v7084, 16
      %v7344 = vshrl.u32 %v7134, 16
      %v7345 = vpack.i.b16 %v7344, %v7343
      %v7349 = vpack.i.b16 %v7233, %v7183
      %v7351 = vshrl.u32 %v7183, 16
      %v7352 = vshrl.u32 %v7233, 16
      %v7353 = vpack.i.b16 %v7352, %v7351
      %v7357 = vpack.i.b16 %v7234, %v7184
      %v7359 = vshrl.u32 %v7184, 16
      %v7360 = vshrl.u32 %v7234, 16
      %v7361 = vpack.i.b16 %v7360, %v7359
      %v7363 = vld [vmem:[%s1] sm:$0xff]
      %v7364 = vld [vmem:[%s1 + $0x8] sm:$0xff]
      %v7365 = vld [vmem:[%s1 + $0x10] sm:$0xff]
      %v7366 = vld [vmem:[%s1 + $0x18] sm:$0xff]
      %v7367 = vld [vmem:[%s1 + $0x20] sm:$0xff]
      %v7368 = vld [vmem:[%s1 + $0x28] sm:$0xff]
      %v7369 = vld [vmem:[%s1 + $0x30] sm:$0xff]
      %v7370 = vld [vmem:[%s1 + $0x38] sm:$0xff]
      %v7371 = vld [vmem:[%s1 + $0x40] sm:$0xff]
      %v7372 = vld [vmem:[%s1 + $0x48] sm:$0xff]
      %v7373 = vld [vmem:[%s1 + $0x50] sm:$0xff]
      %v7374 = vld [vmem:[%s1 + $0x58] sm:$0xff]
      %v7375 = vld [vmem:[%s1 + $0x60] sm:$0xff]
      %v7376 = vld [vmem:[%s1 + $0x68] sm:$0xff]
      %v7377 = vld [vmem:[%s1 + $0x70] sm:$0xff]
      %v7378 = vld [vmem:[%s1 + $0x78] sm:$0xff]
      %vm7379 = vcmask 64512
      %v7381 = vsel %vm7379, %v2949, 0
      %v7384 = vsel %vm7379, %v2961, 0
      %v7387 = vsel %vm7379, %v2973, 0
      %v7390 = vsel %vm7379, %v2985, 0
      %v7393 = vsel %vm7379, %v2997, 0
      %v7396 = vsel %vm7379, %v3009, 0
      %v7399 = vsel %vm7379, %v3021, 0
      %v7402 = vsel %vm7379, %v3033, 0
      %v7405 = vsel %vm7379, %v5093, 0
      %v7408 = vsel %vm7379, %v5105, 0
      %v7411 = vsel %vm7379, %v5117, 0
      %v7414 = vsel %vm7379, %v5129, 0
      %v7417 = vsel %vm7379, %v5141, 0
      %v7420 = vsel %vm7379, %v5153, 0
      %v7423 = vsel %vm7379, %v5165, 0
      %v7426 = vsel %vm7379, %v5177, 0
      %7428 = vmatprep.subr.bf16.mxu0 0
      %7429 = vmatpush1.bf16.xpose.msra.mxu0 %v7426
      %7430 = vmatprep.subr.bf16.mxu0 0
      %7431 = vmatpush1.bf16.xpose.msra.mxu0 %v7423
      %7432 = vmatprep.subr.bf16.mxu0 0
      %7433 = vmatpush1.bf16.xpose.msra.mxu0 %v7420
      %7434 = vmatprep.subr.bf16.mxu0 0
      %7435 = vmatpush1.bf16.xpose.msra.mxu0 %v7417
      %7436 = vmatprep.subr.bf16.mxu0 0
      %7437 = vmatpush1.bf16.xpose.msra.mxu0 %v7414
      %7438 = vmatprep.subr.bf16.mxu0 0
      %7439 = vmatpush1.bf16.xpose.msra.mxu0 %v7411
      %7440 = vmatprep.subr.bf16.mxu0 0
      %7441 = vmatpush1.bf16.xpose.msra.mxu0 %v7408
      %7442 = vmatprep.subr.bf16.mxu0 0
      %7443 = vmatpush1.bf16.xpose.msra.mxu0 %v7405
      %7444 = vmatprep.subr.bf16.mxu0 0
      %7445 = vmatpush2.bf16.xpose.msra.mxu0 0
      %7446 = vmatprep.subr.bf16.mxu0 0
      %7447 = vmatpush2.bf16.xpose.msra.mxu0 0
      %7448 = vmatprep.subr.bf16.mxu0 0
      %7449 = vmatpush2.bf16.xpose.msra.mxu0 0
      %7450 = vmatprep.subr.bf16.mxu0 0
      %7451 = vmatpush2.bf16.xpose.msra.mxu0 0
      %7452 = vmatprep.subr.bf16.mxu0 0
      %7453 = vmatpush2.bf16.xpose.msra.mxu0 0
      %7454 = vmatprep.subr.bf16.mxu0 0
      %7455 = vmatpush2.bf16.xpose.msra.mxu0 0
      %7456 = vmatprep.subr.bf16.mxu0 0
      %7457 = vmatpush2.bf16.xpose.msra.mxu0 0
      %7458 = vmatprep.subr.bf16.mxu0 0
      %7459 = vmatpush2.bf16.xpose.msra.mxu0 0
      %7460 = vmatprep.mubr.bf16.mxu0 0
      %7461 = vmatmul.mubr.bf16.gmra.mxu0 %v7381
      %v7462 = vpop.f32.mrf.mxu0
      %v7463 = vadd.f32 %v7363, %v7462
      %v7464 = vpop.f32.mrf.mxu0
      %v7465 = vpop.f32.mrf.mxu0
      %v7466 = vadd.f32 %v7364, %v7465
      %v7467 = vpop.f32.mrf.mxu0
      %7468 = vmatprep.mubr.bf16.mxu0 0
      %7469 = vmatmul.mubr.bf16.gmra.mxu0 %v7384
      %v7470 = vpop.f32.mrf.mxu0
      %v7471 = vadd.f32 %v7365, %v7470
      %v7472 = vpop.f32.mrf.mxu0
      %v7473 = vpop.f32.mrf.mxu0
      %v7474 = vadd.f32 %v7366, %v7473
      %v7475 = vpop.f32.mrf.mxu0
      %7476 = vmatprep.mubr.bf16.mxu0 0
      %7477 = vmatmul.mubr.bf16.gmra.mxu0 %v7387
      %v7478 = vpop.f32.mrf.mxu0
      %v7479 = vadd.f32 %v7367, %v7478
      %v7480 = vpop.f32.mrf.mxu0
      %v7481 = vpop.f32.mrf.mxu0
      %v7482 = vadd.f32 %v7368, %v7481
      %v7483 = vpop.f32.mrf.mxu0
      %7484 = vmatprep.mubr.bf16.mxu0 0
      %7485 = vmatmul.mubr.bf16.gmra.mxu0 %v7390
      %v7486 = vpop.f32.mrf.mxu0
      %v7487 = vadd.f32 %v7369, %v7486
      %v7488 = vpop.f32.mrf.mxu0
      %v7489 = vpop.f32.mrf.mxu0
      %v7490 = vadd.f32 %v7370, %v7489
      %v7491 = vpop.f32.mrf.mxu0
      %7492 = vmatprep.mubr.bf16.mxu0 0
      %7493 = vmatmul.mubr.bf16.gmra.mxu0 %v7393
      %v7494 = vpop.f32.mrf.mxu0
      %v7495 = vadd.f32 %v7371, %v7494
      %v7496 = vpop.f32.mrf.mxu0
      %v7497 = vpop.f32.mrf.mxu0
      %v7498 = vadd.f32 %v7372, %v7497
      %v7499 = vpop.f32.mrf.mxu0
      %7500 = vmatprep.mubr.bf16.mxu0 0
      %7501 = vmatmul.mubr.bf16.gmra.mxu0 %v7396
      %v7502 = vpop.f32.mrf.mxu0
      %v7503 = vadd.f32 %v7373, %v7502
      %v7504 = vpop.f32.mrf.mxu0
      %v7505 = vpop.f32.mrf.mxu0
      %v7506 = vadd.f32 %v7374, %v7505
      %v7507 = vpop.f32.mrf.mxu0
      %7508 = vmatprep.mubr.bf16.mxu0 0
      %7509 = vmatmul.mubr.bf16.gmra.mxu0 %v7399
      %v7510 = vpop.f32.mrf.mxu0
      %v7511 = vadd.f32 %v7375, %v7510
      %v7512 = vpop.f32.mrf.mxu0
      %v7513 = vpop.f32.mrf.mxu0
      %v7514 = vadd.f32 %v7376, %v7513
      %v7515 = vpop.f32.mrf.mxu0
      %7516 = vmatprep.mubr.bf16.mxu0 0
      %7517 = vmatmul.mubr.bf16.gmra.mxu0 %v7402
      %v7518 = vpop.f32.mrf.mxu0
      %v7519 = vadd.f32 %v7377, %v7518
      %v7520 = vpop.f32.mrf.mxu0
      %v7521 = vpop.f32.mrf.mxu0
      %v7522 = vadd.f32 %v7378, %v7521
      %v7523 = vpop.f32.mrf.mxu0
      %7524 = vdwg.mxu0
      %v7526 = vsel %vm7379, %v2952, 0
      %v7529 = vsel %vm7379, %v2964, 0
      %v7532 = vsel %vm7379, %v2976, 0
      %v7535 = vsel %vm7379, %v2988, 0
      %v7538 = vsel %vm7379, %v3000, 0
      %v7541 = vsel %vm7379, %v3012, 0
      %v7544 = vsel %vm7379, %v3024, 0
      %v7547 = vsel %vm7379, %v3036, 0
      %v7550 = vsel %vm7379, %v5096, 0
      %v7553 = vsel %vm7379, %v5108, 0
      %v7556 = vsel %vm7379, %v5120, 0
      %v7559 = vsel %vm7379, %v5132, 0
      %v7562 = vsel %vm7379, %v5144, 0
      %v7565 = vsel %vm7379, %v5156, 0
      %v7568 = vsel %vm7379, %v5168, 0
      %v7571 = vsel %vm7379, %v5180, 0
      %7573 = vmatprep.subr.bf16.mxu0 0
      %7574 = vmatpush1.bf16.xpose.msra.mxu0 %v7571
      %7575 = vmatprep.subr.bf16.mxu0 0
      %7576 = vmatpush1.bf16.xpose.msra.mxu0 %v7568
      %7577 = vmatprep.subr.bf16.mxu0 0
      %7578 = vmatpush1.bf16.xpose.msra.mxu0 %v7565
      %7579 = vmatprep.subr.bf16.mxu0 0
      %7580 = vmatpush1.bf16.xpose.msra.mxu0 %v7562
      %7581 = vmatprep.subr.bf16.mxu0 0
      %7582 = vmatpush1.bf16.xpose.msra.mxu0 %v7559
      %7583 = vmatprep.subr.bf16.mxu0 0
      %7584 = vmatpush1.bf16.xpose.msra.mxu0 %v7556
      %7585 = vmatprep.subr.bf16.mxu0 0
      %7586 = vmatpush1.bf16.xpose.msra.mxu0 %v7553
      %7587 = vmatprep.subr.bf16.mxu0 0
      %7588 = vmatpush1.bf16.xpose.msra.mxu0 %v7550
      %7589 = vmatprep.subr.bf16.mxu0 0
      %7590 = vmatpush2.bf16.xpose.msra.mxu0 0
      %7591 = vmatprep.subr.bf16.mxu0 0
      %7592 = vmatpush2.bf16.xpose.msra.mxu0 0
      %7593 = vmatprep.subr.bf16.mxu0 0
      %7594 = vmatpush2.bf16.xpose.msra.mxu0 0
      %7595 = vmatprep.subr.bf16.mxu0 0
      %7596 = vmatpush2.bf16.xpose.msra.mxu0 0
      %7597 = vmatprep.subr.bf16.mxu0 0
      %7598 = vmatpush2.bf16.xpose.msra.mxu0 0
      %7599 = vmatprep.subr.bf16.mxu0 0
      %7600 = vmatpush2.bf16.xpose.msra.mxu0 0
      %7601 = vmatprep.subr.bf16.mxu0 0
      %7602 = vmatpush2.bf16.xpose.msra.mxu0 0
      %7603 = vmatprep.subr.bf16.mxu0 0
      %7604 = vmatpush2.bf16.xpose.msra.mxu0 0
      %7605 = vmatprep.mubr.bf16.mxu0 0
      %7606 = vmatmul.mubr.bf16.gmra.mxu0 %v7526
      %v7607 = vpop.f32.mrf.mxu0
      %v7608 = vadd.f32 %v7363, %v7607
      %v7609 = vpop.f32.mrf.mxu0
      %v7610 = vpop.f32.mrf.mxu0
      %v7611 = vadd.f32 %v7364, %v7610
      %v7612 = vpop.f32.mrf.mxu0
      %7613 = vmatprep.mubr.bf16.mxu0 0
      %7614 = vmatmul.mubr.bf16.gmra.mxu0 %v7529
      %v7615 = vpop.f32.mrf.mxu0
      %v7616 = vadd.f32 %v7365, %v7615
      %v7617 = vpop.f32.mrf.mxu0
      %v7618 = vpop.f32.mrf.mxu0
      %v7619 = vadd.f32 %v7366, %v7618
      %v7620 = vpop.f32.mrf.mxu0
      %7621 = vmatprep.mubr.bf16.mxu0 0
      %7622 = vmatmul.mubr.bf16.gmra.mxu0 %v7532
      %v7623 = vpop.f32.mrf.mxu0
      %v7624 = vadd.f32 %v7367, %v7623
      %v7625 = vpop.f32.mrf.mxu0
      %v7626 = vpop.f32.mrf.mxu0
      %v7627 = vadd.f32 %v7368, %v7626
      %v7628 = vpop.f32.mrf.mxu0
      %7629 = vmatprep.mubr.bf16.mxu0 0
      %7630 = vmatmul.mubr.bf16.gmra.mxu0 %v7535
      %v7631 = vpop.f32.mrf.mxu0
      %v7632 = vadd.f32 %v7369, %v7631
      %v7633 = vpop.f32.mrf.mxu0
      %v7634 = vpop.f32.mrf.mxu0
      %v7635 = vadd.f32 %v7370, %v7634
      %v7636 = vpop.f32.mrf.mxu0
      %7637 = vmatprep.mubr.bf16.mxu0 0
      %7638 = vmatmul.mubr.bf16.gmra.mxu0 %v7538
      %v7639 = vpop.f32.mrf.mxu0
      %v7640 = vadd.f32 %v7371, %v7639
      %v7641 = vpop.f32.mrf.mxu0
      %v7642 = vpop.f32.mrf.mxu0
      %v7643 = vadd.f32 %v7372, %v7642
      %v7644 = vpop.f32.mrf.mxu0
      %7645 = vmatprep.mubr.bf16.mxu0 0
      %7646 = vmatmul.mubr.bf16.gmra.mxu0 %v7541
      %v7647 = vpop.f32.mrf.mxu0
      %v7648 = vadd.f32 %v7373, %v7647
      %v7649 = vpop.f32.mrf.mxu0
      %v7650 = vpop.f32.mrf.mxu0
      %v7651 = vadd.f32 %v7374, %v7650
      %v7652 = vpop.f32.mrf.mxu0
      %7653 = vmatprep.mubr.bf16.mxu0 0
      %7654 = vmatmul.mubr.bf16.gmra.mxu0 %v7544
      %v7655 = vpop.f32.mrf.mxu0
      %v7656 = vadd.f32 %v7375, %v7655
      %v7657 = vpop.f32.mrf.mxu0
      %v7658 = vpop.f32.mrf.mxu0
      %v7659 = vadd.f32 %v7376, %v7658
      %v7660 = vpop.f32.mrf.mxu0
      %7661 = vmatprep.mubr.bf16.mxu0 0
      %7662 = vmatmul.mubr.bf16.gmra.mxu0 %v7547
      %v7663 = vpop.f32.mrf.mxu0
      %v7664 = vadd.f32 %v7377, %v7663
      %v7665 = vpop.f32.mrf.mxu0
      %v7666 = vpop.f32.mrf.mxu0
      %v7667 = vadd.f32 %v7378, %v7666
      %v7668 = vpop.f32.mrf.mxu0
      %7669 = vdwg.mxu0
      %v7671 = vsel %vm7379, %v2955, 0
      %v7674 = vsel %vm7379, %v2967, 0
      %v7677 = vsel %vm7379, %v2979, 0
      %v7680 = vsel %vm7379, %v2991, 0
      %v7683 = vsel %vm7379, %v3003, 0
      %v7686 = vsel %vm7379, %v3015, 0
      %v7689 = vsel %vm7379, %v3027, 0
      %v7692 = vsel %vm7379, %v3039, 0
      %v7695 = vsel %vm7379, %v5099, 0
      %v7698 = vsel %vm7379, %v5111, 0
      %v7701 = vsel %vm7379, %v5123, 0
      %v7704 = vsel %vm7379, %v5135, 0
      %v7707 = vsel %vm7379, %v5147, 0
      %v7710 = vsel %vm7379, %v5159, 0
      %v7713 = vsel %vm7379, %v5171, 0
      %v7716 = vsel %vm7379, %v5183, 0
      %7718 = vmatprep.subr.bf16.mxu0 0
      %7719 = vmatpush1.bf16.xpose.msra.mxu0 %v7716
      %7720 = vmatprep.subr.bf16.mxu0 0
      %7721 = vmatpush1.bf16.xpose.msra.mxu0 %v7713
      %7722 = vmatprep.subr.bf16.mxu0 0
      %7723 = vmatpush1.bf16.xpose.msra.mxu0 %v7710
      %7724 = vmatprep.subr.bf16.mxu0 0
      %7725 = vmatpush1.bf16.xpose.msra.mxu0 %v7707
      %7726 = vmatprep.subr.bf16.mxu0 0
      %7727 = vmatpush1.bf16.xpose.msra.mxu0 %v7704
      %7728 = vmatprep.subr.bf16.mxu0 0
      %7729 = vmatpush1.bf16.xpose.msra.mxu0 %v7701
      %7730 = vmatprep.subr.bf16.mxu0 0
      %7731 = vmatpush1.bf16.xpose.msra.mxu0 %v7698
      %7732 = vmatprep.subr.bf16.mxu0 0
      %7733 = vmatpush1.bf16.xpose.msra.mxu0 %v7695
      %7734 = vmatprep.subr.bf16.mxu0 0
      %7735 = vmatpush2.bf16.xpose.msra.mxu0 0
      %7736 = vmatprep.subr.bf16.mxu0 0
      %7737 = vmatpush2.bf16.xpose.msra.mxu0 0
      %7738 = vmatprep.subr.bf16.mxu0 0
      %7739 = vmatpush2.bf16.xpose.msra.mxu0 0
      %7740 = vmatprep.subr.bf16.mxu0 0
      %7741 = vmatpush2.bf16.xpose.msra.mxu0 0
      %7742 = vmatprep.subr.bf16.mxu0 0
      %7743 = vmatpush2.bf16.xpose.msra.mxu0 0
      %7744 = vmatprep.subr.bf16.mxu0 0
      %7745 = vmatpush2.bf16.xpose.msra.mxu0 0
      %7746 = vmatprep.subr.bf16.mxu0 0
      %7747 = vmatpush2.bf16.xpose.msra.mxu0 0
      %7748 = vmatprep.subr.bf16.mxu0 0
      %7749 = vmatpush2.bf16.xpose.msra.mxu0 0
      %7750 = vmatprep.mubr.bf16.mxu0 0
      %7751 = vmatmul.mubr.bf16.gmra.mxu0 %v7671
      %v7752 = vpop.f32.mrf.mxu0
      %v7753 = vadd.f32 %v7363, %v7752
      %v7754 = vpop.f32.mrf.mxu0
      %v7755 = vpop.f32.mrf.mxu0
      %v7756 = vadd.f32 %v7364, %v7755
      %v7757 = vpop.f32.mrf.mxu0
      %7758 = vmatprep.mubr.bf16.mxu0 0
      %7759 = vmatmul.mubr.bf16.gmra.mxu0 %v7674
      %v7760 = vpop.f32.mrf.mxu0
      %v7761 = vadd.f32 %v7365, %v7760
      %v7762 = vpop.f32.mrf.mxu0
      %v7763 = vpop.f32.mrf.mxu0
      %v7764 = vadd.f32 %v7366, %v7763
      %v7765 = vpop.f32.mrf.mxu0
      %7766 = vmatprep.mubr.bf16.mxu0 0
      %7767 = vmatmul.mubr.bf16.gmra.mxu0 %v7677
      %v7768 = vpop.f32.mrf.mxu0
      %v7769 = vadd.f32 %v7367, %v7768
      %v7770 = vpop.f32.mrf.mxu0
      %v7771 = vpop.f32.mrf.mxu0
      %v7772 = vadd.f32 %v7368, %v7771
      %v7773 = vpop.f32.mrf.mxu0
      %7774 = vmatprep.mubr.bf16.mxu0 0
      %7775 = vmatmul.mubr.bf16.gmra.mxu0 %v7680
      %v7776 = vpop.f32.mrf.mxu0
      %v7777 = vadd.f32 %v7369, %v7776
      %v7778 = vpop.f32.mrf.mxu0
      %v7779 = vpop.f32.mrf.mxu0
      %v7780 = vadd.f32 %v7370, %v7779
      %v7781 = vpop.f32.mrf.mxu0
      %7782 = vmatprep.mubr.bf16.mxu0 0
      %7783 = vmatmul.mubr.bf16.gmra.mxu0 %v7683
      %v7784 = vpop.f32.mrf.mxu0
      %v7785 = vadd.f32 %v7371, %v7784
      %v7786 = vpop.f32.mrf.mxu0
      %v7787 = vpop.f32.mrf.mxu0
      %v7788 = vadd.f32 %v7372, %v7787
      %v7789 = vpop.f32.mrf.mxu0
      %7790 = vmatprep.mubr.bf16.mxu0 0
      %7791 = vmatmul.mubr.bf16.gmra.mxu0 %v7686
      %v7792 = vpop.f32.mrf.mxu0
      %v7793 = vadd.f32 %v7373, %v7792
      %v7794 = vpop.f32.mrf.mxu0
      %v7795 = vpop.f32.mrf.mxu0
      %v7796 = vadd.f32 %v7374, %v7795
      %v7797 = vpop.f32.mrf.mxu0
      %7798 = vmatprep.mubr.bf16.mxu0 0
      %7799 = vmatmul.mubr.bf16.gmra.mxu0 %v7689
      %v7800 = vpop.f32.mrf.mxu0
      %v7801 = vadd.f32 %v7375, %v7800
      %v7802 = vpop.f32.mrf.mxu0
      %v7803 = vpop.f32.mrf.mxu0
      %v7804 = vadd.f32 %v7376, %v7803
      %v7805 = vpop.f32.mrf.mxu0
      %7806 = vmatprep.mubr.bf16.mxu0 0
      %7807 = vmatmul.mubr.bf16.gmra.mxu0 %v7692
      %v7808 = vpop.f32.mrf.mxu0
      %v7809 = vadd.f32 %v7377, %v7808
      %v7810 = vpop.f32.mrf.mxu0
      %v7811 = vpop.f32.mrf.mxu0
      %v7812 = vadd.f32 %v7378, %v7811
      %v7813 = vpop.f32.mrf.mxu0
      %7814 = vdwg.mxu0
      %v7816 = vsel %vm7379, %v2958, 0
      %v7819 = vsel %vm7379, %v2970, 0
      %v7822 = vsel %vm7379, %v2982, 0
      %v7825 = vsel %vm7379, %v2994, 0
      %v7828 = vsel %vm7379, %v3006, 0
      %v7831 = vsel %vm7379, %v3018, 0
      %v7834 = vsel %vm7379, %v3030, 0
      %v7837 = vsel %vm7379, %v3042, 0
      %v7840 = vsel %vm7379, %v5102, 0
      %v7843 = vsel %vm7379, %v5114, 0
      %v7846 = vsel %vm7379, %v5126, 0
      %v7849 = vsel %vm7379, %v5138, 0
      %v7852 = vsel %vm7379, %v5150, 0
      %v7855 = vsel %vm7379, %v5162, 0
      %v7858 = vsel %vm7379, %v5174, 0
      %v7861 = vsel %vm7379, %v5186, 0
      %7863 = vmatprep.subr.bf16.mxu0 0
      %7864 = vmatpush1.bf16.xpose.msra.mxu0 %v7861
      %7865 = vmatprep.subr.bf16.mxu0 0
      %7866 = vmatpush1.bf16.xpose.msra.mxu0 %v7858
      %7867 = vmatprep.subr.bf16.mxu0 0
      %7868 = vmatpush1.bf16.xpose.msra.mxu0 %v7855
      %7869 = vmatprep.subr.bf16.mxu0 0
      %7870 = vmatpush1.bf16.xpose.msra.mxu0 %v7852
      %7871 = vmatprep.subr.bf16.mxu0 0
      %7872 = vmatpush1.bf16.xpose.msra.mxu0 %v7849
      %7873 = vmatprep.subr.bf16.mxu0 0
      %7874 = vmatpush1.bf16.xpose.msra.mxu0 %v7846
      %7875 = vmatprep.subr.bf16.mxu0 0
      %7876 = vmatpush1.bf16.xpose.msra.mxu0 %v7843
      %7877 = vmatprep.subr.bf16.mxu0 0
      %7878 = vmatpush1.bf16.xpose.msra.mxu0 %v7840
      %7879 = vmatprep.subr.bf16.mxu0 0
      %7880 = vmatpush2.bf16.xpose.msra.mxu0 0
      %7881 = vmatprep.subr.bf16.mxu0 0
      %7882 = vmatpush2.bf16.xpose.msra.mxu0 0
      %7883 = vmatprep.subr.bf16.mxu0 0
      %7884 = vmatpush2.bf16.xpose.msra.mxu0 0
      %7885 = vmatprep.subr.bf16.mxu0 0
      %7886 = vmatpush2.bf16.xpose.msra.mxu0 0
      %7887 = vmatprep.subr.bf16.mxu0 0
      %7888 = vmatpush2.bf16.xpose.msra.mxu0 0
      %7889 = vmatprep.subr.bf16.mxu0 0
      %7890 = vmatpush2.bf16.xpose.msra.mxu0 0
      %7891 = vmatprep.subr.bf16.mxu0 0
      %7892 = vmatpush2.bf16.xpose.msra.mxu0 0
      %7893 = vmatprep.subr.bf16.mxu0 0
      %7894 = vmatpush2.bf16.xpose.msra.mxu0 0
      %7895 = vmatprep.mubr.bf16.mxu0 0
      %7896 = vmatmul.mubr.bf16.gmra.mxu0 %v7816
      %v7897 = vpop.f32.mrf.mxu0
      %v7898 = vadd.f32 %v7363, %v7897
      %v7899 = vpop.f32.mrf.mxu0
      %v7900 = vpop.f32.mrf.mxu0
      %v7901 = vadd.f32 %v7364, %v7900
      %v7902 = vpop.f32.mrf.mxu0
      %7903 = vmatprep.mubr.bf16.mxu0 0
      %7904 = vmatmul.mubr.bf16.gmra.mxu0 %v7819
      %v7905 = vpop.f32.mrf.mxu0
      %v7906 = vadd.f32 %v7365, %v7905
      %v7907 = vpop.f32.mrf.mxu0
      %v7908 = vpop.f32.mrf.mxu0
      %v7909 = vadd.f32 %v7366, %v7908
      %v7910 = vpop.f32.mrf.mxu0
      %7911 = vmatprep.mubr.bf16.mxu0 0
      %7912 = vmatmul.mubr.bf16.gmra.mxu0 %v7822
      %v7913 = vpop.f32.mrf.mxu0
      %v7914 = vadd.f32 %v7367, %v7913
      %v7915 = vpop.f32.mrf.mxu0
      %v7916 = vpop.f32.mrf.mxu0
      %v7917 = vadd.f32 %v7368, %v7916
      %v7918 = vpop.f32.mrf.mxu0
      %7919 = vmatprep.mubr.bf16.mxu0 0
      %7920 = vmatmul.mubr.bf16.gmra.mxu0 %v7825
      %v7921 = vpop.f32.mrf.mxu0
      %v7922 = vadd.f32 %v7369, %v7921
      %v7923 = vpop.f32.mrf.mxu0
      %v7924 = vpop.f32.mrf.mxu0
      %v7925 = vadd.f32 %v7370, %v7924
      %v7926 = vpop.f32.mrf.mxu0
      %7927 = vmatprep.mubr.bf16.mxu0 0
      %7928 = vmatmul.mubr.bf16.gmra.mxu0 %v7828
      %v7929 = vpop.f32.mrf.mxu0
      %v7930 = vadd.f32 %v7371, %v7929
      %v7931 = vpop.f32.mrf.mxu0
      %v7932 = vpop.f32.mrf.mxu0
      %v7933 = vadd.f32 %v7372, %v7932
      %v7934 = vpop.f32.mrf.mxu0
      %7935 = vmatprep.mubr.bf16.mxu0 0
      %7936 = vmatmul.mubr.bf16.gmra.mxu0 %v7831
      %v7937 = vpop.f32.mrf.mxu0
      %v7938 = vadd.f32 %v7373, %v7937
      %v7939 = vpop.f32.mrf.mxu0
      %v7940 = vpop.f32.mrf.mxu0
      %v7941 = vadd.f32 %v7374, %v7940
      %v7942 = vpop.f32.mrf.mxu0
      %7943 = vmatprep.mubr.bf16.mxu0 0
      %7944 = vmatmul.mubr.bf16.gmra.mxu0 %v7834
      %v7945 = vpop.f32.mrf.mxu0
      %v7946 = vadd.f32 %v7375, %v7945
      %v7947 = vpop.f32.mrf.mxu0
      %v7948 = vpop.f32.mrf.mxu0
      %v7949 = vadd.f32 %v7376, %v7948
      %v7950 = vpop.f32.mrf.mxu0
      %7951 = vmatprep.mubr.bf16.mxu0 0
      %7952 = vmatmul.mubr.bf16.gmra.mxu0 %v7837
      %v7953 = vpop.f32.mrf.mxu0
      %v7954 = vadd.f32 %v7377, %v7953
      %v7955 = vpop.f32.mrf.mxu0
      %v7956 = vpop.f32.mrf.mxu0
      %v7957 = vadd.f32 %v7378, %v7956
      %v7958 = vpop.f32.mrf.mxu0
      %7959 = vdwg.mxu0
      %7960 = vmax.xlane.f32.xlu0 %v7463
      %v7961 = vpop.xlane.xlu0 %7960
      %7962 = vmax.xlane.f32.xlu0 %v7466
      %v7963 = vpop.xlane.xlu0 %7962
      %7964 = vmax.xlane.f32.xlu0 %v7471
      %v7965 = vpop.xlane.xlu0 %7964
      %7966 = vmax.xlane.f32.xlu0 %v7474
      %v7967 = vpop.xlane.xlu0 %7966
      %7968 = vmax.xlane.f32.xlu0 %v7479
      %v7969 = vpop.xlane.xlu0 %7968
      %7970 = vmax.xlane.f32.xlu0 %v7482
      %v7971 = vpop.xlane.xlu0 %7970
      %7972 = vmax.xlane.f32.xlu0 %v7487
      %v7973 = vpop.xlane.xlu0 %7972
      %7974 = vmax.xlane.f32.xlu0 %v7490
      %v7975 = vpop.xlane.xlu0 %7974
      %7976 = vmax.xlane.f32.xlu0 %v7495
      %v7977 = vpop.xlane.xlu0 %7976
      %7978 = vmax.xlane.f32.xlu0 %v7498
      %v7979 = vpop.xlane.xlu0 %7978
      %7980 = vmax.xlane.f32.xlu0 %v7503
      %v7981 = vpop.xlane.xlu0 %7980
      %7982 = vmax.xlane.f32.xlu0 %v7506
      %v7983 = vpop.xlane.xlu0 %7982
      %7984 = vmax.xlane.f32.xlu0 %v7511
      %v7985 = vpop.xlane.xlu0 %7984
      %7986 = vmax.xlane.f32.xlu0 %v7514
      %v7987 = vpop.xlane.xlu0 %7986
      %7988 = vmax.xlane.f32.xlu0 %v7519
      %v7989 = vpop.xlane.xlu0 %7988
      %7990 = vmax.xlane.f32.xlu0 %v7522
      %v7991 = vpop.xlane.xlu0 %7990
      %7992 = vmax.xlane.f32.xlu0 %v7608
      %v7993 = vpop.xlane.xlu0 %7992
      %7994 = vmax.xlane.f32.xlu0 %v7611
      %v7995 = vpop.xlane.xlu0 %7994
      %7996 = vmax.xlane.f32.xlu0 %v7616
      %v7997 = vpop.xlane.xlu0 %7996
      %7998 = vmax.xlane.f32.xlu0 %v7619
      %v7999 = vpop.xlane.xlu0 %7998
      %8000 = vmax.xlane.f32.xlu0 %v7624
      %v8001 = vpop.xlane.xlu0 %8000
      %8002 = vmax.xlane.f32.xlu0 %v7627
      %v8003 = vpop.xlane.xlu0 %8002
      %8004 = vmax.xlane.f32.xlu0 %v7632
      %v8005 = vpop.xlane.xlu0 %8004
      %8006 = vmax.xlane.f32.xlu0 %v7635
      %v8007 = vpop.xlane.xlu0 %8006
      %8008 = vmax.xlane.f32.xlu0 %v7640
      %v8009 = vpop.xlane.xlu0 %8008
      %8010 = vmax.xlane.f32.xlu0 %v7643
      %v8011 = vpop.xlane.xlu0 %8010
      %8012 = vmax.xlane.f32.xlu0 %v7648
      %v8013 = vpop.xlane.xlu0 %8012
      %8014 = vmax.xlane.f32.xlu0 %v7651
      %v8015 = vpop.xlane.xlu0 %8014
      %8016 = vmax.xlane.f32.xlu0 %v7656
      %v8017 = vpop.xlane.xlu0 %8016
      %8018 = vmax.xlane.f32.xlu0 %v7659
      %v8019 = vpop.xlane.xlu0 %8018
      %8020 = vmax.xlane.f32.xlu0 %v7664
      %v8021 = vpop.xlane.xlu0 %8020
      %8022 = vmax.xlane.f32.xlu0 %v7667
      %v8023 = vpop.xlane.xlu0 %8022
      %8024 = vmax.xlane.f32.xlu0 %v7753
      %v8025 = vpop.xlane.xlu0 %8024
      %8026 = vmax.xlane.f32.xlu0 %v7756
      %v8027 = vpop.xlane.xlu0 %8026
      %8028 = vmax.xlane.f32.xlu0 %v7761
      %v8029 = vpop.xlane.xlu0 %8028
      %8030 = vmax.xlane.f32.xlu0 %v7764
      %v8031 = vpop.xlane.xlu0 %8030
      %8032 = vmax.xlane.f32.xlu0 %v7769
      %v8033 = vpop.xlane.xlu0 %8032
      %8034 = vmax.xlane.f32.xlu0 %v7772
      %v8035 = vpop.xlane.xlu0 %8034
      %8036 = vmax.xlane.f32.xlu0 %v7777
      %v8037 = vpop.xlane.xlu0 %8036
      %8038 = vmax.xlane.f32.xlu0 %v7780
      %v8039 = vpop.xlane.xlu0 %8038
      %8040 = vmax.xlane.f32.xlu0 %v7785
      %v8041 = vpop.xlane.xlu0 %8040
      %8042 = vmax.xlane.f32.xlu0 %v7788
      %v8043 = vpop.xlane.xlu0 %8042
      %8044 = vmax.xlane.f32.xlu0 %v7793
      %v8045 = vpop.xlane.xlu0 %8044
      %8046 = vmax.xlane.f32.xlu0 %v7796
      %v8047 = vpop.xlane.xlu0 %8046
      %8048 = vmax.xlane.f32.xlu0 %v7801
      %v8049 = vpop.xlane.xlu0 %8048
      %8050 = vmax.xlane.f32.xlu0 %v7804
      %v8051 = vpop.xlane.xlu0 %8050
      %8052 = vmax.xlane.f32.xlu0 %v7809
      %v8053 = vpop.xlane.xlu0 %8052
      %8054 = vmax.xlane.f32.xlu0 %v7812
      %v8055 = vpop.xlane.xlu0 %8054
      %8056 = vmax.xlane.f32.xlu0 %v7898
      %v8057 = vpop.xlane.xlu0 %8056
      %8058 = vmax.xlane.f32.xlu0 %v7901
      %v8059 = vpop.xlane.xlu0 %8058
      %8060 = vmax.xlane.f32.xlu0 %v7906
      %v8061 = vpop.xlane.xlu0 %8060
      %8062 = vmax.xlane.f32.xlu0 %v7909
      %v8063 = vpop.xlane.xlu0 %8062
      %8064 = vmax.xlane.f32.xlu0 %v7914
      %v8065 = vpop.xlane.xlu0 %8064
      %8066 = vmax.xlane.f32.xlu0 %v7917
      %v8067 = vpop.xlane.xlu0 %8066
      %8068 = vmax.xlane.f32.xlu0 %v7922
      %v8069 = vpop.xlane.xlu0 %8068
      %8070 = vmax.xlane.f32.xlu0 %v7925
      %v8071 = vpop.xlane.xlu0 %8070
      %8072 = vmax.xlane.f32.xlu0 %v7930
      %v8073 = vpop.xlane.xlu0 %8072
      %8074 = vmax.xlane.f32.xlu0 %v7933
      %v8075 = vpop.xlane.xlu0 %8074
      %8076 = vmax.xlane.f32.xlu0 %v7938
      %v8077 = vpop.xlane.xlu0 %8076
      %8078 = vmax.xlane.f32.xlu0 %v7941
      %v8079 = vpop.xlane.xlu0 %8078
      %8080 = vmax.xlane.f32.xlu0 %v7946
      %v8081 = vpop.xlane.xlu0 %8080
      %8082 = vmax.xlane.f32.xlu0 %v7949
      %v8083 = vpop.xlane.xlu0 %8082
      %8084 = vmax.xlane.f32.xlu0 %v7954
      %v8085 = vpop.xlane.xlu0 %8084
      %8086 = vmax.xlane.f32.xlu0 %v7957
      %v8087 = vpop.xlane.xlu0 %8086
      %v8088 = vsub.f32 %v7463, %v7961
      %v8089 = vsub.f32 %v7466, %v7963
      %v8090 = vsub.f32 %v7471, %v7965
      %v8091 = vsub.f32 %v7474, %v7967
      %v8092 = vsub.f32 %v7479, %v7969
      %v8093 = vsub.f32 %v7482, %v7971
      %v8094 = vsub.f32 %v7487, %v7973
      %v8095 = vsub.f32 %v7490, %v7975
      %v8096 = vsub.f32 %v7495, %v7977
      %v8097 = vsub.f32 %v7498, %v7979
      %v8098 = vsub.f32 %v7503, %v7981
      %v8099 = vsub.f32 %v7506, %v7983
      %v8100 = vsub.f32 %v7511, %v7985
      %v8101 = vsub.f32 %v7514, %v7987
      %v8102 = vsub.f32 %v7519, %v7989
      %v8103 = vsub.f32 %v7522, %v7991
      %v8104 = vsub.f32 %v7608, %v7993
      %v8105 = vsub.f32 %v7611, %v7995
      %v8106 = vsub.f32 %v7616, %v7997
      %v8107 = vsub.f32 %v7619, %v7999
      %v8108 = vsub.f32 %v7624, %v8001
      %v8109 = vsub.f32 %v7627, %v8003
      %v8110 = vsub.f32 %v7632, %v8005
      %v8111 = vsub.f32 %v7635, %v8007
      %v8112 = vsub.f32 %v7640, %v8009
      %v8113 = vsub.f32 %v7643, %v8011
      %v8114 = vsub.f32 %v7648, %v8013
      %v8115 = vsub.f32 %v7651, %v8015
      %v8116 = vsub.f32 %v7656, %v8017
      %v8117 = vsub.f32 %v7659, %v8019
      %v8118 = vsub.f32 %v7664, %v8021
      %v8119 = vsub.f32 %v7667, %v8023
      %v8120 = vsub.f32 %v7753, %v8025
      %v8121 = vsub.f32 %v7756, %v8027
      %v8122 = vsub.f32 %v7761, %v8029
      %v8123 = vsub.f32 %v7764, %v8031
      %v8124 = vsub.f32 %v7769, %v8033
      %v8125 = vsub.f32 %v7772, %v8035
      %v8126 = vsub.f32 %v7777, %v8037
      %v8127 = vsub.f32 %v7780, %v8039
      %v8128 = vsub.f32 %v7785, %v8041
      %v8129 = vsub.f32 %v7788, %v8043
      %v8130 = vsub.f32 %v7793, %v8045
      %v8131 = vsub.f32 %v7796, %v8047
      %v8132 = vsub.f32 %v7801, %v8049
      %v8133 = vsub.f32 %v7804, %v8051
      %v8134 = vsub.f32 %v7809, %v8053
      %v8135 = vsub.f32 %v7812, %v8055
      %v8136 = vsub.f32 %v7898, %v8057
      %v8137 = vsub.f32 %v7901, %v8059
      %v8138 = vsub.f32 %v7906, %v8061
      %v8139 = vsub.f32 %v7909, %v8063
      %v8140 = vsub.f32 %v7914, %v8065
      %v8141 = vsub.f32 %v7917, %v8067
      %v8142 = vsub.f32 %v7922, %v8069
      %v8143 = vsub.f32 %v7925, %v8071
      %v8144 = vsub.f32 %v7930, %v8073
      %v8145 = vsub.f32 %v7933, %v8075
      %v8146 = vsub.f32 %v7938, %v8077
      %v8147 = vsub.f32 %v7941, %v8079
      %v8148 = vsub.f32 %v7946, %v8081
      %v8149 = vsub.f32 %v7949, %v8083
      %v8150 = vsub.f32 %v7954, %v8085
      %v8151 = vsub.f32 %v7957, %v8087
      %v8152 = vmul.f32 %v8088, 1.442695
      %v8153 = vpow.pop %v8152
      %v8154 = vmul.f32 %v8089, 1.442695
      %v8155 = vpow.pop %v8154
      %v8156 = vmul.f32 %v8090, 1.442695
      %v8157 = vpow.pop %v8156
      %v8158 = vmul.f32 %v8091, 1.442695
      %v8159 = vpow.pop %v8158
      %v8160 = vmul.f32 %v8092, 1.442695
      %v8161 = vpow.pop %v8160
      %v8162 = vmul.f32 %v8093, 1.442695
      %v8163 = vpow.pop %v8162
      %v8164 = vmul.f32 %v8094, 1.442695
      %v8165 = vpow.pop %v8164
      %v8166 = vmul.f32 %v8095, 1.442695
      %v8167 = vpow.pop %v8166
      %v8168 = vmul.f32 %v8096, 1.442695
      %v8169 = vpow.pop %v8168
      %v8170 = vmul.f32 %v8097, 1.442695
      %v8171 = vpow.pop %v8170
      %v8172 = vmul.f32 %v8098, 1.442695
      %v8173 = vpow.pop %v8172
      %v8174 = vmul.f32 %v8099, 1.442695
      %v8175 = vpow.pop %v8174
      %v8176 = vmul.f32 %v8100, 1.442695
      %v8177 = vpow.pop %v8176
      %v8178 = vmul.f32 %v8101, 1.442695
      %v8179 = vpow.pop %v8178
      %v8180 = vmul.f32 %v8102, 1.442695
      %v8181 = vpow.pop %v8180
      %v8182 = vmul.f32 %v8103, 1.442695
      %v8183 = vpow.pop %v8182
      %v8184 = vmul.f32 %v8104, 1.442695
      %v8185 = vpow.pop %v8184
      %v8186 = vmul.f32 %v8105, 1.442695
      %v8187 = vpow.pop %v8186
      %v8188 = vmul.f32 %v8106, 1.442695
      %v8189 = vpow.pop %v8188
      %v8190 = vmul.f32 %v8107, 1.442695
      %v8191 = vpow.pop %v8190
      %v8192 = vmul.f32 %v8108, 1.442695
      %v8193 = vpow.pop %v8192
      %v8194 = vmul.f32 %v8109, 1.442695
      %v8195 = vpow.pop %v8194
      %v8196 = vmul.f32 %v8110, 1.442695
      %v8197 = vpow.pop %v8196
      %v8198 = vmul.f32 %v8111, 1.442695
      %v8199 = vpow.pop %v8198
      %v8200 = vmul.f32 %v8112, 1.442695
      %v8201 = vpow.pop %v8200
      %v8202 = vmul.f32 %v8113, 1.442695
      %v8203 = vpow.pop %v8202
      %v8204 = vmul.f32 %v8114, 1.442695
      %v8205 = vpow.pop %v8204
      %v8206 = vmul.f32 %v8115, 1.442695
      %v8207 = vpow.pop %v8206
      %v8208 = vmul.f32 %v8116, 1.442695
      %v8209 = vpow.pop %v8208
      %v8210 = vmul.f32 %v8117, 1.442695
      %v8211 = vpow.pop %v8210
      %v8212 = vmul.f32 %v8118, 1.442695
      %v8213 = vpow.pop %v8212
      %v8214 = vmul.f32 %v8119, 1.442695
      %v8215 = vpow.pop %v8214
      %v8216 = vmul.f32 %v8120, 1.442695
      %v8217 = vpow.pop %v8216
      %v8218 = vmul.f32 %v8121, 1.442695
      %v8219 = vpow.pop %v8218
      %v8220 = vmul.f32 %v8122, 1.442695
      %v8221 = vpow.pop %v8220
      %v8222 = vmul.f32 %v8123, 1.442695
      %v8223 = vpow.pop %v8222
      %v8224 = vmul.f32 %v8124, 1.442695
      %v8225 = vpow.pop %v8224
      %v8226 = vmul.f32 %v8125, 1.442695
      %v8227 = vpow.pop %v8226
      %v8228 = vmul.f32 %v8126, 1.442695
      %v8229 = vpow.pop %v8228
      %v8230 = vmul.f32 %v8127, 1.442695
      %v8231 = vpow.pop %v8230
      %v8232 = vmul.f32 %v8128, 1.442695
      %v8233 = vpow.pop %v8232
      %v8234 = vmul.f32 %v8129, 1.442695
      %v8235 = vpow.pop %v8234
      %v8236 = vmul.f32 %v8130, 1.442695
      %v8237 = vpow.pop %v8236
      %v8238 = vmul.f32 %v8131, 1.442695
      %v8239 = vpow.pop %v8238
      %v8240 = vmul.f32 %v8132, 1.442695
      %v8241 = vpow.pop %v8240
      %v8242 = vmul.f32 %v8133, 1.442695
      %v8243 = vpow.pop %v8242
      %v8244 = vmul.f32 %v8134, 1.442695
      %v8245 = vpow.pop %v8244
      %v8246 = vmul.f32 %v8135, 1.442695
      %v8247 = vpow.pop %v8246
      %v8248 = vmul.f32 %v8136, 1.442695
      %v8249 = vpow.pop %v8248
      %v8250 = vmul.f32 %v8137, 1.442695
      %v8251 = vpow.pop %v8250
      %v8252 = vmul.f32 %v8138, 1.442695
      %v8253 = vpow.pop %v8252
      %v8254 = vmul.f32 %v8139, 1.442695
      %v8255 = vpow.pop %v8254
      %v8256 = vmul.f32 %v8140, 1.442695
      %v8257 = vpow.pop %v8256
      %v8258 = vmul.f32 %v8141, 1.442695
      %v8259 = vpow.pop %v8258
      %v8260 = vmul.f32 %v8142, 1.442695
      %v8261 = vpow.pop %v8260
      %v8262 = vmul.f32 %v8143, 1.442695
      %v8263 = vpow.pop %v8262
      %v8264 = vmul.f32 %v8144, 1.442695
      %v8265 = vpow.pop %v8264
      %v8266 = vmul.f32 %v8145, 1.442695
      %v8267 = vpow.pop %v8266
      %v8268 = vmul.f32 %v8146, 1.442695
      %v8269 = vpow.pop %v8268
      %v8270 = vmul.f32 %v8147, 1.442695
      %v8271 = vpow.pop %v8270
      %v8272 = vmul.f32 %v8148, 1.442695
      %v8273 = vpow.pop %v8272
      %v8274 = vmul.f32 %v8149, 1.442695
      %v8275 = vpow.pop %v8274
      %v8276 = vmul.f32 %v8150, 1.442695
      %v8277 = vpow.pop %v8276
      %v8278 = vmul.f32 %v8151, 1.442695
      %v8279 = vpow.pop %v8278
      %8280 = vadd.xlane.f32.xlu0 %v8153
      %v8281 = vpop.xlane.xlu0 %8280
      %8282 = vadd.xlane.f32.xlu0 %v8155
      %v8283 = vpop.xlane.xlu0 %8282
      %8284 = vadd.xlane.f32.xlu0 %v8157
      %v8285 = vpop.xlane.xlu0 %8284
      %8286 = vadd.xlane.f32.xlu0 %v8159
      %v8287 = vpop.xlane.xlu0 %8286
      %8288 = vadd.xlane.f32.xlu0 %v8161
      %v8289 = vpop.xlane.xlu0 %8288
      %8290 = vadd.xlane.f32.xlu0 %v8163
      %v8291 = vpop.xlane.xlu0 %8290
      %8292 = vadd.xlane.f32.xlu0 %v8165
      %v8293 = vpop.xlane.xlu0 %8292
      %8294 = vadd.xlane.f32.xlu0 %v8167
      %v8295 = vpop.xlane.xlu0 %8294
      %8296 = vadd.xlane.f32.xlu0 %v8169
      %v8297 = vpop.xlane.xlu0 %8296
      %8298 = vadd.xlane.f32.xlu0 %v8171
      %v8299 = vpop.xlane.xlu0 %8298
      %8300 = vadd.xlane.f32.xlu0 %v8173
      %v8301 = vpop.xlane.xlu0 %8300
      %8302 = vadd.xlane.f32.xlu0 %v8175
      %v8303 = vpop.xlane.xlu0 %8302
      %8304 = vadd.xlane.f32.xlu0 %v8177
      %v8305 = vpop.xlane.xlu0 %8304
      %8306 = vadd.xlane.f32.xlu0 %v8179
      %v8307 = vpop.xlane.xlu0 %8306
      %8308 = vadd.xlane.f32.xlu0 %v8181
      %v8309 = vpop.xlane.xlu0 %8308
      %8310 = vadd.xlane.f32.xlu0 %v8183
      %v8311 = vpop.xlane.xlu0 %8310
      %8312 = vadd.xlane.f32.xlu0 %v8185
      %v8313 = vpop.xlane.xlu0 %8312
      %8314 = vadd.xlane.f32.xlu0 %v8187
      %v8315 = vpop.xlane.xlu0 %8314
      %8316 = vadd.xlane.f32.xlu0 %v8189
      %v8317 = vpop.xlane.xlu0 %8316
      %8318 = vadd.xlane.f32.xlu0 %v8191
      %v8319 = vpop.xlane.xlu0 %8318
      %8320 = vadd.xlane.f32.xlu0 %v8193
      %v8321 = vpop.xlane.xlu0 %8320
      %8322 = vadd.xlane.f32.xlu0 %v8195
      %v8323 = vpop.xlane.xlu0 %8322
      %8324 = vadd.xlane.f32.xlu0 %v8197
      %v8325 = vpop.xlane.xlu0 %8324
      %8326 = vadd.xlane.f32.xlu0 %v8199
      %v8327 = vpop.xlane.xlu0 %8326
      %8328 = vadd.xlane.f32.xlu0 %v8201
      %v8329 = vpop.xlane.xlu0 %8328
      %8330 = vadd.xlane.f32.xlu0 %v8203
      %v8331 = vpop.xlane.xlu0 %8330
      %8332 = vadd.xlane.f32.xlu0 %v8205
      %v8333 = vpop.xlane.xlu0 %8332
      %8334 = vadd.xlane.f32.xlu0 %v8207
      %v8335 = vpop.xlane.xlu0 %8334
      %8336 = vadd.xlane.f32.xlu0 %v8209
      %v8337 = vpop.xlane.xlu0 %8336
      %8338 = vadd.xlane.f32.xlu0 %v8211
      %v8339 = vpop.xlane.xlu0 %8338
      %8340 = vadd.xlane.f32.xlu0 %v8213
      %v8341 = vpop.xlane.xlu0 %8340
      %8342 = vadd.xlane.f32.xlu0 %v8215
      %v8343 = vpop.xlane.xlu0 %8342
      %8344 = vadd.xlane.f32.xlu0 %v8217
      %v8345 = vpop.xlane.xlu0 %8344
      %8346 = vadd.xlane.f32.xlu0 %v8219
      %v8347 = vpop.xlane.xlu0 %8346
      %8348 = vadd.xlane.f32.xlu0 %v8221
      %v8349 = vpop.xlane.xlu0 %8348
      %8350 = vadd.xlane.f32.xlu0 %v8223
      %v8351 = vpop.xlane.xlu0 %8350
      %8352 = vadd.xlane.f32.xlu0 %v8225
      %v8353 = vpop.xlane.xlu0 %8352
      %8354 = vadd.xlane.f32.xlu0 %v8227
      %v8355 = vpop.xlane.xlu0 %8354
      %8356 = vadd.xlane.f32.xlu0 %v8229
      %v8357 = vpop.xlane.xlu0 %8356
      %8358 = vadd.xlane.f32.xlu0 %v8231
      %v8359 = vpop.xlane.xlu0 %8358
      %8360 = vadd.xlane.f32.xlu0 %v8233
      %v8361 = vpop.xlane.xlu0 %8360
      %8362 = vadd.xlane.f32.xlu0 %v8235
      %v8363 = vpop.xlane.xlu0 %8362
      %8364 = vadd.xlane.f32.xlu0 %v8237
      %v8365 = vpop.xlane.xlu0 %8364
      %8366 = vadd.xlane.f32.xlu0 %v8239
      %v8367 = vpop.xlane.xlu0 %8366
      %8368 = vadd.xlane.f32.xlu0 %v8241
      %v8369 = vpop.xlane.xlu0 %8368
      %8370 = vadd.xlane.f32.xlu0 %v8243
      %v8371 = vpop.xlane.xlu0 %8370
      %8372 = vadd.xlane.f32.xlu0 %v8245
      %v8373 = vpop.xlane.xlu0 %8372
      %8374 = vadd.xlane.f32.xlu0 %v8247
      %v8375 = vpop.xlane.xlu0 %8374
      %8376 = vadd.xlane.f32.xlu0 %v8249
      %v8377 = vpop.xlane.xlu0 %8376
      %8378 = vadd.xlane.f32.xlu0 %v8251
      %v8379 = vpop.xlane.xlu0 %8378
      %8380 = vadd.xlane.f32.xlu0 %v8253
      %v8381 = vpop.xlane.xlu0 %8380
      %8382 = vadd.xlane.f32.xlu0 %v8255
      %v8383 = vpop.xlane.xlu0 %8382
      %8384 = vadd.xlane.f32.xlu0 %v8257
      %v8385 = vpop.xlane.xlu0 %8384
      %8386 = vadd.xlane.f32.xlu0 %v8259
      %v8387 = vpop.xlane.xlu0 %8386
      %8388 = vadd.xlane.f32.xlu0 %v8261
      %v8389 = vpop.xlane.xlu0 %8388
      %8390 = vadd.xlane.f32.xlu0 %v8263
      %v8391 = vpop.xlane.xlu0 %8390
      %8392 = vadd.xlane.f32.xlu0 %v8265
      %v8393 = vpop.xlane.xlu0 %8392
      %8394 = vadd.xlane.f32.xlu0 %v8267
      %v8395 = vpop.xlane.xlu0 %8394
      %8396 = vadd.xlane.f32.xlu0 %v8269
      %v8397 = vpop.xlane.xlu0 %8396
      %8398 = vadd.xlane.f32.xlu0 %v8271
      %v8399 = vpop.xlane.xlu0 %8398
      %8400 = vadd.xlane.f32.xlu0 %v8273
      %v8401 = vpop.xlane.xlu0 %8400
      %8402 = vadd.xlane.f32.xlu0 %v8275
      %v8403 = vpop.xlane.xlu0 %8402
      %8404 = vadd.xlane.f32.xlu0 %v8277
      %v8405 = vpop.xlane.xlu0 %8404
      %8406 = vadd.xlane.f32.xlu0 %v8279
      %v8407 = vpop.xlane.xlu0 %8406
      %v8408 = vrcp.pop %v8281
      %v8409 = vrcp.pop %v8283
      %v8410 = vrcp.pop %v8285
      %v8411 = vrcp.pop %v8287
      %v8412 = vrcp.pop %v8289
      %v8413 = vrcp.pop %v8291
      %v8414 = vrcp.pop %v8293
      %v8415 = vrcp.pop %v8295
      %v8416 = vrcp.pop %v8297
      %v8417 = vrcp.pop %v8299
      %v8418 = vrcp.pop %v8301
      %v8419 = vrcp.pop %v8303
      %v8420 = vrcp.pop %v8305
      %v8421 = vrcp.pop %v8307
      %v8422 = vrcp.pop %v8309
      %v8423 = vrcp.pop %v8311
      %v8424 = vrcp.pop %v8313
      %v8425 = vrcp.pop %v8315
      %v8426 = vrcp.pop %v8317
      %v8427 = vrcp.pop %v8319
      %v8428 = vrcp.pop %v8321
      %v8429 = vrcp.pop %v8323
      %v8430 = vrcp.pop %v8325
      %v8431 = vrcp.pop %v8327
      %v8432 = vrcp.pop %v8329
      %v8433 = vrcp.pop %v8331
      %v8434 = vrcp.pop %v8333
      %v8435 = vrcp.pop %v8335
      %v8436 = vrcp.pop %v8337
      %v8437 = vrcp.pop %v8339
      %v8438 = vrcp.pop %v8341
      %v8439 = vrcp.pop %v8343
      %v8440 = vrcp.pop %v8345
      %v8441 = vrcp.pop %v8347
      %v8442 = vrcp.pop %v8349
      %v8443 = vrcp.pop %v8351
      %v8444 = vrcp.pop %v8353
      %v8445 = vrcp.pop %v8355
      %v8446 = vrcp.pop %v8357
      %v8447 = vrcp.pop %v8359
      %v8448 = vrcp.pop %v8361
      %v8449 = vrcp.pop %v8363
      %v8450 = vrcp.pop %v8365
      %v8451 = vrcp.pop %v8367
      %v8452 = vrcp.pop %v8369
      %v8453 = vrcp.pop %v8371
      %v8454 = vrcp.pop %v8373
      %v8455 = vrcp.pop %v8375
      %v8456 = vrcp.pop %v8377
      %v8457 = vrcp.pop %v8379
      %v8458 = vrcp.pop %v8381
      %v8459 = vrcp.pop %v8383
      %v8460 = vrcp.pop %v8385
      %v8461 = vrcp.pop %v8387
      %v8462 = vrcp.pop %v8389
      %v8463 = vrcp.pop %v8391
      %v8464 = vrcp.pop %v8393
      %v8465 = vrcp.pop %v8395
      %v8466 = vrcp.pop %v8397
      %v8467 = vrcp.pop %v8399
      %v8468 = vrcp.pop %v8401
      %v8469 = vrcp.pop %v8403
      %v8470 = vrcp.pop %v8405
      %v8471 = vrcp.pop %v8407
      %v8472 = vmul.f32 %v8153, %v8408
      %v8473 = vmul.f32 %v8155, %v8409
      %v8474 = vmul.f32 %v8157, %v8410
      %v8475 = vmul.f32 %v8159, %v8411
      %v8476 = vmul.f32 %v8161, %v8412
      %v8477 = vmul.f32 %v8163, %v8413
      %v8478 = vmul.f32 %v8165, %v8414
      %v8479 = vmul.f32 %v8167, %v8415
      %v8480 = vmul.f32 %v8169, %v8416
      %v8481 = vmul.f32 %v8171, %v8417
      %v8482 = vmul.f32 %v8173, %v8418
      %v8483 = vmul.f32 %v8175, %v8419
      %v8484 = vmul.f32 %v8177, %v8420
      %v8485 = vmul.f32 %v8179, %v8421
      %v8486 = vmul.f32 %v8181, %v8422
      %v8487 = vmul.f32 %v8183, %v8423
      %v8488 = vmul.f32 %v8185, %v8424
      %v8489 = vmul.f32 %v8187, %v8425
      %v8490 = vmul.f32 %v8189, %v8426
      %v8491 = vmul.f32 %v8191, %v8427
      %v8492 = vmul.f32 %v8193, %v8428
      %v8493 = vmul.f32 %v8195, %v8429
      %v8494 = vmul.f32 %v8197, %v8430
      %v8495 = vmul.f32 %v8199, %v8431
      %v8496 = vmul.f32 %v8201, %v8432
      %v8497 = vmul.f32 %v8203, %v8433
      %v8498 = vmul.f32 %v8205, %v8434
      %v8499 = vmul.f32 %v8207, %v8435
      %v8500 = vmul.f32 %v8209, %v8436
      %v8501 = vmul.f32 %v8211, %v8437
      %v8502 = vmul.f32 %v8213, %v8438
      %v8503 = vmul.f32 %v8215, %v8439
      %v8504 = vmul.f32 %v8217, %v8440
      %v8505 = vmul.f32 %v8219, %v8441
      %v8506 = vmul.f32 %v8221, %v8442
      %v8507 = vmul.f32 %v8223, %v8443
      %v8508 = vmul.f32 %v8225, %v8444
      %v8509 = vmul.f32 %v8227, %v8445
      %v8510 = vmul.f32 %v8229, %v8446
      %v8511 = vmul.f32 %v8231, %v8447
      %v8512 = vmul.f32 %v8233, %v8448
      %v8513 = vmul.f32 %v8235, %v8449
      %v8514 = vmul.f32 %v8237, %v8450
      %v8515 = vmul.f32 %v8239, %v8451
      %v8516 = vmul.f32 %v8241, %v8452
      %v8517 = vmul.f32 %v8243, %v8453
      %v8518 = vmul.f32 %v8245, %v8454
      %v8519 = vmul.f32 %v8247, %v8455
      %v8520 = vmul.f32 %v8249, %v8456
      %v8521 = vmul.f32 %v8251, %v8457
      %v8522 = vmul.f32 %v8253, %v8458
      %v8523 = vmul.f32 %v8255, %v8459
      %v8524 = vmul.f32 %v8257, %v8460
      %v8525 = vmul.f32 %v8259, %v8461
      %v8526 = vmul.f32 %v8261, %v8462
      %v8527 = vmul.f32 %v8263, %v8463
      %v8528 = vmul.f32 %v8265, %v8464
      %v8529 = vmul.f32 %v8267, %v8465
      %v8530 = vmul.f32 %v8269, %v8466
      %v8531 = vmul.f32 %v8271, %v8467
      %v8532 = vmul.f32 %v8273, %v8468
      %v8533 = vmul.f32 %v8275, %v8469
      %v8534 = vmul.f32 %v8277, %v8470
      %v8535 = vmul.f32 %v8279, %v8471
      %v8536 = vpack.c.bf16 %v8473, %v8472
      %v8537 = vpack.c.bf16 %v8475, %v8474
      %v8538 = vpack.c.bf16 %v8477, %v8476
      %v8539 = vpack.c.bf16 %v8479, %v8478
      %v8540 = vpack.c.bf16 %v8481, %v8480
      %v8541 = vpack.c.bf16 %v8483, %v8482
      %v8542 = vpack.c.bf16 %v8485, %v8484
      %v8543 = vpack.c.bf16 %v8487, %v8486
      %v8544 = vpack.c.bf16 %v8489, %v8488
      %v8545 = vpack.c.bf16 %v8491, %v8490
      %v8546 = vpack.c.bf16 %v8493, %v8492
      %v8547 = vpack.c.bf16 %v8495, %v8494
      %v8548 = vpack.c.bf16 %v8497, %v8496
      %v8549 = vpack.c.bf16 %v8499, %v8498
      %v8550 = vpack.c.bf16 %v8501, %v8500
      %v8551 = vpack.c.bf16 %v8503, %v8502
      %v8552 = vpack.c.bf16 %v8505, %v8504
      %v8553 = vpack.c.bf16 %v8507, %v8506
      %v8554 = vpack.c.bf16 %v8509, %v8508
      %v8555 = vpack.c.bf16 %v8511, %v8510
      %v8556 = vpack.c.bf16 %v8513, %v8512
      %v8557 = vpack.c.bf16 %v8515, %v8514
      %v8558 = vpack.c.bf16 %v8517, %v8516
      %v8559 = vpack.c.bf16 %v8519, %v8518
      %v8560 = vpack.c.bf16 %v8521, %v8520
      %v8561 = vpack.c.bf16 %v8523, %v8522
      %v8562 = vpack.c.bf16 %v8525, %v8524
      %v8563 = vpack.c.bf16 %v8527, %v8526
      %v8564 = vpack.c.bf16 %v8529, %v8528
      %v8565 = vpack.c.bf16 %v8531, %v8530
      %v8566 = vpack.c.bf16 %v8533, %v8532
      %v8567 = vpack.c.bf16 %v8535, %v8534
      %8568 = vmatprep.subr.bf16.mxu0 0
      %8569 = vmatpush1.bf16.msra.mxu0 %v7349
      %8570 = vmatprep.subr.bf16.mxu0 0
      %8571 = vmatpush1.bf16.msra.mxu0 %v7333
      %8572 = vmatprep.subr.bf16.mxu0 0
      %8573 = vmatpush1.bf16.msra.mxu0 %v7317
      %8574 = vmatprep.subr.bf16.mxu0 0
      %8575 = vmatpush1.bf16.msra.mxu0 %v7301
      %8576 = vmatprep.subr.bf16.mxu0 0
      %8577 = vmatpush1.bf16.msra.mxu0 %v7285
      %8578 = vmatprep.subr.bf16.mxu0 0
      %8579 = vmatpush1.bf16.msra.mxu0 %v7269
      %8580 = vmatprep.subr.bf16.mxu0 0
      %8581 = vmatpush1.bf16.msra.mxu0 %v7253
      %8582 = vmatprep.subr.bf16.mxu0 0
      %8583 = vmatpush1.bf16.msra.mxu0 %v7237
      %8584 = vmatprep.subr.bf16.mxu0 0
      %8585 = vmatpush2.bf16.msra.mxu0 0
      %8586 = vmatprep.subr.bf16.mxu0 0
      %8587 = vmatpush2.bf16.msra.mxu0 0
      %8588 = vmatprep.subr.bf16.mxu0 0
      %8589 = vmatpush2.bf16.msra.mxu0 0
      %8590 = vmatprep.subr.bf16.mxu0 0
      %8591 = vmatpush2.bf16.msra.mxu0 0
      %8592 = vmatprep.subr.bf16.mxu0 0
      %8593 = vmatpush2.bf16.msra.mxu0 0
      %8594 = vmatprep.subr.bf16.mxu0 0
      %8595 = vmatpush2.bf16.msra.mxu0 0
      %8596 = vmatprep.subr.bf16.mxu0 0
      %8597 = vmatpush2.bf16.msra.mxu0 0
      %8598 = vmatprep.subr.bf16.mxu0 0
      %8599 = vmatpush2.bf16.msra.mxu0 0
      %8600 = vmatprep.mubr.bf16.mxu0 0
      %8601 = vmatmul.mubr.bf16.gmra.mxu0 %v8536
      %v8602 = vpop.f32.mrf.mxu0
      %v8603 = vadd.f32 0.0, %v8602
      %v8604 = vpop.f32.mrf.mxu0
      %v8605 = vpop.f32.mrf.mxu0
      %v8606 = vadd.f32 0.0, %v8605
      %v8607 = vpop.f32.mrf.mxu0
      %8608 = vmatprep.mubr.bf16.mxu0 0
      %8609 = vmatmul.mubr.bf16.gmra.mxu0 %v8537
      %v8610 = vpop.f32.mrf.mxu0
      %v8611 = vadd.f32 0.0, %v8610
      %v8612 = vpop.f32.mrf.mxu0
      %v8613 = vpop.f32.mrf.mxu0
      %v8614 = vadd.f32 0.0, %v8613
      %v8615 = vpop.f32.mrf.mxu0
      %8616 = vmatprep.mubr.bf16.mxu0 0
      %8617 = vmatmul.mubr.bf16.gmra.mxu0 %v8538
      %v8618 = vpop.f32.mrf.mxu0
      %v8619 = vadd.f32 0.0, %v8618
      %v8620 = vpop.f32.mrf.mxu0
      %v8621 = vpop.f32.mrf.mxu0
      %v8622 = vadd.f32 0.0, %v8621
      %v8623 = vpop.f32.mrf.mxu0
      %8624 = vmatprep.mubr.bf16.mxu0 0
      %8625 = vmatmul.mubr.bf16.gmra.mxu0 %v8539
      %v8626 = vpop.f32.mrf.mxu0
      %v8627 = vadd.f32 0.0, %v8626
      %v8628 = vpop.f32.mrf.mxu0
      %v8629 = vpop.f32.mrf.mxu0
      %v8630 = vadd.f32 0.0, %v8629
      %v8631 = vpop.f32.mrf.mxu0
      %8632 = vmatprep.mubr.bf16.mxu0 0
      %8633 = vmatmul.mubr.bf16.gmra.mxu0 %v8540
      %v8634 = vpop.f32.mrf.mxu0
      %v8635 = vadd.f32 0.0, %v8634
      %v8636 = vpop.f32.mrf.mxu0
      %v8637 = vpop.f32.mrf.mxu0
      %v8638 = vadd.f32 0.0, %v8637
      %v8639 = vpop.f32.mrf.mxu0
      %8640 = vmatprep.mubr.bf16.mxu0 0
      %8641 = vmatmul.mubr.bf16.gmra.mxu0 %v8541
      %v8642 = vpop.f32.mrf.mxu0
      %v8643 = vadd.f32 0.0, %v8642
      %v8644 = vpop.f32.mrf.mxu0
      %v8645 = vpop.f32.mrf.mxu0
      %v8646 = vadd.f32 0.0, %v8645
      %v8647 = vpop.f32.mrf.mxu0
      %8648 = vmatprep.mubr.bf16.mxu0 0
      %8649 = vmatmul.mubr.bf16.gmra.mxu0 %v8542
      %v8650 = vpop.f32.mrf.mxu0
      %v8651 = vadd.f32 0.0, %v8650
      %v8652 = vpop.f32.mrf.mxu0
      %v8653 = vpop.f32.mrf.mxu0
      %v8654 = vadd.f32 0.0, %v8653
      %v8655 = vpop.f32.mrf.mxu0
      %8656 = vmatprep.mubr.bf16.mxu0 0
      %8657 = vmatmul.mubr.bf16.gmra.mxu0 %v8543
      %v8658 = vpop.f32.mrf.mxu0
      %v8659 = vadd.f32 0.0, %v8658
      %v8660 = vpop.f32.mrf.mxu0
      %v8661 = vpop.f32.mrf.mxu0
      %v8662 = vadd.f32 0.0, %v8661
      %v8663 = vpop.f32.mrf.mxu0
      %8664 = vdwg.mxu0
      %8665 = vmatprep.subr.bf16.mxu0 0
      %8666 = vmatpush1.bf16.msra.mxu0 %v7353
      %8667 = vmatprep.subr.bf16.mxu0 0
      %8668 = vmatpush1.bf16.msra.mxu0 %v7337
      %8669 = vmatprep.subr.bf16.mxu0 0
      %8670 = vmatpush1.bf16.msra.mxu0 %v7321
      %8671 = vmatprep.subr.bf16.mxu0 0
      %8672 = vmatpush1.bf16.msra.mxu0 %v7305
      %8673 = vmatprep.subr.bf16.mxu0 0
      %8674 = vmatpush1.bf16.msra.mxu0 %v7289
      %8675 = vmatprep.subr.bf16.mxu0 0
      %8676 = vmatpush1.bf16.msra.mxu0 %v7273
      %8677 = vmatprep.subr.bf16.mxu0 0
      %8678 = vmatpush1.bf16.msra.mxu0 %v7257
      %8679 = vmatprep.subr.bf16.mxu0 0
      %8680 = vmatpush1.bf16.msra.mxu0 %v7241
      %8681 = vmatprep.subr.bf16.mxu0 0
      %8682 = vmatpush2.bf16.msra.mxu0 0
      %8683 = vmatprep.subr.bf16.mxu0 0
      %8684 = vmatpush2.bf16.msra.mxu0 0
      %8685 = vmatprep.subr.bf16.mxu0 0
      %8686 = vmatpush2.bf16.msra.mxu0 0
      %8687 = vmatprep.subr.bf16.mxu0 0
      %8688 = vmatpush2.bf16.msra.mxu0 0
      %8689 = vmatprep.subr.bf16.mxu0 0
      %8690 = vmatpush2.bf16.msra.mxu0 0
      %8691 = vmatprep.subr.bf16.mxu0 0
      %8692 = vmatpush2.bf16.msra.mxu0 0
      %8693 = vmatprep.subr.bf16.mxu0 0
      %8694 = vmatpush2.bf16.msra.mxu0 0
      %8695 = vmatprep.subr.bf16.mxu0 0
      %8696 = vmatpush2.bf16.msra.mxu0 0
      %8697 = vmatprep.mubr.bf16.mxu0 0
      %8698 = vmatmul.mubr.bf16.gmra.mxu0 %v8544
      %v8699 = vpop.f32.mrf.mxu0
      %v8700 = vadd.f32 0.0, %v8699
      %v8701 = vpop.f32.mrf.mxu0
      %v8702 = vpop.f32.mrf.mxu0
      %v8703 = vadd.f32 0.0, %v8702
      %v8704 = vpop.f32.mrf.mxu0
      %8705 = vmatprep.mubr.bf16.mxu0 0
      %8706 = vmatmul.mubr.bf16.gmra.mxu0 %v8545
      %v8707 = vpop.f32.mrf.mxu0
      %v8708 = vadd.f32 0.0, %v8707
      %v8709 = vpop.f32.mrf.mxu0
      %v8710 = vpop.f32.mrf.mxu0
      %v8711 = vadd.f32 0.0, %v8710
      %v8712 = vpop.f32.mrf.mxu0
      %8713 = vmatprep.mubr.bf16.mxu0 0
      %8714 = vmatmul.mubr.bf16.gmra.mxu0 %v8546
      %v8715 = vpop.f32.mrf.mxu0
      %v8716 = vadd.f32 0.0, %v8715
      %v8717 = vpop.f32.mrf.mxu0
      %v8718 = vpop.f32.mrf.mxu0
      %v8719 = vadd.f32 0.0, %v8718
      %v8720 = vpop.f32.mrf.mxu0
      %8721 = vmatprep.mubr.bf16.mxu0 0
      %8722 = vmatmul.mubr.bf16.gmra.mxu0 %v8547
      %v8723 = vpop.f32.mrf.mxu0
      %v8724 = vadd.f32 0.0, %v8723
      %v8725 = vpop.f32.mrf.mxu0
      %v8726 = vpop.f32.mrf.mxu0
      %v8727 = vadd.f32 0.0, %v8726
      %v8728 = vpop.f32.mrf.mxu0
      %8729 = vmatprep.mubr.bf16.mxu0 0
      %8730 = vmatmul.mubr.bf16.gmra.mxu0 %v8548
      %v8731 = vpop.f32.mrf.mxu0
      %v8732 = vadd.f32 0.0, %v8731
      %v8733 = vpop.f32.mrf.mxu0
      %v8734 = vpop.f32.mrf.mxu0
      %v8735 = vadd.f32 0.0, %v8734
      %v8736 = vpop.f32.mrf.mxu0
      %8737 = vmatprep.mubr.bf16.mxu0 0
      %8738 = vmatmul.mubr.bf16.gmra.mxu0 %v8549
      %v8739 = vpop.f32.mrf.mxu0
      %v8740 = vadd.f32 0.0, %v8739
      %v8741 = vpop.f32.mrf.mxu0
      %v8742 = vpop.f32.mrf.mxu0
      %v8743 = vadd.f32 0.0, %v8742
      %v8744 = vpop.f32.mrf.mxu0
      %8745 = vmatprep.mubr.bf16.mxu0 0
      %8746 = vmatmul.mubr.bf16.gmra.mxu0 %v8550
      %v8747 = vpop.f32.mrf.mxu0
      %v8748 = vadd.f32 0.0, %v8747
      %v8749 = vpop.f32.mrf.mxu0
      %v8750 = vpop.f32.mrf.mxu0
      %v8751 = vadd.f32 0.0, %v8750
      %v8752 = vpop.f32.mrf.mxu0
      %8753 = vmatprep.mubr.bf16.mxu0 0
      %8754 = vmatmul.mubr.bf16.gmra.mxu0 %v8551
      %v8755 = vpop.f32.mrf.mxu0
      %v8756 = vadd.f32 0.0, %v8755
      %v8757 = vpop.f32.mrf.mxu0
      %v8758 = vpop.f32.mrf.mxu0
      %v8759 = vadd.f32 0.0, %v8758
      %v8760 = vpop.f32.mrf.mxu0
      %8761 = vdwg.mxu0
      %8762 = vmatprep.subr.bf16.mxu0 0
      %8763 = vmatpush1.bf16.msra.mxu0 %v7357
      %8764 = vmatprep.subr.bf16.mxu0 0
      %8765 = vmatpush1.bf16.msra.mxu0 %v7341
      %8766 = vmatprep.subr.bf16.mxu0 0
      %8767 = vmatpush1.bf16.msra.mxu0 %v7325
      %8768 = vmatprep.subr.bf16.mxu0 0
      %8769 = vmatpush1.bf16.msra.mxu0 %v7309
      %8770 = vmatprep.subr.bf16.mxu0 0
      %8771 = vmatpush1.bf16.msra.mxu0 %v7293
      %8772 = vmatprep.subr.bf16.mxu0 0
      %8773 = vmatpush1.bf16.msra.mxu0 %v7277
      %8774 = vmatprep.subr.bf16.mxu0 0
      %8775 = vmatpush1.bf16.msra.mxu0 %v7261
      %8776 = vmatprep.subr.bf16.mxu0 0
      %8777 = vmatpush1.bf16.msra.mxu0 %v7245
      %8778 = vmatprep.subr.bf16.mxu0 0
      %8779 = vmatpush2.bf16.msra.mxu0 0
      %8780 = vmatprep.subr.bf16.mxu0 0
      %8781 = vmatpush2.bf16.msra.mxu0 0
      %8782 = vmatprep.subr.bf16.mxu0 0
      %8783 = vmatpush2.bf16.msra.mxu0 0
      %8784 = vmatprep.subr.bf16.mxu0 0
      %8785 = vmatpush2.bf16.msra.mxu0 0
      %8786 = vmatprep.subr.bf16.mxu0 0
      %8787 = vmatpush2.bf16.msra.mxu0 0
      %8788 = vmatprep.subr.bf16.mxu0 0
      %8789 = vmatpush2.bf16.msra.mxu0 0
      %8790 = vmatprep.subr.bf16.mxu0 0
      %8791 = vmatpush2.bf16.msra.mxu0 0
      %8792 = vmatprep.subr.bf16.mxu0 0
      %8793 = vmatpush2.bf16.msra.mxu0 0
      %8794 = vmatprep.mubr.bf16.mxu0 0
      %8795 = vmatmul.mubr.bf16.gmra.mxu0 %v8552
      %v8796 = vpop.f32.mrf.mxu0
      %v8797 = vadd.f32 0.0, %v8796
      %v8798 = vpop.f32.mrf.mxu0
      %v8799 = vpop.f32.mrf.mxu0
      %v8800 = vadd.f32 0.0, %v8799
      %v8801 = vpop.f32.mrf.mxu0
      %8802 = vmatprep.mubr.bf16.mxu0 0
      %8803 = vmatmul.mubr.bf16.gmra.mxu0 %v8553
      %v8804 = vpop.f32.mrf.mxu0
      %v8805 = vadd.f32 0.0, %v8804
      %v8806 = vpop.f32.mrf.mxu0
      %v8807 = vpop.f32.mrf.mxu0
      %v8808 = vadd.f32 0.0, %v8807
      %v8809 = vpop.f32.mrf.mxu0
      %8810 = vmatprep.mubr.bf16.mxu0 0
      %8811 = vmatmul.mubr.bf16.gmra.mxu0 %v8554
      %v8812 = vpop.f32.mrf.mxu0
      %v8813 = vadd.f32 0.0, %v8812
      %v8814 = vpop.f32.mrf.mxu0
      %v8815 = vpop.f32.mrf.mxu0
      %v8816 = vadd.f32 0.0, %v8815
      %v8817 = vpop.f32.mrf.mxu0
      %8818 = vmatprep.mubr.bf16.mxu0 0
      %8819 = vmatmul.mubr.bf16.gmra.mxu0 %v8555
      %v8820 = vpop.f32.mrf.mxu0
      %v8821 = vadd.f32 0.0, %v8820
      %v8822 = vpop.f32.mrf.mxu0
      %v8823 = vpop.f32.mrf.mxu0
      %v8824 = vadd.f32 0.0, %v8823
      %v8825 = vpop.f32.mrf.mxu0
      %8826 = vmatprep.mubr.bf16.mxu0 0
      %8827 = vmatmul.mubr.bf16.gmra.mxu0 %v8556
      %v8828 = vpop.f32.mrf.mxu0
      %v8829 = vadd.f32 0.0, %v8828
      %v8830 = vpop.f32.mrf.mxu0
      %v8831 = vpop.f32.mrf.mxu0
      %v8832 = vadd.f32 0.0, %v8831
      %v8833 = vpop.f32.mrf.mxu0
      %8834 = vmatprep.mubr.bf16.mxu0 0
      %8835 = vmatmul.mubr.bf16.gmra.mxu0 %v8557
      %v8836 = vpop.f32.mrf.mxu0
      %v8837 = vadd.f32 0.0, %v8836
      %v8838 = vpop.f32.mrf.mxu0
      %v8839 = vpop.f32.mrf.mxu0
      %v8840 = vadd.f32 0.0, %v8839
      %v8841 = vpop.f32.mrf.mxu0
      %8842 = vmatprep.mubr.bf16.mxu0 0
      %8843 = vmatmul.mubr.bf16.gmra.mxu0 %v8558
      %v8844 = vpop.f32.mrf.mxu0
      %v8845 = vadd.f32 0.0, %v8844
      %v8846 = vpop.f32.mrf.mxu0
      %v8847 = vpop.f32.mrf.mxu0
      %v8848 = vadd.f32 0.0, %v8847
      %v8849 = vpop.f32.mrf.mxu0
      %8850 = vmatprep.mubr.bf16.mxu0 0
      %8851 = vmatmul.mubr.bf16.gmra.mxu0 %v8559
      %v8852 = vpop.f32.mrf.mxu0
      %v8853 = vadd.f32 0.0, %v8852
      %v8854 = vpop.f32.mrf.mxu0
      %v8855 = vpop.f32.mrf.mxu0
      %v8856 = vadd.f32 0.0, %v8855
      %v8857 = vpop.f32.mrf.mxu0
      %8858 = vdwg.mxu0
      %8859 = vmatprep.subr.bf16.mxu0 0
      %8860 = vmatpush1.bf16.msra.mxu0 %v7361
      %8861 = vmatprep.subr.bf16.mxu0 0
      %8862 = vmatpush1.bf16.msra.mxu0 %v7345
      %8863 = vmatprep.subr.bf16.mxu0 0
      %8864 = vmatpush1.bf16.msra.mxu0 %v7329
      %8865 = vmatprep.subr.bf16.mxu0 0
      %8866 = vmatpush1.bf16.msra.mxu0 %v7313
      %8867 = vmatprep.subr.bf16.mxu0 0
      %8868 = vmatpush1.bf16.msra.mxu0 %v7297
      %8869 = vmatprep.subr.bf16.mxu0 0
      %8870 = vmatpush1.bf16.msra.mxu0 %v7281
      %8871 = vmatprep.subr.bf16.mxu0 0
      %8872 = vmatpush1.bf16.msra.mxu0 %v7265
      %8873 = vmatprep.subr.bf16.mxu0 0
      %8874 = vmatpush1.bf16.msra.mxu0 %v7249
      %8875 = vmatprep.subr.bf16.mxu0 0
      %8876 = vmatpush2.bf16.msra.mxu0 0
      %8877 = vmatprep.subr.bf16.mxu0 0
      %8878 = vmatpush2.bf16.msra.mxu0 0
      %8879 = vmatprep.subr.bf16.mxu0 0
      %8880 = vmatpush2.bf16.msra.mxu0 0
      %8881 = vmatprep.subr.bf16.mxu0 0
      %8882 = vmatpush2.bf16.msra.mxu0 0
      %8883 = vmatprep.subr.bf16.mxu0 0
      %8884 = vmatpush2.bf16.msra.mxu0 0
      %8885 = vmatprep.subr.bf16.mxu0 0
      %8886 = vmatpush2.bf16.msra.mxu0 0
      %8887 = vmatprep.subr.bf16.mxu0 0
      %8888 = vmatpush2.bf16.msra.mxu0 0
      %8889 = vmatprep.subr.bf16.mxu0 0
      %8890 = vmatpush2.bf16.msra.mxu0 0
      %8891 = vmatprep.mubr.bf16.mxu0 0
      %8892 = vmatmul.mubr.bf16.gmra.mxu0 %v8560
      %v8893 = vpop.f32.mrf.mxu0
      %v8894 = vadd.f32 0.0, %v8893
      %v8895 = vpop.f32.mrf.mxu0
      %v8896 = vpop.f32.mrf.mxu0
      %v8897 = vadd.f32 0.0, %v8896
      %v8898 = vpop.f32.mrf.mxu0
      %8899 = vmatprep.mubr.bf16.mxu0 0
      %8900 = vmatmul.mubr.bf16.gmra.mxu0 %v8561
      %v8901 = vpop.f32.mrf.mxu0
      %v8902 = vadd.f32 0.0, %v8901
      %v8903 = vpop.f32.mrf.mxu0
      %v8904 = vpop.f32.mrf.mxu0
      %v8905 = vadd.f32 0.0, %v8904
      %v8906 = vpop.f32.mrf.mxu0
      %8907 = vmatprep.mubr.bf16.mxu0 0
      %8908 = vmatmul.mubr.bf16.gmra.mxu0 %v8562
      %v8909 = vpop.f32.mrf.mxu0
      %v8910 = vadd.f32 0.0, %v8909
      %v8911 = vpop.f32.mrf.mxu0
      %v8912 = vpop.f32.mrf.mxu0
      %v8913 = vadd.f32 0.0, %v8912
      %v8914 = vpop.f32.mrf.mxu0
      %8915 = vmatprep.mubr.bf16.mxu0 0
      %8916 = vmatmul.mubr.bf16.gmra.mxu0 %v8563
      %v8917 = vpop.f32.mrf.mxu0
      %v8918 = vadd.f32 0.0, %v8917
      %v8919 = vpop.f32.mrf.mxu0
      %v8920 = vpop.f32.mrf.mxu0
      %v8921 = vadd.f32 0.0, %v8920
      %v8922 = vpop.f32.mrf.mxu0
      %8923 = vmatprep.mubr.bf16.mxu0 0
      %8924 = vmatmul.mubr.bf16.gmra.mxu0 %v8564
      %v8925 = vpop.f32.mrf.mxu0
      %v8926 = vadd.f32 0.0, %v8925
      %v8927 = vpop.f32.mrf.mxu0
      %v8928 = vpop.f32.mrf.mxu0
      %v8929 = vadd.f32 0.0, %v8928
      %v8930 = vpop.f32.mrf.mxu0
      %8931 = vmatprep.mubr.bf16.mxu0 0
      %8932 = vmatmul.mubr.bf16.gmra.mxu0 %v8565
      %v8933 = vpop.f32.mrf.mxu0
      %v8934 = vadd.f32 0.0, %v8933
      %v8935 = vpop.f32.mrf.mxu0
      %v8936 = vpop.f32.mrf.mxu0
      %v8937 = vadd.f32 0.0, %v8936
      %v8938 = vpop.f32.mrf.mxu0
      %8939 = vmatprep.mubr.bf16.mxu0 0
      %8940 = vmatmul.mubr.bf16.gmra.mxu0 %v8566
      %v8941 = vpop.f32.mrf.mxu0
      %v8942 = vadd.f32 0.0, %v8941
      %v8943 = vpop.f32.mrf.mxu0
      %v8944 = vpop.f32.mrf.mxu0
      %v8945 = vadd.f32 0.0, %v8944
      %v8946 = vpop.f32.mrf.mxu0
      %8947 = vmatprep.mubr.bf16.mxu0 0
      %8948 = vmatmul.mubr.bf16.gmra.mxu0 %v8567
      %v8949 = vpop.f32.mrf.mxu0
      %v8950 = vadd.f32 0.0, %v8949
      %v8951 = vpop.f32.mrf.mxu0
      %v8952 = vpop.f32.mrf.mxu0
      %v8953 = vadd.f32 0.0, %v8952
      %v8954 = vpop.f32.mrf.mxu0
      %8955 = vdwg.mxu0
      %v8956 = vcombine.low %v8603, %v8797
      %v8957 = vcombine.high %v8603, %v8797
      %v8959 = vunpack.c.l.s4 1983009808
      %v8960 = vunpack.c.0.s8 %v8959
      %v8961 = vlaneseq
      %v8962 = vshrl.u32 %v8961, 7
      %v8963 = vsub.s32 %v8960, %v8962
      %v8964 = vrot.slane %v8956, %v8963
      %v8966 = vunpack.c.l.s4 1983009808
      %v8967 = vunpack.c.0.s8 %v8966
      %v8968 = vlaneseq
      %v8969 = vshrl.u32 %v8968, 7
      %v8970 = vsub.s32 %v8967, %v8969
      %v8971 = vrot.slane %v8957, %v8970
      %v8972 = vcombine.low %v8700, %v8894
      %v8973 = vcombine.high %v8700, %v8894
      %v8975 = vunpack.c.l.s4 1983009808
      %v8976 = vunpack.c.0.s8 %v8975
      %v8977 = vlaneseq
      %v8978 = vshrl.u32 %v8977, 7
      %v8979 = vsub.s32 %v8976, %v8978
      %v8980 = vrot.slane %v8972, %v8979
      %v8982 = vunpack.c.l.s4 1983009808
      %v8983 = vunpack.c.0.s8 %v8982
      %v8984 = vlaneseq
      %v8985 = vshrl.u32 %v8984, 7
      %v8986 = vsub.s32 %v8983, %v8985
      %v8987 = vrot.slane %v8973, %v8986
      %v8988 = vcombine.low %v8964, %v8980
      %v8989 = vcombine.high %v8964, %v8980
      %v8991 = vunpack.c.l.s4 1934713408
      %v8992 = vunpack.c.0.s8 %v8991
      %v8993 = vlaneseq
      %v8994 = vshrl.u32 %v8993, 7
      %v8995 = vsub.s32 %v8992, %v8994
      %v8996 = vrot.slane %v8988, %v8995
      %v8998 = vunpack.c.l.s4 1934713408
      %v8999 = vunpack.c.0.s8 %v8998
      %v9000 = vlaneseq
      %v9001 = vshrl.u32 %v9000, 7
      %v9002 = vsub.s32 %v8999, %v9001
      %v9003 = vrot.slane %v8989, %v9002
      %v9004 = vcombine.low %v8971, %v8987
      %v9005 = vcombine.high %v8971, %v8987
      %v9007 = vunpack.c.l.s4 1934713408
      %v9008 = vunpack.c.0.s8 %v9007
      %v9009 = vlaneseq
      %v9010 = vshrl.u32 %v9009, 7
      %v9011 = vsub.s32 %v9008, %v9010
      %v9012 = vrot.slane %v9004, %v9011
      %v9014 = vunpack.c.l.s4 1934713408
      %v9015 = vunpack.c.0.s8 %v9014
      %v9016 = vlaneseq
      %v9017 = vshrl.u32 %v9016, 7
      %v9018 = vsub.s32 %v9015, %v9017
      %v9019 = vrot.slane %v9005, %v9018
      %v9020 = vcombine.high %v8996, 0.0
      %v9021 = vcombine.high %v9003, 0.0
      %v9022 = vcombine.high %v9012, 0.0
      %v9023 = vcombine.high %v9019, 0.0
      %v9024 = vcombine.low %v8606, %v8800
      %v9025 = vcombine.high %v8606, %v8800
      %v9027 = vunpack.c.l.s4 1983009808
      %v9028 = vunpack.c.0.s8 %v9027
      %v9029 = vlaneseq
      %v9030 = vshrl.u32 %v9029, 7
      %v9031 = vsub.s32 %v9028, %v9030
      %v9032 = vrot.slane %v9024, %v9031
      %v9034 = vunpack.c.l.s4 1983009808
      %v9035 = vunpack.c.0.s8 %v9034
      %v9036 = vlaneseq
      %v9037 = vshrl.u32 %v9036, 7
      %v9038 = vsub.s32 %v9035, %v9037
      %v9039 = vrot.slane %v9025, %v9038
      %v9040 = vcombine.low %v8703, %v8897
      %v9041 = vcombine.high %v8703, %v8897
      %v9043 = vunpack.c.l.s4 1983009808
      %v9044 = vunpack.c.0.s8 %v9043
      %v9045 = vlaneseq
      %v9046 = vshrl.u32 %v9045, 7
      %v9047 = vsub.s32 %v9044, %v9046
      %v9048 = vrot.slane %v9040, %v9047
      %v9050 = vunpack.c.l.s4 1983009808
      %v9051 = vunpack.c.0.s8 %v9050
      %v9052 = vlaneseq
      %v9053 = vshrl.u32 %v9052, 7
      %v9054 = vsub.s32 %v9051, %v9053
      %v9055 = vrot.slane %v9041, %v9054
      %v9056 = vcombine.low %v9032, %v9048
      %v9057 = vcombine.high %v9032, %v9048
      %v9059 = vunpack.c.l.s4 1934713408
      %v9060 = vunpack.c.0.s8 %v9059
      %v9061 = vlaneseq
      %v9062 = vshrl.u32 %v9061, 7
      %v9063 = vsub.s32 %v9060, %v9062
      %v9064 = vrot.slane %v9056, %v9063
      %v9066 = vunpack.c.l.s4 1934713408
      %v9067 = vunpack.c.0.s8 %v9066
      %v9068 = vlaneseq
      %v9069 = vshrl.u32 %v9068, 7
      %v9070 = vsub.s32 %v9067, %v9069
      %v9071 = vrot.slane %v9057, %v9070
      %v9072 = vcombine.low %v9039, %v9055
      %v9073 = vcombine.high %v9039, %v9055
      %v9075 = vunpack.c.l.s4 1934713408
      %v9076 = vunpack.c.0.s8 %v9075
      %v9077 = vlaneseq
      %v9078 = vshrl.u32 %v9077, 7
      %v9079 = vsub.s32 %v9076, %v9078
      %v9080 = vrot.slane %v9072, %v9079
      %v9082 = vunpack.c.l.s4 1934713408
      %v9083 = vunpack.c.0.s8 %v9082
      %v9084 = vlaneseq
      %v9085 = vshrl.u32 %v9084, 7
      %v9086 = vsub.s32 %v9083, %v9085
      %v9087 = vrot.slane %v9073, %v9086
      %v9088 = vcombine.high %v9064, 0.0
      %v9089 = vcombine.high %v9071, 0.0
      %v9090 = vcombine.high %v9080, 0.0
      %v9091 = vcombine.high %v9087, 0.0
      %v9092 = vcombine.low %v8611, %v8805
      %v9093 = vcombine.high %v8611, %v8805
      %v9095 = vunpack.c.l.s4 1983009808
      %v9096 = vunpack.c.0.s8 %v9095
      %v9097 = vlaneseq
      %v9098 = vshrl.u32 %v9097, 7
      %v9099 = vsub.s32 %v9096, %v9098
      %v9100 = vrot.slane %v9092, %v9099
      %v9102 = vunpack.c.l.s4 1983009808
      %v9103 = vunpack.c.0.s8 %v9102
      %v9104 = vlaneseq
      %v9105 = vshrl.u32 %v9104, 7
      %v9106 = vsub.s32 %v9103, %v9105
      %v9107 = vrot.slane %v9093, %v9106
      %v9108 = vcombine.low %v8708, %v8902
      %v9109 = vcombine.high %v8708, %v8902
      %v9111 = vunpack.c.l.s4 1983009808
      %v9112 = vunpack.c.0.s8 %v9111
      %v9113 = vlaneseq
      %v9114 = vshrl.u32 %v9113, 7
      %v9115 = vsub.s32 %v9112, %v9114
      %v9116 = vrot.slane %v9108, %v9115
      %v9118 = vunpack.c.l.s4 1983009808
      %v9119 = vunpack.c.0.s8 %v9118
      %v9120 = vlaneseq
      %v9121 = vshrl.u32 %v9120, 7
      %v9122 = vsub.s32 %v9119, %v9121
      %v9123 = vrot.slane %v9109, %v9122
      %v9124 = vcombine.low %v9100, %v9116
      %v9125 = vcombine.high %v9100, %v9116
      %v9127 = vunpack.c.l.s4 1934713408
      %v9128 = vunpack.c.0.s8 %v9127
      %v9129 = vlaneseq
      %v9130 = vshrl.u32 %v9129, 7
      %v9131 = vsub.s32 %v9128, %v9130
      %v9132 = vrot.slane %v9124, %v9131
      %v9134 = vunpack.c.l.s4 1934713408
      %v9135 = vunpack.c.0.s8 %v9134
      %v9136 = vlaneseq
      %v9137 = vshrl.u32 %v9136, 7
      %v9138 = vsub.s32 %v9135, %v9137
      %v9139 = vrot.slane %v9125, %v9138
      %v9140 = vcombine.low %v9107, %v9123
      %v9141 = vcombine.high %v9107, %v9123
      %v9143 = vunpack.c.l.s4 1934713408
      %v9144 = vunpack.c.0.s8 %v9143
      %v9145 = vlaneseq
      %v9146 = vshrl.u32 %v9145, 7
      %v9147 = vsub.s32 %v9144, %v9146
      %v9148 = vrot.slane %v9140, %v9147
      %v9150 = vunpack.c.l.s4 1934713408
      %v9151 = vunpack.c.0.s8 %v9150
      %v9152 = vlaneseq
      %v9153 = vshrl.u32 %v9152, 7
      %v9154 = vsub.s32 %v9151, %v9153
      %v9155 = vrot.slane %v9141, %v9154
      %v9156 = vcombine.high %v9132, 0.0
      %v9157 = vcombine.high %v9139, 0.0
      %v9158 = vcombine.high %v9148, 0.0
      %v9159 = vcombine.high %v9155, 0.0
      %v9160 = vcombine.low %v8614, %v8808
      %v9161 = vcombine.high %v8614, %v8808
      %v9163 = vunpack.c.l.s4 1983009808
      %v9164 = vunpack.c.0.s8 %v9163
      %v9165 = vlaneseq
      %v9166 = vshrl.u32 %v9165, 7
      %v9167 = vsub.s32 %v9164, %v9166
      %v9168 = vrot.slane %v9160, %v9167
      %v9170 = vunpack.c.l.s4 1983009808
      %v9171 = vunpack.c.0.s8 %v9170
      %v9172 = vlaneseq
      %v9173 = vshrl.u32 %v9172, 7
      %v9174 = vsub.s32 %v9171, %v9173
      %v9175 = vrot.slane %v9161, %v9174
      %v9176 = vcombine.low %v8711, %v8905
      %v9177 = vcombine.high %v8711, %v8905
      %v9179 = vunpack.c.l.s4 1983009808
      %v9180 = vunpack.c.0.s8 %v9179
      %v9181 = vlaneseq
      %v9182 = vshrl.u32 %v9181, 7
      %v9183 = vsub.s32 %v9180, %v9182
      %v9184 = vrot.slane %v9176, %v9183
      %v9186 = vunpack.c.l.s4 1983009808
      %v9187 = vunpack.c.0.s8 %v9186
      %v9188 = vlaneseq
      %v9189 = vshrl.u32 %v9188, 7
      %v9190 = vsub.s32 %v9187, %v9189
      %v9191 = vrot.slane %v9177, %v9190
      %v9192 = vcombine.low %v9168, %v9184
      %v9193 = vcombine.high %v9168, %v9184
      %v9195 = vunpack.c.l.s4 1934713408
      %v9196 = vunpack.c.0.s8 %v9195
      %v9197 = vlaneseq
      %v9198 = vshrl.u32 %v9197, 7
      %v9199 = vsub.s32 %v9196, %v9198
      %v9200 = vrot.slane %v9192, %v9199
      %v9202 = vunpack.c.l.s4 1934713408
      %v9203 = vunpack.c.0.s8 %v9202
      %v9204 = vlaneseq
      %v9205 = vshrl.u32 %v9204, 7
      %v9206 = vsub.s32 %v9203, %v9205
      %v9207 = vrot.slane %v9193, %v9206
      %v9208 = vcombine.low %v9175, %v9191
      %v9209 = vcombine.high %v9175, %v9191
      %v9211 = vunpack.c.l.s4 1934713408
      %v9212 = vunpack.c.0.s8 %v9211
      %v9213 = vlaneseq
      %v9214 = vshrl.u32 %v9213, 7
      %v9215 = vsub.s32 %v9212, %v9214
      %v9216 = vrot.slane %v9208, %v9215
      %v9218 = vunpack.c.l.s4 1934713408
      %v9219 = vunpack.c.0.s8 %v9218
      %v9220 = vlaneseq
      %v9221 = vshrl.u32 %v9220, 7
      %v9222 = vsub.s32 %v9219, %v9221
      %v9223 = vrot.slane %v9209, %v9222
      %v9224 = vcombine.high %v9200, 0.0
      %v9225 = vcombine.high %v9207, 0.0
      %v9226 = vcombine.high %v9216, 0.0
      %v9227 = vcombine.high %v9223, 0.0
      %v9228 = vcombine.low %v8619, %v8813
      %v9229 = vcombine.high %v8619, %v8813
      %v9231 = vunpack.c.l.s4 1983009808
      %v9232 = vunpack.c.0.s8 %v9231
      %v9233 = vlaneseq
      %v9234 = vshrl.u32 %v9233, 7
      %v9235 = vsub.s32 %v9232, %v9234
      %v9236 = vrot.slane %v9228, %v9235
      %v9238 = vunpack.c.l.s4 1983009808
      %v9239 = vunpack.c.0.s8 %v9238
      %v9240 = vlaneseq
      %v9241 = vshrl.u32 %v9240, 7
      %v9242 = vsub.s32 %v9239, %v9241
      %v9243 = vrot.slane %v9229, %v9242
      %v9244 = vcombine.low %v8716, %v8910
      %v9245 = vcombine.high %v8716, %v8910
      %v9247 = vunpack.c.l.s4 1983009808
      %v9248 = vunpack.c.0.s8 %v9247
      %v9249 = vlaneseq
      %v9250 = vshrl.u32 %v9249, 7
      %v9251 = vsub.s32 %v9248, %v9250
      %v9252 = vrot.slane %v9244, %v9251
      %v9254 = vunpack.c.l.s4 1983009808
      %v9255 = vunpack.c.0.s8 %v9254
      %v9256 = vlaneseq
      %v9257 = vshrl.u32 %v9256, 7
      %v9258 = vsub.s32 %v9255, %v9257
      %v9259 = vrot.slane %v9245, %v9258
      %v9260 = vcombine.low %v9236, %v9252
      %v9261 = vcombine.high %v9236, %v9252
      %v9263 = vunpack.c.l.s4 1934713408
      %v9264 = vunpack.c.0.s8 %v9263
      %v9265 = vlaneseq
      %v9266 = vshrl.u32 %v9265, 7
      %v9267 = vsub.s32 %v9264, %v9266
      %v9268 = vrot.slane %v9260, %v9267
      %v9270 = vunpack.c.l.s4 1934713408
      %v9271 = vunpack.c.0.s8 %v9270
      %v9272 = vlaneseq
      %v9273 = vshrl.u32 %v9272, 7
      %v9274 = vsub.s32 %v9271, %v9273
      %v9275 = vrot.slane %v9261, %v9274
      %v9276 = vcombine.low %v9243, %v9259
      %v9277 = vcombine.high %v9243, %v9259
      %v9279 = vunpack.c.l.s4 1934713408
      %v9280 = vunpack.c.0.s8 %v9279
      %v9281 = vlaneseq
      %v9282 = vshrl.u32 %v9281, 7
      %v9283 = vsub.s32 %v9280, %v9282
      %v9284 = vrot.slane %v9276, %v9283
      %v9286 = vunpack.c.l.s4 1934713408
      %v9287 = vunpack.c.0.s8 %v9286
      %v9288 = vlaneseq
      %v9289 = vshrl.u32 %v9288, 7
      %v9290 = vsub.s32 %v9287, %v9289
      %v9291 = vrot.slane %v9277, %v9290
      %v9292 = vcombine.high %v9268, 0.0
      %v9293 = vcombine.high %v9275, 0.0
      %v9294 = vcombine.high %v9284, 0.0
      %v9295 = vcombine.high %v9291, 0.0
      %v9296 = vcombine.low %v8622, %v8816
      %v9297 = vcombine.high %v8622, %v8816
      %v9299 = vunpack.c.l.s4 1983009808
      %v9300 = vunpack.c.0.s8 %v9299
      %v9301 = vlaneseq
      %v9302 = vshrl.u32 %v9301, 7
      %v9303 = vsub.s32 %v9300, %v9302
      %v9304 = vrot.slane %v9296, %v9303
      %v9306 = vunpack.c.l.s4 1983009808
      %v9307 = vunpack.c.0.s8 %v9306
      %v9308 = vlaneseq
      %v9309 = vshrl.u32 %v9308, 7
      %v9310 = vsub.s32 %v9307, %v9309
      %v9311 = vrot.slane %v9297, %v9310
      %v9312 = vcombine.low %v8719, %v8913
      %v9313 = vcombine.high %v8719, %v8913
      %v9315 = vunpack.c.l.s4 1983009808
      %v9316 = vunpack.c.0.s8 %v9315
      %v9317 = vlaneseq
      %v9318 = vshrl.u32 %v9317, 7
      %v9319 = vsub.s32 %v9316, %v9318
      %v9320 = vrot.slane %v9312, %v9319
      %v9322 = vunpack.c.l.s4 1983009808
      %v9323 = vunpack.c.0.s8 %v9322
      %v9324 = vlaneseq
      %v9325 = vshrl.u32 %v9324, 7
      %v9326 = vsub.s32 %v9323, %v9325
      %v9327 = vrot.slane %v9313, %v9326
      %v9328 = vcombine.low %v9304, %v9320
      %v9329 = vcombine.high %v9304, %v9320
      %v9331 = vunpack.c.l.s4 1934713408
      %v9332 = vunpack.c.0.s8 %v9331
      %v9333 = vlaneseq
      %v9334 = vshrl.u32 %v9333, 7
      %v9335 = vsub.s32 %v9332, %v9334
      %v9336 = vrot.slane %v9328, %v9335
      %v9338 = vunpack.c.l.s4 1934713408
      %v9339 = vunpack.c.0.s8 %v9338
      %v9340 = vlaneseq
      %v9341 = vshrl.u32 %v9340, 7
      %v9342 = vsub.s32 %v9339, %v9341
      %v9343 = vrot.slane %v9329, %v9342
      %v9344 = vcombine.low %v9311, %v9327
      %v9345 = vcombine.high %v9311, %v9327
      %v9347 = vunpack.c.l.s4 1934713408
      %v9348 = vunpack.c.0.s8 %v9347
      %v9349 = vlaneseq
      %v9350 = vshrl.u32 %v9349, 7
      %v9351 = vsub.s32 %v9348, %v9350
      %v9352 = vrot.slane %v9344, %v9351
      %v9354 = vunpack.c.l.s4 1934713408
      %v9355 = vunpack.c.0.s8 %v9354
      %v9356 = vlaneseq
      %v9357 = vshrl.u32 %v9356, 7
      %v9358 = vsub.s32 %v9355, %v9357
      %v9359 = vrot.slane %v9345, %v9358
      %v9360 = vcombine.high %v9336, 0.0
      %v9361 = vcombine.high %v9343, 0.0
      %v9362 = vcombine.high %v9352, 0.0
      %v9363 = vcombine.high %v9359, 0.0
      %v9364 = vcombine.low %v8627, %v8821
      %v9365 = vcombine.high %v8627, %v8821
      %v9367 = vunpack.c.l.s4 1983009808
      %v9368 = vunpack.c.0.s8 %v9367
      %v9369 = vlaneseq
      %v9370 = vshrl.u32 %v9369, 7
      %v9371 = vsub.s32 %v9368, %v9370
      %v9372 = vrot.slane %v9364, %v9371
      %v9374 = vunpack.c.l.s4 1983009808
      %v9375 = vunpack.c.0.s8 %v9374
      %v9376 = vlaneseq
      %v9377 = vshrl.u32 %v9376, 7
      %v9378 = vsub.s32 %v9375, %v9377
      %v9379 = vrot.slane %v9365, %v9378
      %v9380 = vcombine.low %v8724, %v8918
      %v9381 = vcombine.high %v8724, %v8918
      %v9383 = vunpack.c.l.s4 1983009808
      %v9384 = vunpack.c.0.s8 %v9383
      %v9385 = vlaneseq
      %v9386 = vshrl.u32 %v9385, 7
      %v9387 = vsub.s32 %v9384, %v9386
      %v9388 = vrot.slane %v9380, %v9387
      %v9390 = vunpack.c.l.s4 1983009808
      %v9391 = vunpack.c.0.s8 %v9390
      %v9392 = vlaneseq
      %v9393 = vshrl.u32 %v9392, 7
      %v9394 = vsub.s32 %v9391, %v9393
      %v9395 = vrot.slane %v9381, %v9394
      %v9396 = vcombine.low %v9372, %v9388
      %v9397 = vcombine.high %v9372, %v9388
      %v9399 = vunpack.c.l.s4 1934713408
      %v9400 = vunpack.c.0.s8 %v9399
      %v9401 = vlaneseq
      %v9402 = vshrl.u32 %v9401, 7
      %v9403 = vsub.s32 %v9400, %v9402
      %v9404 = vrot.slane %v9396, %v9403
      %v9406 = vunpack.c.l.s4 1934713408
      %v9407 = vunpack.c.0.s8 %v9406
      %v9408 = vlaneseq
      %v9409 = vshrl.u32 %v9408, 7
      %v9410 = vsub.s32 %v9407, %v9409
      %v9411 = vrot.slane %v9397, %v9410
      %v9412 = vcombine.low %v9379, %v9395
      %v9413 = vcombine.high %v9379, %v9395
      %v9415 = vunpack.c.l.s4 1934713408
      %v9416 = vunpack.c.0.s8 %v9415
      %v9417 = vlaneseq
      %v9418 = vshrl.u32 %v9417, 7
      %v9419 = vsub.s32 %v9416, %v9418
      %v9420 = vrot.slane %v9412, %v9419
      %v9422 = vunpack.c.l.s4 1934713408
      %v9423 = vunpack.c.0.s8 %v9422
      %v9424 = vlaneseq
      %v9425 = vshrl.u32 %v9424, 7
      %v9426 = vsub.s32 %v9423, %v9425
      %v9427 = vrot.slane %v9413, %v9426
      %v9428 = vcombine.high %v9404, 0.0
      %v9429 = vcombine.high %v9411, 0.0
      %v9430 = vcombine.high %v9420, 0.0
      %v9431 = vcombine.high %v9427, 0.0
      %v9432 = vcombine.low %v8630, %v8824
      %v9433 = vcombine.high %v8630, %v8824
      %v9435 = vunpack.c.l.s4 1983009808
      %v9436 = vunpack.c.0.s8 %v9435
      %v9437 = vlaneseq
      %v9438 = vshrl.u32 %v9437, 7
      %v9439 = vsub.s32 %v9436, %v9438
      %v9440 = vrot.slane %v9432, %v9439
      %v9442 = vunpack.c.l.s4 1983009808
      %v9443 = vunpack.c.0.s8 %v9442
      %v9444 = vlaneseq
      %v9445 = vshrl.u32 %v9444, 7
      %v9446 = vsub.s32 %v9443, %v9445
      %v9447 = vrot.slane %v9433, %v9446
      %v9448 = vcombine.low %v8727, %v8921
      %v9449 = vcombine.high %v8727, %v8921
      %v9451 = vunpack.c.l.s4 1983009808
      %v9452 = vunpack.c.0.s8 %v9451
      %v9453 = vlaneseq
      %v9454 = vshrl.u32 %v9453, 7
      %v9455 = vsub.s32 %v9452, %v9454
      %v9456 = vrot.slane %v9448, %v9455
      %v9458 = vunpack.c.l.s4 1983009808
      %v9459 = vunpack.c.0.s8 %v9458
      %v9460 = vlaneseq
      %v9461 = vshrl.u32 %v9460, 7
      %v9462 = vsub.s32 %v9459, %v9461
      %v9463 = vrot.slane %v9449, %v9462
      %v9464 = vcombine.low %v9440, %v9456
      %v9465 = vcombine.high %v9440, %v9456
      %v9467 = vunpack.c.l.s4 1934713408
      %v9468 = vunpack.c.0.s8 %v9467
      %v9469 = vlaneseq
      %v9470 = vshrl.u32 %v9469, 7
      %v9471 = vsub.s32 %v9468, %v9470
      %v9472 = vrot.slane %v9464, %v9471
      %v9474 = vunpack.c.l.s4 1934713408
      %v9475 = vunpack.c.0.s8 %v9474
      %v9476 = vlaneseq
      %v9477 = vshrl.u32 %v9476, 7
      %v9478 = vsub.s32 %v9475, %v9477
      %v9479 = vrot.slane %v9465, %v9478
      %v9480 = vcombine.low %v9447, %v9463
      %v9481 = vcombine.high %v9447, %v9463
      %v9483 = vunpack.c.l.s4 1934713408
      %v9484 = vunpack.c.0.s8 %v9483
      %v9485 = vlaneseq
      %v9486 = vshrl.u32 %v9485, 7
      %v9487 = vsub.s32 %v9484, %v9486
      %v9488 = vrot.slane %v9480, %v9487
      %v9490 = vunpack.c.l.s4 1934713408
      %v9491 = vunpack.c.0.s8 %v9490
      %v9492 = vlaneseq
      %v9493 = vshrl.u32 %v9492, 7
      %v9494 = vsub.s32 %v9491, %v9493
      %v9495 = vrot.slane %v9481, %v9494
      %v9496 = vcombine.high %v9472, 0.0
      %v9497 = vcombine.high %v9479, 0.0
      %v9498 = vcombine.high %v9488, 0.0
      %v9499 = vcombine.high %v9495, 0.0
      %v9500 = vcombine.low %v8635, %v8829
      %v9501 = vcombine.high %v8635, %v8829
      %v9503 = vunpack.c.l.s4 1983009808
      %v9504 = vunpack.c.0.s8 %v9503
      %v9505 = vlaneseq
      %v9506 = vshrl.u32 %v9505, 7
      %v9507 = vsub.s32 %v9504, %v9506
      %v9508 = vrot.slane %v9500, %v9507
      %v9510 = vunpack.c.l.s4 1983009808
      %v9511 = vunpack.c.0.s8 %v9510
      %v9512 = vlaneseq
      %v9513 = vshrl.u32 %v9512, 7
      %v9514 = vsub.s32 %v9511, %v9513
      %v9515 = vrot.slane %v9501, %v9514
      %v9516 = vcombine.low %v8732, %v8926
      %v9517 = vcombine.high %v8732, %v8926
      %v9519 = vunpack.c.l.s4 1983009808
      %v9520 = vunpack.c.0.s8 %v9519
      %v9521 = vlaneseq
      %v9522 = vshrl.u32 %v9521, 7
      %v9523 = vsub.s32 %v9520, %v9522
      %v9524 = vrot.slane %v9516, %v9523
      %v9526 = vunpack.c.l.s4 1983009808
      %v9527 = vunpack.c.0.s8 %v9526
      %v9528 = vlaneseq
      %v9529 = vshrl.u32 %v9528, 7
      %v9530 = vsub.s32 %v9527, %v9529
      %v9531 = vrot.slane %v9517, %v9530
      %v9532 = vcombine.low %v9508, %v9524
      %v9533 = vcombine.high %v9508, %v9524
      %v9535 = vunpack.c.l.s4 1934713408
      %v9536 = vunpack.c.0.s8 %v9535
      %v9537 = vlaneseq
      %v9538 = vshrl.u32 %v9537, 7
      %v9539 = vsub.s32 %v9536, %v9538
      %v9540 = vrot.slane %v9532, %v9539
      %v9542 = vunpack.c.l.s4 1934713408
      %v9543 = vunpack.c.0.s8 %v9542
      %v9544 = vlaneseq
      %v9545 = vshrl.u32 %v9544, 7
      %v9546 = vsub.s32 %v9543, %v9545
      %v9547 = vrot.slane %v9533, %v9546
      %v9548 = vcombine.low %v9515, %v9531
      %v9549 = vcombine.high %v9515, %v9531
      %v9551 = vunpack.c.l.s4 1934713408
      %v9552 = vunpack.c.0.s8 %v9551
      %v9553 = vlaneseq
      %v9554 = vshrl.u32 %v9553, 7
      %v9555 = vsub.s32 %v9552, %v9554
      %v9556 = vrot.slane %v9548, %v9555
      %v9558 = vunpack.c.l.s4 1934713408
      %v9559 = vunpack.c.0.s8 %v9558
      %v9560 = vlaneseq
      %v9561 = vshrl.u32 %v9560, 7
      %v9562 = vsub.s32 %v9559, %v9561
      %v9563 = vrot.slane %v9549, %v9562
      %v9564 = vcombine.high %v9540, 0.0
      %v9565 = vcombine.high %v9547, 0.0
      %v9566 = vcombine.high %v9556, 0.0
      %v9567 = vcombine.high %v9563, 0.0
      %v9568 = vcombine.low %v8638, %v8832
      %v9569 = vcombine.high %v8638, %v8832
      %v9571 = vunpack.c.l.s4 1983009808
      %v9572 = vunpack.c.0.s8 %v9571
      %v9573 = vlaneseq
      %v9574 = vshrl.u32 %v9573, 7
      %v9575 = vsub.s32 %v9572, %v9574
      %v9576 = vrot.slane %v9568, %v9575
      %v9578 = vunpack.c.l.s4 1983009808
      %v9579 = vunpack.c.0.s8 %v9578
      %v9580 = vlaneseq
      %v9581 = vshrl.u32 %v9580, 7
      %v9582 = vsub.s32 %v9579, %v9581
      %v9583 = vrot.slane %v9569, %v9582
      %v9584 = vcombine.low %v8735, %v8929
      %v9585 = vcombine.high %v8735, %v8929
      %v9587 = vunpack.c.l.s4 1983009808
      %v9588 = vunpack.c.0.s8 %v9587
      %v9589 = vlaneseq
      %v9590 = vshrl.u32 %v9589, 7
      %v9591 = vsub.s32 %v9588, %v9590
      %v9592 = vrot.slane %v9584, %v9591
      %v9594 = vunpack.c.l.s4 1983009808
      %v9595 = vunpack.c.0.s8 %v9594
      %v9596 = vlaneseq
      %v9597 = vshrl.u32 %v9596, 7
      %v9598 = vsub.s32 %v9595, %v9597
      %v9599 = vrot.slane %v9585, %v9598
      %v9600 = vcombine.low %v9576, %v9592
      %v9601 = vcombine.high %v9576, %v9592
      %v9603 = vunpack.c.l.s4 1934713408
      %v9604 = vunpack.c.0.s8 %v9603
      %v9605 = vlaneseq
      %v9606 = vshrl.u32 %v9605, 7
      %v9607 = vsub.s32 %v9604, %v9606
      %v9608 = vrot.slane %v9600, %v9607
      %v9610 = vunpack.c.l.s4 1934713408
      %v9611 = vunpack.c.0.s8 %v9610
      %v9612 = vlaneseq
      %v9613 = vshrl.u32 %v9612, 7
      %v9614 = vsub.s32 %v9611, %v9613
      %v9615 = vrot.slane %v9601, %v9614
      %v9616 = vcombine.low %v9583, %v9599
      %v9617 = vcombine.high %v9583, %v9599
      %v9619 = vunpack.c.l.s4 1934713408
      %v9620 = vunpack.c.0.s8 %v9619
      %v9621 = vlaneseq
      %v9622 = vshrl.u32 %v9621, 7
      %v9623 = vsub.s32 %v9620, %v9622
      %v9624 = vrot.slane %v9616, %v9623
      %v9626 = vunpack.c.l.s4 1934713408
      %v9627 = vunpack.c.0.s8 %v9626
      %v9628 = vlaneseq
      %v9629 = vshrl.u32 %v9628, 7
      %v9630 = vsub.s32 %v9627, %v9629
      %v9631 = vrot.slane %v9617, %v9630
      %v9632 = vcombine.high %v9608, 0.0
      %v9633 = vcombine.high %v9615, 0.0
      %v9634 = vcombine.high %v9624, 0.0
      %v9635 = vcombine.high %v9631, 0.0
      %v9636 = vcombine.low %v8643, %v8837
      %v9637 = vcombine.high %v8643, %v8837
      %v9639 = vunpack.c.l.s4 1983009808
      %v9640 = vunpack.c.0.s8 %v9639
      %v9641 = vlaneseq
      %v9642 = vshrl.u32 %v9641, 7
      %v9643 = vsub.s32 %v9640, %v9642
      %v9644 = vrot.slane %v9636, %v9643
      %v9646 = vunpack.c.l.s4 1983009808
      %v9647 = vunpack.c.0.s8 %v9646
      %v9648 = vlaneseq
      %v9649 = vshrl.u32 %v9648, 7
      %v9650 = vsub.s32 %v9647, %v9649
      %v9651 = vrot.slane %v9637, %v9650
      %v9652 = vcombine.low %v8740, %v8934
      %v9653 = vcombine.high %v8740, %v8934
      %v9655 = vunpack.c.l.s4 1983009808
      %v9656 = vunpack.c.0.s8 %v9655
      %v9657 = vlaneseq
      %v9658 = vshrl.u32 %v9657, 7
      %v9659 = vsub.s32 %v9656, %v9658
      %v9660 = vrot.slane %v9652, %v9659
      %v9662 = vunpack.c.l.s4 1983009808
      %v9663 = vunpack.c.0.s8 %v9662
      %v9664 = vlaneseq
      %v9665 = vshrl.u32 %v9664, 7
      %v9666 = vsub.s32 %v9663, %v9665
      %v9667 = vrot.slane %v9653, %v9666
      %v9668 = vcombine.low %v9644, %v9660
      %v9669 = vcombine.high %v9644, %v9660
      %v9671 = vunpack.c.l.s4 1934713408
      %v9672 = vunpack.c.0.s8 %v9671
      %v9673 = vlaneseq
      %v9674 = vshrl.u32 %v9673, 7
      %v9675 = vsub.s32 %v9672, %v9674
      %v9676 = vrot.slane %v9668, %v9675
      %v9678 = vunpack.c.l.s4 1934713408
      %v9679 = vunpack.c.0.s8 %v9678
      %v9680 = vlaneseq
      %v9681 = vshrl.u32 %v9680, 7
      %v9682 = vsub.s32 %v9679, %v9681
      %v9683 = vrot.slane %v9669, %v9682
      %v9684 = vcombine.low %v9651, %v9667
      %v9685 = vcombine.high %v9651, %v9667
      %v9687 = vunpack.c.l.s4 1934713408
      %v9688 = vunpack.c.0.s8 %v9687
      %v9689 = vlaneseq
      %v9690 = vshrl.u32 %v9689, 7
      %v9691 = vsub.s32 %v9688, %v9690
      %v9692 = vrot.slane %v9684, %v9691
      %v9694 = vunpack.c.l.s4 1934713408
      %v9695 = vunpack.c.0.s8 %v9694
      %v9696 = vlaneseq
      %v9697 = vshrl.u32 %v9696, 7
      %v9698 = vsub.s32 %v9695, %v9697
      %v9699 = vrot.slane %v9685, %v9698
      %v9700 = vcombine.high %v9676, 0.0
      %v9701 = vcombine.high %v9683, 0.0
      %v9702 = vcombine.high %v9692, 0.0
      %v9703 = vcombine.high %v9699, 0.0
      %v9704 = vcombine.low %v8646, %v8840
      %v9705 = vcombine.high %v8646, %v8840
      %v9707 = vunpack.c.l.s4 1983009808
      %v9708 = vunpack.c.0.s8 %v9707
      %v9709 = vlaneseq
      %v9710 = vshrl.u32 %v9709, 7
      %v9711 = vsub.s32 %v9708, %v9710
      %v9712 = vrot.slane %v9704, %v9711
      %v9714 = vunpack.c.l.s4 1983009808
      %v9715 = vunpack.c.0.s8 %v9714
      %v9716 = vlaneseq
      %v9717 = vshrl.u32 %v9716, 7
      %v9718 = vsub.s32 %v9715, %v9717
      %v9719 = vrot.slane %v9705, %v9718
      %v9720 = vcombine.low %v8743, %v8937
      %v9721 = vcombine.high %v8743, %v8937
      %v9723 = vunpack.c.l.s4 1983009808
      %v9724 = vunpack.c.0.s8 %v9723
      %v9725 = vlaneseq
      %v9726 = vshrl.u32 %v9725, 7
      %v9727 = vsub.s32 %v9724, %v9726
      %v9728 = vrot.slane %v9720, %v9727
      %v9730 = vunpack.c.l.s4 1983009808
      %v9731 = vunpack.c.0.s8 %v9730
      %v9732 = vlaneseq
      %v9733 = vshrl.u32 %v9732, 7
      %v9734 = vsub.s32 %v9731, %v9733
      %v9735 = vrot.slane %v9721, %v9734
      %v9736 = vcombine.low %v9712, %v9728
      %v9737 = vcombine.high %v9712, %v9728
      %v9739 = vunpack.c.l.s4 1934713408
      %v9740 = vunpack.c.0.s8 %v9739
      %v9741 = vlaneseq
      %v9742 = vshrl.u32 %v9741, 7
      %v9743 = vsub.s32 %v9740, %v9742
      %v9744 = vrot.slane %v9736, %v9743
      %v9746 = vunpack.c.l.s4 1934713408
      %v9747 = vunpack.c.0.s8 %v9746
      %v9748 = vlaneseq
      %v9749 = vshrl.u32 %v9748, 7
      %v9750 = vsub.s32 %v9747, %v9749
      %v9751 = vrot.slane %v9737, %v9750
      %v9752 = vcombine.low %v9719, %v9735
      %v9753 = vcombine.high %v9719, %v9735
      %v9755 = vunpack.c.l.s4 1934713408
      %v9756 = vunpack.c.0.s8 %v9755
      %v9757 = vlaneseq
      %v9758 = vshrl.u32 %v9757, 7
      %v9759 = vsub.s32 %v9756, %v9758
      %v9760 = vrot.slane %v9752, %v9759
      %v9762 = vunpack.c.l.s4 1934713408
      %v9763 = vunpack.c.0.s8 %v9762
      %v9764 = vlaneseq
      %v9765 = vshrl.u32 %v9764, 7
      %v9766 = vsub.s32 %v9763, %v9765
      %v9767 = vrot.slane %v9753, %v9766
      %v9768 = vcombine.high %v9744, 0.0
      %v9769 = vcombine.high %v9751, 0.0
      %v9770 = vcombine.high %v9760, 0.0
      %v9771 = vcombine.high %v9767, 0.0
      %v9772 = vcombine.low %v8651, %v8845
      %v9773 = vcombine.high %v8651, %v8845
      %v9775 = vunpack.c.l.s4 1983009808
      %v9776 = vunpack.c.0.s8 %v9775
      %v9777 = vlaneseq
      %v9778 = vshrl.u32 %v9777, 7
      %v9779 = vsub.s32 %v9776, %v9778
      %v9780 = vrot.slane %v9772, %v9779
      %v9782 = vunpack.c.l.s4 1983009808
      %v9783 = vunpack.c.0.s8 %v9782
      %v9784 = vlaneseq
      %v9785 = vshrl.u32 %v9784, 7
      %v9786 = vsub.s32 %v9783, %v9785
      %v9787 = vrot.slane %v9773, %v9786
      %v9788 = vcombine.low %v8748, %v8942
      %v9789 = vcombine.high %v8748, %v8942
      %v9791 = vunpack.c.l.s4 1983009808
      %v9792 = vunpack.c.0.s8 %v9791
      %v9793 = vlaneseq
      %v9794 = vshrl.u32 %v9793, 7
      %v9795 = vsub.s32 %v9792, %v9794
      %v9796 = vrot.slane %v9788, %v9795
      %v9798 = vunpack.c.l.s4 1983009808
      %v9799 = vunpack.c.0.s8 %v9798
      %v9800 = vlaneseq
      %v9801 = vshrl.u32 %v9800, 7
      %v9802 = vsub.s32 %v9799, %v9801
      %v9803 = vrot.slane %v9789, %v9802
      %v9804 = vcombine.low %v9780, %v9796
      %v9805 = vcombine.high %v9780, %v9796
      %v9807 = vunpack.c.l.s4 1934713408
      %v9808 = vunpack.c.0.s8 %v9807
      %v9809 = vlaneseq
      %v9810 = vshrl.u32 %v9809, 7
      %v9811 = vsub.s32 %v9808, %v9810
      %v9812 = vrot.slane %v9804, %v9811
      %v9814 = vunpack.c.l.s4 1934713408
      %v9815 = vunpack.c.0.s8 %v9814
      %v9816 = vlaneseq
      %v9817 = vshrl.u32 %v9816, 7
      %v9818 = vsub.s32 %v9815, %v9817
      %v9819 = vrot.slane %v9805, %v9818
      %v9820 = vcombine.low %v9787, %v9803
      %v9821 = vcombine.high %v9787, %v9803
      %v9823 = vunpack.c.l.s4 1934713408
      %v9824 = vunpack.c.0.s8 %v9823
      %v9825 = vlaneseq
      %v9826 = vshrl.u32 %v9825, 7
      %v9827 = vsub.s32 %v9824, %v9826
      %v9828 = vrot.slane %v9820, %v9827
      %v9830 = vunpack.c.l.s4 1934713408
      %v9831 = vunpack.c.0.s8 %v9830
      %v9832 = vlaneseq
      %v9833 = vshrl.u32 %v9832, 7
      %v9834 = vsub.s32 %v9831, %v9833
      %v9835 = vrot.slane %v9821, %v9834
      %v9836 = vcombine.high %v9812, 0.0
      %v9837 = vcombine.high %v9819, 0.0
      %v9838 = vcombine.high %v9828, 0.0
      %v9839 = vcombine.high %v9835, 0.0
      %v9840 = vcombine.low %v8654, %v8848
      %v9841 = vcombine.high %v8654, %v8848
      %v9843 = vunpack.c.l.s4 1983009808
      %v9844 = vunpack.c.0.s8 %v9843
      %v9845 = vlaneseq
      %v9846 = vshrl.u32 %v9845, 7
      %v9847 = vsub.s32 %v9844, %v9846
      %v9848 = vrot.slane %v9840, %v9847
      %v9850 = vunpack.c.l.s4 1983009808
      %v9851 = vunpack.c.0.s8 %v9850
      %v9852 = vlaneseq
      %v9853 = vshrl.u32 %v9852, 7
      %v9854 = vsub.s32 %v9851, %v9853
      %v9855 = vrot.slane %v9841, %v9854
      %v9856 = vcombine.low %v8751, %v8945
      %v9857 = vcombine.high %v8751, %v8945
      %v9859 = vunpack.c.l.s4 1983009808
      %v9860 = vunpack.c.0.s8 %v9859
      %v9861 = vlaneseq
      %v9862 = vshrl.u32 %v9861, 7
      %v9863 = vsub.s32 %v9860, %v9862
      %v9864 = vrot.slane %v9856, %v9863
      %v9866 = vunpack.c.l.s4 1983009808
      %v9867 = vunpack.c.0.s8 %v9866
      %v9868 = vlaneseq
      %v9869 = vshrl.u32 %v9868, 7
      %v9870 = vsub.s32 %v9867, %v9869
      %v9871 = vrot.slane %v9857, %v9870
      %v9872 = vcombine.low %v9848, %v9864
      %v9873 = vcombine.high %v9848, %v9864
      %v9875 = vunpack.c.l.s4 1934713408
      %v9876 = vunpack.c.0.s8 %v9875
      %v9877 = vlaneseq
      %v9878 = vshrl.u32 %v9877, 7
      %v9879 = vsub.s32 %v9876, %v9878
      %v9880 = vrot.slane %v9872, %v9879
      %v9882 = vunpack.c.l.s4 1934713408
      %v9883 = vunpack.c.0.s8 %v9882
      %v9884 = vlaneseq
      %v9885 = vshrl.u32 %v9884, 7
      %v9886 = vsub.s32 %v9883, %v9885
      %v9887 = vrot.slane %v9873, %v9886
      %v9888 = vcombine.low %v9855, %v9871
      %v9889 = vcombine.high %v9855, %v9871
      %v9891 = vunpack.c.l.s4 1934713408
      %v9892 = vunpack.c.0.s8 %v9891
      %v9893 = vlaneseq
      %v9894 = vshrl.u32 %v9893, 7
      %v9895 = vsub.s32 %v9892, %v9894
      %v9896 = vrot.slane %v9888, %v9895
      %v9898 = vunpack.c.l.s4 1934713408
      %v9899 = vunpack.c.0.s8 %v9898
      %v9900 = vlaneseq
      %v9901 = vshrl.u32 %v9900, 7
      %v9902 = vsub.s32 %v9899, %v9901
      %v9903 = vrot.slane %v9889, %v9902
      %v9904 = vcombine.high %v9880, 0.0
      %v9905 = vcombine.high %v9887, 0.0
      %v9906 = vcombine.high %v9896, 0.0
      %v9907 = vcombine.high %v9903, 0.0
      %v9908 = vcombine.low %v8659, %v8853
      %v9909 = vcombine.high %v8659, %v8853
      %v9911 = vunpack.c.l.s4 1983009808
      %v9912 = vunpack.c.0.s8 %v9911
      %v9913 = vlaneseq
      %v9914 = vshrl.u32 %v9913, 7
      %v9915 = vsub.s32 %v9912, %v9914
      %v9916 = vrot.slane %v9908, %v9915
      %v9918 = vunpack.c.l.s4 1983009808
      %v9919 = vunpack.c.0.s8 %v9918
      %v9920 = vlaneseq
      %v9921 = vshrl.u32 %v9920, 7
      %v9922 = vsub.s32 %v9919, %v9921
      %v9923 = vrot.slane %v9909, %v9922
      %v9924 = vcombine.low %v8756, %v8950
      %v9925 = vcombine.high %v8756, %v8950
      %v9927 = vunpack.c.l.s4 1983009808
      %v9928 = vunpack.c.0.s8 %v9927
      %v9929 = vlaneseq
      %v9930 = vshrl.u32 %v9929, 7
      %v9931 = vsub.s32 %v9928, %v9930
      %v9932 = vrot.slane %v9924, %v9931
      %v9934 = vunpack.c.l.s4 1983009808
      %v9935 = vunpack.c.0.s8 %v9934
      %v9936 = vlaneseq
      %v9937 = vshrl.u32 %v9936, 7
      %v9938 = vsub.s32 %v9935, %v9937
      %v9939 = vrot.slane %v9925, %v9938
      %v9940 = vcombine.low %v9916, %v9932
      %v9941 = vcombine.high %v9916, %v9932
      %v9943 = vunpack.c.l.s4 1934713408
      %v9944 = vunpack.c.0.s8 %v9943
      %v9945 = vlaneseq
      %v9946 = vshrl.u32 %v9945, 7
      %v9947 = vsub.s32 %v9944, %v9946
      %v9948 = vrot.slane %v9940, %v9947
      %v9950 = vunpack.c.l.s4 1934713408
      %v9951 = vunpack.c.0.s8 %v9950
      %v9952 = vlaneseq
      %v9953 = vshrl.u32 %v9952, 7
      %v9954 = vsub.s32 %v9951, %v9953
      %v9955 = vrot.slane %v9941, %v9954
      %v9956 = vcombine.low %v9923, %v9939
      %v9957 = vcombine.high %v9923, %v9939
      %v9959 = vunpack.c.l.s4 1934713408
      %v9960 = vunpack.c.0.s8 %v9959
      %v9961 = vlaneseq
      %v9962 = vshrl.u32 %v9961, 7
      %v9963 = vsub.s32 %v9960, %v9962
      %v9964 = vrot.slane %v9956, %v9963
      %v9966 = vunpack.c.l.s4 1934713408
      %v9967 = vunpack.c.0.s8 %v9966
      %v9968 = vlaneseq
      %v9969 = vshrl.u32 %v9968, 7
      %v9970 = vsub.s32 %v9967, %v9969
      %v9971 = vrot.slane %v9957, %v9970
      %v9972 = vcombine.high %v9948, 0.0
      %v9973 = vcombine.high %v9955, 0.0
      %v9974 = vcombine.high %v9964, 0.0
      %v9975 = vcombine.high %v9971, 0.0
      %v9976 = vcombine.low %v8662, %v8856
      %v9977 = vcombine.high %v8662, %v8856
      %v9979 = vunpack.c.l.s4 1983009808
      %v9980 = vunpack.c.0.s8 %v9979
      %v9981 = vlaneseq
      %v9982 = vshrl.u32 %v9981, 7
      %v9983 = vsub.s32 %v9980, %v9982
      %v9984 = vrot.slane %v9976, %v9983
      %v9986 = vunpack.c.l.s4 1983009808
      %v9987 = vunpack.c.0.s8 %v9986
      %v9988 = vlaneseq
      %v9989 = vshrl.u32 %v9988, 7
      %v9990 = vsub.s32 %v9987, %v9989
      %v9991 = vrot.slane %v9977, %v9990
      %v9992 = vcombine.low %v8759, %v8953
      %v9993 = vcombine.high %v8759, %v8953
      %v9995 = vunpack.c.l.s4 1983009808
      %v9996 = vunpack.c.0.s8 %v9995
      %v9997 = vlaneseq
      %v9998 = vshrl.u32 %v9997, 7
      %v9999 = vsub.s32 %v9996, %v9998
      %v10000 = vrot.slane %v9992, %v9999
      %v10002 = vunpack.c.l.s4 1983009808
      %v10003 = vunpack.c.0.s8 %v10002
      %v10004 = vlaneseq
      %v10005 = vshrl.u32 %v10004, 7
      %v10006 = vsub.s32 %v10003, %v10005
      %v10007 = vrot.slane %v9993, %v10006
      %v10008 = vcombine.low %v9984, %v10000
      %v10009 = vcombine.high %v9984, %v10000
      %v10011 = vunpack.c.l.s4 1934713408
      %v10012 = vunpack.c.0.s8 %v10011
      %v10013 = vlaneseq
      %v10014 = vshrl.u32 %v10013, 7
      %v10015 = vsub.s32 %v10012, %v10014
      %v10016 = vrot.slane %v10008, %v10015
      %v10018 = vunpack.c.l.s4 1934713408
      %v10019 = vunpack.c.0.s8 %v10018
      %v10020 = vlaneseq
      %v10021 = vshrl.u32 %v10020, 7
      %v10022 = vsub.s32 %v10019, %v10021
      %v10023 = vrot.slane %v10009, %v10022
      %v10024 = vcombine.low %v9991, %v10007
      %v10025 = vcombine.high %v9991, %v10007
      %v10027 = vunpack.c.l.s4 1934713408
      %v10028 = vunpack.c.0.s8 %v10027
      %v10029 = vlaneseq
      %v10030 = vshrl.u32 %v10029, 7
      %v10031 = vsub.s32 %v10028, %v10030
      %v10032 = vrot.slane %v10024, %v10031
      %v10034 = vunpack.c.l.s4 1934713408
      %v10035 = vunpack.c.0.s8 %v10034
      %v10036 = vlaneseq
      %v10037 = vshrl.u32 %v10036, 7
      %v10038 = vsub.s32 %v10035, %v10037
      %v10039 = vrot.slane %v10025, %v10038
      %v10040 = vcombine.high %v10016, 0.0
      %v10041 = vcombine.high %v10023, 0.0
      %v10042 = vcombine.high %v10032, 0.0
      %v10043 = vcombine.high %v10039, 0.0
      %v10044 = vcombine.low %v8996, %v9003
      %v10046 = vunpack.c.l.s4 1983009808
      %v10047 = vunpack.c.0.s8 %v10046
      %v10048 = vlaneseq
      %v10049 = vshrl.u32 %v10048, 7
      %v10050 = vsub.s32 %v10047, %v10049
      %v10051 = vrot.slane %v10044, %v10050
      %v10052 = vcombine.low %v9020, %v9021
      %v10054 = vunpack.c.l.s4 1983009808
      %v10055 = vunpack.c.0.s8 %v10054
      %v10056 = vlaneseq
      %v10057 = vshrl.u32 %v10056, 7
      %v10058 = vsub.s32 %v10055, %v10057
      %v10059 = vrot.slane %v10052, %v10058
      %v10060 = vcombine.low %v9012, %v9019
      %v10062 = vunpack.c.l.s4 1983009808
      %v10063 = vunpack.c.0.s8 %v10062
      %v10064 = vlaneseq
      %v10065 = vshrl.u32 %v10064, 7
      %v10066 = vsub.s32 %v10063, %v10065
      %v10067 = vrot.slane %v10060, %v10066
      %v10068 = vcombine.low %v9022, %v9023
      %v10070 = vunpack.c.l.s4 1983009808
      %v10071 = vunpack.c.0.s8 %v10070
      %v10072 = vlaneseq
      %v10073 = vshrl.u32 %v10072, 7
      %v10074 = vsub.s32 %v10071, %v10073
      %v10075 = vrot.slane %v10068, %v10074
      %v10076 = vcombine.low %v10051, %v10059
      %v10077 = vcombine.high %v10051, %v10059
      %v10079 = vunpack.c.l.s4 1934713408
      %v10080 = vunpack.c.0.s8 %v10079
      %v10081 = vlaneseq
      %v10082 = vshrl.u32 %v10081, 7
      %v10083 = vsub.s32 %v10080, %v10082
      %v10084 = vrot.slane %v10076, %v10083
      %v10086 = vunpack.c.l.s4 1934713408
      %v10087 = vunpack.c.0.s8 %v10086
      %v10088 = vlaneseq
      %v10089 = vshrl.u32 %v10088, 7
      %v10090 = vsub.s32 %v10087, %v10089
      %v10091 = vrot.slane %v10077, %v10090
      %v10092 = vcombine.low %v10067, %v10075
      %v10093 = vcombine.high %v10067, %v10075
      %v10095 = vunpack.c.l.s4 1934713408
      %v10096 = vunpack.c.0.s8 %v10095
      %v10097 = vlaneseq
      %v10098 = vshrl.u32 %v10097, 7
      %v10099 = vsub.s32 %v10096, %v10098
      %v10100 = vrot.slane %v10092, %v10099
      %v10102 = vunpack.c.l.s4 1934713408
      %v10103 = vunpack.c.0.s8 %v10102
      %v10104 = vlaneseq
      %v10105 = vshrl.u32 %v10104, 7
      %v10106 = vsub.s32 %v10103, %v10105
      %v10107 = vrot.slane %v10093, %v10106
      %v10108 = vcombine.low %v10084, %v10100
      %v10109 = vcombine.high %v10084, %v10100
      %v10110 = vcombine.low %v10091, %v10107
      %v10111 = vcombine.high %v10091, %v10107
      %v10112 = vcombine.low %v9064, %v9071
      %v10114 = vunpack.c.l.s4 1983009808
      %v10115 = vunpack.c.0.s8 %v10114
      %v10116 = vlaneseq
      %v10117 = vshrl.u32 %v10116, 7
      %v10118 = vsub.s32 %v10115, %v10117
      %v10119 = vrot.slane %v10112, %v10118
      %v10120 = vcombine.low %v9088, %v9089
      %v10122 = vunpack.c.l.s4 1983009808
      %v10123 = vunpack.c.0.s8 %v10122
      %v10124 = vlaneseq
      %v10125 = vshrl.u32 %v10124, 7
      %v10126 = vsub.s32 %v10123, %v10125
      %v10127 = vrot.slane %v10120, %v10126
      %v10128 = vcombine.low %v9080, %v9087
      %v10130 = vunpack.c.l.s4 1983009808
      %v10131 = vunpack.c.0.s8 %v10130
      %v10132 = vlaneseq
      %v10133 = vshrl.u32 %v10132, 7
      %v10134 = vsub.s32 %v10131, %v10133
      %v10135 = vrot.slane %v10128, %v10134
      %v10136 = vcombine.low %v9090, %v9091
      %v10138 = vunpack.c.l.s4 1983009808
      %v10139 = vunpack.c.0.s8 %v10138
      %v10140 = vlaneseq
      %v10141 = vshrl.u32 %v10140, 7
      %v10142 = vsub.s32 %v10139, %v10141
      %v10143 = vrot.slane %v10136, %v10142
      %v10144 = vcombine.low %v10119, %v10127
      %v10145 = vcombine.high %v10119, %v10127
      %v10147 = vunpack.c.l.s4 1934713408
      %v10148 = vunpack.c.0.s8 %v10147
      %v10149 = vlaneseq
      %v10150 = vshrl.u32 %v10149, 7
      %v10151 = vsub.s32 %v10148, %v10150
      %v10152 = vrot.slane %v10144, %v10151
      %v10154 = vunpack.c.l.s4 1934713408
      %v10155 = vunpack.c.0.s8 %v10154
      %v10156 = vlaneseq
      %v10157 = vshrl.u32 %v10156, 7
      %v10158 = vsub.s32 %v10155, %v10157
      %v10159 = vrot.slane %v10145, %v10158
      %v10160 = vcombine.low %v10135, %v10143
      %v10161 = vcombine.high %v10135, %v10143
      %v10163 = vunpack.c.l.s4 1934713408
      %v10164 = vunpack.c.0.s8 %v10163
      %v10165 = vlaneseq
      %v10166 = vshrl.u32 %v10165, 7
      %v10167 = vsub.s32 %v10164, %v10166
      %v10168 = vrot.slane %v10160, %v10167
      %v10170 = vunpack.c.l.s4 1934713408
      %v10171 = vunpack.c.0.s8 %v10170
      %v10172 = vlaneseq
      %v10173 = vshrl.u32 %v10172, 7
      %v10174 = vsub.s32 %v10171, %v10173
      %v10175 = vrot.slane %v10161, %v10174
      %v10176 = vcombine.low %v10152, %v10168
      %v10177 = vcombine.high %v10152, %v10168
      %v10178 = vcombine.low %v10159, %v10175
      %v10179 = vcombine.high %v10159, %v10175
      %v10180 = vcombine.low %v9132, %v9139
      %v10182 = vunpack.c.l.s4 1983009808
      %v10183 = vunpack.c.0.s8 %v10182
      %v10184 = vlaneseq
      %v10185 = vshrl.u32 %v10184, 7
      %v10186 = vsub.s32 %v10183, %v10185
      %v10187 = vrot.slane %v10180, %v10186
      %v10188 = vcombine.low %v9156, %v9157
      %v10190 = vunpack.c.l.s4 1983009808
      %v10191 = vunpack.c.0.s8 %v10190
      %v10192 = vlaneseq
      %v10193 = vshrl.u32 %v10192, 7
      %v10194 = vsub.s32 %v10191, %v10193
      %v10195 = vrot.slane %v10188, %v10194
      %v10196 = vcombine.low %v9148, %v9155
      %v10198 = vunpack.c.l.s4 1983009808
      %v10199 = vunpack.c.0.s8 %v10198
      %v10200 = vlaneseq
      %v10201 = vshrl.u32 %v10200, 7
      %v10202 = vsub.s32 %v10199, %v10201
      %v10203 = vrot.slane %v10196, %v10202
      %v10204 = vcombine.low %v9158, %v9159
      %v10206 = vunpack.c.l.s4 1983009808
      %v10207 = vunpack.c.0.s8 %v10206
      %v10208 = vlaneseq
      %v10209 = vshrl.u32 %v10208, 7
      %v10210 = vsub.s32 %v10207, %v10209
      %v10211 = vrot.slane %v10204, %v10210
      %v10212 = vcombine.low %v10187, %v10195
      %v10213 = vcombine.high %v10187, %v10195
      %v10215 = vunpack.c.l.s4 1934713408
      %v10216 = vunpack.c.0.s8 %v10215
      %v10217 = vlaneseq
      %v10218 = vshrl.u32 %v10217, 7
      %v10219 = vsub.s32 %v10216, %v10218
      %v10220 = vrot.slane %v10212, %v10219
      %v10222 = vunpack.c.l.s4 1934713408
      %v10223 = vunpack.c.0.s8 %v10222
      %v10224 = vlaneseq
      %v10225 = vshrl.u32 %v10224, 7
      %v10226 = vsub.s32 %v10223, %v10225
      %v10227 = vrot.slane %v10213, %v10226
      %v10228 = vcombine.low %v10203, %v10211
      %v10229 = vcombine.high %v10203, %v10211
      %v10231 = vunpack.c.l.s4 1934713408
      %v10232 = vunpack.c.0.s8 %v10231
      %v10233 = vlaneseq
      %v10234 = vshrl.u32 %v10233, 7
      %v10235 = vsub.s32 %v10232, %v10234
      %v10236 = vrot.slane %v10228, %v10235
      %v10238 = vunpack.c.l.s4 1934713408
      %v10239 = vunpack.c.0.s8 %v10238
      %v10240 = vlaneseq
      %v10241 = vshrl.u32 %v10240, 7
      %v10242 = vsub.s32 %v10239, %v10241
      %v10243 = vrot.slane %v10229, %v10242
      %v10244 = vcombine.low %v10220, %v10236
      %v10245 = vcombine.high %v10220, %v10236
      %v10246 = vcombine.low %v10227, %v10243
      %v10247 = vcombine.high %v10227, %v10243
      %v10248 = vcombine.low %v9200, %v9207
      %v10250 = vunpack.c.l.s4 1983009808
      %v10251 = vunpack.c.0.s8 %v10250
      %v10252 = vlaneseq
      %v10253 = vshrl.u32 %v10252, 7
      %v10254 = vsub.s32 %v10251, %v10253
      %v10255 = vrot.slane %v10248, %v10254
      %v10256 = vcombine.low %v9224, %v9225
      %v10258 = vunpack.c.l.s4 1983009808
      %v10259 = vunpack.c.0.s8 %v10258
      %v10260 = vlaneseq
      %v10261 = vshrl.u32 %v10260, 7
      %v10262 = vsub.s32 %v10259, %v10261
      %v10263 = vrot.slane %v10256, %v10262
      %v10264 = vcombine.low %v9216, %v9223
      %v10266 = vunpack.c.l.s4 1983009808
      %v10267 = vunpack.c.0.s8 %v10266
      %v10268 = vlaneseq
      %v10269 = vshrl.u32 %v10268, 7
      %v10270 = vsub.s32 %v10267, %v10269
      %v10271 = vrot.slane %v10264, %v10270
      %v10272 = vcombine.low %v9226, %v9227
      %v10274 = vunpack.c.l.s4 1983009808
      %v10275 = vunpack.c.0.s8 %v10274
      %v10276 = vlaneseq
      %v10277 = vshrl.u32 %v10276, 7
      %v10278 = vsub.s32 %v10275, %v10277
      %v10279 = vrot.slane %v10272, %v10278
      %v10280 = vcombine.low %v10255, %v10263
      %v10281 = vcombine.high %v10255, %v10263
      %v10283 = vunpack.c.l.s4 1934713408
      %v10284 = vunpack.c.0.s8 %v10283
      %v10285 = vlaneseq
      %v10286 = vshrl.u32 %v10285, 7
      %v10287 = vsub.s32 %v10284, %v10286
      %v10288 = vrot.slane %v10280, %v10287
      %v10290 = vunpack.c.l.s4 1934713408
      %v10291 = vunpack.c.0.s8 %v10290
      %v10292 = vlaneseq
      %v10293 = vshrl.u32 %v10292, 7
      %v10294 = vsub.s32 %v10291, %v10293
      %v10295 = vrot.slane %v10281, %v10294
      %v10296 = vcombine.low %v10271, %v10279
      %v10297 = vcombine.high %v10271, %v10279
      %v10299 = vunpack.c.l.s4 1934713408
      %v10300 = vunpack.c.0.s8 %v10299
      %v10301 = vlaneseq
      %v10302 = vshrl.u32 %v10301, 7
      %v10303 = vsub.s32 %v10300, %v10302
      %v10304 = vrot.slane %v10296, %v10303
      %v10306 = vunpack.c.l.s4 1934713408
      %v10307 = vunpack.c.0.s8 %v10306
      %v10308 = vlaneseq
      %v10309 = vshrl.u32 %v10308, 7
      %v10310 = vsub.s32 %v10307, %v10309
      %v10311 = vrot.slane %v10297, %v10310
      %v10312 = vcombine.low %v10288, %v10304
      %v10313 = vcombine.high %v10288, %v10304
      %v10314 = vcombine.low %v10295, %v10311
      %v10315 = vcombine.high %v10295, %v10311
      %v10316 = vcombine.low %v9268, %v9275
      %v10318 = vunpack.c.l.s4 1983009808
      %v10319 = vunpack.c.0.s8 %v10318
      %v10320 = vlaneseq
      %v10321 = vshrl.u32 %v10320, 7
      %v10322 = vsub.s32 %v10319, %v10321
      %v10323 = vrot.slane %v10316, %v10322
      %v10324 = vcombine.low %v9292, %v9293
      %v10326 = vunpack.c.l.s4 1983009808
      %v10327 = vunpack.c.0.s8 %v10326
      %v10328 = vlaneseq
      %v10329 = vshrl.u32 %v10328, 7
      %v10330 = vsub.s32 %v10327, %v10329
      %v10331 = vrot.slane %v10324, %v10330
      %v10332 = vcombine.low %v9284, %v9291
      %v10334 = vunpack.c.l.s4 1983009808
      %v10335 = vunpack.c.0.s8 %v10334
      %v10336 = vlaneseq
      %v10337 = vshrl.u32 %v10336, 7
      %v10338 = vsub.s32 %v10335, %v10337
      %v10339 = vrot.slane %v10332, %v10338
      %v10340 = vcombine.low %v9294, %v9295
      %v10342 = vunpack.c.l.s4 1983009808
      %v10343 = vunpack.c.0.s8 %v10342
      %v10344 = vlaneseq
      %v10345 = vshrl.u32 %v10344, 7
      %v10346 = vsub.s32 %v10343, %v10345
      %v10347 = vrot.slane %v10340, %v10346
      %v10348 = vcombine.low %v10323, %v10331
      %v10349 = vcombine.high %v10323, %v10331
      %v10351 = vunpack.c.l.s4 1934713408
      %v10352 = vunpack.c.0.s8 %v10351
      %v10353 = vlaneseq
      %v10354 = vshrl.u32 %v10353, 7
      %v10355 = vsub.s32 %v10352, %v10354
      %v10356 = vrot.slane %v10348, %v10355
      %v10358 = vunpack.c.l.s4 1934713408
      %v10359 = vunpack.c.0.s8 %v10358
      %v10360 = vlaneseq
      %v10361 = vshrl.u32 %v10360, 7
      %v10362 = vsub.s32 %v10359, %v10361
      %v10363 = vrot.slane %v10349, %v10362
      %v10364 = vcombine.low %v10339, %v10347
      %v10365 = vcombine.high %v10339, %v10347
      %v10367 = vunpack.c.l.s4 1934713408
      %v10368 = vunpack.c.0.s8 %v10367
      %v10369 = vlaneseq
      %v10370 = vshrl.u32 %v10369, 7
      %v10371 = vsub.s32 %v10368, %v10370
      %v10372 = vrot.slane %v10364, %v10371
      %v10374 = vunpack.c.l.s4 1934713408
      %v10375 = vunpack.c.0.s8 %v10374
      %v10376 = vlaneseq
      %v10377 = vshrl.u32 %v10376, 7
      %v10378 = vsub.s32 %v10375, %v10377
      %v10379 = vrot.slane %v10365, %v10378
      %v10380 = vcombine.low %v10356, %v10372
      %v10381 = vcombine.high %v10356, %v10372
      %v10382 = vcombine.low %v10363, %v10379
      %v10383 = vcombine.high %v10363, %v10379
      %v10384 = vcombine.low %v9336, %v9343
      %v10386 = vunpack.c.l.s4 1983009808
      %v10387 = vunpack.c.0.s8 %v10386
      %v10388 = vlaneseq
      %v10389 = vshrl.u32 %v10388, 7
      %v10390 = vsub.s32 %v10387, %v10389
      %v10391 = vrot.slane %v10384, %v10390
      %v10392 = vcombine.low %v9360, %v9361
      %v10394 = vunpack.c.l.s4 1983009808
      %v10395 = vunpack.c.0.s8 %v10394
      %v10396 = vlaneseq
      %v10397 = vshrl.u32 %v10396, 7
      %v10398 = vsub.s32 %v10395, %v10397
      %v10399 = vrot.slane %v10392, %v10398
      %v10400 = vcombine.low %v9352, %v9359
      %v10402 = vunpack.c.l.s4 1983009808
      %v10403 = vunpack.c.0.s8 %v10402
      %v10404 = vlaneseq
      %v10405 = vshrl.u32 %v10404, 7
      %v10406 = vsub.s32 %v10403, %v10405
      %v10407 = vrot.slane %v10400, %v10406
      %v10408 = vcombine.low %v9362, %v9363
      %v10410 = vunpack.c.l.s4 1983009808
      %v10411 = vunpack.c.0.s8 %v10410
      %v10412 = vlaneseq
      %v10413 = vshrl.u32 %v10412, 7
      %v10414 = vsub.s32 %v10411, %v10413
      %v10415 = vrot.slane %v10408, %v10414
      %v10416 = vcombine.low %v10391, %v10399
      %v10417 = vcombine.high %v10391, %v10399
      %v10419 = vunpack.c.l.s4 1934713408
      %v10420 = vunpack.c.0.s8 %v10419
      %v10421 = vlaneseq
      %v10422 = vshrl.u32 %v10421, 7
      %v10423 = vsub.s32 %v10420, %v10422
      %v10424 = vrot.slane %v10416, %v10423
      %v10426 = vunpack.c.l.s4 1934713408
      %v10427 = vunpack.c.0.s8 %v10426
      %v10428 = vlaneseq
      %v10429 = vshrl.u32 %v10428, 7
      %v10430 = vsub.s32 %v10427, %v10429
      %v10431 = vrot.slane %v10417, %v10430
      %v10432 = vcombine.low %v10407, %v10415
      %v10433 = vcombine.high %v10407, %v10415
      %v10435 = vunpack.c.l.s4 1934713408
      %v10436 = vunpack.c.0.s8 %v10435
      %v10437 = vlaneseq
      %v10438 = vshrl.u32 %v10437, 7
      %v10439 = vsub.s32 %v10436, %v10438
      %v10440 = vrot.slane %v10432, %v10439
      %v10442 = vunpack.c.l.s4 1934713408
      %v10443 = vunpack.c.0.s8 %v10442
      %v10444 = vlaneseq
      %v10445 = vshrl.u32 %v10444, 7
      %v10446 = vsub.s32 %v10443, %v10445
      %v10447 = vrot.slane %v10433, %v10446
      %v10448 = vcombine.low %v10424, %v10440
      %v10449 = vcombine.high %v10424, %v10440
      %v10450 = vcombine.low %v10431, %v10447
      %v10451 = vcombine.high %v10431, %v10447
      %v10452 = vcombine.low %v9404, %v9411
      %v10454 = vunpack.c.l.s4 1983009808
      %v10455 = vunpack.c.0.s8 %v10454
      %v10456 = vlaneseq
      %v10457 = vshrl.u32 %v10456, 7
      %v10458 = vsub.s32 %v10455, %v10457
      %v10459 = vrot.slane %v10452, %v10458
      %v10460 = vcombine.low %v9428, %v9429
      %v10462 = vunpack.c.l.s4 1983009808
      %v10463 = vunpack.c.0.s8 %v10462
      %v10464 = vlaneseq
      %v10465 = vshrl.u32 %v10464, 7
      %v10466 = vsub.s32 %v10463, %v10465
      %v10467 = vrot.slane %v10460, %v10466
      %v10468 = vcombine.low %v9420, %v9427
      %v10470 = vunpack.c.l.s4 1983009808
      %v10471 = vunpack.c.0.s8 %v10470
      %v10472 = vlaneseq
      %v10473 = vshrl.u32 %v10472, 7
      %v10474 = vsub.s32 %v10471, %v10473
      %v10475 = vrot.slane %v10468, %v10474
      %v10476 = vcombine.low %v9430, %v9431
      %v10478 = vunpack.c.l.s4 1983009808
      %v10479 = vunpack.c.0.s8 %v10478
      %v10480 = vlaneseq
      %v10481 = vshrl.u32 %v10480, 7
      %v10482 = vsub.s32 %v10479, %v10481
      %v10483 = vrot.slane %v10476, %v10482
      %v10484 = vcombine.low %v10459, %v10467
      %v10485 = vcombine.high %v10459, %v10467
      %v10487 = vunpack.c.l.s4 1934713408
      %v10488 = vunpack.c.0.s8 %v10487
      %v10489 = vlaneseq
      %v10490 = vshrl.u32 %v10489, 7
      %v10491 = vsub.s32 %v10488, %v10490
      %v10492 = vrot.slane %v10484, %v10491
      %v10494 = vunpack.c.l.s4 1934713408
      %v10495 = vunpack.c.0.s8 %v10494
      %v10496 = vlaneseq
      %v10497 = vshrl.u32 %v10496, 7
      %v10498 = vsub.s32 %v10495, %v10497
      %v10499 = vrot.slane %v10485, %v10498
      %v10500 = vcombine.low %v10475, %v10483
      %v10501 = vcombine.high %v10475, %v10483
      %v10503 = vunpack.c.l.s4 1934713408
      %v10504 = vunpack.c.0.s8 %v10503
      %v10505 = vlaneseq
      %v10506 = vshrl.u32 %v10505, 7
      %v10507 = vsub.s32 %v10504, %v10506
      %v10508 = vrot.slane %v10500, %v10507
      %v10510 = vunpack.c.l.s4 1934713408
      %v10511 = vunpack.c.0.s8 %v10510
      %v10512 = vlaneseq
      %v10513 = vshrl.u32 %v10512, 7
      %v10514 = vsub.s32 %v10511, %v10513
      %v10515 = vrot.slane %v10501, %v10514
      %v10516 = vcombine.low %v10492, %v10508
      %v10517 = vcombine.high %v10492, %v10508
      %v10518 = vcombine.low %v10499, %v10515
      %v10519 = vcombine.high %v10499, %v10515
      %v10520 = vcombine.low %v9472, %v9479
      %v10522 = vunpack.c.l.s4 1983009808
      %v10523 = vunpack.c.0.s8 %v10522
      %v10524 = vlaneseq
      %v10525 = vshrl.u32 %v10524, 7
      %v10526 = vsub.s32 %v10523, %v10525
      %v10527 = vrot.slane %v10520, %v10526
      %v10528 = vcombine.low %v9496, %v9497
      %v10530 = vunpack.c.l.s4 1983009808
      %v10531 = vunpack.c.0.s8 %v10530
      %v10532 = vlaneseq
      %v10533 = vshrl.u32 %v10532, 7
      %v10534 = vsub.s32 %v10531, %v10533
      %v10535 = vrot.slane %v10528, %v10534
      %v10536 = vcombine.low %v9488, %v9495
      %v10538 = vunpack.c.l.s4 1983009808
      %v10539 = vunpack.c.0.s8 %v10538
      %v10540 = vlaneseq
      %v10541 = vshrl.u32 %v10540, 7
      %v10542 = vsub.s32 %v10539, %v10541
      %v10543 = vrot.slane %v10536, %v10542
      %v10544 = vcombine.low %v9498, %v9499
      %v10546 = vunpack.c.l.s4 1983009808
      %v10547 = vunpack.c.0.s8 %v10546
      %v10548 = vlaneseq
      %v10549 = vshrl.u32 %v10548, 7
      %v10550 = vsub.s32 %v10547, %v10549
      %v10551 = vrot.slane %v10544, %v10550
      %v10552 = vcombine.low %v10527, %v10535
      %v10553 = vcombine.high %v10527, %v10535
      %v10555 = vunpack.c.l.s4 1934713408
      %v10556 = vunpack.c.0.s8 %v10555
      %v10557 = vlaneseq
      %v10558 = vshrl.u32 %v10557, 7
      %v10559 = vsub.s32 %v10556, %v10558
      %v10560 = vrot.slane %v10552, %v10559
      %v10562 = vunpack.c.l.s4 1934713408
      %v10563 = vunpack.c.0.s8 %v10562
      %v10564 = vlaneseq
      %v10565 = vshrl.u32 %v10564, 7
      %v10566 = vsub.s32 %v10563, %v10565
      %v10567 = vrot.slane %v10553, %v10566
      %v10568 = vcombine.low %v10543, %v10551
      %v10569 = vcombine.high %v10543, %v10551
      %v10571 = vunpack.c.l.s4 1934713408
      %v10572 = vunpack.c.0.s8 %v10571
      %v10573 = vlaneseq
      %v10574 = vshrl.u32 %v10573, 7
      %v10575 = vsub.s32 %v10572, %v10574
      %v10576 = vrot.slane %v10568, %v10575
      %v10578 = vunpack.c.l.s4 1934713408
      %v10579 = vunpack.c.0.s8 %v10578
      %v10580 = vlaneseq
      %v10581 = vshrl.u32 %v10580, 7
      %v10582 = vsub.s32 %v10579, %v10581
      %v10583 = vrot.slane %v10569, %v10582
      %v10584 = vcombine.low %v10560, %v10576
      %v10585 = vcombine.high %v10560, %v10576
      %v10586 = vcombine.low %v10567, %v10583
      %v10587 = vcombine.high %v10567, %v10583
      %v10588 = vcombine.low %v9540, %v9547
      %v10590 = vunpack.c.l.s4 1983009808
      %v10591 = vunpack.c.0.s8 %v10590
      %v10592 = vlaneseq
      %v10593 = vshrl.u32 %v10592, 7
      %v10594 = vsub.s32 %v10591, %v10593
      %v10595 = vrot.slane %v10588, %v10594
      %v10596 = vcombine.low %v9564, %v9565
      %v10598 = vunpack.c.l.s4 1983009808
      %v10599 = vunpack.c.0.s8 %v10598
      %v10600 = vlaneseq
      %v10601 = vshrl.u32 %v10600, 7
      %v10602 = vsub.s32 %v10599, %v10601
      %v10603 = vrot.slane %v10596, %v10602
      %v10604 = vcombine.low %v9556, %v9563
      %v10606 = vunpack.c.l.s4 1983009808
      %v10607 = vunpack.c.0.s8 %v10606
      %v10608 = vlaneseq
      %v10609 = vshrl.u32 %v10608, 7
      %v10610 = vsub.s32 %v10607, %v10609
      %v10611 = vrot.slane %v10604, %v10610
      %v10612 = vcombine.low %v9566, %v9567
      %v10614 = vunpack.c.l.s4 1983009808
      %v10615 = vunpack.c.0.s8 %v10614
      %v10616 = vlaneseq
      %v10617 = vshrl.u32 %v10616, 7
      %v10618 = vsub.s32 %v10615, %v10617
      %v10619 = vrot.slane %v10612, %v10618
      %v10620 = vcombine.low %v10595, %v10603
      %v10621 = vcombine.high %v10595, %v10603
      %v10623 = vunpack.c.l.s4 1934713408
      %v10624 = vunpack.c.0.s8 %v10623
      %v10625 = vlaneseq
      %v10626 = vshrl.u32 %v10625, 7
      %v10627 = vsub.s32 %v10624, %v10626
      %v10628 = vrot.slane %v10620, %v10627
      %v10630 = vunpack.c.l.s4 1934713408
      %v10631 = vunpack.c.0.s8 %v10630
      %v10632 = vlaneseq
      %v10633 = vshrl.u32 %v10632, 7
      %v10634 = vsub.s32 %v10631, %v10633
      %v10635 = vrot.slane %v10621, %v10634
      %v10636 = vcombine.low %v10611, %v10619
      %v10637 = vcombine.high %v10611, %v10619
      %v10639 = vunpack.c.l.s4 1934713408
      %v10640 = vunpack.c.0.s8 %v10639
      %v10641 = vlaneseq
      %v10642 = vshrl.u32 %v10641, 7
      %v10643 = vsub.s32 %v10640, %v10642
      %v10644 = vrot.slane %v10636, %v10643
      %v10646 = vunpack.c.l.s4 1934713408
      %v10647 = vunpack.c.0.s8 %v10646
      %v10648 = vlaneseq
      %v10649 = vshrl.u32 %v10648, 7
      %v10650 = vsub.s32 %v10647, %v10649
      %v10651 = vrot.slane %v10637, %v10650
      %v10652 = vcombine.low %v10628, %v10644
      %v10653 = vcombine.high %v10628, %v10644
      %v10654 = vcombine.low %v10635, %v10651
      %v10655 = vcombine.high %v10635, %v10651
      %v10656 = vcombine.low %v9608, %v9615
      %v10658 = vunpack.c.l.s4 1983009808
      %v10659 = vunpack.c.0.s8 %v10658
      %v10660 = vlaneseq
      %v10661 = vshrl.u32 %v10660, 7
      %v10662 = vsub.s32 %v10659, %v10661
      %v10663 = vrot.slane %v10656, %v10662
      %v10664 = vcombine.low %v9632, %v9633
      %v10666 = vunpack.c.l.s4 1983009808
      %v10667 = vunpack.c.0.s8 %v10666
      %v10668 = vlaneseq
      %v10669 = vshrl.u32 %v10668, 7
      %v10670 = vsub.s32 %v10667, %v10669
      %v10671 = vrot.slane %v10664, %v10670
      %v10672 = vcombine.low %v9624, %v9631
      %v10674 = vunpack.c.l.s4 1983009808
      %v10675 = vunpack.c.0.s8 %v10674
      %v10676 = vlaneseq
      %v10677 = vshrl.u32 %v10676, 7
      %v10678 = vsub.s32 %v10675, %v10677
      %v10679 = vrot.slane %v10672, %v10678
      %v10680 = vcombine.low %v9634, %v9635
      %v10682 = vunpack.c.l.s4 1983009808
      %v10683 = vunpack.c.0.s8 %v10682
      %v10684 = vlaneseq
      %v10685 = vshrl.u32 %v10684, 7
      %v10686 = vsub.s32 %v10683, %v10685
      %v10687 = vrot.slane %v10680, %v10686
      %v10688 = vcombine.low %v10663, %v10671
      %v10689 = vcombine.high %v10663, %v10671
      %v10691 = vunpack.c.l.s4 1934713408
      %v10692 = vunpack.c.0.s8 %v10691
      %v10693 = vlaneseq
      %v10694 = vshrl.u32 %v10693, 7
      %v10695 = vsub.s32 %v10692, %v10694
      %v10696 = vrot.slane %v10688, %v10695
      %v10698 = vunpack.c.l.s4 1934713408
      %v10699 = vunpack.c.0.s8 %v10698
      %v10700 = vlaneseq
      %v10701 = vshrl.u32 %v10700, 7
      %v10702 = vsub.s32 %v10699, %v10701
      %v10703 = vrot.slane %v10689, %v10702
      %v10704 = vcombine.low %v10679, %v10687
      %v10705 = vcombine.high %v10679, %v10687
      %v10707 = vunpack.c.l.s4 1934713408
      %v10708 = vunpack.c.0.s8 %v10707
      %v10709 = vlaneseq
      %v10710 = vshrl.u32 %v10709, 7
      %v10711 = vsub.s32 %v10708, %v10710
      %v10712 = vrot.slane %v10704, %v10711
      %v10714 = vunpack.c.l.s4 1934713408
      %v10715 = vunpack.c.0.s8 %v10714
      %v10716 = vlaneseq
      %v10717 = vshrl.u32 %v10716, 7
      %v10718 = vsub.s32 %v10715, %v10717
      %v10719 = vrot.slane %v10705, %v10718
      %v10720 = vcombine.low %v10696, %v10712
      %v10721 = vcombine.high %v10696, %v10712
      %v10722 = vcombine.low %v10703, %v10719
      %v10723 = vcombine.high %v10703, %v10719
      %v10724 = vcombine.low %v9676, %v9683
      %v10726 = vunpack.c.l.s4 1983009808
      %v10727 = vunpack.c.0.s8 %v10726
      %v10728 = vlaneseq
      %v10729 = vshrl.u32 %v10728, 7
      %v10730 = vsub.s32 %v10727, %v10729
      %v10731 = vrot.slane %v10724, %v10730
      %v10732 = vcombine.low %v9700, %v9701
      %v10734 = vunpack.c.l.s4 1983009808
      %v10735 = vunpack.c.0.s8 %v10734
      %v10736 = vlaneseq
      %v10737 = vshrl.u32 %v10736, 7
      %v10738 = vsub.s32 %v10735, %v10737
      %v10739 = vrot.slane %v10732, %v10738
      %v10740 = vcombine.low %v9692, %v9699
      %v10742 = vunpack.c.l.s4 1983009808
      %v10743 = vunpack.c.0.s8 %v10742
      %v10744 = vlaneseq
      %v10745 = vshrl.u32 %v10744, 7
      %v10746 = vsub.s32 %v10743, %v10745
      %v10747 = vrot.slane %v10740, %v10746
      %v10748 = vcombine.low %v9702, %v9703
      %v10750 = vunpack.c.l.s4 1983009808
      %v10751 = vunpack.c.0.s8 %v10750
      %v10752 = vlaneseq
      %v10753 = vshrl.u32 %v10752, 7
      %v10754 = vsub.s32 %v10751, %v10753
      %v10755 = vrot.slane %v10748, %v10754
      %v10756 = vcombine.low %v10731, %v10739
      %v10757 = vcombine.high %v10731, %v10739
      %v10759 = vunpack.c.l.s4 1934713408
      %v10760 = vunpack.c.0.s8 %v10759
      %v10761 = vlaneseq
      %v10762 = vshrl.u32 %v10761, 7
      %v10763 = vsub.s32 %v10760, %v10762
      %v10764 = vrot.slane %v10756, %v10763
      %v10766 = vunpack.c.l.s4 1934713408
      %v10767 = vunpack.c.0.s8 %v10766
      %v10768 = vlaneseq
      %v10769 = vshrl.u32 %v10768, 7
      %v10770 = vsub.s32 %v10767, %v10769
      %v10771 = vrot.slane %v10757, %v10770
      %v10772 = vcombine.low %v10747, %v10755
      %v10773 = vcombine.high %v10747, %v10755
      %v10775 = vunpack.c.l.s4 1934713408
      %v10776 = vunpack.c.0.s8 %v10775
      %v10777 = vlaneseq
      %v10778 = vshrl.u32 %v10777, 7
      %v10779 = vsub.s32 %v10776, %v10778
      %v10780 = vrot.slane %v10772, %v10779
      %v10782 = vunpack.c.l.s4 1934713408
      %v10783 = vunpack.c.0.s8 %v10782
      %v10784 = vlaneseq
      %v10785 = vshrl.u32 %v10784, 7
      %v10786 = vsub.s32 %v10783, %v10785
      %v10787 = vrot.slane %v10773, %v10786
      %v10788 = vcombine.low %v10764, %v10780
      %v10789 = vcombine.high %v10764, %v10780
      %v10790 = vcombine.low %v10771, %v10787
      %v10791 = vcombine.high %v10771, %v10787
      %v10792 = vcombine.low %v9744, %v9751
      %v10794 = vunpack.c.l.s4 1983009808
      %v10795 = vunpack.c.0.s8 %v10794
      %v10796 = vlaneseq
      %v10797 = vshrl.u32 %v10796, 7
      %v10798 = vsub.s32 %v10795, %v10797
      %v10799 = vrot.slane %v10792, %v10798
      %v10800 = vcombine.low %v9768, %v9769
      %v10802 = vunpack.c.l.s4 1983009808
      %v10803 = vunpack.c.0.s8 %v10802
      %v10804 = vlaneseq
      %v10805 = vshrl.u32 %v10804, 7
      %v10806 = vsub.s32 %v10803, %v10805
      %v10807 = vrot.slane %v10800, %v10806
      %v10808 = vcombine.low %v9760, %v9767
      %v10810 = vunpack.c.l.s4 1983009808
      %v10811 = vunpack.c.0.s8 %v10810
      %v10812 = vlaneseq
      %v10813 = vshrl.u32 %v10812, 7
      %v10814 = vsub.s32 %v10811, %v10813
      %v10815 = vrot.slane %v10808, %v10814
      %v10816 = vcombine.low %v9770, %v9771
      %v10818 = vunpack.c.l.s4 1983009808
      %v10819 = vunpack.c.0.s8 %v10818
      %v10820 = vlaneseq
      %v10821 = vshrl.u32 %v10820, 7
      %v10822 = vsub.s32 %v10819, %v10821
      %v10823 = vrot.slane %v10816, %v10822
      %v10824 = vcombine.low %v10799, %v10807
      %v10825 = vcombine.high %v10799, %v10807
      %v10827 = vunpack.c.l.s4 1934713408
      %v10828 = vunpack.c.0.s8 %v10827
      %v10829 = vlaneseq
      %v10830 = vshrl.u32 %v10829, 7
      %v10831 = vsub.s32 %v10828, %v10830
      %v10832 = vrot.slane %v10824, %v10831
      %v10834 = vunpack.c.l.s4 1934713408
      %v10835 = vunpack.c.0.s8 %v10834
      %v10836 = vlaneseq
      %v10837 = vshrl.u32 %v10836, 7
      %v10838 = vsub.s32 %v10835, %v10837
      %v10839 = vrot.slane %v10825, %v10838
      %v10840 = vcombine.low %v10815, %v10823
      %v10841 = vcombine.high %v10815, %v10823
      %v10843 = vunpack.c.l.s4 1934713408
      %v10844 = vunpack.c.0.s8 %v10843
      %v10845 = vlaneseq
      %v10846 = vshrl.u32 %v10845, 7
      %v10847 = vsub.s32 %v10844, %v10846
      %v10848 = vrot.slane %v10840, %v10847
      %v10850 = vunpack.c.l.s4 1934713408
      %v10851 = vunpack.c.0.s8 %v10850
      %v10852 = vlaneseq
      %v10853 = vshrl.u32 %v10852, 7
      %v10854 = vsub.s32 %v10851, %v10853
      %v10855 = vrot.slane %v10841, %v10854
      %v10856 = vcombine.low %v10832, %v10848
      %v10857 = vcombine.high %v10832, %v10848
      %v10858 = vcombine.low %v10839, %v10855
      %v10859 = vcombine.high %v10839, %v10855
      %v10860 = vcombine.low %v9812, %v9819
      %v10862 = vunpack.c.l.s4 1983009808
      %v10863 = vunpack.c.0.s8 %v10862
      %v10864 = vlaneseq
      %v10865 = vshrl.u32 %v10864, 7
      %v10866 = vsub.s32 %v10863, %v10865
      %v10867 = vrot.slane %v10860, %v10866
      %v10868 = vcombine.low %v9836, %v9837
      %v10870 = vunpack.c.l.s4 1983009808
      %v10871 = vunpack.c.0.s8 %v10870
      %v10872 = vlaneseq
      %v10873 = vshrl.u32 %v10872, 7
      %v10874 = vsub.s32 %v10871, %v10873
      %v10875 = vrot.slane %v10868, %v10874
      %v10876 = vcombine.low %v9828, %v9835
      %v10878 = vunpack.c.l.s4 1983009808
      %v10879 = vunpack.c.0.s8 %v10878
      %v10880 = vlaneseq
      %v10881 = vshrl.u32 %v10880, 7
      %v10882 = vsub.s32 %v10879, %v10881
      %v10883 = vrot.slane %v10876, %v10882
      %v10884 = vcombine.low %v9838, %v9839
      %v10886 = vunpack.c.l.s4 1983009808
      %v10887 = vunpack.c.0.s8 %v10886
      %v10888 = vlaneseq
      %v10889 = vshrl.u32 %v10888, 7
      %v10890 = vsub.s32 %v10887, %v10889
      %v10891 = vrot.slane %v10884, %v10890
      %v10892 = vcombine.low %v10867, %v10875
      %v10893 = vcombine.high %v10867, %v10875
      %v10895 = vunpack.c.l.s4 1934713408
      %v10896 = vunpack.c.0.s8 %v10895
      %v10897 = vlaneseq
      %v10898 = vshrl.u32 %v10897, 7
      %v10899 = vsub.s32 %v10896, %v10898
      %v10900 = vrot.slane %v10892, %v10899
      %v10902 = vunpack.c.l.s4 1934713408
      %v10903 = vunpack.c.0.s8 %v10902
      %v10904 = vlaneseq
      %v10905 = vshrl.u32 %v10904, 7
      %v10906 = vsub.s32 %v10903, %v10905
      %v10907 = vrot.slane %v10893, %v10906
      %v10908 = vcombine.low %v10883, %v10891
      %v10909 = vcombine.high %v10883, %v10891
      %v10911 = vunpack.c.l.s4 1934713408
      %v10912 = vunpack.c.0.s8 %v10911
      %v10913 = vlaneseq
      %v10914 = vshrl.u32 %v10913, 7
      %v10915 = vsub.s32 %v10912, %v10914
      %v10916 = vrot.slane %v10908, %v10915
      %v10918 = vunpack.c.l.s4 1934713408
      %v10919 = vunpack.c.0.s8 %v10918
      %v10920 = vlaneseq
      %v10921 = vshrl.u32 %v10920, 7
      %v10922 = vsub.s32 %v10919, %v10921
      %v10923 = vrot.slane %v10909, %v10922
      %v10924 = vcombine.low %v10900, %v10916
      %v10925 = vcombine.high %v10900, %v10916
      %v10926 = vcombine.low %v10907, %v10923
      %v10927 = vcombine.high %v10907, %v10923
      %v10928 = vcombine.low %v9880, %v9887
      %v10930 = vunpack.c.l.s4 1983009808
      %v10931 = vunpack.c.0.s8 %v10930
      %v10932 = vlaneseq
      %v10933 = vshrl.u32 %v10932, 7
      %v10934 = vsub.s32 %v10931, %v10933
      %v10935 = vrot.slane %v10928, %v10934
      %v10936 = vcombine.low %v9904, %v9905
      %v10938 = vunpack.c.l.s4 1983009808
      %v10939 = vunpack.c.0.s8 %v10938
      %v10940 = vlaneseq
      %v10941 = vshrl.u32 %v10940, 7
      %v10942 = vsub.s32 %v10939, %v10941
      %v10943 = vrot.slane %v10936, %v10942
      %v10944 = vcombine.low %v9896, %v9903
      %v10946 = vunpack.c.l.s4 1983009808
      %v10947 = vunpack.c.0.s8 %v10946
      %v10948 = vlaneseq
      %v10949 = vshrl.u32 %v10948, 7
      %v10950 = vsub.s32 %v10947, %v10949
      %v10951 = vrot.slane %v10944, %v10950
      %v10952 = vcombine.low %v9906, %v9907
      %v10954 = vunpack.c.l.s4 1983009808
      %v10955 = vunpack.c.0.s8 %v10954
      %v10956 = vlaneseq
      %v10957 = vshrl.u32 %v10956, 7
      %v10958 = vsub.s32 %v10955, %v10957
      %v10959 = vrot.slane %v10952, %v10958
      %v10960 = vcombine.low %v10935, %v10943
      %v10961 = vcombine.high %v10935, %v10943
      %v10963 = vunpack.c.l.s4 1934713408
      %v10964 = vunpack.c.0.s8 %v10963
      %v10965 = vlaneseq
      %v10966 = vshrl.u32 %v10965, 7
      %v10967 = vsub.s32 %v10964, %v10966
      %v10968 = vrot.slane %v10960, %v10967
      %v10970 = vunpack.c.l.s4 1934713408
      %v10971 = vunpack.c.0.s8 %v10970
      %v10972 = vlaneseq
      %v10973 = vshrl.u32 %v10972, 7
      %v10974 = vsub.s32 %v10971, %v10973
      %v10975 = vrot.slane %v10961, %v10974
      %v10976 = vcombine.low %v10951, %v10959
      %v10977 = vcombine.high %v10951, %v10959
      %v10979 = vunpack.c.l.s4 1934713408
      %v10980 = vunpack.c.0.s8 %v10979
      %v10981 = vlaneseq
      %v10982 = vshrl.u32 %v10981, 7
      %v10983 = vsub.s32 %v10980, %v10982
      %v10984 = vrot.slane %v10976, %v10983
      %v10986 = vunpack.c.l.s4 1934713408
      %v10987 = vunpack.c.0.s8 %v10986
      %v10988 = vlaneseq
      %v10989 = vshrl.u32 %v10988, 7
      %v10990 = vsub.s32 %v10987, %v10989
      %v10991 = vrot.slane %v10977, %v10990
      %v10992 = vcombine.low %v10968, %v10984
      %v10993 = vcombine.high %v10968, %v10984
      %v10994 = vcombine.low %v10975, %v10991
      %v10995 = vcombine.high %v10975, %v10991
      %v10996 = vcombine.low %v9948, %v9955
      %v10998 = vunpack.c.l.s4 1983009808
      %v10999 = vunpack.c.0.s8 %v10998
      %v11000 = vlaneseq
      %v11001 = vshrl.u32 %v11000, 7
      %v11002 = vsub.s32 %v10999, %v11001
      %v11003 = vrot.slane %v10996, %v11002
      %v11004 = vcombine.low %v9972, %v9973
      %v11006 = vunpack.c.l.s4 1983009808
      %v11007 = vunpack.c.0.s8 %v11006
      %v11008 = vlaneseq
      %v11009 = vshrl.u32 %v11008, 7
      %v11010 = vsub.s32 %v11007, %v11009
      %v11011 = vrot.slane %v11004, %v11010
      %v11012 = vcombine.low %v9964, %v9971
      %v11014 = vunpack.c.l.s4 1983009808
      %v11015 = vunpack.c.0.s8 %v11014
      %v11016 = vlaneseq
      %v11017 = vshrl.u32 %v11016, 7
      %v11018 = vsub.s32 %v11015, %v11017
      %v11019 = vrot.slane %v11012, %v11018
      %v11020 = vcombine.low %v9974, %v9975
      %v11022 = vunpack.c.l.s4 1983009808
      %v11023 = vunpack.c.0.s8 %v11022
      %v11024 = vlaneseq
      %v11025 = vshrl.u32 %v11024, 7
      %v11026 = vsub.s32 %v11023, %v11025
      %v11027 = vrot.slane %v11020, %v11026
      %v11028 = vcombine.low %v11003, %v11011
      %v11029 = vcombine.high %v11003, %v11011
      %v11031 = vunpack.c.l.s4 1934713408
      %v11032 = vunpack.c.0.s8 %v11031
      %v11033 = vlaneseq
      %v11034 = vshrl.u32 %v11033, 7
      %v11035 = vsub.s32 %v11032, %v11034
      %v11036 = vrot.slane %v11028, %v11035
      %v11038 = vunpack.c.l.s4 1934713408
      %v11039 = vunpack.c.0.s8 %v11038
      %v11040 = vlaneseq
      %v11041 = vshrl.u32 %v11040, 7
      %v11042 = vsub.s32 %v11039, %v11041
      %v11043 = vrot.slane %v11029, %v11042
      %v11044 = vcombine.low %v11019, %v11027
      %v11045 = vcombine.high %v11019, %v11027
      %v11047 = vunpack.c.l.s4 1934713408
      %v11048 = vunpack.c.0.s8 %v11047
      %v11049 = vlaneseq
      %v11050 = vshrl.u32 %v11049, 7
      %v11051 = vsub.s32 %v11048, %v11050
      %v11052 = vrot.slane %v11044, %v11051
      %v11054 = vunpack.c.l.s4 1934713408
      %v11055 = vunpack.c.0.s8 %v11054
      %v11056 = vlaneseq
      %v11057 = vshrl.u32 %v11056, 7
      %v11058 = vsub.s32 %v11055, %v11057
      %v11059 = vrot.slane %v11045, %v11058
      %v11060 = vcombine.low %v11036, %v11052
      %v11061 = vcombine.high %v11036, %v11052
      %v11062 = vcombine.low %v11043, %v11059
      %v11063 = vcombine.high %v11043, %v11059
      %v11064 = vcombine.low %v10016, %v10023
      %v11066 = vunpack.c.l.s4 1983009808
      %v11067 = vunpack.c.0.s8 %v11066
      %v11068 = vlaneseq
      %v11069 = vshrl.u32 %v11068, 7
      %v11070 = vsub.s32 %v11067, %v11069
      %v11071 = vrot.slane %v11064, %v11070
      %v11072 = vcombine.low %v10040, %v10041
      %v11074 = vunpack.c.l.s4 1983009808
      %v11075 = vunpack.c.0.s8 %v11074
      %v11076 = vlaneseq
      %v11077 = vshrl.u32 %v11076, 7
      %v11078 = vsub.s32 %v11075, %v11077
      %v11079 = vrot.slane %v11072, %v11078
      %v11080 = vcombine.low %v10032, %v10039
      %v11082 = vunpack.c.l.s4 1983009808
      %v11083 = vunpack.c.0.s8 %v11082
      %v11084 = vlaneseq
      %v11085 = vshrl.u32 %v11084, 7
      %v11086 = vsub.s32 %v11083, %v11085
      %v11087 = vrot.slane %v11080, %v11086
      %v11088 = vcombine.low %v10042, %v10043
      %v11090 = vunpack.c.l.s4 1983009808
      %v11091 = vunpack.c.0.s8 %v11090
      %v11092 = vlaneseq
      %v11093 = vshrl.u32 %v11092, 7
      %v11094 = vsub.s32 %v11091, %v11093
      %v11095 = vrot.slane %v11088, %v11094
      %v11096 = vcombine.low %v11071, %v11079
      %v11097 = vcombine.high %v11071, %v11079
      %v11099 = vunpack.c.l.s4 1934713408
      %v11100 = vunpack.c.0.s8 %v11099
      %v11101 = vlaneseq
      %v11102 = vshrl.u32 %v11101, 7
      %v11103 = vsub.s32 %v11100, %v11102
      %v11104 = vrot.slane %v11096, %v11103
      %v11106 = vunpack.c.l.s4 1934713408
      %v11107 = vunpack.c.0.s8 %v11106
      %v11108 = vlaneseq
      %v11109 = vshrl.u32 %v11108, 7
      %v11110 = vsub.s32 %v11107, %v11109
      %v11111 = vrot.slane %v11097, %v11110
      %v11112 = vcombine.low %v11087, %v11095
      %v11113 = vcombine.high %v11087, %v11095
      %v11115 = vunpack.c.l.s4 1934713408
      %v11116 = vunpack.c.0.s8 %v11115
      %v11117 = vlaneseq
      %v11118 = vshrl.u32 %v11117, 7
      %v11119 = vsub.s32 %v11116, %v11118
      %v11120 = vrot.slane %v11112, %v11119
      %v11122 = vunpack.c.l.s4 1934713408
      %v11123 = vunpack.c.0.s8 %v11122
      %v11124 = vlaneseq
      %v11125 = vshrl.u32 %v11124, 7
      %v11126 = vsub.s32 %v11123, %v11125
      %v11127 = vrot.slane %v11113, %v11126
      %v11128 = vcombine.low %v11104, %v11120
      %v11129 = vcombine.high %v11104, %v11120
      %v11130 = vcombine.low %v11111, %v11127
      %v11131 = vcombine.high %v11111, %v11127
      %11148 = vrot.lane.b32.xlu0 %v10109, 8
      %v11149 = vpop.permute.xlu0 %11148
      %11150 = vrot.lane.b32.xlu0 %v10177, 8
      %v11151 = vpop.permute.xlu0 %11150
      %11152 = vrot.lane.b32.xlu0 %v10245, 8
      %v11153 = vpop.permute.xlu0 %11152
      %11154 = vrot.lane.b32.xlu0 %v10313, 8
      %v11155 = vpop.permute.xlu0 %11154
      %11156 = vrot.lane.b32.xlu0 %v10381, 8
      %v11157 = vpop.permute.xlu0 %11156
      %11158 = vrot.lane.b32.xlu0 %v10449, 8
      %v11159 = vpop.permute.xlu0 %11158
      %11160 = vrot.lane.b32.xlu0 %v10517, 8
      %v11161 = vpop.permute.xlu0 %11160
      %11162 = vrot.lane.b32.xlu0 %v10585, 8
      %v11163 = vpop.permute.xlu0 %11162
      %11164 = vrot.lane.b32.xlu0 %v10653, 8
      %v11165 = vpop.permute.xlu0 %11164
      %11166 = vrot.lane.b32.xlu0 %v10721, 8
      %v11167 = vpop.permute.xlu0 %11166
      %11168 = vrot.lane.b32.xlu0 %v10789, 8
      %v11169 = vpop.permute.xlu0 %11168
      %11170 = vrot.lane.b32.xlu0 %v10857, 8
      %v11171 = vpop.permute.xlu0 %11170
      %11172 = vrot.lane.b32.xlu0 %v10925, 8
      %v11173 = vpop.permute.xlu0 %11172
      %11174 = vrot.lane.b32.xlu0 %v10993, 8
      %v11175 = vpop.permute.xlu0 %11174
      %11176 = vrot.lane.b32.xlu0 %v11061, 8
      %v11177 = vpop.permute.xlu0 %11176
      %11178 = vrot.lane.b32.xlu0 %v11129, 8
      %v11179 = vpop.permute.xlu0 %11178
      %11212 = vrot.lane.b32.xlu0 %v10110, 16
      %v11213 = vpop.permute.xlu0 %11212
      %11214 = vrot.lane.b32.xlu0 %v10178, 16
      %v11215 = vpop.permute.xlu0 %11214
      %11216 = vrot.lane.b32.xlu0 %v10246, 16
      %v11217 = vpop.permute.xlu0 %11216
      %11218 = vrot.lane.b32.xlu0 %v10314, 16
      %v11219 = vpop.permute.xlu0 %11218
      %11220 = vrot.lane.b32.xlu0 %v10382, 16
      %v11221 = vpop.permute.xlu0 %11220
      %11222 = vrot.lane.b32.xlu0 %v10450, 16
      %v11223 = vpop.permute.xlu0 %11222
      %11224 = vrot.lane.b32.xlu0 %v10518, 16
      %v11225 = vpop.permute.xlu0 %11224
      %11226 = vrot.lane.b32.xlu0 %v10586, 16
      %v11227 = vpop.permute.xlu0 %11226
      %11228 = vrot.lane.b32.xlu0 %v10654, 16
      %v11229 = vpop.permute.xlu0 %11228
      %11230 = vrot.lane.b32.xlu0 %v10722, 16
      %v11231 = vpop.permute.xlu0 %11230
      %11232 = vrot.lane.b32.xlu0 %v10790, 16
      %v11233 = vpop.permute.xlu0 %11232
      %11234 = vrot.lane.b32.xlu0 %v10858, 16
      %v11235 = vpop.permute.xlu0 %11234
      %11236 = vrot.lane.b32.xlu0 %v10926, 16
      %v11237 = vpop.permute.xlu0 %11236
      %11238 = vrot.lane.b32.xlu0 %v10994, 16
      %v11239 = vpop.permute.xlu0 %11238
      %11240 = vrot.lane.b32.xlu0 %v11062, 16
      %v11241 = vpop.permute.xlu0 %11240
      %11242 = vrot.lane.b32.xlu0 %v11130, 16
      %v11243 = vpop.permute.xlu0 %11242
      %11276 = vrot.lane.b32.xlu0 %v10111, 24
      %v11277 = vpop.permute.xlu0 %11276
      %11278 = vrot.lane.b32.xlu0 %v10179, 24
      %v11279 = vpop.permute.xlu0 %11278
      %11280 = vrot.lane.b32.xlu0 %v10247, 24
      %v11281 = vpop.permute.xlu0 %11280
      %11282 = vrot.lane.b32.xlu0 %v10315, 24
      %v11283 = vpop.permute.xlu0 %11282
      %11284 = vrot.lane.b32.xlu0 %v10383, 24
      %v11285 = vpop.permute.xlu0 %11284
      %11286 = vrot.lane.b32.xlu0 %v10451, 24
      %v11287 = vpop.permute.xlu0 %11286
      %11288 = vrot.lane.b32.xlu0 %v10519, 24
      %v11289 = vpop.permute.xlu0 %11288
      %11290 = vrot.lane.b32.xlu0 %v10587, 24
      %v11291 = vpop.permute.xlu0 %11290
      %11292 = vrot.lane.b32.xlu0 %v10655, 24
      %v11293 = vpop.permute.xlu0 %11292
      %11294 = vrot.lane.b32.xlu0 %v10723, 24
      %v11295 = vpop.permute.xlu0 %11294
      %11296 = vrot.lane.b32.xlu0 %v10791, 24
      %v11297 = vpop.permute.xlu0 %11296
      %11298 = vrot.lane.b32.xlu0 %v10859, 24
      %v11299 = vpop.permute.xlu0 %11298
      %11300 = vrot.lane.b32.xlu0 %v10927, 24
      %v11301 = vpop.permute.xlu0 %11300
      %11302 = vrot.lane.b32.xlu0 %v10995, 24
      %v11303 = vpop.permute.xlu0 %11302
      %11304 = vrot.lane.b32.xlu0 %v11063, 24
      %v11305 = vpop.permute.xlu0 %11304
      %11306 = vrot.lane.b32.xlu0 %v11131, 24
      %v11307 = vpop.permute.xlu0 %11306
      %v11324 = vsel %vm7379, %v10108, %v11149
      %v11325 = vsel %vm7379, %v10176, %v11151
      %v11326 = vsel %vm7379, %v10244, %v11153
      %v11327 = vsel %vm7379, %v10312, %v11155
      %v11328 = vsel %vm7379, %v10380, %v11157
      %v11329 = vsel %vm7379, %v10448, %v11159
      %v11330 = vsel %vm7379, %v10516, %v11161
      %v11331 = vsel %vm7379, %v10584, %v11163
      %v11332 = vsel %vm7379, %v10652, %v11165
      %v11333 = vsel %vm7379, %v10720, %v11167
      %v11334 = vsel %vm7379, %v10788, %v11169
      %v11335 = vsel %vm7379, %v10856, %v11171
      %v11336 = vsel %vm7379, %v10924, %v11173
      %v11337 = vsel %vm7379, %v10992, %v11175
      %v11338 = vsel %vm7379, %v11060, %v11177
      %v11339 = vsel %vm7379, %v11128, %v11179
      %vm11340 = vcmask 130048
      %v11341 = vsel %vm11340, %v11324, %v11213
      %v11342 = vsel %vm11340, %v11325, %v11215
      %v11343 = vsel %vm11340, %v11326, %v11217
      %v11344 = vsel %vm11340, %v11327, %v11219
      %v11345 = vsel %vm11340, %v11328, %v11221
      %v11346 = vsel %vm11340, %v11329, %v11223
      %v11347 = vsel %vm11340, %v11330, %v11225
      %v11348 = vsel %vm11340, %v11331, %v11227
      %v11349 = vsel %vm11340, %v11332, %v11229
      %v11350 = vsel %vm11340, %v11333, %v11231
      %v11351 = vsel %vm11340, %v11334, %v11233
      %v11352 = vsel %vm11340, %v11335, %v11235
      %v11353 = vsel %vm11340, %v11336, %v11237
      %v11354 = vsel %vm11340, %v11337, %v11239
      %v11355 = vsel %vm11340, %v11338, %v11241
      %v11356 = vsel %vm11340, %v11339, %v11243
      %vm11357 = vcmask 195584
      %v11358 = vsel %vm11357, %v11341, %v11277
      %v11359 = vsel %vm11357, %v11342, %v11279
      %v11360 = vsel %vm11357, %v11343, %v11281
      %v11361 = vsel %vm11357, %v11344, %v11283
      %v11362 = vsel %vm11357, %v11345, %v11285
      %v11363 = vsel %vm11357, %v11346, %v11287
      %v11364 = vsel %vm11357, %v11347, %v11289
      %v11365 = vsel %vm11357, %v11348, %v11291
      %v11366 = vsel %vm11357, %v11349, %v11293
      %v11367 = vsel %vm11357, %v11350, %v11295
      %v11368 = vsel %vm11357, %v11351, %v11297
      %v11369 = vsel %vm11357, %v11352, %v11299
      %v11370 = vsel %vm11357, %v11353, %v11301
      %v11371 = vsel %vm11357, %v11354, %v11303
      %v11372 = vsel %vm11357, %v11355, %v11305
      %v11373 = vsel %vm11357, %v11356, %v11307
      %v11374 = vpack.c.bf16 %v11359, %v11358
      %v11375 = vpack.c.bf16 %v11361, %v11360
      %v11376 = vpack.c.bf16 %v11363, %v11362
      %v11377 = vpack.c.bf16 %v11365, %v11364
      %v11378 = vpack.c.bf16 %v11367, %v11366
      %v11379 = vpack.c.bf16 %v11369, %v11368
      %v11380 = vpack.c.bf16 %v11371, %v11370
      %v11381 = vpack.c.bf16 %v11373, %v11372
      %v11382 = vld [vmem:[%s6] sm:$0xf]
      %v11383 = vld [vmem:[%s6 + $0x4] sm:$0xf]
      %v11384 = vld [vmem:[%s6 + $0x8] sm:$0xf]
      %v11385 = vld [vmem:[%s6 + $0xc] sm:$0xf]
      %v11386 = vld [vmem:[%s7] sm:$0x1]
      %v11388 = vlaneseq
      %v11389 = vshrl.u32 %v11388, 7
      %v11390 = vsub.s32 0, %v11389
      %v11391 = vrot.slane %v11386, %v11390
      %v11397 = vunpack.c.l.b16 %v11382
      %v11398 = vunpack.c.l.b16 %v11383
      %v11399 = vunpack.c.l.b16 %v11384
      %v11400 = vunpack.c.l.b16 %v11385
      %v11401 = vpack.c.b16 %v11398, %v11397
      %v11402 = vpack.c.b16 %v11400, %v11399
      %v11406 = vsel %vm487, %v11374, 0
      %v11409 = vsel %vm487, %v11375, 0
      %v11412 = vsel %vm487, %v11376, 0
      %v11415 = vsel %vm487, %v11377, 0
      %v11418 = vsel %vm487, %v11378, 0
      %v11421 = vsel %vm487, %v11379, 0
      %v11424 = vsel %vm487, %v11380, 0
      %v11427 = vsel %vm487, %v11381, 0
      %11429 = vmatprep.subr.bf16.mxu0 0
      %11430 = vmatpush1.bf16.msra.mxu0 0
      %11431 = vmatprep.subr.bf16.mxu0 0
      %11432 = vmatpush1.bf16.msra.mxu0 0
      %11433 = vmatprep.subr.bf16.mxu0 0
      %11434 = vmatpush1.bf16.msra.mxu0 0
      %11435 = vmatprep.subr.bf16.mxu0 0
      %11436 = vmatpush1.bf16.msra.mxu0 0
      %11437 = vmatprep.subr.bf16.mxu0 0
      %11438 = vmatpush1.bf16.msra.mxu0 0
      %11439 = vmatprep.subr.bf16.mxu0 0
      %11440 = vmatpush1.bf16.msra.mxu0 0
      %11441 = vmatprep.subr.bf16.mxu0 0
      %11442 = vmatpush1.bf16.msra.mxu0 %v11402
      %11443 = vmatprep.subr.bf16.mxu0 0
      %11444 = vmatpush1.bf16.msra.mxu0 %v11401
      %11445 = vmatprep.subr.bf16.mxu0 0
      %11446 = vmatpush2.bf16.msra.mxu0 0
      %11447 = vmatprep.subr.bf16.mxu0 0
      %11448 = vmatpush2.bf16.msra.mxu0 0
      %11449 = vmatprep.subr.bf16.mxu0 0
      %11450 = vmatpush2.bf16.msra.mxu0 0
      %11451 = vmatprep.subr.bf16.mxu0 0
      %11452 = vmatpush2.bf16.msra.mxu0 0
      %11453 = vmatprep.subr.bf16.mxu0 0
      %11454 = vmatpush2.bf16.msra.mxu0 0
      %11455 = vmatprep.subr.bf16.mxu0 0
      %11456 = vmatpush2.bf16.msra.mxu0 0
      %11457 = vmatprep.subr.bf16.mxu0 0
      %11458 = vmatpush2.bf16.msra.mxu0 0
      %11459 = vmatprep.subr.bf16.mxu0 0
      %11460 = vmatpush2.bf16.msra.mxu0 0
      %11461 = vmatprep.mubr.bf16.mxu0 0
      %11462 = vmatmul.mubr.bf16.gmra.mxu0 %v11406
      %v11463 = vpop.f32.mrf.mxu0
      %v11464 = vadd.f32 %v11391, %v11463
      %v11465 = vpop.f32.mrf.mxu0
      %v11466 = vpop.f32.mrf.mxu0
      %v11467 = vadd.f32 %v11391, %v11466
      %v11468 = vpop.f32.mrf.mxu0
      %11469 = vmatprep.mubr.bf16.mxu0 0
      %11470 = vmatmul.mubr.bf16.gmra.mxu0 %v11409
      %v11471 = vpop.f32.mrf.mxu0
      %v11472 = vadd.f32 %v11391, %v11471
      %v11473 = vpop.f32.mrf.mxu0
      %v11474 = vpop.f32.mrf.mxu0
      %v11475 = vadd.f32 %v11391, %v11474
      %v11476 = vpop.f32.mrf.mxu0
      %11477 = vmatprep.mubr.bf16.mxu0 0
      %11478 = vmatmul.mubr.bf16.gmra.mxu0 %v11412
      %v11479 = vpop.f32.mrf.mxu0
      %v11480 = vadd.f32 %v11391, %v11479
      %v11481 = vpop.f32.mrf.mxu0
      %v11482 = vpop.f32.mrf.mxu0
      %v11483 = vadd.f32 %v11391, %v11482
      %v11484 = vpop.f32.mrf.mxu0
      %11485 = vmatprep.mubr.bf16.mxu0 0
      %11486 = vmatmul.mubr.bf16.gmra.mxu0 %v11415
      %v11487 = vpop.f32.mrf.mxu0
      %v11488 = vadd.f32 %v11391, %v11487
      %v11489 = vpop.f32.mrf.mxu0
      %v11490 = vpop.f32.mrf.mxu0
      %v11491 = vadd.f32 %v11391, %v11490
      %v11492 = vpop.f32.mrf.mxu0
      %11493 = vmatprep.mubr.bf16.mxu0 0
      %11494 = vmatmul.mubr.bf16.gmra.mxu0 %v11418
      %v11495 = vpop.f32.mrf.mxu0
      %v11496 = vadd.f32 %v11391, %v11495
      %v11497 = vpop.f32.mrf.mxu0
      %v11498 = vpop.f32.mrf.mxu0
      %v11499 = vadd.f32 %v11391, %v11498
      %v11500 = vpop.f32.mrf.mxu0
      %11501 = vmatprep.mubr.bf16.mxu0 0
      %11502 = vmatmul.mubr.bf16.gmra.mxu0 %v11421
      %v11503 = vpop.f32.mrf.mxu0
      %v11504 = vadd.f32 %v11391, %v11503
      %v11505 = vpop.f32.mrf.mxu0
      %v11506 = vpop.f32.mrf.mxu0
      %v11507 = vadd.f32 %v11391, %v11506
      %v11508 = vpop.f32.mrf.mxu0
      %11509 = vmatprep.mubr.bf16.mxu0 0
      %11510 = vmatmul.mubr.bf16.gmra.mxu0 %v11424
      %v11511 = vpop.f32.mrf.mxu0
      %v11512 = vadd.f32 %v11391, %v11511
      %v11513 = vpop.f32.mrf.mxu0
      %v11514 = vpop.f32.mrf.mxu0
      %v11515 = vadd.f32 %v11391, %v11514
      %v11516 = vpop.f32.mrf.mxu0
      %11517 = vmatprep.mubr.bf16.mxu0 0
      %11518 = vmatmul.mubr.bf16.gmra.mxu0 %v11427
      %v11519 = vpop.f32.mrf.mxu0
      %v11520 = vadd.f32 %v11391, %v11519
      %v11521 = vpop.f32.mrf.mxu0
      %v11522 = vpop.f32.mrf.mxu0
      %v11523 = vadd.f32 %v11391, %v11522
      %v11524 = vpop.f32.mrf.mxu0
      %11525 = vdwg.mxu0
      %v11526 = vadd.f32 %v469, %v11464
      %v11527 = vadd.f32 %v470, %v11467
      %v11528 = vadd.f32 %v471, %v11472
      %v11529 = vadd.f32 %v472, %v11475
      %v11530 = vadd.f32 %v473, %v11480
      %v11531 = vadd.f32 %v474, %v11483
      %v11532 = vadd.f32 %v475, %v11488
      %v11533 = vadd.f32 %v476, %v11491
      %v11534 = vadd.f32 %v477, %v11496
      %v11535 = vadd.f32 %v478, %v11499
      %v11536 = vadd.f32 %v479, %v11504
      %v11537 = vadd.f32 %v480, %v11507
      %v11538 = vadd.f32 %v481, %v11512
      %v11539 = vadd.f32 %v482, %v11515
      %v11540 = vadd.f32 %v483, %v11520
      %v11541 = vadd.f32 %v484, %v11523
      %v11542 = vld [vmem:[%s8] sm:$0x1]
      %v11543 = vld [vmem:[%s9] sm:$0x1]
      %v11544 = vsel %vm487, %v11526, 0.0
      %11545 = vadd.xlane.f32.xlu0 %v11544
      %v11546 = vpop.xlane.xlu0 %11545
      %v11547 = vsel %vm487, %v11527, 0.0
      %11548 = vadd.xlane.f32.xlu0 %v11547
      %v11549 = vpop.xlane.xlu0 %11548
      %v11550 = vsel %vm487, %v11528, 0.0
      %11551 = vadd.xlane.f32.xlu0 %v11550
      %v11552 = vpop.xlane.xlu0 %11551
      %v11553 = vsel %vm487, %v11529, 0.0
      %11554 = vadd.xlane.f32.xlu0 %v11553
      %v11555 = vpop.xlane.xlu0 %11554
      %v11556 = vsel %vm487, %v11530, 0.0
      %11557 = vadd.xlane.f32.xlu0 %v11556
      %v11558 = vpop.xlane.xlu0 %11557
      %v11559 = vsel %vm487, %v11531, 0.0
      %11560 = vadd.xlane.f32.xlu0 %v11559
      %v11561 = vpop.xlane.xlu0 %11560
      %v11562 = vsel %vm487, %v11532, 0.0
      %11563 = vadd.xlane.f32.xlu0 %v11562
      %v11564 = vpop.xlane.xlu0 %11563
      %v11565 = vsel %vm487, %v11533, 0.0
      %11566 = vadd.xlane.f32.xlu0 %v11565
      %v11567 = vpop.xlane.xlu0 %11566
      %v11568 = vsel %vm487, %v11534, 0.0
      %11569 = vadd.xlane.f32.xlu0 %v11568
      %v11570 = vpop.xlane.xlu0 %11569
      %v11571 = vsel %vm487, %v11535, 0.0
      %11572 = vadd.xlane.f32.xlu0 %v11571
      %v11573 = vpop.xlane.xlu0 %11572
      %v11574 = vsel %vm487, %v11536, 0.0
      %11575 = vadd.xlane.f32.xlu0 %v11574
      %v11576 = vpop.xlane.xlu0 %11575
      %v11577 = vsel %vm487, %v11537, 0.0
      %11578 = vadd.xlane.f32.xlu0 %v11577
      %v11579 = vpop.xlane.xlu0 %11578
      %v11580 = vsel %vm487, %v11538, 0.0
      %11581 = vadd.xlane.f32.xlu0 %v11580
      %v11582 = vpop.xlane.xlu0 %11581
      %v11583 = vsel %vm487, %v11539, 0.0
      %11584 = vadd.xlane.f32.xlu0 %v11583
      %v11585 = vpop.xlane.xlu0 %11584
      %v11586 = vsel %vm487, %v11540, 0.0
      %11587 = vadd.xlane.f32.xlu0 %v11586
      %v11588 = vpop.xlane.xlu0 %11587
      %v11589 = vsel %vm487, %v11541, 0.0
      %11590 = vadd.xlane.f32.xlu0 %v11589
      %v11591 = vpop.xlane.xlu0 %11590
      %v11592 = vmul.f32 %v11546, %v536
      %v11593 = vmul.f32 %v11549, %v536
      %v11594 = vmul.f32 %v11552, %v536
      %v11595 = vmul.f32 %v11555, %v536
      %v11596 = vmul.f32 %v11558, %v536
      %v11597 = vmul.f32 %v11561, %v536
      %v11598 = vmul.f32 %v11564, %v536
      %v11599 = vmul.f32 %v11567, %v536
      %v11600 = vmul.f32 %v11570, %v536
      %v11601 = vmul.f32 %v11573, %v536
      %v11602 = vmul.f32 %v11576, %v536
      %v11603 = vmul.f32 %v11579, %v536
      %v11604 = vmul.f32 %v11582, %v536
      %v11605 = vmul.f32 %v11585, %v536
      %v11606 = vmul.f32 %v11588, %v536
      %v11607 = vmul.f32 %v11591, %v536
      %v11608 = vsub.f32 %v11526, %v11592
      %v11609 = vsub.f32 %v11527, %v11593
      %v11610 = vsub.f32 %v11528, %v11594
      %v11611 = vsub.f32 %v11529, %v11595
      %v11612 = vsub.f32 %v11530, %v11596
      %v11613 = vsub.f32 %v11531, %v11597
      %v11614 = vsub.f32 %v11532, %v11598
      %v11615 = vsub.f32 %v11533, %v11599
      %v11616 = vsub.f32 %v11534, %v11600
      %v11617 = vsub.f32 %v11535, %v11601
      %v11618 = vsub.f32 %v11536, %v11602
      %v11619 = vsub.f32 %v11537, %v11603
      %v11620 = vsub.f32 %v11538, %v11604
      %v11621 = vsub.f32 %v11539, %v11605
      %v11622 = vsub.f32 %v11540, %v11606
      %v11623 = vsub.f32 %v11541, %v11607
      %v11624 = vmul.f32 %v11608, %v11608
      %v11625 = vmul.f32 %v11609, %v11609
      %v11626 = vmul.f32 %v11610, %v11610
      %v11627 = vmul.f32 %v11611, %v11611
      %v11628 = vmul.f32 %v11612, %v11612
      %v11629 = vmul.f32 %v11613, %v11613
      %v11630 = vmul.f32 %v11614, %v11614
      %v11631 = vmul.f32 %v11615, %v11615
      %v11632 = vmul.f32 %v11616, %v11616
      %v11633 = vmul.f32 %v11617, %v11617
      %v11634 = vmul.f32 %v11618, %v11618
      %v11635 = vmul.f32 %v11619, %v11619
      %v11636 = vmul.f32 %v11620, %v11620
      %v11637 = vmul.f32 %v11621, %v11621
      %v11638 = vmul.f32 %v11622, %v11622
      %v11639 = vmul.f32 %v11623, %v11623
      %v11640 = vsel %vm487, %v11624, 0.0
      %11641 = vadd.xlane.f32.xlu0 %v11640
      %v11642 = vpop.xlane.xlu0 %11641
      %v11643 = vsel %vm487, %v11625, 0.0
      %11644 = vadd.xlane.f32.xlu0 %v11643
      %v11645 = vpop.xlane.xlu0 %11644
      %v11646 = vsel %vm487, %v11626, 0.0
      %11647 = vadd.xlane.f32.xlu0 %v11646
      %v11648 = vpop.xlane.xlu0 %11647
      %v11649 = vsel %vm487, %v11627, 0.0
      %11650 = vadd.xlane.f32.xlu0 %v11649
      %v11651 = vpop.xlane.xlu0 %11650
      %v11652 = vsel %vm487, %v11628, 0.0
      %11653 = vadd.xlane.f32.xlu0 %v11652
      %v11654 = vpop.xlane.xlu0 %11653
      %v11655 = vsel %vm487, %v11629, 0.0
      %11656 = vadd.xlane.f32.xlu0 %v11655
      %v11657 = vpop.xlane.xlu0 %11656
      %v11658 = vsel %vm487, %v11630, 0.0
      %11659 = vadd.xlane.f32.xlu0 %v11658
      %v11660 = vpop.xlane.xlu0 %11659
      %v11661 = vsel %vm487, %v11631, 0.0
      %11662 = vadd.xlane.f32.xlu0 %v11661
      %v11663 = vpop.xlane.xlu0 %11662
      %v11664 = vsel %vm487, %v11632, 0.0
      %11665 = vadd.xlane.f32.xlu0 %v11664
      %v11666 = vpop.xlane.xlu0 %11665
      %v11667 = vsel %vm487, %v11633, 0.0
      %11668 = vadd.xlane.f32.xlu0 %v11667
      %v11669 = vpop.xlane.xlu0 %11668
      %v11670 = vsel %vm487, %v11634, 0.0
      %11671 = vadd.xlane.f32.xlu0 %v11670
      %v11672 = vpop.xlane.xlu0 %11671
      %v11673 = vsel %vm487, %v11635, 0.0
      %11674 = vadd.xlane.f32.xlu0 %v11673
      %v11675 = vpop.xlane.xlu0 %11674
      %v11676 = vsel %vm487, %v11636, 0.0
      %11677 = vadd.xlane.f32.xlu0 %v11676
      %v11678 = vpop.xlane.xlu0 %11677
      %v11679 = vsel %vm487, %v11637, 0.0
      %11680 = vadd.xlane.f32.xlu0 %v11679
      %v11681 = vpop.xlane.xlu0 %11680
      %v11682 = vsel %vm487, %v11638, 0.0
      %11683 = vadd.xlane.f32.xlu0 %v11682
      %v11684 = vpop.xlane.xlu0 %11683
      %v11685 = vsel %vm487, %v11639, 0.0
      %11686 = vadd.xlane.f32.xlu0 %v11685
      %v11687 = vpop.xlane.xlu0 %11686
      %v11688 = vmul.f32 %v11642, %v536
      %v11689 = vmul.f32 %v11645, %v536
      %v11690 = vmul.f32 %v11648, %v536
      %v11691 = vmul.f32 %v11651, %v536
      %v11692 = vmul.f32 %v11654, %v536
      %v11693 = vmul.f32 %v11657, %v536
      %v11694 = vmul.f32 %v11660, %v536
      %v11695 = vmul.f32 %v11663, %v536
      %v11696 = vmul.f32 %v11666, %v536
      %v11697 = vmul.f32 %v11669, %v536
      %v11698 = vmul.f32 %v11672, %v536
      %v11699 = vmul.f32 %v11675, %v536
      %v11700 = vmul.f32 %v11678, %v536
      %v11701 = vmul.f32 %v11681, %v536
      %v11702 = vmul.f32 %v11684, %v536
      %v11703 = vmul.f32 %v11687, %v536
      %v11704 = vadd.f32 %v11688, 1e-05
      %v11705 = vadd.f32 %v11689, 1e-05
      %v11706 = vadd.f32 %v11690, 1e-05
      %v11707 = vadd.f32 %v11691, 1e-05
      %v11708 = vadd.f32 %v11692, 1e-05
      %v11709 = vadd.f32 %v11693, 1e-05
      %v11710 = vadd.f32 %v11694, 1e-05
      %v11711 = vadd.f32 %v11695, 1e-05
      %v11712 = vadd.f32 %v11696, 1e-05
      %v11713 = vadd.f32 %v11697, 1e-05
      %v11714 = vadd.f32 %v11698, 1e-05
      %v11715 = vadd.f32 %v11699, 1e-05
      %v11716 = vadd.f32 %v11700, 1e-05
      %v11717 = vadd.f32 %v11701, 1e-05
      %v11718 = vadd.f32 %v11702, 1e-05
      %v11719 = vadd.f32 %v11703, 1e-05
      %v11720 = vrsqrt.pop %v11704
      %v11721 = vrsqrt.pop %v11705
      %v11722 = vrsqrt.pop %v11706
      %v11723 = vrsqrt.pop %v11707
      %v11724 = vrsqrt.pop %v11708
      %v11725 = vrsqrt.pop %v11709
      %v11726 = vrsqrt.pop %v11710
      %v11727 = vrsqrt.pop %v11711
      %v11728 = vrsqrt.pop %v11712
      %v11729 = vrsqrt.pop %v11713
      %v11730 = vrsqrt.pop %v11714
      %v11731 = vrsqrt.pop %v11715
      %v11732 = vrsqrt.pop %v11716
      %v11733 = vrsqrt.pop %v11717
      %v11734 = vrsqrt.pop %v11718
      %v11735 = vrsqrt.pop %v11719
      %v11736 = vmul.f32 %v11608, %v11720
      %v11737 = vmul.f32 %v11609, %v11721
      %v11738 = vmul.f32 %v11610, %v11722
      %v11739 = vmul.f32 %v11611, %v11723
      %v11740 = vmul.f32 %v11612, %v11724
      %v11741 = vmul.f32 %v11613, %v11725
      %v11742 = vmul.f32 %v11614, %v11726
      %v11743 = vmul.f32 %v11615, %v11727
      %v11744 = vmul.f32 %v11616, %v11728
      %v11745 = vmul.f32 %v11617, %v11729
      %v11746 = vmul.f32 %v11618, %v11730
      %v11747 = vmul.f32 %v11619, %v11731
      %v11748 = vmul.f32 %v11620, %v11732
      %v11749 = vmul.f32 %v11621, %v11733
      %v11750 = vmul.f32 %v11622, %v11734
      %v11751 = vmul.f32 %v11623, %v11735
      %v11753 = vlaneseq
      %v11754 = vshrl.u32 %v11753, 7
      %v11755 = vsub.s32 0, %v11754
      %v11756 = vrot.slane %v11542, %v11755
      %v11758 = vmul.f32 %v11736, %v11756
      %v11759 = vmul.f32 %v11737, %v11756
      %v11760 = vmul.f32 %v11738, %v11756
      %v11761 = vmul.f32 %v11739, %v11756
      %v11762 = vmul.f32 %v11740, %v11756
      %v11763 = vmul.f32 %v11741, %v11756
      %v11764 = vmul.f32 %v11742, %v11756
      %v11765 = vmul.f32 %v11743, %v11756
      %v11766 = vmul.f32 %v11744, %v11756
      %v11767 = vmul.f32 %v11745, %v11756
      %v11768 = vmul.f32 %v11746, %v11756
      %v11769 = vmul.f32 %v11747, %v11756
      %v11770 = vmul.f32 %v11748, %v11756
      %v11771 = vmul.f32 %v11749, %v11756
      %v11772 = vmul.f32 %v11750, %v11756
      %v11773 = vmul.f32 %v11751, %v11756
      %v11775 = vlaneseq
      %v11776 = vshrl.u32 %v11775, 7
      %v11777 = vsub.s32 0, %v11776
      %v11778 = vrot.slane %v11543, %v11777
      %v11780 = vadd.f32 %v11758, %v11778
      %v11781 = vadd.f32 %v11759, %v11778
      %v11782 = vadd.f32 %v11760, %v11778
      %v11783 = vadd.f32 %v11761, %v11778
      %v11784 = vadd.f32 %v11762, %v11778
      %v11785 = vadd.f32 %v11763, %v11778
      %v11786 = vadd.f32 %v11764, %v11778
      %v11787 = vadd.f32 %v11765, %v11778
      %v11788 = vadd.f32 %v11766, %v11778
      %v11789 = vadd.f32 %v11767, %v11778
      %v11790 = vadd.f32 %v11768, %v11778
      %v11791 = vadd.f32 %v11769, %v11778
      %v11792 = vadd.f32 %v11770, %v11778
      %v11793 = vadd.f32 %v11771, %v11778
      %v11794 = vadd.f32 %v11772, %v11778
      %v11795 = vadd.f32 %v11773, %v11778
      %v11796 = vpack.c.bf16 %v11781, %v11780
      %v11797 = vpack.c.bf16 %v11783, %v11782
      %v11798 = vpack.c.bf16 %v11785, %v11784
      %v11799 = vpack.c.bf16 %v11787, %v11786
      %v11800 = vpack.c.bf16 %v11789, %v11788
      %v11801 = vpack.c.bf16 %v11791, %v11790
      %v11802 = vpack.c.bf16 %v11793, %v11792
      %v11803 = vpack.c.bf16 %v11795, %v11794
      %v11804 = vld [vmem:[%s10] sm:$0xf]
      %v11805 = vld [vmem:[%s10 + $0x4] sm:$0xf]
      %v11806 = vld [vmem:[%s10 + $0x8] sm:$0xf]
      %v11807 = vld [vmem:[%s10 + $0xc] sm:$0xf]
      %v11808 = vld [vmem:[%s11] sm:$0x1]
      %v11810 = vlaneseq
      %v11811 = vshrl.u32 %v11810, 7
      %v11812 = vsub.s32 0, %v11811
      %v11813 = vrot.slane %v11808, %v11812
      %v11819 = vunpack.c.l.b16 %v11804
      %v11820 = vunpack.c.l.b16 %v11805
      %v11821 = vunpack.c.l.b16 %v11806
      %v11822 = vunpack.c.l.b16 %v11807
      %v11823 = vpack.c.b16 %v11820, %v11819
      %v11824 = vpack.c.b16 %v11822, %v11821
      %v11828 = vsel %vm487, %v11796, 0
      %v11831 = vsel %vm487, %v11797, 0
      %v11834 = vsel %vm487, %v11798, 0
      %v11837 = vsel %vm487, %v11799, 0
      %v11840 = vsel %vm487, %v11800, 0
      %v11843 = vsel %vm487, %v11801, 0
      %v11846 = vsel %vm487, %v11802, 0
      %v11849 = vsel %vm487, %v11803, 0
      %11851 = vmatprep.subr.bf16.mxu0 0
      %11852 = vmatpush1.bf16.msra.mxu0 0
      %11853 = vmatprep.subr.bf16.mxu0 0
      %11854 = vmatpush1.bf16.msra.mxu0 0
      %11855 = vmatprep.subr.bf16.mxu0 0
      %11856 = vmatpush1.bf16.msra.mxu0 0
      %11857 = vmatprep.subr.bf16.mxu0 0
      %11858 = vmatpush1.bf16.msra.mxu0 0
      %11859 = vmatprep.subr.bf16.mxu0 0
      %11860 = vmatpush1.bf16.msra.mxu0 0
      %11861 = vmatprep.subr.bf16.mxu0 0
      %11862 = vmatpush1.bf16.msra.mxu0 0
      %11863 = vmatprep.subr.bf16.mxu0 0
      %11864 = vmatpush1.bf16.msra.mxu0 %v11824
      %11865 = vmatprep.subr.bf16.mxu0 0
      %11866 = vmatpush1.bf16.msra.mxu0 %v11823
      %11867 = vmatprep.subr.bf16.mxu0 0
      %11868 = vmatpush2.bf16.msra.mxu0 0
      %11869 = vmatprep.subr.bf16.mxu0 0
      %11870 = vmatpush2.bf16.msra.mxu0 0
      %11871 = vmatprep.subr.bf16.mxu0 0
      %11872 = vmatpush2.bf16.msra.mxu0 0
      %11873 = vmatprep.subr.bf16.mxu0 0
      %11874 = vmatpush2.bf16.msra.mxu0 0
      %11875 = vmatprep.subr.bf16.mxu0 0
      %11876 = vmatpush2.bf16.msra.mxu0 0
      %11877 = vmatprep.subr.bf16.mxu0 0
      %11878 = vmatpush2.bf16.msra.mxu0 0
      %11879 = vmatprep.subr.bf16.mxu0 0
      %11880 = vmatpush2.bf16.msra.mxu0 0
      %11881 = vmatprep.subr.bf16.mxu0 0
      %11882 = vmatpush2.bf16.msra.mxu0 0
      %11883 = vmatprep.mubr.bf16.mxu0 0
      %11884 = vmatmul.mubr.bf16.gmra.mxu0 %v11828
      %v11885 = vpop.f32.mrf.mxu0
      %v11886 = vadd.f32 %v11813, %v11885
      %v11887 = vpop.f32.mrf.mxu0
      %v11888 = vpop.f32.mrf.mxu0
      %v11889 = vadd.f32 %v11813, %v11888
      %v11890 = vpop.f32.mrf.mxu0
      %11891 = vmatprep.mubr.bf16.mxu0 0
      %11892 = vmatmul.mubr.bf16.gmra.mxu0 %v11831
      %v11893 = vpop.f32.mrf.mxu0
      %v11894 = vadd.f32 %v11813, %v11893
      %v11895 = vpop.f32.mrf.mxu0
      %v11896 = vpop.f32.mrf.mxu0
      %v11897 = vadd.f32 %v11813, %v11896
      %v11898 = vpop.f32.mrf.mxu0
      %11899 = vmatprep.mubr.bf16.mxu0 0
      %11900 = vmatmul.mubr.bf16.gmra.mxu0 %v11834
      %v11901 = vpop.f32.mrf.mxu0
      %v11902 = vadd.f32 %v11813, %v11901
      %v11903 = vpop.f32.mrf.mxu0
      %v11904 = vpop.f32.mrf.mxu0
      %v11905 = vadd.f32 %v11813, %v11904
      %v11906 = vpop.f32.mrf.mxu0
      %11907 = vmatprep.mubr.bf16.mxu0 0
      %11908 = vmatmul.mubr.bf16.gmra.mxu0 %v11837
      %v11909 = vpop.f32.mrf.mxu0
      %v11910 = vadd.f32 %v11813, %v11909
      %v11911 = vpop.f32.mrf.mxu0
      %v11912 = vpop.f32.mrf.mxu0
      %v11913 = vadd.f32 %v11813, %v11912
      %v11914 = vpop.f32.mrf.mxu0
      %11915 = vmatprep.mubr.bf16.mxu0 0
      %11916 = vmatmul.mubr.bf16.gmra.mxu0 %v11840
      %v11917 = vpop.f32.mrf.mxu0
      %v11918 = vadd.f32 %v11813, %v11917
      %v11919 = vpop.f32.mrf.mxu0
      %v11920 = vpop.f32.mrf.mxu0
      %v11921 = vadd.f32 %v11813, %v11920
      %v11922 = vpop.f32.mrf.mxu0
      %11923 = vmatprep.mubr.bf16.mxu0 0
      %11924 = vmatmul.mubr.bf16.gmra.mxu0 %v11843
      %v11925 = vpop.f32.mrf.mxu0
      %v11926 = vadd.f32 %v11813, %v11925
      %v11927 = vpop.f32.mrf.mxu0
      %v11928 = vpop.f32.mrf.mxu0
      %v11929 = vadd.f32 %v11813, %v11928
      %v11930 = vpop.f32.mrf.mxu0
      %11931 = vmatprep.mubr.bf16.mxu0 0
      %11932 = vmatmul.mubr.bf16.gmra.mxu0 %v11846
      %v11933 = vpop.f32.mrf.mxu0
      %v11934 = vadd.f32 %v11813, %v11933
      %v11935 = vpop.f32.mrf.mxu0
      %v11936 = vpop.f32.mrf.mxu0
      %v11937 = vadd.f32 %v11813, %v11936
      %v11938 = vpop.f32.mrf.mxu0
      %11939 = vmatprep.mubr.bf16.mxu0 0
      %11940 = vmatmul.mubr.bf16.gmra.mxu0 %v11849
      %v11941 = vpop.f32.mrf.mxu0
      %v11942 = vadd.f32 %v11813, %v11941
      %v11943 = vpop.f32.mrf.mxu0
      %v11944 = vpop.f32.mrf.mxu0
      %v11945 = vadd.f32 %v11813, %v11944
      %v11946 = vpop.f32.mrf.mxu0
      %11947 = vdwg.mxu0
      %v11948 = vmul.f32 %v11886, 1.702
      %v11949 = vmul.f32 %v11889, 1.702
      %v11950 = vmul.f32 %v11894, 1.702
      %v11951 = vmul.f32 %v11897, 1.702
      %v11952 = vmul.f32 %v11902, 1.702
      %v11953 = vmul.f32 %v11905, 1.702
      %v11954 = vmul.f32 %v11910, 1.702
      %v11955 = vmul.f32 %v11913, 1.702
      %v11956 = vmul.f32 %v11918, 1.702
      %v11957 = vmul.f32 %v11921, 1.702
      %v11958 = vmul.f32 %v11926, 1.702
      %v11959 = vmul.f32 %v11929, 1.702
      %v11960 = vmul.f32 %v11934, 1.702
      %v11961 = vmul.f32 %v11937, 1.702
      %v11962 = vmul.f32 %v11942, 1.702
      %v11963 = vmul.f32 %v11945, 1.702
      %v11964 = vxor.u32 %v11948, 2147483648
      %v11965 = vxor.u32 %v11949, 2147483648
      %v11966 = vxor.u32 %v11950, 2147483648
      %v11967 = vxor.u32 %v11951, 2147483648
      %v11968 = vxor.u32 %v11952, 2147483648
      %v11969 = vxor.u32 %v11953, 2147483648
      %v11970 = vxor.u32 %v11954, 2147483648
      %v11971 = vxor.u32 %v11955, 2147483648
      %v11972 = vxor.u32 %v11956, 2147483648
      %v11973 = vxor.u32 %v11957, 2147483648
      %v11974 = vxor.u32 %v11958, 2147483648
      %v11975 = vxor.u32 %v11959, 2147483648
      %v11976 = vxor.u32 %v11960, 2147483648
      %v11977 = vxor.u32 %v11961, 2147483648
      %v11978 = vxor.u32 %v11962, 2147483648
      %v11979 = vxor.u32 %v11963, 2147483648
      %v11980 = vmul.f32 %v11964, 1.442695
      %v11981 = vpow.pop %v11980
      %v11982 = vmul.f32 %v11965, 1.442695
      %v11983 = vpow.pop %v11982
      %v11984 = vmul.f32 %v11966, 1.442695
      %v11985 = vpow.pop %v11984
      %v11986 = vmul.f32 %v11967, 1.442695
      %v11987 = vpow.pop %v11986
      %v11988 = vmul.f32 %v11968, 1.442695
      %v11989 = vpow.pop %v11988
      %v11990 = vmul.f32 %v11969, 1.442695
      %v11991 = vpow.pop %v11990
      %v11992 = vmul.f32 %v11970, 1.442695
      %v11993 = vpow.pop %v11992
      %v11994 = vmul.f32 %v11971, 1.442695
      %v11995 = vpow.pop %v11994
      %v11996 = vmul.f32 %v11972, 1.442695
      %v11997 = vpow.pop %v11996
      %v11998 = vmul.f32 %v11973, 1.442695
      %v11999 = vpow.pop %v11998
      %v12000 = vmul.f32 %v11974, 1.442695
      %v12001 = vpow.pop %v12000
      %v12002 = vmul.f32 %v11975, 1.442695
      %v12003 = vpow.pop %v12002
      %v12004 = vmul.f32 %v11976, 1.442695
      %v12005 = vpow.pop %v12004
      %v12006 = vmul.f32 %v11977, 1.442695
      %v12007 = vpow.pop %v12006
      %v12008 = vmul.f32 %v11978, 1.442695
      %v12009 = vpow.pop %v12008
      %v12010 = vmul.f32 %v11979, 1.442695
      %v12011 = vpow.pop %v12010
      %v12012 = vadd.f32 %v11981, 1.0
      %v12013 = vadd.f32 %v11983, 1.0
      %v12014 = vadd.f32 %v11985, 1.0
      %v12015 = vadd.f32 %v11987, 1.0
      %v12016 = vadd.f32 %v11989, 1.0
      %v12017 = vadd.f32 %v11991, 1.0
      %v12018 = vadd.f32 %v11993, 1.0
      %v12019 = vadd.f32 %v11995, 1.0
      %v12020 = vadd.f32 %v11997, 1.0
      %v12021 = vadd.f32 %v11999, 1.0
      %v12022 = vadd.f32 %v12001, 1.0
      %v12023 = vadd.f32 %v12003, 1.0
      %v12024 = vadd.f32 %v12005, 1.0
      %v12025 = vadd.f32 %v12007, 1.0
      %v12026 = vadd.f32 %v12009, 1.0
      %v12027 = vadd.f32 %v12011, 1.0
      %v12028 = vrcp.pop %v12012
      %v12029 = vmul.f32 1.0, %v12028
      %v12030 = vrcp.pop %v12013
      %v12031 = vmul.f32 1.0, %v12030
      %v12032 = vrcp.pop %v12014
      %v12033 = vmul.f32 1.0, %v12032
      %v12034 = vrcp.pop %v12015
      %v12035 = vmul.f32 1.0, %v12034
      %v12036 = vrcp.pop %v12016
      %v12037 = vmul.f32 1.0, %v12036
      %v12038 = vrcp.pop %v12017
      %v12039 = vmul.f32 1.0, %v12038
      %v12040 = vrcp.pop %v12018
      %v12041 = vmul.f32 1.0, %v12040
      %v12042 = vrcp.pop %v12019
      %v12043 = vmul.f32 1.0, %v12042
      %v12044 = vrcp.pop %v12020
      %v12045 = vmul.f32 1.0, %v12044
      %v12046 = vrcp.pop %v12021
      %v12047 = vmul.f32 1.0, %v12046
      %v12048 = vrcp.pop %v12022
      %v12049 = vmul.f32 1.0, %v12048
      %v12050 = vrcp.pop %v12023
      %v12051 = vmul.f32 1.0, %v12050
      %v12052 = vrcp.pop %v12024
      %v12053 = vmul.f32 1.0, %v12052
      %v12054 = vrcp.pop %v12025
      %v12055 = vmul.f32 1.0, %v12054
      %v12056 = vrcp.pop %v12026
      %v12057 = vmul.f32 1.0, %v12056
      %v12058 = vrcp.pop %v12027
      %v12059 = vmul.f32 1.0, %v12058
      %v12060 = vmul.f32 %v11886, %v12029
      %v12061 = vmul.f32 %v11889, %v12031
      %v12062 = vmul.f32 %v11894, %v12033
      %v12063 = vmul.f32 %v11897, %v12035
      %v12064 = vmul.f32 %v11902, %v12037
      %v12065 = vmul.f32 %v11905, %v12039
      %v12066 = vmul.f32 %v11910, %v12041
      %v12067 = vmul.f32 %v11913, %v12043
      %v12068 = vmul.f32 %v11918, %v12045
      %v12069 = vmul.f32 %v11921, %v12047
      %v12070 = vmul.f32 %v11926, %v12049
      %v12071 = vmul.f32 %v11929, %v12051
      %v12072 = vmul.f32 %v11934, %v12053
      %v12073 = vmul.f32 %v11937, %v12055
      %v12074 = vmul.f32 %v11942, %v12057
      %v12075 = vmul.f32 %v11945, %v12059
      %v12076 = vpack.c.bf16 %v12061, %v12060
      %v12077 = vpack.c.bf16 %v12063, %v12062
      %v12078 = vpack.c.bf16 %v12065, %v12064
      %v12079 = vpack.c.bf16 %v12067, %v12066
      %v12080 = vpack.c.bf16 %v12069, %v12068
      %v12081 = vpack.c.bf16 %v12071, %v12070
      %v12082 = vpack.c.bf16 %v12073, %v12072
      %v12083 = vpack.c.bf16 %v12075, %v12074
      %v12084 = vld [vmem:[%s12] sm:$0xf]
      %v12085 = vld [vmem:[%s12 + $0x4] sm:$0xf]
      %v12086 = vld [vmem:[%s12 + $0x8] sm:$0xf]
      %v12087 = vld [vmem:[%s12 + $0xc] sm:$0xf]
      %v12088 = vld [vmem:[%s12 + $0x10] sm:$0xf]
      %v12089 = vld [vmem:[%s12 + $0x14] sm:$0xf]
      %v12090 = vld [vmem:[%s12 + $0x18] sm:$0xf]
      %v12091 = vld [vmem:[%s12 + $0x1c] sm:$0xf]
      %v12092 = vld [vmem:[%s12 + $0x20] sm:$0xf]
      %v12093 = vld [vmem:[%s12 + $0x24] sm:$0xf]
      %v12094 = vld [vmem:[%s12 + $0x28] sm:$0xf]
      %v12095 = vld [vmem:[%s12 + $0x2c] sm:$0xf]
      %v12096 = vld [vmem:[%s12 + $0x30] sm:$0xf]
      %v12097 = vld [vmem:[%s12 + $0x34] sm:$0xf]
      %v12098 = vld [vmem:[%s12 + $0x38] sm:$0xf]
      %v12099 = vld [vmem:[%s12 + $0x3c] sm:$0xf]
      %v12100 = vld [vmem:[%s13] sm:$0x1]
      %v12102 = vlaneseq
      %v12103 = vshrl.u32 %v12102, 7
      %v12104 = vsub.s32 0, %v12103
      %v12105 = vrot.slane %v12100, %v12104
      %v12123 = vunpack.c.l.b16 %v12084
      %v12124 = vunpack.c.l.b16 %v12085
      %v12125 = vunpack.c.l.b16 %v12086
      %v12126 = vunpack.c.l.b16 %v12087
      %v12127 = vunpack.c.l.b16 %v12088
      %v12128 = vunpack.c.l.b16 %v12089
      %v12129 = vunpack.c.l.b16 %v12090
      %v12130 = vunpack.c.l.b16 %v12091
      %v12131 = vunpack.c.l.b16 %v12092
      %v12132 = vunpack.c.l.b16 %v12093
      %v12133 = vunpack.c.l.b16 %v12094
      %v12134 = vunpack.c.l.b16 %v12095
      %v12135 = vunpack.c.l.b16 %v12096
      %v12136 = vunpack.c.l.b16 %v12097
      %v12137 = vunpack.c.l.b16 %v12098
      %v12138 = vunpack.c.l.b16 %v12099
      %v12139 = vpack.c.b16 %v12124, %v12123
      %v12140 = vpack.c.b16 %v12126, %v12125
      %v12141 = vpack.c.b16 %v12128, %v12127
      %v12142 = vpack.c.b16 %v12130, %v12129
      %v12143 = vpack.c.b16 %v12132, %v12131
      %v12144 = vpack.c.b16 %v12134, %v12133
      %v12145 = vpack.c.b16 %v12136, %v12135
      %v12146 = vpack.c.b16 %v12138, %v12137
      %12155 = vmatprep.subr.bf16.mxu0 0
      %12156 = vmatpush1.bf16.msra.mxu0 %v12146
      %12157 = vmatprep.subr.bf16.mxu0 0
      %12158 = vmatpush1.bf16.msra.mxu0 %v12145
      %12159 = vmatprep.subr.bf16.mxu0 0
      %12160 = vmatpush1.bf16.msra.mxu0 %v12144
      %12161 = vmatprep.subr.bf16.mxu0 0
      %12162 = vmatpush1.bf16.msra.mxu0 %v12143
      %12163 = vmatprep.subr.bf16.mxu0 0
      %12164 = vmatpush1.bf16.msra.mxu0 %v12142
      %12165 = vmatprep.subr.bf16.mxu0 0
      %12166 = vmatpush1.bf16.msra.mxu0 %v12141
      %12167 = vmatprep.subr.bf16.mxu0 0
      %12168 = vmatpush1.bf16.msra.mxu0 %v12140
      %12169 = vmatprep.subr.bf16.mxu0 0
      %12170 = vmatpush1.bf16.msra.mxu0 %v12139
      %12171 = vmatprep.subr.bf16.mxu0 0
      %12172 = vmatpush2.bf16.msra.mxu0 0
      %12173 = vmatprep.subr.bf16.mxu0 0
      %12174 = vmatpush2.bf16.msra.mxu0 0
      %12175 = vmatprep.subr.bf16.mxu0 0
      %12176 = vmatpush2.bf16.msra.mxu0 0
      %12177 = vmatprep.subr.bf16.mxu0 0
      %12178 = vmatpush2.bf16.msra.mxu0 0
      %12179 = vmatprep.subr.bf16.mxu0 0
      %12180 = vmatpush2.bf16.msra.mxu0 0
      %12181 = vmatprep.subr.bf16.mxu0 0
      %12182 = vmatpush2.bf16.msra.mxu0 0
      %12183 = vmatprep.subr.bf16.mxu0 0
      %12184 = vmatpush2.bf16.msra.mxu0 0
      %12185 = vmatprep.subr.bf16.mxu0 0
      %12186 = vmatpush2.bf16.msra.mxu0 0
      %12187 = vmatprep.mubr.bf16.mxu0 0
      %12188 = vmatmul.mubr.bf16.gmra.mxu0 %v12076
      %v12189 = vpop.f32.mrf.mxu0
      %v12190 = vadd.f32 %v12105, %v12189
      %v12191 = vpop.f32.mrf.mxu0
      %v12192 = vpop.f32.mrf.mxu0
      %v12193 = vadd.f32 %v12105, %v12192
      %v12194 = vpop.f32.mrf.mxu0
      %12195 = vmatprep.mubr.bf16.mxu0 0
      %12196 = vmatmul.mubr.bf16.gmra.mxu0 %v12077
      %v12197 = vpop.f32.mrf.mxu0
      %v12198 = vadd.f32 %v12105, %v12197
      %v12199 = vpop.f32.mrf.mxu0
      %v12200 = vpop.f32.mrf.mxu0
      %v12201 = vadd.f32 %v12105, %v12200
      %v12202 = vpop.f32.mrf.mxu0
      %12203 = vmatprep.mubr.bf16.mxu0 0
      %12204 = vmatmul.mubr.bf16.gmra.mxu0 %v12078
      %v12205 = vpop.f32.mrf.mxu0
      %v12206 = vadd.f32 %v12105, %v12205
      %v12207 = vpop.f32.mrf.mxu0
      %v12208 = vpop.f32.mrf.mxu0
      %v12209 = vadd.f32 %v12105, %v12208
      %v12210 = vpop.f32.mrf.mxu0
      %12211 = vmatprep.mubr.bf16.mxu0 0
      %12212 = vmatmul.mubr.bf16.gmra.mxu0 %v12079
      %v12213 = vpop.f32.mrf.mxu0
      %v12214 = vadd.f32 %v12105, %v12213
      %v12215 = vpop.f32.mrf.mxu0
      %v12216 = vpop.f32.mrf.mxu0
      %v12217 = vadd.f32 %v12105, %v12216
      %v12218 = vpop.f32.mrf.mxu0
      %12219 = vmatprep.mubr.bf16.mxu0 0
      %12220 = vmatmul.mubr.bf16.gmra.mxu0 %v12080
      %v12221 = vpop.f32.mrf.mxu0
      %v12222 = vadd.f32 %v12105, %v12221
      %v12223 = vpop.f32.mrf.mxu0
      %v12224 = vpop.f32.mrf.mxu0
      %v12225 = vadd.f32 %v12105, %v12224
      %v12226 = vpop.f32.mrf.mxu0
      %12227 = vmatprep.mubr.bf16.mxu0 0
      %12228 = vmatmul.mubr.bf16.gmra.mxu0 %v12081
      %v12229 = vpop.f32.mrf.mxu0
      %v12230 = vadd.f32 %v12105, %v12229
      %v12231 = vpop.f32.mrf.mxu0
      %v12232 = vpop.f32.mrf.mxu0
      %v12233 = vadd.f32 %v12105, %v12232
      %v12234 = vpop.f32.mrf.mxu0
      %12235 = vmatprep.mubr.bf16.mxu0 0
      %12236 = vmatmul.mubr.bf16.gmra.mxu0 %v12082
      %v12237 = vpop.f32.mrf.mxu0
      %v12238 = vadd.f32 %v12105, %v12237
      %v12239 = vpop.f32.mrf.mxu0
      %v12240 = vpop.f32.mrf.mxu0
      %v12241 = vadd.f32 %v12105, %v12240
      %v12242 = vpop.f32.mrf.mxu0
      %12243 = vmatprep.mubr.bf16.mxu0 0
      %12244 = vmatmul.mubr.bf16.gmra.mxu0 %v12083
      %v12245 = vpop.f32.mrf.mxu0
      %v12246 = vadd.f32 %v12105, %v12245
      %v12247 = vpop.f32.mrf.mxu0
      %v12248 = vpop.f32.mrf.mxu0
      %v12249 = vadd.f32 %v12105, %v12248
      %v12250 = vpop.f32.mrf.mxu0
      %12251 = vdwg.mxu0
      %v12252 = vadd.f32 %v11526, %v12190
      %v12253 = vadd.f32 %v11527, %v12193
      %v12254 = vadd.f32 %v11528, %v12198
      %v12255 = vadd.f32 %v11529, %v12201
      %v12256 = vadd.f32 %v11530, %v12206
      %v12257 = vadd.f32 %v11531, %v12209
      %v12258 = vadd.f32 %v11532, %v12214
      %v12259 = vadd.f32 %v11533, %v12217
      %v12260 = vadd.f32 %v11534, %v12222
      %v12261 = vadd.f32 %v11535, %v12225
      %v12262 = vadd.f32 %v11536, %v12230
      %v12263 = vadd.f32 %v11537, %v12233
      %v12264 = vadd.f32 %v11538, %v12238
      %v12265 = vadd.f32 %v11539, %v12241
      %v12266 = vadd.f32 %v11540, %v12246
      %v12267 = vadd.f32 %v11541, %v12249
      %12268 = vst.msk [vmem:[%s467] sm:$0xff] %vm487, %v12252
      %12269 = vst.msk [vmem:[%s467 + $0x8] sm:$0xff] %vm487, %v12253
      %12270 = vst.msk [vmem:[%s467 + $0x10] sm:$0xff] %vm487, %v12254
      %12271 = vst.msk [vmem:[%s467 + $0x18] sm:$0xff] %vm487, %v12255
      %12272 = vst.msk [vmem:[%s467 + $0x20] sm:$0xff] %vm487, %v12256
      %12273 = vst.msk [vmem:[%s467 + $0x28] sm:$0xff] %vm487, %v12257
      %12274 = vst.msk [vmem:[%s467 + $0x30] sm:$0xff] %vm487, %v12258
      %12275 = vst.msk [vmem:[%s467 + $0x38] sm:$0xff] %vm487, %v12259
      %12276 = vst.msk [vmem:[%s467 + $0x40] sm:$0xff] %vm487, %v12260
      %12277 = vst.msk [vmem:[%s467 + $0x48] sm:$0xff] %vm487, %v12261
      %12278 = vst.msk [vmem:[%s467 + $0x50] sm:$0xff] %vm487, %v12262
      %12279 = vst.msk [vmem:[%s467 + $0x58] sm:$0xff] %vm487, %v12263
      %12280 = vst.msk [vmem:[%s467 + $0x60] sm:$0xff] %vm487, %v12264
      %12281 = vst.msk [vmem:[%s467 + $0x68] sm:$0xff] %vm487, %v12265
      %12282 = vst.msk [vmem:[%s467 + $0x70] sm:$0xff] %vm487, %v12266
      %12283 = vst.msk [vmem:[%s467 + $0x78] sm:$0xff] %vm487, %v12267
      %p12284 = scmp.lt.s32.totalorder %s25, 1
      %s12285 = scalar_select %p12284, %s25, 1
      %s12286 = smul.addr %s12285, 16
      %s12287 = smul.addr %s12286, 8
      %s12288 = scalar_lea.vmem %s14, %s12287
      // Predicated region
      $region77: #{tpu_custom_call.1} parent=75 // pred_check
        %p12289 = pneg %p342
      $region78: #{tpu_custom_call.1} parent=75 // pred_check_branch
        %12291 = sbr.rel (%p12289) target = $region80
      $region79: #{tpu_custom_call.1} parent=75 // pred_region
        _
      $region80: #{tpu_custom_call.1} parent=75 // pred_fallthru
        _
    $region76: #{tpu_custom_call.1} parent=5 // pred_fallthru
      _
    %p12292 = scmp.le.s32.totalorder 2, %s20
    // Predicated region
    $region81: #{tpu_custom_call.1} parent=5 // pred_check
      %p12293 = pneg %p12292
    $region82: #{tpu_custom_call.1} parent=5 // pred_check_branch
      %12295 = sbr.rel (%p12293) target = $region84
    $region83: #{tpu_custom_call.1} parent=5 // pred_region
      %s12296 = ssub.s32 %s20, 2
      // Predicated region
      $region85: #{tpu_custom_call.1} parent=83 // pred_check
        %p12297 = pneg %p348
      $region86: #{tpu_custom_call.1} parent=83 // pred_check_branch
        %12299 = sbr.rel (%p12297) target = $region88
      $region87: #{tpu_custom_call.1} parent=83 // pred_region
        %p12300 = scmp.lt.s32.totalorder %s26, 1
        %s12301 = scalar_select %p12300, %s26, 1
        %s12302 = smul.addr %s12301, 16
        %s12303 = smul.addr %s12302, 8
        %s12304 = scalar_lea.vmem %s14, %s12303
      $region88: #{tpu_custom_call.1} parent=83 // pred_fallthru
        _
    $region84: #{tpu_custom_call.1} parent=5 // pred_fallthru
      _
  $region6: #{tpu_custom_call.1} parent=0 // loop_footer
    %s24 = sadd.s32 1, %s20
  $region7: #{tpu_custom_call.1} parent=0 // loop_footer_branch
    %19 = sbr.rel target = $region3
  $region8: #{tpu_custom_call.1} parent=0 // loop_exit
    _

</llo_original>
